<compile_context>
chip_gen: v6e
topology: v6e:2x2x1
jax: 0.10.0
libtpu: 0.0.40
codegen_flags: <defaults>
</compile_context>

<pallas_src>
import math
import functools

import jax
import jax.numpy as jnp
from jax.experimental import pallas as pl
from jax.experimental.pallas import tpu as pltpu


# ---------------------------------------------------------------------------
# Fused kernel: per batch element
#   qkv projection (im2col GEMM, per-head weights) + softmax attention +
#   accumulated 1x1 output conv.
# ---------------------------------------------------------------------------
def _fused_attn_kernel(p_ref, wq_ref, wk_ref, wv_ref, bq_ref, bk_ref, bv_ref,
                       wo_ref, bo_ref, o_ref, *, Nh):
    p = p_ref[...]                                    # (HW, KP) bf16 im2col patches
    hw = p.shape[0]
    dv = wo_ref.shape[2]
    acc = jnp.zeros((hw, dv), jnp.float32)

    # Nh is a small static int -> unrolled loop; each head is pure MXU work.
    for h in range(Nh):
        # Per-head projections straight from patches (head split lives in the
        # host-side weight layout, so no in-kernel lane slicing).
        qh = jnp.dot(p, wq_ref[h], preferred_element_type=jnp.float32) + bq_ref[h]
        kh = jnp.dot(p, wk_ref[h], preferred_element_type=jnp.float32) + bk_ref[h]
        vh = jnp.dot(p, wv_ref[h], preferred_element_type=jnp.float32) + bv_ref[h]

        # logits = qh @ kh^T, contracting last dims (no explicit K transpose).
        logits = jax.lax.dot_general(
            qh.astype(jnp.bfloat16), kh.astype(jnp.bfloat16),
            (((1,), (1,)), ((), ())),
            preferred_element_type=jnp.float32)       # (HW, HW) f32

        # Numerically-stable softmax over keys; all elementwise math in f32
        # (safe on v5e: bf16 only feeds the MXU).
        m = jnp.max(logits, axis=-1, keepdims=True)
        e = jnp.exp(logits - m)
        denom = jnp.sum(e, axis=-1, keepdims=True)
        attn = e * pl.reciprocal(denom, approx=True)  # EUP vrcp

        oh = jnp.dot(attn.astype(jnp.bfloat16), vh.astype(jnp.bfloat16),
                     preferred_element_type=jnp.float32)          # (HW, dvh)

        # 1x1 output conv, accumulated per head instead of concat + big matmul.
        acc = acc + jnp.dot(oh.astype(jnp.bfloat16), wo_ref[h],
                            preferred_element_type=jnp.float32)

    o_ref[...] = (acc + bo_ref[...]).astype(o_ref.dtype)


def pos_attention_2d(x, params, *, dk, dv, Nh, kernel_size, stride=1):
    """Pallas forward of M_PosAttention2d (singleHead=False).

    x: (N, Cin, H, W) float32.
    params:
      w_qkv: (ksz, ksz, Cin, 2*dk+dv)  HWIO conv weight
      b_qkv: (2*dk+dv,)
      w_out: (dv, dv)   1x1 conv weight laid out so out_ch d = sum_c O[c]*w_out[c, d]
      b_out: (dv,)
    Returns (N, dv, Ho, Wo) float32.
    """
    N, Cin, H, W = x.shape
    ksz = kernel_size
    pad = (ksz - 1) // 2
    assert Nh >= 1 and dk % Nh == 0 and dv % Nh == 0
    assert stride in (1, 2)
    dkh, dvh = dk // Nh, dv // Nh

    Ho = (H + 2 * pad - ksz) // stride + 1
    Wo = (W + 2 * pad - ksz) // stride + 1
    HW = Ho * Wo
    KP = ksz * ksz * Cin
    Cq = 2 * dk + dv

    # ---- wrapper-side layout plumbing: NCHW -> NHWC, zero-pad, im2col ----
    x_cl = jnp.transpose(x, (0, 2, 3, 1))
    x_pad = jnp.pad(x_cl, ((0, 0), (pad, pad), (pad, pad), (0, 0)))
    cols = []
    for ky in range(ksz):
        for kx in range(ksz):
            cols.append(x_pad[:, ky: ky + (Ho - 1) * stride + 1: stride,
                                 kx: kx + (Wo - 1) * stride + 1: stride, :])
    patches = jnp.concatenate(cols, axis=-1).reshape(N, HW, KP)
    patches = patches.astype(jnp.bfloat16)            # bf16 at the MXU boundary

    # ---- weight prep: per-head split + fold dkh**-0.5 into Wq/bq (host) ----
    scale = dkh ** -0.5
    w_flat = params["w_qkv"].reshape(KP, Cq)
    wq = (w_flat[:, :dk] * scale).reshape(KP, Nh, dkh)
    wq = jnp.transpose(wq, (1, 0, 2)).astype(jnp.bfloat16)              # (Nh, KP, dkh)
    wk = jnp.transpose(w_flat[:, dk:2 * dk].reshape(KP, Nh, dkh),
                       (1, 0, 2)).astype(jnp.bfloat16)                  # (Nh, KP, dkh)
    wv = jnp.transpose(w_flat[:, 2 * dk:].reshape(KP, Nh, dvh),
                       (1, 0, 2)).astype(jnp.bfloat16)                  # (Nh, KP, dvh)
    bq = (params["b_qkv"][:dk] * scale).reshape(Nh, 1, dkh).astype(jnp.float32)
    bk = params["b_qkv"][dk:2 * dk].reshape(Nh, 1, dkh).astype(jnp.float32)
    bv = params["b_qkv"][2 * dk:].reshape(Nh, 1, dvh).astype(jnp.float32)
    wo = params["w_out"].reshape(Nh, dvh, dv).astype(jnp.bfloat16)      # (Nh, dvh, dv)
    bo = params["b_out"].reshape(1, dv).astype(jnp.float32)

    kernel = functools.partial(_fused_attn_kernel, Nh=Nh)

    def _full(a):  # whole-array (grid-invariant) block
        return pl.BlockSpec(a.shape, lambda n, _nd=a.ndim: (0,) * _nd)

    out_flat = pl.pallas_call(
        kernel,
        out_shape=jax.ShapeDtypeStruct((N, HW, dv), jnp.float32),
        grid=(N,),
        in_specs=[pl.BlockSpec((None, HW, KP), lambda n: (n, 0, 0)),
                  _full(wq), _full(wk), _full(wv),
                  _full(bq), _full(bk), _full(bv),
                  _full(wo), _full(bo)],
        out_specs=pl.BlockSpec((None, HW, dv), lambda n: (n, 0, 0)),
        compiler_params=pltpu.CompilerParams(
            dimension_semantics=("parallel",)),
    )(patches, wq, wk, wv, bq, bk, bv, wo, bo)

    # ---- wrapper-side layout: (N, HW, dv) -> (N, dv, Ho, Wo) ----
    return jnp.transpose(out_flat.reshape(N, Ho, Wo, dv), (0, 3, 1, 2))


def reference_pos_attention_2d(x, params, *, dk, dv, Nh, kernel_size, stride=1):
    """Pure-JAX (f32) mirror of the PyTorch M_PosAttention2d.forward."""
    ksz = kernel_size
    pad = (ksz - 1) // 2
    dkh, dvh = dk // Nh, dv // Nh

    qkv = jax.lax.conv_general_dilated(
        x, params["w_qkv"], window_strides=(stride, stride),
        padding=((pad, pad), (pad, pad)),
        dimension_numbers=("NCHW", "HWIO", "NCHW"))
    qkv = qkv + params["b_qkv"].reshape(1, -1, 1, 1)

    N, _, H, W = qkv.shape
    q = qkv[:, :dk] * (dkh ** -0.5)
    k = qkv[:, dk:2 * dk]
    v = qkv[:, 2 * dk:]

    flat_q = q.reshape(N, Nh, dkh, H * W)
    flat_k = k.reshape(N, Nh, dkh, H * W)
    flat_v = v.reshape(N, Nh, dvh, H * W)

    logits = jnp.einsum("nhci,nhcj->nhij", flat_q, flat_k)
    weights = jax.nn.softmax(logits, axis=-1)
    Oh = jnp.einsum("nhij,nhcj->nhic", weights, flat_v)        # (N, Nh, HW, dvh)
    O_all = jnp.transpose(Oh, (0, 1, 3, 2)).reshape(N, dv, H, W)

    out = jnp.einsum("nchw,cd->ndhw", O_all, params["w_out"])
    return out + params["b_out"].reshape(1, -1, 1, 1)


if __name__ == "__main__":
    # Small config consistent with the module:
    #   x: (N=2, in_channels=4, 16x16), kernel_size=3, stride=1,
    #   dk=32, dv=32, Nh=4 -> dkh=dvh=8, attention over 256 spatial positions.
    N, Cin, H, W = 2, 4, 16, 16
    ksz, stride = 3, 1
    dk, dv, Nh = 32, 32, 4

    key = jax.random.PRNGKey(0)
    k0, k1, k2, k3, k4 = jax.random.split(key, 5)

    b_qkv_bound = 1.0 / math.sqrt(Cin * ksz * ksz)
    b_out_bound = 1.0 / math.sqrt(dv)
    params = {
        "w_qkv": jax.random.uniform(k0, (ksz, ksz, Cin, 2 * dk + dv),
                                    jnp.float32, -b_qkv_bound, b_qkv_bound),
        "b_qkv": jax.random.uniform(k1, (2 * dk + dv,),
                                    jnp.float32, -b_qkv_bound, b_qkv_bound),
        "w_out": jax.random.uniform(k2, (dv, dv),
                                    jnp.float32, -b_out_bound, b_out_bound),
        "b_out": jax.random.uniform(k3, (dv,),
                                    jnp.float32, -b_out_bound, b_out_bound),
    }
    x = jax.random.normal(k4, (N, Cin, H, W), jnp.float32)

    out = pos_attention_2d(x, params, dk=dk, dv=dv, Nh=Nh,
                           kernel_size=ksz, stride=stride)
    out = jax.block_until_ready(out)

    ref = jax.block_until_ready(
        reference_pos_attention_2d(x, params, dk=dk, dv=dv, Nh=Nh,
                                   kernel_size=ksz, stride=stride))

    assert out.shape == (N, dv, H, W), out.shape
    # bf16 MXU inputs with f32 accumulation -> relaxed tolerance vs f32 reference.
    assert jnp.allclose(out, ref, atol=2e-2, rtol=2e-2), (
        "max abs err = %f" % float(jnp.max(jnp.abs(out - ref))))

    print("KERNEL_OK")
</pallas_src>

<mosaic_0001>
module attributes {stable_mosaic.version = 11 : i64} {
  func.func @_fused_attn_kernel(%arg0: i32, %arg1: memref<1x256x36xbf16, #tpu.memory_space<vmem>>, %arg2: memref<4x36x8xbf16, #tpu.memory_space<vmem>>, %arg3: memref<4x36x8xbf16, #tpu.memory_space<vmem>>, %arg4: memref<4x36x8xbf16, #tpu.memory_space<vmem>>, %arg5: memref<4x1x8xf32, #tpu.memory_space<vmem>>, %arg6: memref<4x1x8xf32, #tpu.memory_space<vmem>>, %arg7: memref<4x1x8xf32, #tpu.memory_space<vmem>>, %arg8: memref<4x8x32xbf16, #tpu.memory_space<vmem>>, %arg9: memref<1x32xf32, #tpu.memory_space<vmem>>, %arg10: memref<1x256x32xf32, #tpu.memory_space<vmem>>) attributes {dimension_semantics = [#tpu.dimension_semantics<parallel>], iteration_bounds = array<i64: 2>, scalar_prefetch = 0 : i64, scratch_operands = 0 : i64, tpu.core_type = #tpu.core_type<tc>, window_params = [{transform_indices = @transform_0, window_bounds = array<i64: 1, 256, 36>}, {pipeline_mode = #tpu.pipeline_mode<synchronous>, transform_indices = @transform_1, window_bounds = array<i64: 4, 36, 8>}, {pipeline_mode = #tpu.pipeline_mode<synchronous>, transform_indices = @transform_2, window_bounds = array<i64: 4, 36, 8>}, {pipeline_mode = #tpu.pipeline_mode<synchronous>, transform_indices = @transform_3, window_bounds = array<i64: 4, 36, 8>}, {pipeline_mode = #tpu.pipeline_mode<synchronous>, transform_indices = @transform_4, window_bounds = array<i64: 4, 1, 8>}, {pipeline_mode = #tpu.pipeline_mode<synchronous>, transform_indices = @transform_5, window_bounds = array<i64: 4, 1, 8>}, {pipeline_mode = #tpu.pipeline_mode<synchronous>, transform_indices = @transform_6, window_bounds = array<i64: 4, 1, 8>}, {pipeline_mode = #tpu.pipeline_mode<synchronous>, transform_indices = @transform_7, window_bounds = array<i64: 4, 8, 32>}, {pipeline_mode = #tpu.pipeline_mode<synchronous>, transform_indices = @transform_8, window_bounds = array<i64: 1, 32>}, {transform_indices = @transform_9, window_bounds = array<i64: 1, 256, 32>}]} {
    %c0 = arith.constant 0 : index
    %c0_0 = arith.constant 0 : index
    %c0_1 = arith.constant 0 : index
    %0 = vector.load %arg1[%c0, %c0_0, %c0_1] : memref<1x256x36xbf16, #tpu.memory_space<vmem>>, vector<1x256x36xbf16>
    %1 = vector.shape_cast %0 : vector<1x256x36xbf16> to vector<256x36xbf16>
    %cst = arith.constant 0.000000e+00 : f32
    %2 = vector.broadcast %cst : f32 to vector<256x32xf32>
    %c0_2 = arith.constant 0 : index
    %c0_3 = arith.constant 0 : index
    %c0_4 = arith.constant 0 : index
    %3 = vector.load %arg2[%c0_2, %c0_3, %c0_4] : memref<4x36x8xbf16, #tpu.memory_space<vmem>>, vector<1x36x8xbf16>
    %4 = vector.shape_cast %3 : vector<1x36x8xbf16> to vector<36x8xbf16>
    %cst_5 = arith.constant dense<0.000000e+00> : vector<256x8xf32>
    %5 = tpu.matmul %1, %4, %cst_5 {dimension_numbers = #tpu.dot_dimension_numbers<[1], [0], [0], [1], [0, 0, 1, 1], [], []>} : vector<256x36xbf16>, vector<36x8xbf16>, vector<256x8xf32> -> vector<256x8xf32>
    %c0_6 = arith.constant 0 : index
    %c0_7 = arith.constant 0 : index
    %c0_8 = arith.constant 0 : index
    %6 = vector.load %arg5[%c0_6, %c0_7, %c0_8] : memref<4x1x8xf32, #tpu.memory_space<vmem>>, vector<1x1x8xf32>
    %7 = vector.shape_cast %6 : vector<1x1x8xf32> to vector<1x8xf32>
    %8 = vector.broadcast %7 : vector<1x8xf32> to vector<256x8xf32>
    %9 = arith.addf %5, %8 : vector<256x8xf32>
    %c0_9 = arith.constant 0 : index
    %c0_10 = arith.constant 0 : index
    %c0_11 = arith.constant 0 : index
    %10 = vector.load %arg3[%c0_9, %c0_10, %c0_11] : memref<4x36x8xbf16, #tpu.memory_space<vmem>>, vector<1x36x8xbf16>
    %11 = vector.shape_cast %10 : vector<1x36x8xbf16> to vector<36x8xbf16>
    %cst_12 = arith.constant dense<0.000000e+00> : vector<256x8xf32>
    %12 = tpu.matmul %1, %11, %cst_12 {dimension_numbers = #tpu.dot_dimension_numbers<[1], [0], [0], [1], [0, 0, 1, 1], [], []>} : vector<256x36xbf16>, vector<36x8xbf16>, vector<256x8xf32> -> vector<256x8xf32>
    %c0_13 = arith.constant 0 : index
    %c0_14 = arith.constant 0 : index
    %c0_15 = arith.constant 0 : index
    %13 = vector.load %arg6[%c0_13, %c0_14, %c0_15] : memref<4x1x8xf32, #tpu.memory_space<vmem>>, vector<1x1x8xf32>
    %14 = vector.shape_cast %13 : vector<1x1x8xf32> to vector<1x8xf32>
    %15 = vector.broadcast %14 : vector<1x8xf32> to vector<256x8xf32>
    %16 = arith.addf %12, %15 : vector<256x8xf32>
    %c0_16 = arith.constant 0 : index
    %c0_17 = arith.constant 0 : index
    %c0_18 = arith.constant 0 : index
    %17 = vector.load %arg4[%c0_16, %c0_17, %c0_18] : memref<4x36x8xbf16, #tpu.memory_space<vmem>>, vector<1x36x8xbf16>
    %18 = vector.shape_cast %17 : vector<1x36x8xbf16> to vector<36x8xbf16>
    %cst_19 = arith.constant dense<0.000000e+00> : vector<256x8xf32>
    %19 = tpu.matmul %1, %18, %cst_19 {dimension_numbers = #tpu.dot_dimension_numbers<[1], [0], [0], [1], [0, 0, 1, 1], [], []>} : vector<256x36xbf16>, vector<36x8xbf16>, vector<256x8xf32> -> vector<256x8xf32>
    %c0_20 = arith.constant 0 : index
    %c0_21 = arith.constant 0 : index
    %c0_22 = arith.constant 0 : index
    %20 = vector.load %arg7[%c0_20, %c0_21, %c0_22] : memref<4x1x8xf32, #tpu.memory_space<vmem>>, vector<1x1x8xf32>
    %21 = vector.shape_cast %20 : vector<1x1x8xf32> to vector<1x8xf32>
    %22 = vector.broadcast %21 : vector<1x8xf32> to vector<256x8xf32>
    %23 = arith.addf %19, %22 : vector<256x8xf32>
    %24 = arith.truncf %9 : vector<256x8xf32> to vector<256x8xbf16>
    %25 = arith.truncf %16 : vector<256x8xf32> to vector<256x8xbf16>
    %cst_23 = arith.constant dense<0.000000e+00> : vector<256x256xf32>
    %26 = tpu.matmul %24, %25, %cst_23 {dimension_numbers = #tpu.dot_dimension_numbers<[1], [1], [0], [0], [0, 0, 1, 0], [], []>} : vector<256x8xbf16>, vector<256x8xbf16>, vector<256x256xf32> -> vector<256x256xf32>
    %cst_24 = arith.constant dense<0xFF800000> : vector<256xf32>
    %27 = vector.multi_reduction <maximumf>, %26, %cst_24 [1] : vector<256x256xf32> to vector<256xf32>
    %28 = vector.shape_cast %27 : vector<256xf32> to vector<256x1xf32>
    %29 = vector.broadcast %28 : vector<256x1xf32> to vector<256x256xf32>
    %30 = arith.subf %26, %29 : vector<256x256xf32>
    %31 = math.exp %30 : vector<256x256xf32>
    %cst_25 = arith.constant dense<0.000000e+00> : vector<256xf32>
    %32 = vector.multi_reduction <add>, %31, %cst_25 [1] : vector<256x256xf32> to vector<256xf32>
    %33 = vector.shape_cast %32 : vector<256xf32> to vector<256x1xf32>
    %34 = tpu.reciprocal %33 {approx = true} : vector<256x1xf32> -> vector<256x1xf32>
    %35 = vector.broadcast %34 : vector<256x1xf32> to vector<256x256xf32>
    %36 = arith.mulf %31, %35 : vector<256x256xf32>
    %37 = arith.truncf %36 : vector<256x256xf32> to vector<256x256xbf16>
    %38 = arith.truncf %23 : vector<256x8xf32> to vector<256x8xbf16>
    %cst_26 = arith.constant dense<0.000000e+00> : vector<256x8xf32>
    %39 = tpu.matmul %37, %38, %cst_26 {dimension_numbers = #tpu.dot_dimension_numbers<[1], [0], [0], [1], [0, 0, 1, 1], [], []>} : vector<256x256xbf16>, vector<256x8xbf16>, vector<256x8xf32> -> vector<256x8xf32>
    %40 = arith.truncf %39 : vector<256x8xf32> to vector<256x8xbf16>
    %c0_27 = arith.constant 0 : index
    %c0_28 = arith.constant 0 : index
    %c0_29 = arith.constant 0 : index
    %41 = vector.load %arg8[%c0_27, %c0_28, %c0_29] : memref<4x8x32xbf16, #tpu.memory_space<vmem>>, vector<1x8x32xbf16>
    %42 = vector.shape_cast %41 : vector<1x8x32xbf16> to vector<8x32xbf16>
    %cst_30 = arith.constant dense<0.000000e+00> : vector<256x32xf32>
    %43 = tpu.matmul %40, %42, %cst_30 {dimension_numbers = #tpu.dot_dimension_numbers<[1], [0], [0], [1], [0, 0, 1, 1], [], []>} : vector<256x8xbf16>, vector<8x32xbf16>, vector<256x32xf32> -> vector<256x32xf32>
    %44 = arith.addf %2, %43 : vector<256x32xf32>
    %c1 = arith.constant 1 : index
    %c0_31 = arith.constant 0 : index
    %c0_32 = arith.constant 0 : index
    %45 = vector.load %arg2[%c1, %c0_31, %c0_32] : memref<4x36x8xbf16, #tpu.memory_space<vmem>>, vector<1x36x8xbf16>
    %46 = vector.shape_cast %45 : vector<1x36x8xbf16> to vector<36x8xbf16>
    %cst_33 = arith.constant dense<0.000000e+00> : vector<256x8xf32>
    %47 = tpu.matmul %1, %46, %cst_33 {dimension_numbers = #tpu.dot_dimension_numbers<[1], [0], [0], [1], [0, 0, 1, 1], [], []>} : vector<256x36xbf16>, vector<36x8xbf16>, vector<256x8xf32> -> vector<256x8xf32>
    %c1_34 = arith.constant 1 : index
    %c0_35 = arith.constant 0 : index
    %c0_36 = arith.constant 0 : index
    %48 = vector.load %arg5[%c1_34, %c0_35, %c0_36] : memref<4x1x8xf32, #tpu.memory_space<vmem>>, vector<1x1x8xf32>
    %49 = vector.shape_cast %48 : vector<1x1x8xf32> to vector<1x8xf32>
    %50 = vector.broadcast %49 : vector<1x8xf32> to vector<256x8xf32>
    %51 = arith.addf %47, %50 : vector<256x8xf32>
    %c1_37 = arith.constant 1 : index
    %c0_38 = arith.constant 0 : index
    %c0_39 = arith.constant 0 : index
    %52 = vector.load %arg3[%c1_37, %c0_38, %c0_39] : memref<4x36x8xbf16, #tpu.memory_space<vmem>>, vector<1x36x8xbf16>
    %53 = vector.shape_cast %52 : vector<1x36x8xbf16> to vector<36x8xbf16>
    %cst_40 = arith.constant dense<0.000000e+00> : vector<256x8xf32>
    %54 = tpu.matmul %1, %53, %cst_40 {dimension_numbers = #tpu.dot_dimension_numbers<[1], [0], [0], [1], [0, 0, 1, 1], [], []>} : vector<256x36xbf16>, vector<36x8xbf16>, vector<256x8xf32> -> vector<256x8xf32>
    %c1_41 = arith.constant 1 : index
    %c0_42 = arith.constant 0 : index
    %c0_43 = arith.constant 0 : index
    %55 = vector.load %arg6[%c1_41, %c0_42, %c0_43] : memref<4x1x8xf32, #tpu.memory_space<vmem>>, vector<1x1x8xf32>
    %56 = vector.shape_cast %55 : vector<1x1x8xf32> to vector<1x8xf32>
    %57 = vector.broadcast %56 : vector<1x8xf32> to vector<256x8xf32>
    %58 = arith.addf %54, %57 : vector<256x8xf32>
    %c1_44 = arith.constant 1 : index
    %c0_45 = arith.constant 0 : index
    %c0_46 = arith.constant 0 : index
    %59 = vector.load %arg4[%c1_44, %c0_45, %c0_46] : memref<4x36x8xbf16, #tpu.memory_space<vmem>>, vector<1x36x8xbf16>
    %60 = vector.shape_cast %59 : vector<1x36x8xbf16> to vector<36x8xbf16>
    %cst_47 = arith.constant dense<0.000000e+00> : vector<256x8xf32>
    %61 = tpu.matmul %1, %60, %cst_47 {dimension_numbers = #tpu.dot_dimension_numbers<[1], [0], [0], [1], [0, 0, 1, 1], [], []>} : vector<256x36xbf16>, vector<36x8xbf16>, vector<256x8xf32> -> vector<256x8xf32>
    %c1_48 = arith.constant 1 : index
    %c0_49 = arith.constant 0 : index
    %c0_50 = arith.constant 0 : index
    %62 = vector.load %arg7[%c1_48, %c0_49, %c0_50] : memref<4x1x8xf32, #tpu.memory_space<vmem>>, vector<1x1x8xf32>
    %63 = vector.shape_cast %62 : vector<1x1x8xf32> to vector<1x8xf32>
    %64 = vector.broadcast %63 : vector<1x8xf32> to vector<256x8xf32>
    %65 = arith.addf %61, %64 : vector<256x8xf32>
    %66 = arith.truncf %51 : vector<256x8xf32> to vector<256x8xbf16>
    %67 = arith.truncf %58 : vector<256x8xf32> to vector<256x8xbf16>
    %cst_51 = arith.constant dense<0.000000e+00> : vector<256x256xf32>
    %68 = tpu.matmul %66, %67, %cst_51 {dimension_numbers = #tpu.dot_dimension_numbers<[1], [1], [0], [0], [0, 0, 1, 0], [], []>} : vector<256x8xbf16>, vector<256x8xbf16>, vector<256x256xf32> -> vector<256x256xf32>
    %cst_52 = arith.constant dense<0xFF800000> : vector<256xf32>
    %69 = vector.multi_reduction <maximumf>, %68, %cst_52 [1] : vector<256x256xf32> to vector<256xf32>
    %70 = vector.shape_cast %69 : vector<256xf32> to vector<256x1xf32>
    %71 = vector.broadcast %70 : vector<256x1xf32> to vector<256x256xf32>
    %72 = arith.subf %68, %71 : vector<256x256xf32>
    %73 = math.exp %72 : vector<256x256xf32>
    %cst_53 = arith.constant dense<0.000000e+00> : vector<256xf32>
    %74 = vector.multi_reduction <add>, %73, %cst_53 [1] : vector<256x256xf32> to vector<256xf32>
    %75 = vector.shape_cast %74 : vector<256xf32> to vector<256x1xf32>
    %76 = tpu.reciprocal %75 {approx = true} : vector<256x1xf32> -> vector<256x1xf32>
    %77 = vector.broadcast %76 : vector<256x1xf32> to vector<256x256xf32>
    %78 = arith.mulf %73, %77 : vector<256x256xf32>
    %79 = arith.truncf %78 : vector<256x256xf32> to vector<256x256xbf16>
    %80 = arith.truncf %65 : vector<256x8xf32> to vector<256x8xbf16>
    %cst_54 = arith.constant dense<0.000000e+00> : vector<256x8xf32>
    %81 = tpu.matmul %79, %80, %cst_54 {dimension_numbers = #tpu.dot_dimension_numbers<[1], [0], [0], [1], [0, 0, 1, 1], [], []>} : vector<256x256xbf16>, vector<256x8xbf16>, vector<256x8xf32> -> vector<256x8xf32>
    %82 = arith.truncf %81 : vector<256x8xf32> to vector<256x8xbf16>
    %c1_55 = arith.constant 1 : index
    %c0_56 = arith.constant 0 : index
    %c0_57 = arith.constant 0 : index
    %83 = vector.load %arg8[%c1_55, %c0_56, %c0_57] : memref<4x8x32xbf16, #tpu.memory_space<vmem>>, vector<1x8x32xbf16>
    %84 = vector.shape_cast %83 : vector<1x8x32xbf16> to vector<8x32xbf16>
    %cst_58 = arith.constant dense<0.000000e+00> : vector<256x32xf32>
    %85 = tpu.matmul %82, %84, %cst_58 {dimension_numbers = #tpu.dot_dimension_numbers<[1], [0], [0], [1], [0, 0, 1, 1], [], []>} : vector<256x8xbf16>, vector<8x32xbf16>, vector<256x32xf32> -> vector<256x32xf32>
    %86 = arith.addf %44, %85 : vector<256x32xf32>
    %c2 = arith.constant 2 : index
    %c0_59 = arith.constant 0 : index
    %c0_60 = arith.constant 0 : index
    %87 = vector.load %arg2[%c2, %c0_59, %c0_60] : memref<4x36x8xbf16, #tpu.memory_space<vmem>>, vector<1x36x8xbf16>
    %88 = vector.shape_cast %87 : vector<1x36x8xbf16> to vector<36x8xbf16>
    %cst_61 = arith.constant dense<0.000000e+00> : vector<256x8xf32>
    %89 = tpu.matmul %1, %88, %cst_61 {dimension_numbers = #tpu.dot_dimension_numbers<[1], [0], [0], [1], [0, 0, 1, 1], [], []>} : vector<256x36xbf16>, vector<36x8xbf16>, vector<256x8xf32> -> vector<256x8xf32>
    %c2_62 = arith.constant 2 : index
    %c0_63 = arith.constant 0 : index
    %c0_64 = arith.constant 0 : index
    %90 = vector.load %arg5[%c2_62, %c0_63, %c0_64] : memref<4x1x8xf32, #tpu.memory_space<vmem>>, vector<1x1x8xf32>
    %91 = vector.shape_cast %90 : vector<1x1x8xf32> to vector<1x8xf32>
    %92 = vector.broadcast %91 : vector<1x8xf32> to vector<256x8xf32>
    %93 = arith.addf %89, %92 : vector<256x8xf32>
    %c2_65 = arith.constant 2 : index
    %c0_66 = arith.constant 0 : index
    %c0_67 = arith.constant 0 : index
    %94 = vector.load %arg3[%c2_65, %c0_66, %c0_67] : memref<4x36x8xbf16, #tpu.memory_space<vmem>>, vector<1x36x8xbf16>
    %95 = vector.shape_cast %94 : vector<1x36x8xbf16> to vector<36x8xbf16>
    %cst_68 = arith.constant dense<0.000000e+00> : vector<256x8xf32>
    %96 = tpu.matmul %1, %95, %cst_68 {dimension_numbers = #tpu.dot_dimension_numbers<[1], [0], [0], [1], [0, 0, 1, 1], [], []>} : vector<256x36xbf16>, vector<36x8xbf16>, vector<256x8xf32> -> vector<256x8xf32>
    %c2_69 = arith.constant 2 : index
    %c0_70 = arith.constant 0 : index
    %c0_71 = arith.constant 0 : index
    %97 = vector.load %arg6[%c2_69, %c0_70, %c0_71] : memref<4x1x8xf32, #tpu.memory_space<vmem>>, vector<1x1x8xf32>
    %98 = vector.shape_cast %97 : vector<1x1x8xf32> to vector<1x8xf32>
    %99 = vector.broadcast %98 : vector<1x8xf32> to vector<256x8xf32>
    %100 = arith.addf %96, %99 : vector<256x8xf32>
    %c2_72 = arith.constant 2 : index
    %c0_73 = arith.constant 0 : index
    %c0_74 = arith.constant 0 : index
    %101 = vector.load %arg4[%c2_72, %c0_73, %c0_74] : memref<4x36x8xbf16, #tpu.memory_space<vmem>>, vector<1x36x8xbf16>
    %102 = vector.shape_cast %101 : vector<1x36x8xbf16> to vector<36x8xbf16>
    %cst_75 = arith.constant dense<0.000000e+00> : vector<256x8xf32>
    %103 = tpu.matmul %1, %102, %cst_75 {dimension_numbers = #tpu.dot_dimension_numbers<[1], [0], [0], [1], [0, 0, 1, 1], [], []>} : vector<256x36xbf16>, vector<36x8xbf16>, vector<256x8xf32> -> vector<256x8xf32>
    %c2_76 = arith.constant 2 : index
    %c0_77 = arith.constant 0 : index
    %c0_78 = arith.constant 0 : index
    %104 = vector.load %arg7[%c2_76, %c0_77, %c0_78] : memref<4x1x8xf32, #tpu.memory_space<vmem>>, vector<1x1x8xf32>
    %105 = vector.shape_cast %104 : vector<1x1x8xf32> to vector<1x8xf32>
    %106 = vector.broadcast %105 : vector<1x8xf32> to vector<256x8xf32>
    %107 = arith.addf %103, %106 : vector<256x8xf32>
    %108 = arith.truncf %93 : vector<256x8xf32> to vector<256x8xbf16>
    %109 = arith.truncf %100 : vector<256x8xf32> to vector<256x8xbf16>
    %cst_79 = arith.constant dense<0.000000e+00> : vector<256x256xf32>
    %110 = tpu.matmul %108, %109, %cst_79 {dimension_numbers = #tpu.dot_dimension_numbers<[1], [1], [0], [0], [0, 0, 1, 0], [], []>} : vector<256x8xbf16>, vector<256x8xbf16>, vector<256x256xf32> -> vector<256x256xf32>
    %cst_80 = arith.constant dense<0xFF800000> : vector<256xf32>
    %111 = vector.multi_reduction <maximumf>, %110, %cst_80 [1] : vector<256x256xf32> to vector<256xf32>
    %112 = vector.shape_cast %111 : vector<256xf32> to vector<256x1xf32>
    %113 = vector.broadcast %112 : vector<256x1xf32> to vector<256x256xf32>
    %114 = arith.subf %110, %113 : vector<256x256xf32>
    %115 = math.exp %114 : vector<256x256xf32>
    %cst_81 = arith.constant dense<0.000000e+00> : vector<256xf32>
    %116 = vector.multi_reduction <add>, %115, %cst_81 [1] : vector<256x256xf32> to vector<256xf32>
    %117 = vector.shape_cast %116 : vector<256xf32> to vector<256x1xf32>
    %118 = tpu.reciprocal %117 {approx = true} : vector<256x1xf32> -> vector<256x1xf32>
    %119 = vector.broadcast %118 : vector<256x1xf32> to vector<256x256xf32>
    %120 = arith.mulf %115, %119 : vector<256x256xf32>
    %121 = arith.truncf %120 : vector<256x256xf32> to vector<256x256xbf16>
    %122 = arith.truncf %107 : vector<256x8xf32> to vector<256x8xbf16>
    %cst_82 = arith.constant dense<0.000000e+00> : vector<256x8xf32>
    %123 = tpu.matmul %121, %122, %cst_82 {dimension_numbers = #tpu.dot_dimension_numbers<[1], [0], [0], [1], [0, 0, 1, 1], [], []>} : vector<256x256xbf16>, vector<256x8xbf16>, vector<256x8xf32> -> vector<256x8xf32>
    %124 = arith.truncf %123 : vector<256x8xf32> to vector<256x8xbf16>
    %c2_83 = arith.constant 2 : index
    %c0_84 = arith.constant 0 : index
    %c0_85 = arith.constant 0 : index
    %125 = vector.load %arg8[%c2_83, %c0_84, %c0_85] : memref<4x8x32xbf16, #tpu.memory_space<vmem>>, vector<1x8x32xbf16>
    %126 = vector.shape_cast %125 : vector<1x8x32xbf16> to vector<8x32xbf16>
    %cst_86 = arith.constant dense<0.000000e+00> : vector<256x32xf32>
    %127 = tpu.matmul %124, %126, %cst_86 {dimension_numbers = #tpu.dot_dimension_numbers<[1], [0], [0], [1], [0, 0, 1, 1], [], []>} : vector<256x8xbf16>, vector<8x32xbf16>, vector<256x32xf32> -> vector<256x32xf32>
    %128 = arith.addf %86, %127 : vector<256x32xf32>
    %c3 = arith.constant 3 : index
    %c0_87 = arith.constant 0 : index
    %c0_88 = arith.constant 0 : index
    %129 = vector.load %arg2[%c3, %c0_87, %c0_88] : memref<4x36x8xbf16, #tpu.memory_space<vmem>>, vector<1x36x8xbf16>
    %130 = vector.shape_cast %129 : vector<1x36x8xbf16> to vector<36x8xbf16>
    %cst_89 = arith.constant dense<0.000000e+00> : vector<256x8xf32>
    %131 = tpu.matmul %1, %130, %cst_89 {dimension_numbers = #tpu.dot_dimension_numbers<[1], [0], [0], [1], [0, 0, 1, 1], [], []>} : vector<256x36xbf16>, vector<36x8xbf16>, vector<256x8xf32> -> vector<256x8xf32>
    %c3_90 = arith.constant 3 : index
    %c0_91 = arith.constant 0 : index
    %c0_92 = arith.constant 0 : index
    %132 = vector.load %arg5[%c3_90, %c0_91, %c0_92] : memref<4x1x8xf32, #tpu.memory_space<vmem>>, vector<1x1x8xf32>
    %133 = vector.shape_cast %132 : vector<1x1x8xf32> to vector<1x8xf32>
    %134 = vector.broadcast %133 : vector<1x8xf32> to vector<256x8xf32>
    %135 = arith.addf %131, %134 : vector<256x8xf32>
    %c3_93 = arith.constant 3 : index
    %c0_94 = arith.constant 0 : index
    %c0_95 = arith.constant 0 : index
    %136 = vector.load %arg3[%c3_93, %c0_94, %c0_95] : memref<4x36x8xbf16, #tpu.memory_space<vmem>>, vector<1x36x8xbf16>
    %137 = vector.shape_cast %136 : vector<1x36x8xbf16> to vector<36x8xbf16>
    %cst_96 = arith.constant dense<0.000000e+00> : vector<256x8xf32>
    %138 = tpu.matmul %1, %137, %cst_96 {dimension_numbers = #tpu.dot_dimension_numbers<[1], [0], [0], [1], [0, 0, 1, 1], [], []>} : vector<256x36xbf16>, vector<36x8xbf16>, vector<256x8xf32> -> vector<256x8xf32>
    %c3_97 = arith.constant 3 : index
    %c0_98 = arith.constant 0 : index
    %c0_99 = arith.constant 0 : index
    %139 = vector.load %arg6[%c3_97, %c0_98, %c0_99] : memref<4x1x8xf32, #tpu.memory_space<vmem>>, vector<1x1x8xf32>
    %140 = vector.shape_cast %139 : vector<1x1x8xf32> to vector<1x8xf32>
    %141 = vector.broadcast %140 : vector<1x8xf32> to vector<256x8xf32>
    %142 = arith.addf %138, %141 : vector<256x8xf32>
    %c3_100 = arith.constant 3 : index
    %c0_101 = arith.constant 0 : index
    %c0_102 = arith.constant 0 : index
    %143 = vector.load %arg4[%c3_100, %c0_101, %c0_102] : memref<4x36x8xbf16, #tpu.memory_space<vmem>>, vector<1x36x8xbf16>
    %144 = vector.shape_cast %143 : vector<1x36x8xbf16> to vector<36x8xbf16>
    %cst_103 = arith.constant dense<0.000000e+00> : vector<256x8xf32>
    %145 = tpu.matmul %1, %144, %cst_103 {dimension_numbers = #tpu.dot_dimension_numbers<[1], [0], [0], [1], [0, 0, 1, 1], [], []>} : vector<256x36xbf16>, vector<36x8xbf16>, vector<256x8xf32> -> vector<256x8xf32>
    %c3_104 = arith.constant 3 : index
    %c0_105 = arith.constant 0 : index
    %c0_106 = arith.constant 0 : index
    %146 = vector.load %arg7[%c3_104, %c0_105, %c0_106] : memref<4x1x8xf32, #tpu.memory_space<vmem>>, vector<1x1x8xf32>
    %147 = vector.shape_cast %146 : vector<1x1x8xf32> to vector<1x8xf32>
    %148 = vector.broadcast %147 : vector<1x8xf32> to vector<256x8xf32>
    %149 = arith.addf %145, %148 : vector<256x8xf32>
    %150 = arith.truncf %135 : vector<256x8xf32> to vector<256x8xbf16>
    %151 = arith.truncf %142 : vector<256x8xf32> to vector<256x8xbf16>
    %cst_107 = arith.constant dense<0.000000e+00> : vector<256x256xf32>
    %152 = tpu.matmul %150, %151, %cst_107 {dimension_numbers = #tpu.dot_dimension_numbers<[1], [1], [0], [0], [0, 0, 1, 0], [], []>} : vector<256x8xbf16>, vector<256x8xbf16>, vector<256x256xf32> -> vector<256x256xf32>
    %cst_108 = arith.constant dense<0xFF800000> : vector<256xf32>
    %153 = vector.multi_reduction <maximumf>, %152, %cst_108 [1] : vector<256x256xf32> to vector<256xf32>
    %154 = vector.shape_cast %153 : vector<256xf32> to vector<256x1xf32>
    %155 = vector.broadcast %154 : vector<256x1xf32> to vector<256x256xf32>
    %156 = arith.subf %152, %155 : vector<256x256xf32>
    %157 = math.exp %156 : vector<256x256xf32>
    %cst_109 = arith.constant dense<0.000000e+00> : vector<256xf32>
    %158 = vector.multi_reduction <add>, %157, %cst_109 [1] : vector<256x256xf32> to vector<256xf32>
    %159 = vector.shape_cast %158 : vector<256xf32> to vector<256x1xf32>
    %160 = tpu.reciprocal %159 {approx = true} : vector<256x1xf32> -> vector<256x1xf32>
    %161 = vector.broadcast %160 : vector<256x1xf32> to vector<256x256xf32>
    %162 = arith.mulf %157, %161 : vector<256x256xf32>
    %163 = arith.truncf %162 : vector<256x256xf32> to vector<256x256xbf16>
    %164 = arith.truncf %149 : vector<256x8xf32> to vector<256x8xbf16>
    %cst_110 = arith.constant dense<0.000000e+00> : vector<256x8xf32>
    %165 = tpu.matmul %163, %164, %cst_110 {dimension_numbers = #tpu.dot_dimension_numbers<[1], [0], [0], [1], [0, 0, 1, 1], [], []>} : vector<256x256xbf16>, vector<256x8xbf16>, vector<256x8xf32> -> vector<256x8xf32>
    %166 = arith.truncf %165 : vector<256x8xf32> to vector<256x8xbf16>
    %c3_111 = arith.constant 3 : index
    %c0_112 = arith.constant 0 : index
    %c0_113 = arith.constant 0 : index
    %167 = vector.load %arg8[%c3_111, %c0_112, %c0_113] : memref<4x8x32xbf16, #tpu.memory_space<vmem>>, vector<1x8x32xbf16>
    %168 = vector.shape_cast %167 : vector<1x8x32xbf16> to vector<8x32xbf16>
    %cst_114 = arith.constant dense<0.000000e+00> : vector<256x32xf32>
    %169 = tpu.matmul %166, %168, %cst_114 {dimension_numbers = #tpu.dot_dimension_numbers<[1], [0], [0], [1], [0, 0, 1, 1], [], []>} : vector<256x8xbf16>, vector<8x32xbf16>, vector<256x32xf32> -> vector<256x32xf32>
    %170 = arith.addf %128, %169 : vector<256x32xf32>
    %c0_115 = arith.constant 0 : index
    %c0_116 = arith.constant 0 : index
    %171 = vector.load %arg9[%c0_115, %c0_116] : memref<1x32xf32, #tpu.memory_space<vmem>>, vector<1x32xf32>
    %172 = vector.broadcast %171 : vector<1x32xf32> to vector<256x32xf32>
    %173 = arith.addf %170, %172 : vector<256x32xf32>
    %c0_117 = arith.constant 0 : index
    %c0_118 = arith.constant 0 : index
    %c0_119 = arith.constant 0 : index
    %174 = vector.load %arg10[%c0_117, %c0_118, %c0_119] : memref<1x256x32xf32, #tpu.memory_space<vmem>>, vector<1x256x32xf32>
    %175 = vector.shape_cast %174 : vector<1x256x32xf32> to vector<256x32xf32>
    %176 = vector.shape_cast %173 : vector<256x32xf32> to vector<1x256x32xf32>
    tpu.vector_store %arg10[%c0_117, %c0_118, %c0_119], %176 {strides = array<i32>} : memref<1x256x32xf32, #tpu.memory_space<vmem>>, vector<1x256x32xf32>,
    return
  }
  func.func @transform_0(%arg0: i32) -> (i32, i32, i32) {
    %c0_i32 = arith.constant 0 : i32
    %c0_i32_0 = arith.constant 0 : i32
    %c0_i32_1 = arith.constant 0 : i32
    return %arg0, %c0_i32, %c0_i32_0 : i32, i32, i32
  }
  func.func @transform_1(%arg0: i32) -> (i32, i32, i32) {
    %c0_i32 = arith.constant 0 : i32
    %c0_i32_0 = arith.constant 0 : i32
    %c0_i32_1 = arith.constant 0 : i32
    %c0_i32_2 = arith.constant 0 : i32
    return %c0_i32, %c0_i32_0, %c0_i32_1 : i32, i32, i32
  }
  func.func @transform_2(%arg0: i32) -> (i32, i32, i32) {
    %c0_i32 = arith.constant 0 : i32
    %c0_i32_0 = arith.constant 0 : i32
    %c0_i32_1 = arith.constant 0 : i32
    %c0_i32_2 = arith.constant 0 : i32
    return %c0_i32, %c0_i32_0, %c0_i32_1 : i32, i32, i32
  }
  func.func @transform_3(%arg0: i32) -> (i32, i32, i32) {
    %c0_i32 = arith.constant 0 : i32
    %c0_i32_0 = arith.constant 0 : i32
    %c0_i32_1 = arith.constant 0 : i32
    %c0_i32_2 = arith.constant 0 : i32
    return %c0_i32, %c0_i32_0, %c0_i32_1 : i32, i32, i32
  }
  func.func @transform_4(%arg0: i32) -> (i32, i32, i32) {
    %c0_i32 = arith.constant 0 : i32
    %c0_i32_0 = arith.constant 0 : i32
    %c0_i32_1 = arith.constant 0 : i32
    %c0_i32_2 = arith.constant 0 : i32
    return %c0_i32, %c0_i32_0, %c0_i32_1 : i32, i32, i32
  }
  func.func @transform_5(%arg0: i32) -> (i32, i32, i32) {
    %c0_i32 = arith.constant 0 : i32
    %c0_i32_0 = arith.constant 0 : i32
    %c0_i32_1 = arith.constant 0 : i32
    %c0_i32_2 = arith.constant 0 : i32
    return %c0_i32, %c0_i32_0, %c0_i32_1 : i32, i32, i32
  }
  func.func @transform_6(%arg0: i32) -> (i32, i32, i32) {
    %c0_i32 = arith.constant 0 : i32
    %c0_i32_0 = arith.constant 0 : i32
    %c0_i32_1 = arith.constant 0 : i32
    %c0_i32_2 = arith.constant 0 : i32
    return %c0_i32, %c0_i32_0, %c0_i32_1 : i32, i32, i32
  }
  func.func @transform_7(%arg0: i32) -> (i32, i32, i32) {
    %c0_i32 = arith.constant 0 : i32
    %c0_i32_0 = arith.constant 0 : i32
    %c0_i32_1 = arith.constant 0 : i32
    %c0_i32_2 = arith.constant 0 : i32
    return %c0_i32, %c0_i32_0, %c0_i32_1 : i32, i32, i32
  }
  func.func @transform_8(%arg0: i32) -> (i32, i32) {
    %c0_i32 = arith.constant 0 : i32
    %c0_i32_0 = arith.constant 0 : i32
    %c0_i32_1 = arith.constant 0 : i32
    return %c0_i32, %c0_i32_0 : i32, i32
  }
  func.func @transform_9(%arg0: i32) -> (i32, i32, i32) {
    %c0_i32 = arith.constant 0 : i32
    %c0_i32_0 = arith.constant 0 : i32
    %c0_i32_1 = arith.constant 0 : i32
    return %arg0, %c0_i32, %c0_i32_0 : i32, i32, i32
  }
}

</mosaic_0001>

<llo_original>
// kernel: tpu_custom_call.1
$region0: #{tpu_custom_call.1}
  #allocation0 [shape = 'u32[]', space=smem, size = 0x4, offset = 0x4, fixed_abs, tag = 'smem constant byte address 0x4 - core index']
  #allocation1 [shape = 'u32[144,128]{1,0:T(1,128)}', space=vmem, size = 0x12000, scoped, tag = 'internal scratch']
  %s0 = inlined_call_operand.vmem [shape: bf16[2,256,36], index: 0, kind: input, shape index: {}]
  %s1 = inlined_call_operand.vmem [shape: bf16[4,36,8], index: 1, kind: input, shape index: {}]
  %s2 = inlined_call_operand.vmem [shape: bf16[4,36,8], index: 2, kind: input, shape index: {}]
  %s3 = inlined_call_operand.vmem [shape: bf16[4,36,8], index: 3, kind: input, shape index: {}]
  %s4 = inlined_call_operand.vmem [shape: f32[4,1,8], index: 4, kind: input, shape index: {}]
  %s5 = inlined_call_operand.vmem [shape: f32[4,1,8], index: 5, kind: input, shape index: {}]
  %s6 = inlined_call_operand.vmem [shape: f32[4,1,8], index: 6, kind: input, shape index: {}]
  %s7 = inlined_call_operand.vmem [shape: bf16[4,8,32], index: 7, kind: input, shape index: {}]
  %s8 = inlined_call_operand.vmem [shape: f32[1,32], index: 8, kind: input, shape index: {}]
  %s9 = inlined_call_operand.vmem [shape: f32[2,256,32], index: 9, kind: output, shape index: {}]
  %s10 = sld [smem:[#allocation0]]
  $region69: #{tpu_custom_call.1} parent=0
    _
  %s12 = ssub.s32 1, %s10
  %s13 = scalar_select 0, %s12, %s10
  loop: start=0, step=1, limit=4
  $region2: #{tpu_custom_call.1} parent=0 // loop_pre_header
    _
  $region3: #{tpu_custom_call.1} parent=0 // loop_header
    %s15 = sphi 0, %s19
    %p16 = scmp.ge.s32.totalorder %s15, 4
    %s25 = sphi 0, %s27
    %s28 = sphi 0, %s25
    %s29 = sphi 0, %s28
    %s45 = sphi 0, %s29
    %s49 = sphi 0, %s49
    %s51 = sphi 0, %s49
    %s52 = sphi 0, %s51
    %s66 = sphi 0, %s52
    %s70 = sphi 0, %s70
    %s72 = sphi 0, %s70
    %s73 = sphi 0, %s72
    %s87 = sphi 0, %s73
    %s91 = sphi 0, %s91
    %s93 = sphi 0, %s91
    %s94 = sphi 0, %s93
    %s108 = sphi 0, %s94
    %s112 = sphi 0, %s112
    %s114 = sphi 0, %s112
    %s115 = sphi 0, %s114
    %s129 = sphi 0, %s115
    %s133 = sphi 0, %s133
    %s135 = sphi 0, %s133
    %s136 = sphi 0, %s135
    %s150 = sphi 0, %s136
    %s154 = sphi 0, %s154
    %s156 = sphi 0, %s154
    %s157 = sphi 0, %s156
    %s171 = sphi 0, %s157
    %s175 = sphi 0, %s175
    %s177 = sphi 0, %s175
    %s178 = sphi 0, %s177
    %s192 = sphi 0, %s178
    %s196 = sphi 0, %s196
    %s198 = sphi 0, %s196
    %s199 = sphi 0, %s198
    %s213 = sphi 0, %s199
    %s219 = sphi 0, %s221
    %s222 = sphi 0, %s219
    %s223 = sphi 0, %s222
    %s239 = sphi 0, %s223
  $region4: #{tpu_custom_call.1} parent=0 // loop_header_branch
    %18 = sbr.rel (%p16) target = $region8
  $region5: #{tpu_custom_call.1} parent=0 // loop_body
    %s20 = ssub.s32 %s15, 1
    %s21 = ssub.s32 %s15, 2
    %s22 = sadd.s32 %s15, 1
    %s23 = ssub.s32 %s15, %s22
    %p24 = scmp.eq.s32.totalorder %s23, 0
    %s26 = sadd.s32 %s25, 1
    %s27 = scalar_select %p24, %s25, %s26
    %p30 = pneg %p24
    %p31 = scmp.eq.s32.totalorder %s15, 1
    %p32 = por %p30, %p31
    %p33 = scmp.ne.s32.totalorder %s25, %s28
    %p34 = scmp.eq.s32.totalorder %s15, 0
    %p35 = por %p33, %p34
    %p36 = scmp.ne.s32.totalorder %s25, %s28
    %p37 = scmp.eq.s32.totalorder %s20, 1
    %p38 = por %p36, %p37
    %p39 = scmp.ne.s32.totalorder %s28, %s29
    %p40 = scmp.eq.s32.totalorder %s20, 0
    %p41 = por %p39, %p40
    %p42 = scmp.ne.s32.totalorder %s28, %s29
    %p43 = scmp.eq.s32.totalorder %s21, 1
    %p44 = por %p42, %p43
    %p46 = scmp.ne.s32.totalorder %s29, %s45
    %p47 = scmp.eq.s32.totalorder %s21, 0
    %p48 = por %p46, %p47
    %s50 = sadd.s32 %s49, 1
    %p53 = scmp.eq.s32.totalorder %s15, 1
    %p54 = scmp.ne.s32.totalorder %s49, %s51
    %p55 = scmp.eq.s32.totalorder %s15, 0
    %p56 = por %p54, %p55
    %p57 = scmp.ne.s32.totalorder %s49, %s51
    %p58 = scmp.eq.s32.totalorder %s20, 1
    %p59 = por %p57, %p58
    %p60 = scmp.ne.s32.totalorder %s51, %s52
    %p61 = scmp.eq.s32.totalorder %s20, 0
    %p62 = por %p60, %p61
    %p63 = scmp.ne.s32.totalorder %s51, %s52
    %p64 = scmp.eq.s32.totalorder %s21, 1
    %p65 = por %p63, %p64
    %p67 = scmp.ne.s32.totalorder %s52, %s66
    %p68 = scmp.eq.s32.totalorder %s21, 0
    %p69 = por %p67, %p68
    %s71 = sadd.s32 %s70, 1
    %p74 = scmp.eq.s32.totalorder %s15, 1
    %p75 = scmp.ne.s32.totalorder %s70, %s72
    %p76 = scmp.eq.s32.totalorder %s15, 0
    %p77 = por %p75, %p76
    %p78 = scmp.ne.s32.totalorder %s70, %s72
    %p79 = scmp.eq.s32.totalorder %s20, 1
    %p80 = por %p78, %p79
    %p81 = scmp.ne.s32.totalorder %s72, %s73
    %p82 = scmp.eq.s32.totalorder %s20, 0
    %p83 = por %p81, %p82
    %p84 = scmp.ne.s32.totalorder %s72, %s73
    %p85 = scmp.eq.s32.totalorder %s21, 1
    %p86 = por %p84, %p85
    %p88 = scmp.ne.s32.totalorder %s73, %s87
    %p89 = scmp.eq.s32.totalorder %s21, 0
    %p90 = por %p88, %p89
    %s92 = sadd.s32 %s91, 1
    %p95 = scmp.eq.s32.totalorder %s15, 1
    %p96 = scmp.ne.s32.totalorder %s91, %s93
    %p97 = scmp.eq.s32.totalorder %s15, 0
    %p98 = por %p96, %p97
    %p99 = scmp.ne.s32.totalorder %s91, %s93
    %p100 = scmp.eq.s32.totalorder %s20, 1
    %p101 = por %p99, %p100
    %p102 = scmp.ne.s32.totalorder %s93, %s94
    %p103 = scmp.eq.s32.totalorder %s20, 0
    %p104 = por %p102, %p103
    %p105 = scmp.ne.s32.totalorder %s93, %s94
    %p106 = scmp.eq.s32.totalorder %s21, 1
    %p107 = por %p105, %p106
    %p109 = scmp.ne.s32.totalorder %s94, %s108
    %p110 = scmp.eq.s32.totalorder %s21, 0
    %p111 = por %p109, %p110
    %s113 = sadd.s32 %s112, 1
    %p116 = scmp.eq.s32.totalorder %s15, 1
    %p117 = scmp.ne.s32.totalorder %s112, %s114
    %p118 = scmp.eq.s32.totalorder %s15, 0
    %p119 = por %p117, %p118
    %p120 = scmp.ne.s32.totalorder %s112, %s114
    %p121 = scmp.eq.s32.totalorder %s20, 1
    %p122 = por %p120, %p121
    %p123 = scmp.ne.s32.totalorder %s114, %s115
    %p124 = scmp.eq.s32.totalorder %s20, 0
    %p125 = por %p123, %p124
    %p126 = scmp.ne.s32.totalorder %s114, %s115
    %p127 = scmp.eq.s32.totalorder %s21, 1
    %p128 = por %p126, %p127
    %p130 = scmp.ne.s32.totalorder %s115, %s129
    %p131 = scmp.eq.s32.totalorder %s21, 0
    %p132 = por %p130, %p131
    %s134 = sadd.s32 %s133, 1
    %p137 = scmp.eq.s32.totalorder %s15, 1
    %p138 = scmp.ne.s32.totalorder %s133, %s135
    %p139 = scmp.eq.s32.totalorder %s15, 0
    %p140 = por %p138, %p139
    %p141 = scmp.ne.s32.totalorder %s133, %s135
    %p142 = scmp.eq.s32.totalorder %s20, 1
    %p143 = por %p141, %p142
    %p144 = scmp.ne.s32.totalorder %s135, %s136
    %p145 = scmp.eq.s32.totalorder %s20, 0
    %p146 = por %p144, %p145
    %p147 = scmp.ne.s32.totalorder %s135, %s136
    %p148 = scmp.eq.s32.totalorder %s21, 1
    %p149 = por %p147, %p148
    %p151 = scmp.ne.s32.totalorder %s136, %s150
    %p152 = scmp.eq.s32.totalorder %s21, 0
    %p153 = por %p151, %p152
    %s155 = sadd.s32 %s154, 1
    %p158 = scmp.eq.s32.totalorder %s15, 1
    %p159 = scmp.ne.s32.totalorder %s154, %s156
    %p160 = scmp.eq.s32.totalorder %s15, 0
    %p161 = por %p159, %p160
    %p162 = scmp.ne.s32.totalorder %s154, %s156
    %p163 = scmp.eq.s32.totalorder %s20, 1
    %p164 = por %p162, %p163
    %p165 = scmp.ne.s32.totalorder %s156, %s157
    %p166 = scmp.eq.s32.totalorder %s20, 0
    %p167 = por %p165, %p166
    %p168 = scmp.ne.s32.totalorder %s156, %s157
    %p169 = scmp.eq.s32.totalorder %s21, 1
    %p170 = por %p168, %p169
    %p172 = scmp.ne.s32.totalorder %s157, %s171
    %p173 = scmp.eq.s32.totalorder %s21, 0
    %p174 = por %p172, %p173
    %s176 = sadd.s32 %s175, 1
    %p179 = scmp.eq.s32.totalorder %s15, 1
    %p180 = scmp.ne.s32.totalorder %s175, %s177
    %p181 = scmp.eq.s32.totalorder %s15, 0
    %p182 = por %p180, %p181
    %p183 = scmp.ne.s32.totalorder %s175, %s177
    %p184 = scmp.eq.s32.totalorder %s20, 1
    %p185 = por %p183, %p184
    %p186 = scmp.ne.s32.totalorder %s177, %s178
    %p187 = scmp.eq.s32.totalorder %s20, 0
    %p188 = por %p186, %p187
    %p189 = scmp.ne.s32.totalorder %s177, %s178
    %p190 = scmp.eq.s32.totalorder %s21, 1
    %p191 = por %p189, %p190
    %p193 = scmp.ne.s32.totalorder %s178, %s192
    %p194 = scmp.eq.s32.totalorder %s21, 0
    %p195 = por %p193, %p194
    %s197 = sadd.s32 %s196, 1
    %p200 = scmp.eq.s32.totalorder %s15, 1
    %p201 = scmp.ne.s32.totalorder %s196, %s198
    %p202 = scmp.eq.s32.totalorder %s15, 0
    %p203 = por %p201, %p202
    %p204 = scmp.ne.s32.totalorder %s196, %s198
    %p205 = scmp.eq.s32.totalorder %s20, 1
    %p206 = por %p204, %p205
    %p207 = scmp.ne.s32.totalorder %s198, %s199
    %p208 = scmp.eq.s32.totalorder %s20, 0
    %p209 = por %p207, %p208
    %p210 = scmp.ne.s32.totalorder %s198, %s199
    %p211 = scmp.eq.s32.totalorder %s21, 1
    %p212 = por %p210, %p211
    %p214 = scmp.ne.s32.totalorder %s199, %s213
    %p215 = scmp.eq.s32.totalorder %s21, 0
    %p216 = por %p214, %p215
    %s217 = ssub.s32 %s15, %s22
    %p218 = scmp.eq.s32.totalorder %s217, 0
    %s220 = sadd.s32 %s219, 1
    %s221 = scalar_select %p218, %s219, %s220
    %p224 = pneg %p218
    %p225 = scmp.eq.s32.totalorder %s15, 1
    %p226 = por %p224, %p225
    %p227 = scmp.ne.s32.totalorder %s219, %s222
    %p228 = scmp.eq.s32.totalorder %s15, 0
    %p229 = por %p227, %p228
    %p230 = scmp.ne.s32.totalorder %s219, %s222
    %p231 = scmp.eq.s32.totalorder %s20, 1
    %p232 = por %p230, %p231
    %p233 = scmp.ne.s32.totalorder %s222, %s223
    %p234 = scmp.eq.s32.totalorder %s20, 0
    %p235 = por %p233, %p234
    %p236 = scmp.ne.s32.totalorder %s222, %s223
    %p237 = scmp.eq.s32.totalorder %s21, 1
    %p238 = por %p236, %p237
    %p240 = scmp.ne.s32.totalorder %s223, %s239
    %p241 = scmp.eq.s32.totalorder %s21, 0
    %p242 = por %p240, %p241
    %p243 = scmp.le.s32.totalorder 1, %s15
    %p244 = scmp.lt.s32.totalorder %s15, 3
    %p245 = pnand %p243, %p244
    %p246 = pneg %p245
    // Predicated region
    $region9: #{tpu_custom_call.1} parent=5 // pred_check
      _
    $region10: #{tpu_custom_call.1} parent=5 // pred_check_branch
      %248 = sbr.rel (%p245) target = $region12
    $region11: #{tpu_custom_call.1} parent=5 // pred_region
      %s249 = ssub.s32 %s15, 1
      // Predicated region
      $region13: #{tpu_custom_call.1} parent=11 // pred_check
        %p250 = pneg %p62
      $region14: #{tpu_custom_call.1} parent=11 // pred_check_branch
        %252 = sbr.rel (%p250) target = $region16
      $region15: #{tpu_custom_call.1} parent=11 // pred_region
        _
      $region16: #{tpu_custom_call.1} parent=11 // pred_fallthru
        _
      // Predicated region
      $region17: #{tpu_custom_call.1} parent=11 // pred_check
        %p253 = pneg %p83
      $region18: #{tpu_custom_call.1} parent=11 // pred_check_branch
        %255 = sbr.rel (%p253) target = $region20
      $region19: #{tpu_custom_call.1} parent=11 // pred_region
        _
      $region20: #{tpu_custom_call.1} parent=11 // pred_fallthru
        _
      // Predicated region
      $region21: #{tpu_custom_call.1} parent=11 // pred_check
        %p256 = pneg %p104
      $region22: #{tpu_custom_call.1} parent=11 // pred_check_branch
        %258 = sbr.rel (%p256) target = $region24
      $region23: #{tpu_custom_call.1} parent=11 // pred_region
        _
      $region24: #{tpu_custom_call.1} parent=11 // pred_fallthru
        _
      // Predicated region
      $region25: #{tpu_custom_call.1} parent=11 // pred_check
        %p259 = pneg %p125
      $region26: #{tpu_custom_call.1} parent=11 // pred_check_branch
        %261 = sbr.rel (%p259) target = $region28
      $region27: #{tpu_custom_call.1} parent=11 // pred_region
        _
      $region28: #{tpu_custom_call.1} parent=11 // pred_fallthru
        _
      // Predicated region
      $region29: #{tpu_custom_call.1} parent=11 // pred_check
        %p262 = pneg %p146
      $region30: #{tpu_custom_call.1} parent=11 // pred_check_branch
        %264 = sbr.rel (%p262) target = $region32
      $region31: #{tpu_custom_call.1} parent=11 // pred_region
        _
      $region32: #{tpu_custom_call.1} parent=11 // pred_fallthru
        _
      // Predicated region
      $region33: #{tpu_custom_call.1} parent=11 // pred_check
        %p265 = pneg %p167
      $region34: #{tpu_custom_call.1} parent=11 // pred_check_branch
        %267 = sbr.rel (%p265) target = $region36
      $region35: #{tpu_custom_call.1} parent=11 // pred_region
        _
      $region36: #{tpu_custom_call.1} parent=11 // pred_fallthru
        _
      // Predicated region
      $region37: #{tpu_custom_call.1} parent=11 // pred_check
        %p268 = pneg %p188
      $region38: #{tpu_custom_call.1} parent=11 // pred_check_branch
        %270 = sbr.rel (%p268) target = $region40
      $region39: #{tpu_custom_call.1} parent=11 // pred_region
        _
      $region40: #{tpu_custom_call.1} parent=11 // pred_fallthru
        _
      // Predicated region
      $region41: #{tpu_custom_call.1} parent=11 // pred_check
        %p271 = pneg %p209
      $region42: #{tpu_custom_call.1} parent=11 // pred_check_branch
        %273 = sbr.rel (%p271) target = $region44
      $region43: #{tpu_custom_call.1} parent=11 // pred_region
        _
      $region44: #{tpu_custom_call.1} parent=11 // pred_fallthru
        _
    $region12: #{tpu_custom_call.1} parent=5 // pred_fallthru
      _
    %p274 = scmp.lt.s32.totalorder %s15, 2
    // Predicated region
    $region45: #{tpu_custom_call.1} parent=5 // pred_check
      %p275 = pneg %p274
    $region46: #{tpu_custom_call.1} parent=5 // pred_check_branch
      %277 = sbr.rel (%p275) target = $region48
    $region47: #{tpu_custom_call.1} parent=5 // pred_region
      // Predicated region
      $region49: #{tpu_custom_call.1} parent=47 // pred_check
        %p278 = pneg %p35
      $region50: #{tpu_custom_call.1} parent=47 // pred_check_branch
        %280 = sbr.rel (%p278) target = $region52
      $region51: #{tpu_custom_call.1} parent=47 // pred_region
        %p281 = scmp.lt.s32.totalorder %s15, 1
        %s282 = scalar_select %p281, %s15, 1
        %s283 = smul.addr %s282, 32
        %s284 = smul.addr %s283, 4
        %s285 = scalar_lea.vmem %s0, %s284
      $region52: #{tpu_custom_call.1} parent=47 // pred_fallthru
        _
    $region48: #{tpu_custom_call.1} parent=5 // pred_fallthru
      _
    %p286 = scmp.le.s32.totalorder 1, %s15
    %p287 = scmp.lt.s32.totalorder %s15, 3
    %p288 = pnand %p286, %p287
    %p289 = pneg %p288
    // Predicated region
    $region53: #{tpu_custom_call.1} parent=5 // pred_check
      _
    $region54: #{tpu_custom_call.1} parent=5 // pred_check_branch
      %291 = sbr.rel (%p288) target = $region56
    $region55: #{tpu_custom_call.1} parent=5 // pred_region
      %s292 = ssub.s32 %s15, 1
      %p293 = scmp.lt.s32.totalorder %s20, 1
      %s294 = scalar_select %p293, %s20, 1
      %s295 = smul.addr %s294, 32
      %s296 = smul.addr %s295, 4
      %s297 = scalar_lea.vmem %s0, %s296
      %p298 = pneg %p41
      %p299 = pneg %p38
      %p300 = pneg %p62
      %p301 = pneg %p59
      %p302 = pneg %p83
      %p303 = pneg %p80
      %p304 = pneg %p104
      %p305 = pneg %p101
      %p306 = pneg %p125
      %p307 = pneg %p122
      %p308 = pneg %p146
      %p309 = pneg %p143
      %p310 = pneg %p167
      %p311 = pneg %p164
      %p312 = pneg %p188
      %p313 = pneg %p185
      %p314 = pneg %p209
      %p315 = pneg %p206
      %p316 = pneg %p235
      %p317 = pneg %p232
      %p318 = scmp.lt.s32.totalorder %s20, 1
      %s319 = scalar_select %p318, %s20, 1
      %s320 = smul.addr %s319, 32
      %s321 = smul.addr %s320, 8
      %s322 = scalar_lea.vmem %s9, %s321
      %p323 = scmp.lt.s32.totalorder %s20, 1
      %s324 = scalar_select %p323, %s20, 1
      %s325 = smul.addr %s324, 32
      %s326 = smul.addr %s325, 4
      %s327 = scalar_lea.vmem %s0, %s326
      %p328 = scmp.lt.s32.totalorder %s20, 1
      %s329 = scalar_select %p328, %s20, 1
      %s330 = smul.addr %s329, 32
      %s331 = smul.addr %s330, 8
      %s332 = scalar_lea.vmem %s9, %s331
      %v334 = vld [vmem:[%s327] sm:$0xf]
      %v335 = vld [vmem:[%s327 + $0x4] sm:$0xf]
      %v336 = vld [vmem:[%s327 + $0x8] sm:$0xf]
      %v337 = vld [vmem:[%s327 + $0xc] sm:$0xf]
      %v338 = vld [vmem:[%s327 + $0x10] sm:$0xf]
      %v339 = vld [vmem:[%s327 + $0x14] sm:$0xf]
      %v340 = vld [vmem:[%s327 + $0x18] sm:$0xf]
      %v341 = vld [vmem:[%s327 + $0x1c] sm:$0xf]
      %v342 = vld [vmem:[%s327 + $0x20] sm:$0xf]
      %v343 = vld [vmem:[%s327 + $0x24] sm:$0xf]
      %v344 = vld [vmem:[%s327 + $0x28] sm:$0xf]
      %v345 = vld [vmem:[%s327 + $0x2c] sm:$0xf]
      %v346 = vld [vmem:[%s327 + $0x30] sm:$0xf]
      %v347 = vld [vmem:[%s327 + $0x34] sm:$0xf]
      %v348 = vld [vmem:[%s327 + $0x38] sm:$0xf]
      %v349 = vld [vmem:[%s327 + $0x3c] sm:$0xf]
      %v350 = vld [vmem:[%s327 + $0x40] sm:$0xf]
      %v351 = vld [vmem:[%s327 + $0x44] sm:$0xf]
      %v352 = vld [vmem:[%s327 + $0x48] sm:$0xf]
      %v353 = vld [vmem:[%s327 + $0x4c] sm:$0xf]
      %v354 = vld [vmem:[%s327 + $0x50] sm:$0xf]
      %v355 = vld [vmem:[%s327 + $0x54] sm:$0xf]
      %v356 = vld [vmem:[%s327 + $0x58] sm:$0xf]
      %v357 = vld [vmem:[%s327 + $0x5c] sm:$0xf]
      %v358 = vld [vmem:[%s327 + $0x60] sm:$0xf]
      %v359 = vld [vmem:[%s327 + $0x64] sm:$0xf]
      %v360 = vld [vmem:[%s327 + $0x68] sm:$0xf]
      %v361 = vld [vmem:[%s327 + $0x6c] sm:$0xf]
      %v362 = vld [vmem:[%s327 + $0x70] sm:$0xf]
      %v363 = vld [vmem:[%s327 + $0x74] sm:$0xf]
      %v364 = vld [vmem:[%s327 + $0x78] sm:$0xf]
      %v365 = vld [vmem:[%s327 + $0x7c] sm:$0xf]
      %v366 = vld [vmem:[%s1] sm:$0xf]
      %v367 = vld [vmem:[%s1 + $0x4] sm:$0xf]
      %v368 = vld [vmem:[%s1 + $0x8] sm:$0xf]
      %v369 = vld [vmem:[%s1 + $0xc] sm:$0xf]
      %v370 = vld [vmem:[%s1 + $0x10] sm:$0x3]
      %v371 = vld [vmem:[%s4] sm:$0x1]
      %v373 = vlaneseq
      %v374 = vshrl.u32 %v373, 7
      %v375 = vsub.s32 0, %v374
      %v376 = vrot.slane %v371, %v375
      %v410 = vunpack.c.l.b16 %v334
      %v411 = vunpack.c.l.b16 %v335
      %v412 = vunpack.c.l.b16 %v336
      %v413 = vunpack.c.l.b16 %v337
      %v414 = vunpack.c.l.b16 %v338
      %v415 = vunpack.c.l.b16 %v339
      %v416 = vunpack.c.l.b16 %v340
      %v417 = vunpack.c.l.b16 %v341
      %v418 = vunpack.c.l.b16 %v342
      %v419 = vunpack.c.l.b16 %v343
      %v420 = vunpack.c.l.b16 %v344
      %v421 = vunpack.c.l.b16 %v345
      %v422 = vunpack.c.l.b16 %v346
      %v423 = vunpack.c.l.b16 %v347
      %v424 = vunpack.c.l.b16 %v348
      %v425 = vunpack.c.l.b16 %v349
      %v426 = vunpack.c.l.b16 %v350
      %v427 = vunpack.c.l.b16 %v351
      %v428 = vunpack.c.l.b16 %v352
      %v429 = vunpack.c.l.b16 %v353
      %v430 = vunpack.c.l.b16 %v354
      %v431 = vunpack.c.l.b16 %v355
      %v432 = vunpack.c.l.b16 %v356
      %v433 = vunpack.c.l.b16 %v357
      %v434 = vunpack.c.l.b16 %v358
      %v435 = vunpack.c.l.b16 %v359
      %v436 = vunpack.c.l.b16 %v360
      %v437 = vunpack.c.l.b16 %v361
      %v438 = vunpack.c.l.b16 %v362
      %v439 = vunpack.c.l.b16 %v363
      %v440 = vunpack.c.l.b16 %v364
      %v441 = vunpack.c.l.b16 %v365
      %v442 = vpack.c.b16 %v411, %v410
      %v443 = vpack.c.b16 %v413, %v412
      %v444 = vpack.c.b16 %v415, %v414
      %v445 = vpack.c.b16 %v417, %v416
      %v446 = vpack.c.b16 %v419, %v418
      %v447 = vpack.c.b16 %v421, %v420
      %v448 = vpack.c.b16 %v423, %v422
      %v449 = vpack.c.b16 %v425, %v424
      %v450 = vpack.c.b16 %v427, %v426
      %v451 = vpack.c.b16 %v429, %v428
      %v452 = vpack.c.b16 %v431, %v430
      %v453 = vpack.c.b16 %v433, %v432
      %v454 = vpack.c.b16 %v435, %v434
      %v455 = vpack.c.b16 %v437, %v436
      %v456 = vpack.c.b16 %v439, %v438
      %v457 = vpack.c.b16 %v441, %v440
      %v463 = vunpack.c.l.b16 %v366
      %v464 = vunpack.c.l.b16 %v367
      %v465 = vunpack.c.l.b16 %v368
      %v466 = vunpack.c.l.b16 %v369
      %v467 = vunpack.c.l.b16 %v370
      %v468 = vpack.c.b16 %v464, %v463
      %v469 = vpack.c.b16 %v466, %v465
      %v470 = vpack.c.b16 %v467, %v467
      %vm473 = vcmask 293888
      %v475 = vsel %vm473, %v442, 0
      %v478 = vsel %vm473, %v443, 0
      %v481 = vsel %vm473, %v444, 0
      %v484 = vsel %vm473, %v445, 0
      %v487 = vsel %vm473, %v446, 0
      %v490 = vsel %vm473, %v447, 0
      %v493 = vsel %vm473, %v448, 0
      %v496 = vsel %vm473, %v449, 0
      %v499 = vsel %vm473, %v450, 0
      %v502 = vsel %vm473, %v451, 0
      %v505 = vsel %vm473, %v452, 0
      %v508 = vsel %vm473, %v453, 0
      %v511 = vsel %vm473, %v454, 0
      %v514 = vsel %vm473, %v455, 0
      %v517 = vsel %vm473, %v456, 0
      %v520 = vsel %vm473, %v457, 0
      %vm522 = vcmask 1041408
      %v524 = vsel %vm522, %v470, 0
      %526 = vmatprep.subr.bf16.mxu0 0
      %527 = vmatpush1.bf16.msra.mxu0 0
      %528 = vmatprep.subr.bf16.mxu0 0
      %529 = vmatpush1.bf16.msra.mxu0 0
      %530 = vmatprep.subr.bf16.mxu0 0
      %531 = vmatpush1.bf16.msra.mxu0 0
      %532 = vmatprep.subr.bf16.mxu0 0
      %533 = vmatpush1.bf16.msra.mxu0 0
      %534 = vmatprep.subr.bf16.mxu0 0
      %535 = vmatpush1.bf16.msra.mxu0 0
      %536 = vmatprep.subr.bf16.mxu0 0
      %537 = vmatpush1.bf16.msra.mxu0 %v524
      %538 = vmatprep.subr.bf16.mxu0 0
      %539 = vmatpush1.bf16.msra.mxu0 %v469
      %540 = vmatprep.subr.bf16.mxu0 0
      %541 = vmatpush1.bf16.msra.mxu0 %v468
      %542 = vmatprep.subr.bf16.mxu0 0
      %543 = vmatpush2.bf16.msra.mxu0 0
      %544 = vmatprep.subr.bf16.mxu0 0
      %545 = vmatpush2.bf16.msra.mxu0 0
      %546 = vmatprep.subr.bf16.mxu0 0
      %547 = vmatpush2.bf16.msra.mxu0 0
      %548 = vmatprep.subr.bf16.mxu0 0
      %549 = vmatpush2.bf16.msra.mxu0 0
      %550 = vmatprep.subr.bf16.mxu0 0
      %551 = vmatpush2.bf16.msra.mxu0 0
      %552 = vmatprep.subr.bf16.mxu0 0
      %553 = vmatpush2.bf16.msra.mxu0 0
      %554 = vmatprep.subr.bf16.mxu0 0
      %555 = vmatpush2.bf16.msra.mxu0 0
      %556 = vmatprep.subr.bf16.mxu0 0
      %557 = vmatpush2.bf16.msra.mxu0 0
      %558 = vmatprep.mubr.bf16.mxu0 0
      %559 = vmatmul.mubr.bf16.gmra.mxu0 %v475
      %v560 = vpop.f32.mrf.mxu0
      %v561 = vadd.f32 %v376, %v560
      %v562 = vpop.f32.mrf.mxu0
      %v563 = vpop.f32.mrf.mxu0
      %v564 = vadd.f32 %v376, %v563
      %v565 = vpop.f32.mrf.mxu0
      %566 = vmatprep.mubr.bf16.mxu0 0
      %567 = vmatmul.mubr.bf16.gmra.mxu0 %v478
      %v568 = vpop.f32.mrf.mxu0
      %v569 = vadd.f32 %v376, %v568
      %v570 = vpop.f32.mrf.mxu0
      %v571 = vpop.f32.mrf.mxu0
      %v572 = vadd.f32 %v376, %v571
      %v573 = vpop.f32.mrf.mxu0
      %574 = vmatprep.mubr.bf16.mxu0 0
      %575 = vmatmul.mubr.bf16.gmra.mxu0 %v481
      %v576 = vpop.f32.mrf.mxu0
      %v577 = vadd.f32 %v376, %v576
      %v578 = vpop.f32.mrf.mxu0
      %v579 = vpop.f32.mrf.mxu0
      %v580 = vadd.f32 %v376, %v579
      %v581 = vpop.f32.mrf.mxu0
      %582 = vmatprep.mubr.bf16.mxu0 0
      %583 = vmatmul.mubr.bf16.gmra.mxu0 %v484
      %v584 = vpop.f32.mrf.mxu0
      %v585 = vadd.f32 %v376, %v584
      %v586 = vpop.f32.mrf.mxu0
      %v587 = vpop.f32.mrf.mxu0
      %v588 = vadd.f32 %v376, %v587
      %v589 = vpop.f32.mrf.mxu0
      %590 = vmatprep.mubr.bf16.mxu0 0
      %591 = vmatmul.mubr.bf16.gmra.mxu0 %v487
      %v592 = vpop.f32.mrf.mxu0
      %v593 = vadd.f32 %v376, %v592
      %v594 = vpop.f32.mrf.mxu0
      %v595 = vpop.f32.mrf.mxu0
      %v596 = vadd.f32 %v376, %v595
      %v597 = vpop.f32.mrf.mxu0
      %598 = vmatprep.mubr.bf16.mxu0 0
      %599 = vmatmul.mubr.bf16.gmra.mxu0 %v490
      %v600 = vpop.f32.mrf.mxu0
      %v601 = vadd.f32 %v376, %v600
      %v602 = vpop.f32.mrf.mxu0
      %v603 = vpop.f32.mrf.mxu0
      %v604 = vadd.f32 %v376, %v603
      %v605 = vpop.f32.mrf.mxu0
      %606 = vmatprep.mubr.bf16.mxu0 0
      %607 = vmatmul.mubr.bf16.gmra.mxu0 %v493
      %v608 = vpop.f32.mrf.mxu0
      %v609 = vadd.f32 %v376, %v608
      %v610 = vpop.f32.mrf.mxu0
      %v611 = vpop.f32.mrf.mxu0
      %v612 = vadd.f32 %v376, %v611
      %v613 = vpop.f32.mrf.mxu0
      %614 = vmatprep.mubr.bf16.mxu0 0
      %615 = vmatmul.mubr.bf16.gmra.mxu0 %v496
      %v616 = vpop.f32.mrf.mxu0
      %v617 = vadd.f32 %v376, %v616
      %v618 = vpop.f32.mrf.mxu0
      %v619 = vpop.f32.mrf.mxu0
      %v620 = vadd.f32 %v376, %v619
      %v621 = vpop.f32.mrf.mxu0
      %622 = vmatprep.mubr.bf16.mxu0 0
      %623 = vmatmul.mubr.bf16.gmra.mxu0 %v499
      %v624 = vpop.f32.mrf.mxu0
      %v625 = vadd.f32 %v376, %v624
      %v626 = vpop.f32.mrf.mxu0
      %v627 = vpop.f32.mrf.mxu0
      %v628 = vadd.f32 %v376, %v627
      %v629 = vpop.f32.mrf.mxu0
      %630 = vmatprep.mubr.bf16.mxu0 0
      %631 = vmatmul.mubr.bf16.gmra.mxu0 %v502
      %v632 = vpop.f32.mrf.mxu0
      %v633 = vadd.f32 %v376, %v632
      %v634 = vpop.f32.mrf.mxu0
      %v635 = vpop.f32.mrf.mxu0
      %v636 = vadd.f32 %v376, %v635
      %v637 = vpop.f32.mrf.mxu0
      %638 = vmatprep.mubr.bf16.mxu0 0
      %639 = vmatmul.mubr.bf16.gmra.mxu0 %v505
      %v640 = vpop.f32.mrf.mxu0
      %v641 = vadd.f32 %v376, %v640
      %v642 = vpop.f32.mrf.mxu0
      %v643 = vpop.f32.mrf.mxu0
      %v644 = vadd.f32 %v376, %v643
      %v645 = vpop.f32.mrf.mxu0
      %646 = vmatprep.mubr.bf16.mxu0 0
      %647 = vmatmul.mubr.bf16.gmra.mxu0 %v508
      %v648 = vpop.f32.mrf.mxu0
      %v649 = vadd.f32 %v376, %v648
      %v650 = vpop.f32.mrf.mxu0
      %v651 = vpop.f32.mrf.mxu0
      %v652 = vadd.f32 %v376, %v651
      %v653 = vpop.f32.mrf.mxu0
      %654 = vmatprep.mubr.bf16.mxu0 0
      %655 = vmatmul.mubr.bf16.gmra.mxu0 %v511
      %v656 = vpop.f32.mrf.mxu0
      %v657 = vadd.f32 %v376, %v656
      %v658 = vpop.f32.mrf.mxu0
      %v659 = vpop.f32.mrf.mxu0
      %v660 = vadd.f32 %v376, %v659
      %v661 = vpop.f32.mrf.mxu0
      %662 = vmatprep.mubr.bf16.mxu0 0
      %663 = vmatmul.mubr.bf16.gmra.mxu0 %v514
      %v664 = vpop.f32.mrf.mxu0
      %v665 = vadd.f32 %v376, %v664
      %v666 = vpop.f32.mrf.mxu0
      %v667 = vpop.f32.mrf.mxu0
      %v668 = vadd.f32 %v376, %v667
      %v669 = vpop.f32.mrf.mxu0
      %670 = vmatprep.mubr.bf16.mxu0 0
      %671 = vmatmul.mubr.bf16.gmra.mxu0 %v517
      %v672 = vpop.f32.mrf.mxu0
      %v673 = vadd.f32 %v376, %v672
      %v674 = vpop.f32.mrf.mxu0
      %v675 = vpop.f32.mrf.mxu0
      %v676 = vadd.f32 %v376, %v675
      %v677 = vpop.f32.mrf.mxu0
      %678 = vmatprep.mubr.bf16.mxu0 0
      %679 = vmatmul.mubr.bf16.gmra.mxu0 %v520
      %v680 = vpop.f32.mrf.mxu0
      %v681 = vadd.f32 %v376, %v680
      %v682 = vpop.f32.mrf.mxu0
      %v683 = vpop.f32.mrf.mxu0
      %v684 = vadd.f32 %v376, %v683
      %v685 = vpop.f32.mrf.mxu0
      %686 = vdwg.mxu0
      %v687 = vld [vmem:[%s2] sm:$0xf]
      %v688 = vld [vmem:[%s2 + $0x4] sm:$0xf]
      %v689 = vld [vmem:[%s2 + $0x8] sm:$0xf]
      %v690 = vld [vmem:[%s2 + $0xc] sm:$0xf]
      %v691 = vld [vmem:[%s2 + $0x10] sm:$0x3]
      %v692 = vld [vmem:[%s5] sm:$0x1]
      %v694 = vlaneseq
      %v695 = vshrl.u32 %v694, 7
      %v696 = vsub.s32 0, %v695
      %v697 = vrot.slane %v692, %v696
      %v704 = vunpack.c.l.b16 %v687
      %v705 = vunpack.c.l.b16 %v688
      %v706 = vunpack.c.l.b16 %v689
      %v707 = vunpack.c.l.b16 %v690
      %v708 = vunpack.c.l.b16 %v691
      %v709 = vpack.c.b16 %v705, %v704
      %v710 = vpack.c.b16 %v707, %v706
      %v711 = vpack.c.b16 %v708, %v708
      %v715 = vsel %vm522, %v711, 0
      %717 = vmatprep.subr.bf16.mxu0 0
      %718 = vmatpush1.bf16.msra.mxu0 0
      %719 = vmatprep.subr.bf16.mxu0 0
      %720 = vmatpush1.bf16.msra.mxu0 0
      %721 = vmatprep.subr.bf16.mxu0 0
      %722 = vmatpush1.bf16.msra.mxu0 0
      %723 = vmatprep.subr.bf16.mxu0 0
      %724 = vmatpush1.bf16.msra.mxu0 0
      %725 = vmatprep.subr.bf16.mxu0 0
      %726 = vmatpush1.bf16.msra.mxu0 0
      %727 = vmatprep.subr.bf16.mxu0 0
      %728 = vmatpush1.bf16.msra.mxu0 %v715
      %729 = vmatprep.subr.bf16.mxu0 0
      %730 = vmatpush1.bf16.msra.mxu0 %v710
      %731 = vmatprep.subr.bf16.mxu0 0
      %732 = vmatpush1.bf16.msra.mxu0 %v709
      %733 = vmatprep.subr.bf16.mxu0 0
      %734 = vmatpush2.bf16.msra.mxu0 0
      %735 = vmatprep.subr.bf16.mxu0 0
      %736 = vmatpush2.bf16.msra.mxu0 0
      %737 = vmatprep.subr.bf16.mxu0 0
      %738 = vmatpush2.bf16.msra.mxu0 0
      %739 = vmatprep.subr.bf16.mxu0 0
      %740 = vmatpush2.bf16.msra.mxu0 0
      %741 = vmatprep.subr.bf16.mxu0 0
      %742 = vmatpush2.bf16.msra.mxu0 0
      %743 = vmatprep.subr.bf16.mxu0 0
      %744 = vmatpush2.bf16.msra.mxu0 0
      %745 = vmatprep.subr.bf16.mxu0 0
      %746 = vmatpush2.bf16.msra.mxu0 0
      %747 = vmatprep.subr.bf16.mxu0 0
      %748 = vmatpush2.bf16.msra.mxu0 0
      %749 = vmatprep.mubr.bf16.mxu0 0
      %750 = vmatmul.mubr.bf16.gmra.mxu0 %v475
      %v751 = vpop.f32.mrf.mxu0
      %v752 = vadd.f32 %v697, %v751
      %v753 = vpop.f32.mrf.mxu0
      %v754 = vpop.f32.mrf.mxu0
      %v755 = vadd.f32 %v697, %v754
      %v756 = vpop.f32.mrf.mxu0
      %757 = vmatprep.mubr.bf16.mxu0 0
      %758 = vmatmul.mubr.bf16.gmra.mxu0 %v478
      %v759 = vpop.f32.mrf.mxu0
      %v760 = vadd.f32 %v697, %v759
      %v761 = vpop.f32.mrf.mxu0
      %v762 = vpop.f32.mrf.mxu0
      %v763 = vadd.f32 %v697, %v762
      %v764 = vpop.f32.mrf.mxu0
      %765 = vmatprep.mubr.bf16.mxu0 0
      %766 = vmatmul.mubr.bf16.gmra.mxu0 %v481
      %v767 = vpop.f32.mrf.mxu0
      %v768 = vadd.f32 %v697, %v767
      %v769 = vpop.f32.mrf.mxu0
      %v770 = vpop.f32.mrf.mxu0
      %v771 = vadd.f32 %v697, %v770
      %v772 = vpop.f32.mrf.mxu0
      %773 = vmatprep.mubr.bf16.mxu0 0
      %774 = vmatmul.mubr.bf16.gmra.mxu0 %v484
      %v775 = vpop.f32.mrf.mxu0
      %v776 = vadd.f32 %v697, %v775
      %v777 = vpop.f32.mrf.mxu0
      %v778 = vpop.f32.mrf.mxu0
      %v779 = vadd.f32 %v697, %v778
      %v780 = vpop.f32.mrf.mxu0
      %781 = vmatprep.mubr.bf16.mxu0 0
      %782 = vmatmul.mubr.bf16.gmra.mxu0 %v487
      %v783 = vpop.f32.mrf.mxu0
      %v784 = vadd.f32 %v697, %v783
      %v785 = vpop.f32.mrf.mxu0
      %v786 = vpop.f32.mrf.mxu0
      %v787 = vadd.f32 %v697, %v786
      %v788 = vpop.f32.mrf.mxu0
      %789 = vmatprep.mubr.bf16.mxu0 0
      %790 = vmatmul.mubr.bf16.gmra.mxu0 %v490
      %v791 = vpop.f32.mrf.mxu0
      %v792 = vadd.f32 %v697, %v791
      %v793 = vpop.f32.mrf.mxu0
      %v794 = vpop.f32.mrf.mxu0
      %v795 = vadd.f32 %v697, %v794
      %v796 = vpop.f32.mrf.mxu0
      %797 = vmatprep.mubr.bf16.mxu0 0
      %798 = vmatmul.mubr.bf16.gmra.mxu0 %v493
      %v799 = vpop.f32.mrf.mxu0
      %v800 = vadd.f32 %v697, %v799
      %v801 = vpop.f32.mrf.mxu0
      %v802 = vpop.f32.mrf.mxu0
      %v803 = vadd.f32 %v697, %v802
      %v804 = vpop.f32.mrf.mxu0
      %805 = vmatprep.mubr.bf16.mxu0 0
      %806 = vmatmul.mubr.bf16.gmra.mxu0 %v496
      %v807 = vpop.f32.mrf.mxu0
      %v808 = vadd.f32 %v697, %v807
      %v809 = vpop.f32.mrf.mxu0
      %v810 = vpop.f32.mrf.mxu0
      %v811 = vadd.f32 %v697, %v810
      %v812 = vpop.f32.mrf.mxu0
      %813 = vmatprep.mubr.bf16.mxu0 0
      %814 = vmatmul.mubr.bf16.gmra.mxu0 %v499
      %v815 = vpop.f32.mrf.mxu0
      %v816 = vadd.f32 %v697, %v815
      %v817 = vpop.f32.mrf.mxu0
      %v818 = vpop.f32.mrf.mxu0
      %v819 = vadd.f32 %v697, %v818
      %v820 = vpop.f32.mrf.mxu0
      %821 = vmatprep.mubr.bf16.mxu0 0
      %822 = vmatmul.mubr.bf16.gmra.mxu0 %v502
      %v823 = vpop.f32.mrf.mxu0
      %v824 = vadd.f32 %v697, %v823
      %v825 = vpop.f32.mrf.mxu0
      %v826 = vpop.f32.mrf.mxu0
      %v827 = vadd.f32 %v697, %v826
      %v828 = vpop.f32.mrf.mxu0
      %829 = vmatprep.mubr.bf16.mxu0 0
      %830 = vmatmul.mubr.bf16.gmra.mxu0 %v505
      %v831 = vpop.f32.mrf.mxu0
      %v832 = vadd.f32 %v697, %v831
      %v833 = vpop.f32.mrf.mxu0
      %v834 = vpop.f32.mrf.mxu0
      %v835 = vadd.f32 %v697, %v834
      %v836 = vpop.f32.mrf.mxu0
      %837 = vmatprep.mubr.bf16.mxu0 0
      %838 = vmatmul.mubr.bf16.gmra.mxu0 %v508
      %v839 = vpop.f32.mrf.mxu0
      %v840 = vadd.f32 %v697, %v839
      %v841 = vpop.f32.mrf.mxu0
      %v842 = vpop.f32.mrf.mxu0
      %v843 = vadd.f32 %v697, %v842
      %v844 = vpop.f32.mrf.mxu0
      %845 = vmatprep.mubr.bf16.mxu0 0
      %846 = vmatmul.mubr.bf16.gmra.mxu0 %v511
      %v847 = vpop.f32.mrf.mxu0
      %v848 = vadd.f32 %v697, %v847
      %v849 = vpop.f32.mrf.mxu0
      %v850 = vpop.f32.mrf.mxu0
      %v851 = vadd.f32 %v697, %v850
      %v852 = vpop.f32.mrf.mxu0
      %853 = vmatprep.mubr.bf16.mxu0 0
      %854 = vmatmul.mubr.bf16.gmra.mxu0 %v514
      %v855 = vpop.f32.mrf.mxu0
      %v856 = vadd.f32 %v697, %v855
      %v857 = vpop.f32.mrf.mxu0
      %v858 = vpop.f32.mrf.mxu0
      %v859 = vadd.f32 %v697, %v858
      %v860 = vpop.f32.mrf.mxu0
      %861 = vmatprep.mubr.bf16.mxu0 0
      %862 = vmatmul.mubr.bf16.gmra.mxu0 %v517
      %v863 = vpop.f32.mrf.mxu0
      %v864 = vadd.f32 %v697, %v863
      %v865 = vpop.f32.mrf.mxu0
      %v866 = vpop.f32.mrf.mxu0
      %v867 = vadd.f32 %v697, %v866
      %v868 = vpop.f32.mrf.mxu0
      %869 = vmatprep.mubr.bf16.mxu0 0
      %870 = vmatmul.mubr.bf16.gmra.mxu0 %v520
      %v871 = vpop.f32.mrf.mxu0
      %v872 = vadd.f32 %v697, %v871
      %v873 = vpop.f32.mrf.mxu0
      %v874 = vpop.f32.mrf.mxu0
      %v875 = vadd.f32 %v697, %v874
      %v876 = vpop.f32.mrf.mxu0
      %877 = vdwg.mxu0
      %v878 = vld [vmem:[%s3] sm:$0xf]
      %v879 = vld [vmem:[%s3 + $0x4] sm:$0xf]
      %v880 = vld [vmem:[%s3 + $0x8] sm:$0xf]
      %v881 = vld [vmem:[%s3 + $0xc] sm:$0xf]
      %v882 = vld [vmem:[%s3 + $0x10] sm:$0x3]
      %v883 = vld [vmem:[%s6] sm:$0x1]
      %v885 = vlaneseq
      %v886 = vshrl.u32 %v885, 7
      %v887 = vsub.s32 0, %v886
      %v888 = vrot.slane %v883, %v887
      %v895 = vunpack.c.l.b16 %v878
      %v896 = vunpack.c.l.b16 %v879
      %v897 = vunpack.c.l.b16 %v880
      %v898 = vunpack.c.l.b16 %v881
      %v899 = vunpack.c.l.b16 %v882
      %v900 = vpack.c.b16 %v896, %v895
      %v901 = vpack.c.b16 %v898, %v897
      %v902 = vpack.c.b16 %v899, %v899
      %v906 = vsel %vm522, %v902, 0
      %908 = vmatprep.subr.bf16.mxu0 0
      %909 = vmatpush1.bf16.msra.mxu0 0
      %910 = vmatprep.subr.bf16.mxu0 0
      %911 = vmatpush1.bf16.msra.mxu0 0
      %912 = vmatprep.subr.bf16.mxu0 0
      %913 = vmatpush1.bf16.msra.mxu0 0
      %914 = vmatprep.subr.bf16.mxu0 0
      %915 = vmatpush1.bf16.msra.mxu0 0
      %916 = vmatprep.subr.bf16.mxu0 0
      %917 = vmatpush1.bf16.msra.mxu0 0
      %918 = vmatprep.subr.bf16.mxu0 0
      %919 = vmatpush1.bf16.msra.mxu0 %v906
      %920 = vmatprep.subr.bf16.mxu0 0
      %921 = vmatpush1.bf16.msra.mxu0 %v901
      %922 = vmatprep.subr.bf16.mxu0 0
      %923 = vmatpush1.bf16.msra.mxu0 %v900
      %924 = vmatprep.subr.bf16.mxu0 0
      %925 = vmatpush2.bf16.msra.mxu0 0
      %926 = vmatprep.subr.bf16.mxu0 0
      %927 = vmatpush2.bf16.msra.mxu0 0
      %928 = vmatprep.subr.bf16.mxu0 0
      %929 = vmatpush2.bf16.msra.mxu0 0
      %930 = vmatprep.subr.bf16.mxu0 0
      %931 = vmatpush2.bf16.msra.mxu0 0
      %932 = vmatprep.subr.bf16.mxu0 0
      %933 = vmatpush2.bf16.msra.mxu0 0
      %934 = vmatprep.subr.bf16.mxu0 0
      %935 = vmatpush2.bf16.msra.mxu0 0
      %936 = vmatprep.subr.bf16.mxu0 0
      %937 = vmatpush2.bf16.msra.mxu0 0
      %938 = vmatprep.subr.bf16.mxu0 0
      %939 = vmatpush2.bf16.msra.mxu0 0
      %940 = vmatprep.mubr.bf16.mxu0 0
      %941 = vmatmul.mubr.bf16.gmra.mxu0 %v475
      %v942 = vpop.f32.mrf.mxu0
      %v943 = vadd.f32 %v888, %v942
      %v944 = vpop.f32.mrf.mxu0
      %v945 = vpop.f32.mrf.mxu0
      %v946 = vadd.f32 %v888, %v945
      %v947 = vpop.f32.mrf.mxu0
      %948 = vmatprep.mubr.bf16.mxu0 0
      %949 = vmatmul.mubr.bf16.gmra.mxu0 %v478
      %v950 = vpop.f32.mrf.mxu0
      %v951 = vadd.f32 %v888, %v950
      %v952 = vpop.f32.mrf.mxu0
      %v953 = vpop.f32.mrf.mxu0
      %v954 = vadd.f32 %v888, %v953
      %v955 = vpop.f32.mrf.mxu0
      %956 = vmatprep.mubr.bf16.mxu0 0
      %957 = vmatmul.mubr.bf16.gmra.mxu0 %v481
      %v958 = vpop.f32.mrf.mxu0
      %v959 = vadd.f32 %v888, %v958
      %v960 = vpop.f32.mrf.mxu0
      %v961 = vpop.f32.mrf.mxu0
      %v962 = vadd.f32 %v888, %v961
      %v963 = vpop.f32.mrf.mxu0
      %964 = vmatprep.mubr.bf16.mxu0 0
      %965 = vmatmul.mubr.bf16.gmra.mxu0 %v484
      %v966 = vpop.f32.mrf.mxu0
      %v967 = vadd.f32 %v888, %v966
      %v968 = vpop.f32.mrf.mxu0
      %v969 = vpop.f32.mrf.mxu0
      %v970 = vadd.f32 %v888, %v969
      %v971 = vpop.f32.mrf.mxu0
      %972 = vmatprep.mubr.bf16.mxu0 0
      %973 = vmatmul.mubr.bf16.gmra.mxu0 %v487
      %v974 = vpop.f32.mrf.mxu0
      %v975 = vadd.f32 %v888, %v974
      %v976 = vpop.f32.mrf.mxu0
      %v977 = vpop.f32.mrf.mxu0
      %v978 = vadd.f32 %v888, %v977
      %v979 = vpop.f32.mrf.mxu0
      %980 = vmatprep.mubr.bf16.mxu0 0
      %981 = vmatmul.mubr.bf16.gmra.mxu0 %v490
      %v982 = vpop.f32.mrf.mxu0
      %v983 = vadd.f32 %v888, %v982
      %v984 = vpop.f32.mrf.mxu0
      %v985 = vpop.f32.mrf.mxu0
      %v986 = vadd.f32 %v888, %v985
      %v987 = vpop.f32.mrf.mxu0
      %988 = vmatprep.mubr.bf16.mxu0 0
      %989 = vmatmul.mubr.bf16.gmra.mxu0 %v493
      %v990 = vpop.f32.mrf.mxu0
      %v991 = vadd.f32 %v888, %v990
      %v992 = vpop.f32.mrf.mxu0
      %v993 = vpop.f32.mrf.mxu0
      %v994 = vadd.f32 %v888, %v993
      %v995 = vpop.f32.mrf.mxu0
      %996 = vmatprep.mubr.bf16.mxu0 0
      %997 = vmatmul.mubr.bf16.gmra.mxu0 %v496
      %v998 = vpop.f32.mrf.mxu0
      %v999 = vadd.f32 %v888, %v998
      %v1000 = vpop.f32.mrf.mxu0
      %v1001 = vpop.f32.mrf.mxu0
      %v1002 = vadd.f32 %v888, %v1001
      %v1003 = vpop.f32.mrf.mxu0
      %1004 = vmatprep.mubr.bf16.mxu0 0
      %1005 = vmatmul.mubr.bf16.gmra.mxu0 %v499
      %v1006 = vpop.f32.mrf.mxu0
      %v1007 = vadd.f32 %v888, %v1006
      %v1008 = vpop.f32.mrf.mxu0
      %v1009 = vpop.f32.mrf.mxu0
      %v1010 = vadd.f32 %v888, %v1009
      %v1011 = vpop.f32.mrf.mxu0
      %1012 = vmatprep.mubr.bf16.mxu0 0
      %1013 = vmatmul.mubr.bf16.gmra.mxu0 %v502
      %v1014 = vpop.f32.mrf.mxu0
      %v1015 = vadd.f32 %v888, %v1014
      %v1016 = vpop.f32.mrf.mxu0
      %v1017 = vpop.f32.mrf.mxu0
      %v1018 = vadd.f32 %v888, %v1017
      %v1019 = vpop.f32.mrf.mxu0
      %1020 = vmatprep.mubr.bf16.mxu0 0
      %1021 = vmatmul.mubr.bf16.gmra.mxu0 %v505
      %v1022 = vpop.f32.mrf.mxu0
      %v1023 = vadd.f32 %v888, %v1022
      %v1024 = vpop.f32.mrf.mxu0
      %v1025 = vpop.f32.mrf.mxu0
      %v1026 = vadd.f32 %v888, %v1025
      %v1027 = vpop.f32.mrf.mxu0
      %1028 = vmatprep.mubr.bf16.mxu0 0
      %1029 = vmatmul.mubr.bf16.gmra.mxu0 %v508
      %v1030 = vpop.f32.mrf.mxu0
      %v1031 = vadd.f32 %v888, %v1030
      %v1032 = vpop.f32.mrf.mxu0
      %v1033 = vpop.f32.mrf.mxu0
      %v1034 = vadd.f32 %v888, %v1033
      %v1035 = vpop.f32.mrf.mxu0
      %1036 = vmatprep.mubr.bf16.mxu0 0
      %1037 = vmatmul.mubr.bf16.gmra.mxu0 %v511
      %v1038 = vpop.f32.mrf.mxu0
      %v1039 = vadd.f32 %v888, %v1038
      %v1040 = vpop.f32.mrf.mxu0
      %v1041 = vpop.f32.mrf.mxu0
      %v1042 = vadd.f32 %v888, %v1041
      %v1043 = vpop.f32.mrf.mxu0
      %1044 = vmatprep.mubr.bf16.mxu0 0
      %1045 = vmatmul.mubr.bf16.gmra.mxu0 %v514
      %v1046 = vpop.f32.mrf.mxu0
      %v1047 = vadd.f32 %v888, %v1046
      %v1048 = vpop.f32.mrf.mxu0
      %v1049 = vpop.f32.mrf.mxu0
      %v1050 = vadd.f32 %v888, %v1049
      %v1051 = vpop.f32.mrf.mxu0
      %1052 = vmatprep.mubr.bf16.mxu0 0
      %1053 = vmatmul.mubr.bf16.gmra.mxu0 %v517
      %v1054 = vpop.f32.mrf.mxu0
      %v1055 = vadd.f32 %v888, %v1054
      %v1056 = vpop.f32.mrf.mxu0
      %v1057 = vpop.f32.mrf.mxu0
      %v1058 = vadd.f32 %v888, %v1057
      %v1059 = vpop.f32.mrf.mxu0
      %1060 = vmatprep.mubr.bf16.mxu0 0
      %1061 = vmatmul.mubr.bf16.gmra.mxu0 %v520
      %v1062 = vpop.f32.mrf.mxu0
      %v1063 = vadd.f32 %v888, %v1062
      %v1064 = vpop.f32.mrf.mxu0
      %v1065 = vpop.f32.mrf.mxu0
      %v1066 = vadd.f32 %v888, %v1065
      %v1067 = vpop.f32.mrf.mxu0
      %1068 = vdwg.mxu0
      %v1069 = vpack.c.bf16 %v564, %v561
      %v1070 = vpack.c.bf16 %v572, %v569
      %v1071 = vpack.c.bf16 %v580, %v577
      %v1072 = vpack.c.bf16 %v588, %v585
      %v1073 = vpack.c.bf16 %v596, %v593
      %v1074 = vpack.c.bf16 %v604, %v601
      %v1075 = vpack.c.bf16 %v612, %v609
      %v1076 = vpack.c.bf16 %v620, %v617
      %v1077 = vpack.c.bf16 %v628, %v625
      %v1078 = vpack.c.bf16 %v636, %v633
      %v1079 = vpack.c.bf16 %v644, %v641
      %v1080 = vpack.c.bf16 %v652, %v649
      %v1081 = vpack.c.bf16 %v660, %v657
      %v1082 = vpack.c.bf16 %v668, %v665
      %v1083 = vpack.c.bf16 %v676, %v673
      %v1084 = vpack.c.bf16 %v684, %v681
      %v1085 = vpack.c.bf16 %v755, %v752
      %v1086 = vpack.c.bf16 %v763, %v760
      %v1087 = vpack.c.bf16 %v771, %v768
      %v1088 = vpack.c.bf16 %v779, %v776
      %v1089 = vpack.c.bf16 %v787, %v784
      %v1090 = vpack.c.bf16 %v795, %v792
      %v1091 = vpack.c.bf16 %v803, %v800
      %v1092 = vpack.c.bf16 %v811, %v808
      %v1093 = vpack.c.bf16 %v819, %v816
      %v1094 = vpack.c.bf16 %v827, %v824
      %v1095 = vpack.c.bf16 %v835, %v832
      %v1096 = vpack.c.bf16 %v843, %v840
      %v1097 = vpack.c.bf16 %v851, %v848
      %v1098 = vpack.c.bf16 %v859, %v856
      %v1099 = vpack.c.bf16 %v867, %v864
      %v1100 = vpack.c.bf16 %v875, %v872
      %vm1101 = vcmask 64512
      %v1103 = vsel %vm1101, %v1069, 0
      %v1106 = vsel %vm1101, %v1070, 0
      %v1109 = vsel %vm1101, %v1071, 0
      %v1112 = vsel %vm1101, %v1072, 0
      %v1115 = vsel %vm1101, %v1073, 0
      %v1118 = vsel %vm1101, %v1074, 0
      %v1121 = vsel %vm1101, %v1075, 0
      %v1124 = vsel %vm1101, %v1076, 0
      %v1127 = vsel %vm1101, %v1077, 0
      %v1130 = vsel %vm1101, %v1078, 0
      %v1133 = vsel %vm1101, %v1079, 0
      %v1136 = vsel %vm1101, %v1080, 0
      %v1139 = vsel %vm1101, %v1081, 0
      %v1142 = vsel %vm1101, %v1082, 0
      %v1145 = vsel %vm1101, %v1083, 0
      %v1148 = vsel %vm1101, %v1084, 0
      %v1151 = vsel %vm1101, %v1085, 0
      %v1154 = vsel %vm1101, %v1086, 0
      %v1157 = vsel %vm1101, %v1087, 0
      %v1160 = vsel %vm1101, %v1088, 0
      %v1163 = vsel %vm1101, %v1089, 0
      %v1166 = vsel %vm1101, %v1090, 0
      %v1169 = vsel %vm1101, %v1091, 0
      %v1172 = vsel %vm1101, %v1092, 0
      %v1175 = vsel %vm1101, %v1093, 0
      %v1178 = vsel %vm1101, %v1094, 0
      %v1181 = vsel %vm1101, %v1095, 0
      %v1184 = vsel %vm1101, %v1096, 0
      %v1187 = vsel %vm1101, %v1097, 0
      %v1190 = vsel %vm1101, %v1098, 0
      %v1193 = vsel %vm1101, %v1099, 0
      %v1196 = vsel %vm1101, %v1100, 0
      %1198 = vmatprep.subr.bf16.mxu0 0
      %1199 = vmatpush1.bf16.xpose.msra.mxu0 %v1172
      %1200 = vmatprep.subr.bf16.mxu0 0
      %1201 = vmatpush1.bf16.xpose.msra.mxu0 %v1169
      %1202 = vmatprep.subr.bf16.mxu0 0
      %1203 = vmatpush1.bf16.xpose.msra.mxu0 %v1166
      %1204 = vmatprep.subr.bf16.mxu0 0
      %1205 = vmatpush1.bf16.xpose.msra.mxu0 %v1163
      %1206 = vmatprep.subr.bf16.mxu0 0
      %1207 = vmatpush1.bf16.xpose.msra.mxu0 %v1160
      %1208 = vmatprep.subr.bf16.mxu0 0
      %1209 = vmatpush1.bf16.xpose.msra.mxu0 %v1157
      %1210 = vmatprep.subr.bf16.mxu0 0
      %1211 = vmatpush1.bf16.xpose.msra.mxu0 %v1154
      %1212 = vmatprep.subr.bf16.mxu0 0
      %1213 = vmatpush1.bf16.xpose.msra.mxu0 %v1151
      %1214 = vmatprep.subr.bf16.mxu0 0
      %1215 = vmatpush2.bf16.xpose.msra.mxu0 %v1196
      %1216 = vmatprep.subr.bf16.mxu0 0
      %1217 = vmatpush2.bf16.xpose.msra.mxu0 %v1193
      %1218 = vmatprep.subr.bf16.mxu0 0
      %1219 = vmatpush2.bf16.xpose.msra.mxu0 %v1190
      %1220 = vmatprep.subr.bf16.mxu0 0
      %1221 = vmatpush2.bf16.xpose.msra.mxu0 %v1187
      %1222 = vmatprep.subr.bf16.mxu0 0
      %1223 = vmatpush2.bf16.xpose.msra.mxu0 %v1184
      %1224 = vmatprep.subr.bf16.mxu0 0
      %1225 = vmatpush2.bf16.xpose.msra.mxu0 %v1181
      %1226 = vmatprep.subr.bf16.mxu0 0
      %1227 = vmatpush2.bf16.xpose.msra.mxu0 %v1178
      %1228 = vmatprep.subr.bf16.mxu0 0
      %1229 = vmatpush2.bf16.xpose.msra.mxu0 %v1175
      %1230 = vmatprep.mubr.bf16.mxu0 0
      %1231 = vmatmul.mubr.bf16.gmra.mxu0 %v1103
      %v1232 = vpop.f32.mrf.mxu0
      %v1233 = vadd.f32 0.0, %v1232
      %v1234 = vpop.f32.mrf.mxu0
      %v1235 = vadd.f32 0.0, %v1234
      %v1236 = vpop.f32.mrf.mxu0
      %v1237 = vadd.f32 0.0, %v1236
      %v1238 = vpop.f32.mrf.mxu0
      %v1239 = vadd.f32 0.0, %v1238
      %1240 = vmatprep.mubr.bf16.mxu0 0
      %1241 = vmatmul.mubr.bf16.gmra.mxu0 %v1106
      %v1242 = vpop.f32.mrf.mxu0
      %v1243 = vadd.f32 0.0, %v1242
      %v1244 = vpop.f32.mrf.mxu0
      %v1245 = vadd.f32 0.0, %v1244
      %v1246 = vpop.f32.mrf.mxu0
      %v1247 = vadd.f32 0.0, %v1246
      %v1248 = vpop.f32.mrf.mxu0
      %v1249 = vadd.f32 0.0, %v1248
      %1250 = vmatprep.mubr.bf16.mxu0 0
      %1251 = vmatmul.mubr.bf16.gmra.mxu0 %v1109
      %v1252 = vpop.f32.mrf.mxu0
      %v1253 = vadd.f32 0.0, %v1252
      %v1254 = vpop.f32.mrf.mxu0
      %v1255 = vadd.f32 0.0, %v1254
      %v1256 = vpop.f32.mrf.mxu0
      %v1257 = vadd.f32 0.0, %v1256
      %v1258 = vpop.f32.mrf.mxu0
      %v1259 = vadd.f32 0.0, %v1258
      %1260 = vmatprep.mubr.bf16.mxu0 0
      %1261 = vmatmul.mubr.bf16.gmra.mxu0 %v1112
      %v1262 = vpop.f32.mrf.mxu0
      %v1263 = vadd.f32 0.0, %v1262
      %v1264 = vpop.f32.mrf.mxu0
      %v1265 = vadd.f32 0.0, %v1264
      %v1266 = vpop.f32.mrf.mxu0
      %v1267 = vadd.f32 0.0, %v1266
      %v1268 = vpop.f32.mrf.mxu0
      %v1269 = vadd.f32 0.0, %v1268
      %1270 = vmatprep.mubr.bf16.mxu0 0
      %1271 = vmatmul.mubr.bf16.gmra.mxu0 %v1115
      %v1272 = vpop.f32.mrf.mxu0
      %v1273 = vadd.f32 0.0, %v1272
      %v1274 = vpop.f32.mrf.mxu0
      %v1275 = vadd.f32 0.0, %v1274
      %v1276 = vpop.f32.mrf.mxu0
      %v1277 = vadd.f32 0.0, %v1276
      %v1278 = vpop.f32.mrf.mxu0
      %v1279 = vadd.f32 0.0, %v1278
      %1280 = vmatprep.mubr.bf16.mxu0 0
      %1281 = vmatmul.mubr.bf16.gmra.mxu0 %v1118
      %v1282 = vpop.f32.mrf.mxu0
      %v1283 = vadd.f32 0.0, %v1282
      %v1284 = vpop.f32.mrf.mxu0
      %v1285 = vadd.f32 0.0, %v1284
      %v1286 = vpop.f32.mrf.mxu0
      %v1287 = vadd.f32 0.0, %v1286
      %v1288 = vpop.f32.mrf.mxu0
      %v1289 = vadd.f32 0.0, %v1288
      %1290 = vmatprep.mubr.bf16.mxu0 0
      %1291 = vmatmul.mubr.bf16.gmra.mxu0 %v1121
      %v1292 = vpop.f32.mrf.mxu0
      %v1293 = vadd.f32 0.0, %v1292
      %v1294 = vpop.f32.mrf.mxu0
      %v1295 = vadd.f32 0.0, %v1294
      %v1296 = vpop.f32.mrf.mxu0
      %v1297 = vadd.f32 0.0, %v1296
      %v1298 = vpop.f32.mrf.mxu0
      %v1299 = vadd.f32 0.0, %v1298
      %1300 = vmatprep.mubr.bf16.mxu0 0
      %1301 = vmatmul.mubr.bf16.gmra.mxu0 %v1124
      %v1302 = vpop.f32.mrf.mxu0
      %v1303 = vadd.f32 0.0, %v1302
      %v1304 = vpop.f32.mrf.mxu0
      %v1305 = vadd.f32 0.0, %v1304
      %v1306 = vpop.f32.mrf.mxu0
      %v1307 = vadd.f32 0.0, %v1306
      %v1308 = vpop.f32.mrf.mxu0
      %v1309 = vadd.f32 0.0, %v1308
      %1310 = vmatprep.mubr.bf16.mxu0 0
      %1311 = vmatmul.mubr.bf16.gmra.mxu0 %v1127
      %v1312 = vpop.f32.mrf.mxu0
      %v1313 = vadd.f32 0.0, %v1312
      %v1314 = vpop.f32.mrf.mxu0
      %v1315 = vadd.f32 0.0, %v1314
      %v1316 = vpop.f32.mrf.mxu0
      %v1317 = vadd.f32 0.0, %v1316
      %v1318 = vpop.f32.mrf.mxu0
      %v1319 = vadd.f32 0.0, %v1318
      %1320 = vmatprep.mubr.bf16.mxu0 0
      %1321 = vmatmul.mubr.bf16.gmra.mxu0 %v1130
      %v1322 = vpop.f32.mrf.mxu0
      %v1323 = vadd.f32 0.0, %v1322
      %v1324 = vpop.f32.mrf.mxu0
      %v1325 = vadd.f32 0.0, %v1324
      %v1326 = vpop.f32.mrf.mxu0
      %v1327 = vadd.f32 0.0, %v1326
      %v1328 = vpop.f32.mrf.mxu0
      %v1329 = vadd.f32 0.0, %v1328
      %1330 = vmatprep.mubr.bf16.mxu0 0
      %1331 = vmatmul.mubr.bf16.gmra.mxu0 %v1133
      %v1332 = vpop.f32.mrf.mxu0
      %v1333 = vadd.f32 0.0, %v1332
      %v1334 = vpop.f32.mrf.mxu0
      %v1335 = vadd.f32 0.0, %v1334
      %v1336 = vpop.f32.mrf.mxu0
      %v1337 = vadd.f32 0.0, %v1336
      %v1338 = vpop.f32.mrf.mxu0
      %v1339 = vadd.f32 0.0, %v1338
      %1340 = vmatprep.mubr.bf16.mxu0 0
      %1341 = vmatmul.mubr.bf16.gmra.mxu0 %v1136
      %v1342 = vpop.f32.mrf.mxu0
      %v1343 = vadd.f32 0.0, %v1342
      %v1344 = vpop.f32.mrf.mxu0
      %v1345 = vadd.f32 0.0, %v1344
      %v1346 = vpop.f32.mrf.mxu0
      %v1347 = vadd.f32 0.0, %v1346
      %v1348 = vpop.f32.mrf.mxu0
      %v1349 = vadd.f32 0.0, %v1348
      %1350 = vmatprep.mubr.bf16.mxu0 0
      %1351 = vmatmul.mubr.bf16.gmra.mxu0 %v1139
      %v1352 = vpop.f32.mrf.mxu0
      %v1353 = vadd.f32 0.0, %v1352
      %v1354 = vpop.f32.mrf.mxu0
      %v1355 = vadd.f32 0.0, %v1354
      %v1356 = vpop.f32.mrf.mxu0
      %v1357 = vadd.f32 0.0, %v1356
      %v1358 = vpop.f32.mrf.mxu0
      %v1359 = vadd.f32 0.0, %v1358
      %1360 = vmatprep.mubr.bf16.mxu0 0
      %1361 = vmatmul.mubr.bf16.gmra.mxu0 %v1142
      %v1362 = vpop.f32.mrf.mxu0
      %v1363 = vadd.f32 0.0, %v1362
      %v1364 = vpop.f32.mrf.mxu0
      %v1365 = vadd.f32 0.0, %v1364
      %v1366 = vpop.f32.mrf.mxu0
      %v1367 = vadd.f32 0.0, %v1366
      %v1368 = vpop.f32.mrf.mxu0
      %v1369 = vadd.f32 0.0, %v1368
      %1370 = vmatprep.mubr.bf16.mxu0 0
      %1371 = vmatmul.mubr.bf16.gmra.mxu0 %v1145
      %v1372 = vpop.f32.mrf.mxu0
      %v1373 = vadd.f32 0.0, %v1372
      %v1374 = vpop.f32.mrf.mxu0
      %v1375 = vadd.f32 0.0, %v1374
      %v1376 = vpop.f32.mrf.mxu0
      %v1377 = vadd.f32 0.0, %v1376
      %v1378 = vpop.f32.mrf.mxu0
      %v1379 = vadd.f32 0.0, %v1378
      %1380 = vmatprep.mubr.bf16.mxu0 0
      %1381 = vmatmul.mubr.bf16.gmra.mxu0 %v1148
      %v1382 = vpop.f32.mrf.mxu0
      %v1383 = vadd.f32 0.0, %v1382
      %v1384 = vpop.f32.mrf.mxu0
      %v1385 = vadd.f32 0.0, %v1384
      %v1386 = vpop.f32.mrf.mxu0
      %v1387 = vadd.f32 0.0, %v1386
      %v1388 = vpop.f32.mrf.mxu0
      %v1389 = vadd.f32 0.0, %v1388
      %1390 = vdwg.mxu0
      %v1391 = vmax.f32 %v1233, %v1235
      %1392 = vmax.xlane.f32.xlu0 %v1391
      %v1393 = vpop.xlane.xlu0 %1392
      %v1394 = vmax.f32 %v1237, %v1239
      %1395 = vmax.xlane.f32.xlu0 %v1394
      %v1396 = vpop.xlane.xlu0 %1395
      %v1397 = vmax.f32 %v1243, %v1245
      %1398 = vmax.xlane.f32.xlu0 %v1397
      %v1399 = vpop.xlane.xlu0 %1398
      %v1400 = vmax.f32 %v1247, %v1249
      %1401 = vmax.xlane.f32.xlu0 %v1400
      %v1402 = vpop.xlane.xlu0 %1401
      %v1403 = vmax.f32 %v1253, %v1255
      %1404 = vmax.xlane.f32.xlu0 %v1403
      %v1405 = vpop.xlane.xlu0 %1404
      %v1406 = vmax.f32 %v1257, %v1259
      %1407 = vmax.xlane.f32.xlu0 %v1406
      %v1408 = vpop.xlane.xlu0 %1407
      %v1409 = vmax.f32 %v1263, %v1265
      %1410 = vmax.xlane.f32.xlu0 %v1409
      %v1411 = vpop.xlane.xlu0 %1410
      %v1412 = vmax.f32 %v1267, %v1269
      %1413 = vmax.xlane.f32.xlu0 %v1412
      %v1414 = vpop.xlane.xlu0 %1413
      %v1415 = vmax.f32 %v1273, %v1275
      %1416 = vmax.xlane.f32.xlu0 %v1415
      %v1417 = vpop.xlane.xlu0 %1416
      %v1418 = vmax.f32 %v1277, %v1279
      %1419 = vmax.xlane.f32.xlu0 %v1418
      %v1420 = vpop.xlane.xlu0 %1419
      %v1421 = vmax.f32 %v1283, %v1285
      %1422 = vmax.xlane.f32.xlu0 %v1421
      %v1423 = vpop.xlane.xlu0 %1422
      %v1424 = vmax.f32 %v1287, %v1289
      %1425 = vmax.xlane.f32.xlu0 %v1424
      %v1426 = vpop.xlane.xlu0 %1425
      %v1427 = vmax.f32 %v1293, %v1295
      %1428 = vmax.xlane.f32.xlu0 %v1427
      %v1429 = vpop.xlane.xlu0 %1428
      %v1430 = vmax.f32 %v1297, %v1299
      %1431 = vmax.xlane.f32.xlu0 %v1430
      %v1432 = vpop.xlane.xlu0 %1431
      %v1433 = vmax.f32 %v1303, %v1305
      %1434 = vmax.xlane.f32.xlu0 %v1433
      %v1435 = vpop.xlane.xlu0 %1434
      %v1436 = vmax.f32 %v1307, %v1309
      %1437 = vmax.xlane.f32.xlu0 %v1436
      %v1438 = vpop.xlane.xlu0 %1437
      %v1439 = vmax.f32 %v1313, %v1315
      %1440 = vmax.xlane.f32.xlu0 %v1439
      %v1441 = vpop.xlane.xlu0 %1440
      %v1442 = vmax.f32 %v1317, %v1319
      %1443 = vmax.xlane.f32.xlu0 %v1442
      %v1444 = vpop.xlane.xlu0 %1443
      %v1445 = vmax.f32 %v1323, %v1325
      %1446 = vmax.xlane.f32.xlu0 %v1445
      %v1447 = vpop.xlane.xlu0 %1446
      %v1448 = vmax.f32 %v1327, %v1329
      %1449 = vmax.xlane.f32.xlu0 %v1448
      %v1450 = vpop.xlane.xlu0 %1449
      %v1451 = vmax.f32 %v1333, %v1335
      %1452 = vmax.xlane.f32.xlu0 %v1451
      %v1453 = vpop.xlane.xlu0 %1452
      %v1454 = vmax.f32 %v1337, %v1339
      %1455 = vmax.xlane.f32.xlu0 %v1454
      %v1456 = vpop.xlane.xlu0 %1455
      %v1457 = vmax.f32 %v1343, %v1345
      %1458 = vmax.xlane.f32.xlu0 %v1457
      %v1459 = vpop.xlane.xlu0 %1458
      %v1460 = vmax.f32 %v1347, %v1349
      %1461 = vmax.xlane.f32.xlu0 %v1460
      %v1462 = vpop.xlane.xlu0 %1461
      %v1463 = vmax.f32 %v1353, %v1355
      %1464 = vmax.xlane.f32.xlu0 %v1463
      %v1465 = vpop.xlane.xlu0 %1464
      %v1466 = vmax.f32 %v1357, %v1359
      %1467 = vmax.xlane.f32.xlu0 %v1466
      %v1468 = vpop.xlane.xlu0 %1467
      %v1469 = vmax.f32 %v1363, %v1365
      %1470 = vmax.xlane.f32.xlu0 %v1469
      %v1471 = vpop.xlane.xlu0 %1470
      %v1472 = vmax.f32 %v1367, %v1369
      %1473 = vmax.xlane.f32.xlu0 %v1472
      %v1474 = vpop.xlane.xlu0 %1473
      %v1475 = vmax.f32 %v1373, %v1375
      %1476 = vmax.xlane.f32.xlu0 %v1475
      %v1477 = vpop.xlane.xlu0 %1476
      %v1478 = vmax.f32 %v1377, %v1379
      %1479 = vmax.xlane.f32.xlu0 %v1478
      %v1480 = vpop.xlane.xlu0 %1479
      %v1481 = vmax.f32 %v1383, %v1385
      %1482 = vmax.xlane.f32.xlu0 %v1481
      %v1483 = vpop.xlane.xlu0 %1482
      %v1484 = vmax.f32 %v1387, %v1389
      %1485 = vmax.xlane.f32.xlu0 %v1484
      %v1486 = vpop.xlane.xlu0 %1485
      %v1487 = vsub.f32 %v1233, %v1393
      %v1488 = vsub.f32 %v1235, %v1393
      %v1489 = vsub.f32 %v1237, %v1396
      %v1490 = vsub.f32 %v1239, %v1396
      %v1491 = vsub.f32 %v1243, %v1399
      %v1492 = vsub.f32 %v1245, %v1399
      %v1493 = vsub.f32 %v1247, %v1402
      %v1494 = vsub.f32 %v1249, %v1402
      %v1495 = vsub.f32 %v1253, %v1405
      %v1496 = vsub.f32 %v1255, %v1405
      %v1497 = vsub.f32 %v1257, %v1408
      %v1498 = vsub.f32 %v1259, %v1408
      %v1499 = vsub.f32 %v1263, %v1411
      %v1500 = vsub.f32 %v1265, %v1411
      %v1501 = vsub.f32 %v1267, %v1414
      %v1502 = vsub.f32 %v1269, %v1414
      %v1503 = vsub.f32 %v1273, %v1417
      %v1504 = vsub.f32 %v1275, %v1417
      %v1505 = vsub.f32 %v1277, %v1420
      %v1506 = vsub.f32 %v1279, %v1420
      %v1507 = vsub.f32 %v1283, %v1423
      %v1508 = vsub.f32 %v1285, %v1423
      %v1509 = vsub.f32 %v1287, %v1426
      %v1510 = vsub.f32 %v1289, %v1426
      %v1511 = vsub.f32 %v1293, %v1429
      %v1512 = vsub.f32 %v1295, %v1429
      %v1513 = vsub.f32 %v1297, %v1432
      %v1514 = vsub.f32 %v1299, %v1432
      %v1515 = vsub.f32 %v1303, %v1435
      %v1516 = vsub.f32 %v1305, %v1435
      %v1517 = vsub.f32 %v1307, %v1438
      %v1518 = vsub.f32 %v1309, %v1438
      %v1519 = vsub.f32 %v1313, %v1441
      %v1520 = vsub.f32 %v1315, %v1441
      %v1521 = vsub.f32 %v1317, %v1444
      %v1522 = vsub.f32 %v1319, %v1444
      %v1523 = vsub.f32 %v1323, %v1447
      %v1524 = vsub.f32 %v1325, %v1447
      %v1525 = vsub.f32 %v1327, %v1450
      %v1526 = vsub.f32 %v1329, %v1450
      %v1527 = vsub.f32 %v1333, %v1453
      %v1528 = vsub.f32 %v1335, %v1453
      %v1529 = vsub.f32 %v1337, %v1456
      %v1530 = vsub.f32 %v1339, %v1456
      %v1531 = vsub.f32 %v1343, %v1459
      %v1532 = vsub.f32 %v1345, %v1459
      %v1533 = vsub.f32 %v1347, %v1462
      %v1534 = vsub.f32 %v1349, %v1462
      %v1535 = vsub.f32 %v1353, %v1465
      %v1536 = vsub.f32 %v1355, %v1465
      %v1537 = vsub.f32 %v1357, %v1468
      %v1538 = vsub.f32 %v1359, %v1468
      %v1539 = vsub.f32 %v1363, %v1471
      %v1540 = vsub.f32 %v1365, %v1471
      %v1541 = vsub.f32 %v1367, %v1474
      %v1542 = vsub.f32 %v1369, %v1474
      %v1543 = vsub.f32 %v1373, %v1477
      %v1544 = vsub.f32 %v1375, %v1477
      %v1545 = vsub.f32 %v1377, %v1480
      %v1546 = vsub.f32 %v1379, %v1480
      %v1547 = vsub.f32 %v1383, %v1483
      %v1548 = vsub.f32 %v1385, %v1483
      %v1549 = vsub.f32 %v1387, %v1486
      %v1550 = vsub.f32 %v1389, %v1486
      %v1551 = vmul.f32 %v1487, 1.442695
      %v1552 = vpow.pop %v1551
      %v1553 = vmul.f32 %v1488, 1.442695
      %v1554 = vpow.pop %v1553
      %v1555 = vmul.f32 %v1489, 1.442695
      %v1556 = vpow.pop %v1555
      %v1557 = vmul.f32 %v1490, 1.442695
      %v1558 = vpow.pop %v1557
      %v1559 = vmul.f32 %v1491, 1.442695
      %v1560 = vpow.pop %v1559
      %v1561 = vmul.f32 %v1492, 1.442695
      %v1562 = vpow.pop %v1561
      %v1563 = vmul.f32 %v1493, 1.442695
      %v1564 = vpow.pop %v1563
      %v1565 = vmul.f32 %v1494, 1.442695
      %v1566 = vpow.pop %v1565
      %v1567 = vmul.f32 %v1495, 1.442695
      %v1568 = vpow.pop %v1567
      %v1569 = vmul.f32 %v1496, 1.442695
      %v1570 = vpow.pop %v1569
      %v1571 = vmul.f32 %v1497, 1.442695
      %v1572 = vpow.pop %v1571
      %v1573 = vmul.f32 %v1498, 1.442695
      %v1574 = vpow.pop %v1573
      %v1575 = vmul.f32 %v1499, 1.442695
      %v1576 = vpow.pop %v1575
      %v1577 = vmul.f32 %v1500, 1.442695
      %v1578 = vpow.pop %v1577
      %v1579 = vmul.f32 %v1501, 1.442695
      %v1580 = vpow.pop %v1579
      %v1581 = vmul.f32 %v1502, 1.442695
      %v1582 = vpow.pop %v1581
      %v1583 = vmul.f32 %v1503, 1.442695
      %v1584 = vpow.pop %v1583
      %v1585 = vmul.f32 %v1504, 1.442695
      %v1586 = vpow.pop %v1585
      %v1587 = vmul.f32 %v1505, 1.442695
      %v1588 = vpow.pop %v1587
      %v1589 = vmul.f32 %v1506, 1.442695
      %v1590 = vpow.pop %v1589
      %v1591 = vmul.f32 %v1507, 1.442695
      %v1592 = vpow.pop %v1591
      %v1593 = vmul.f32 %v1508, 1.442695
      %v1594 = vpow.pop %v1593
      %v1595 = vmul.f32 %v1509, 1.442695
      %v1596 = vpow.pop %v1595
      %v1597 = vmul.f32 %v1510, 1.442695
      %v1598 = vpow.pop %v1597
      %v1599 = vmul.f32 %v1511, 1.442695
      %v1600 = vpow.pop %v1599
      %v1601 = vmul.f32 %v1512, 1.442695
      %v1602 = vpow.pop %v1601
      %v1603 = vmul.f32 %v1513, 1.442695
      %v1604 = vpow.pop %v1603
      %v1605 = vmul.f32 %v1514, 1.442695
      %v1606 = vpow.pop %v1605
      %v1607 = vmul.f32 %v1515, 1.442695
      %v1608 = vpow.pop %v1607
      %v1609 = vmul.f32 %v1516, 1.442695
      %v1610 = vpow.pop %v1609
      %v1611 = vmul.f32 %v1517, 1.442695
      %v1612 = vpow.pop %v1611
      %v1613 = vmul.f32 %v1518, 1.442695
      %v1614 = vpow.pop %v1613
      %v1615 = vmul.f32 %v1519, 1.442695
      %v1616 = vpow.pop %v1615
      %v1617 = vmul.f32 %v1520, 1.442695
      %v1618 = vpow.pop %v1617
      %v1619 = vmul.f32 %v1521, 1.442695
      %v1620 = vpow.pop %v1619
      %v1621 = vmul.f32 %v1522, 1.442695
      %v1622 = vpow.pop %v1621
      %v1623 = vmul.f32 %v1523, 1.442695
      %v1624 = vpow.pop %v1623
      %v1625 = vmul.f32 %v1524, 1.442695
      %v1626 = vpow.pop %v1625
      %v1627 = vmul.f32 %v1525, 1.442695
      %v1628 = vpow.pop %v1627
      %v1629 = vmul.f32 %v1526, 1.442695
      %v1630 = vpow.pop %v1629
      %v1631 = vmul.f32 %v1527, 1.442695
      %v1632 = vpow.pop %v1631
      %v1633 = vmul.f32 %v1528, 1.442695
      %v1634 = vpow.pop %v1633
      %v1635 = vmul.f32 %v1529, 1.442695
      %v1636 = vpow.pop %v1635
      %v1637 = vmul.f32 %v1530, 1.442695
      %v1638 = vpow.pop %v1637
      %v1639 = vmul.f32 %v1531, 1.442695
      %v1640 = vpow.pop %v1639
      %v1641 = vmul.f32 %v1532, 1.442695
      %v1642 = vpow.pop %v1641
      %v1643 = vmul.f32 %v1533, 1.442695
      %v1644 = vpow.pop %v1643
      %v1645 = vmul.f32 %v1534, 1.442695
      %v1646 = vpow.pop %v1645
      %v1647 = vmul.f32 %v1535, 1.442695
      %v1648 = vpow.pop %v1647
      %v1649 = vmul.f32 %v1536, 1.442695
      %v1650 = vpow.pop %v1649
      %v1651 = vmul.f32 %v1537, 1.442695
      %v1652 = vpow.pop %v1651
      %v1653 = vmul.f32 %v1538, 1.442695
      %v1654 = vpow.pop %v1653
      %v1655 = vmul.f32 %v1539, 1.442695
      %v1656 = vpow.pop %v1655
      %v1657 = vmul.f32 %v1540, 1.442695
      %v1658 = vpow.pop %v1657
      %v1659 = vmul.f32 %v1541, 1.442695
      %v1660 = vpow.pop %v1659
      %v1661 = vmul.f32 %v1542, 1.442695
      %v1662 = vpow.pop %v1661
      %v1663 = vmul.f32 %v1543, 1.442695
      %v1664 = vpow.pop %v1663
      %v1665 = vmul.f32 %v1544, 1.442695
      %v1666 = vpow.pop %v1665
      %v1667 = vmul.f32 %v1545, 1.442695
      %v1668 = vpow.pop %v1667
      %v1669 = vmul.f32 %v1546, 1.442695
      %v1670 = vpow.pop %v1669
      %v1671 = vmul.f32 %v1547, 1.442695
      %v1672 = vpow.pop %v1671
      %v1673 = vmul.f32 %v1548, 1.442695
      %v1674 = vpow.pop %v1673
      %v1675 = vmul.f32 %v1549, 1.442695
      %v1676 = vpow.pop %v1675
      %v1677 = vmul.f32 %v1550, 1.442695
      %v1678 = vpow.pop %v1677
      %v1679 = vadd.f32 %v1552, %v1554
      %1680 = vadd.xlane.f32.xlu0 %v1679
      %v1681 = vpop.xlane.xlu0 %1680
      %v1682 = vadd.f32 %v1556, %v1558
      %1683 = vadd.xlane.f32.xlu0 %v1682
      %v1684 = vpop.xlane.xlu0 %1683
      %v1685 = vadd.f32 %v1560, %v1562
      %1686 = vadd.xlane.f32.xlu0 %v1685
      %v1687 = vpop.xlane.xlu0 %1686
      %v1688 = vadd.f32 %v1564, %v1566
      %1689 = vadd.xlane.f32.xlu0 %v1688
      %v1690 = vpop.xlane.xlu0 %1689
      %v1691 = vadd.f32 %v1568, %v1570
      %1692 = vadd.xlane.f32.xlu0 %v1691
      %v1693 = vpop.xlane.xlu0 %1692
      %v1694 = vadd.f32 %v1572, %v1574
      %1695 = vadd.xlane.f32.xlu0 %v1694
      %v1696 = vpop.xlane.xlu0 %1695
      %v1697 = vadd.f32 %v1576, %v1578
      %1698 = vadd.xlane.f32.xlu0 %v1697
      %v1699 = vpop.xlane.xlu0 %1698
      %v1700 = vadd.f32 %v1580, %v1582
      %1701 = vadd.xlane.f32.xlu0 %v1700
      %v1702 = vpop.xlane.xlu0 %1701
      %v1703 = vadd.f32 %v1584, %v1586
      %1704 = vadd.xlane.f32.xlu0 %v1703
      %v1705 = vpop.xlane.xlu0 %1704
      %v1706 = vadd.f32 %v1588, %v1590
      %1707 = vadd.xlane.f32.xlu0 %v1706
      %v1708 = vpop.xlane.xlu0 %1707
      %v1709 = vadd.f32 %v1592, %v1594
      %1710 = vadd.xlane.f32.xlu0 %v1709
      %v1711 = vpop.xlane.xlu0 %1710
      %v1712 = vadd.f32 %v1596, %v1598
      %1713 = vadd.xlane.f32.xlu0 %v1712
      %v1714 = vpop.xlane.xlu0 %1713
      %v1715 = vadd.f32 %v1600, %v1602
      %1716 = vadd.xlane.f32.xlu0 %v1715
      %v1717 = vpop.xlane.xlu0 %1716
      %v1718 = vadd.f32 %v1604, %v1606
      %1719 = vadd.xlane.f32.xlu0 %v1718
      %v1720 = vpop.xlane.xlu0 %1719
      %v1721 = vadd.f32 %v1608, %v1610
      %1722 = vadd.xlane.f32.xlu0 %v1721
      %v1723 = vpop.xlane.xlu0 %1722
      %v1724 = vadd.f32 %v1612, %v1614
      %1725 = vadd.xlane.f32.xlu0 %v1724
      %v1726 = vpop.xlane.xlu0 %1725
      %v1727 = vadd.f32 %v1616, %v1618
      %1728 = vadd.xlane.f32.xlu0 %v1727
      %v1729 = vpop.xlane.xlu0 %1728
      %v1730 = vadd.f32 %v1620, %v1622
      %1731 = vadd.xlane.f32.xlu0 %v1730
      %v1732 = vpop.xlane.xlu0 %1731
      %v1733 = vadd.f32 %v1624, %v1626
      %1734 = vadd.xlane.f32.xlu0 %v1733
      %v1735 = vpop.xlane.xlu0 %1734
      %v1736 = vadd.f32 %v1628, %v1630
      %1737 = vadd.xlane.f32.xlu0 %v1736
      %v1738 = vpop.xlane.xlu0 %1737
      %v1739 = vadd.f32 %v1632, %v1634
      %1740 = vadd.xlane.f32.xlu0 %v1739
      %v1741 = vpop.xlane.xlu0 %1740
      %v1742 = vadd.f32 %v1636, %v1638
      %1743 = vadd.xlane.f32.xlu0 %v1742
      %v1744 = vpop.xlane.xlu0 %1743
      %v1745 = vadd.f32 %v1640, %v1642
      %1746 = vadd.xlane.f32.xlu0 %v1745
      %v1747 = vpop.xlane.xlu0 %1746
      %v1748 = vadd.f32 %v1644, %v1646
      %1749 = vadd.xlane.f32.xlu0 %v1748
      %v1750 = vpop.xlane.xlu0 %1749
      %v1751 = vadd.f32 %v1648, %v1650
      %1752 = vadd.xlane.f32.xlu0 %v1751
      %v1753 = vpop.xlane.xlu0 %1752
      %v1754 = vadd.f32 %v1652, %v1654
      %1755 = vadd.xlane.f32.xlu0 %v1754
      %v1756 = vpop.xlane.xlu0 %1755
      %v1757 = vadd.f32 %v1656, %v1658
      %1758 = vadd.xlane.f32.xlu0 %v1757
      %v1759 = vpop.xlane.xlu0 %1758
      %v1760 = vadd.f32 %v1660, %v1662
      %1761 = vadd.xlane.f32.xlu0 %v1760
      %v1762 = vpop.xlane.xlu0 %1761
      %v1763 = vadd.f32 %v1664, %v1666
      %1764 = vadd.xlane.f32.xlu0 %v1763
      %v1765 = vpop.xlane.xlu0 %1764
      %v1766 = vadd.f32 %v1668, %v1670
      %1767 = vadd.xlane.f32.xlu0 %v1766
      %v1768 = vpop.xlane.xlu0 %1767
      %v1769 = vadd.f32 %v1672, %v1674
      %1770 = vadd.xlane.f32.xlu0 %v1769
      %v1771 = vpop.xlane.xlu0 %1770
      %v1772 = vadd.f32 %v1676, %v1678
      %1773 = vadd.xlane.f32.xlu0 %v1772
      %v1774 = vpop.xlane.xlu0 %1773
      %v1775 = vrcp.pop %v1681
      %v1776 = vrcp.pop %v1684
      %v1777 = vrcp.pop %v1687
      %v1778 = vrcp.pop %v1690
      %v1779 = vrcp.pop %v1693
      %v1780 = vrcp.pop %v1696
      %v1781 = vrcp.pop %v1699
      %v1782 = vrcp.pop %v1702
      %v1783 = vrcp.pop %v1705
      %v1784 = vrcp.pop %v1708
      %v1785 = vrcp.pop %v1711
      %v1786 = vrcp.pop %v1714
      %v1787 = vrcp.pop %v1717
      %v1788 = vrcp.pop %v1720
      %v1789 = vrcp.pop %v1723
      %v1790 = vrcp.pop %v1726
      %v1791 = vrcp.pop %v1729
      %v1792 = vrcp.pop %v1732
      %v1793 = vrcp.pop %v1735
      %v1794 = vrcp.pop %v1738
      %v1795 = vrcp.pop %v1741
      %v1796 = vrcp.pop %v1744
      %v1797 = vrcp.pop %v1747
      %v1798 = vrcp.pop %v1750
      %v1799 = vrcp.pop %v1753
      %v1800 = vrcp.pop %v1756
      %v1801 = vrcp.pop %v1759
      %v1802 = vrcp.pop %v1762
      %v1803 = vrcp.pop %v1765
      %v1804 = vrcp.pop %v1768
      %v1805 = vrcp.pop %v1771
      %v1806 = vrcp.pop %v1774
      %v1807 = vmul.f32 %v1552, %v1775
      %v1808 = vmul.f32 %v1554, %v1775
      %v1809 = vmul.f32 %v1556, %v1776
      %v1810 = vmul.f32 %v1558, %v1776
      %v1811 = vmul.f32 %v1560, %v1777
      %v1812 = vmul.f32 %v1562, %v1777
      %v1813 = vmul.f32 %v1564, %v1778
      %v1814 = vmul.f32 %v1566, %v1778
      %v1815 = vmul.f32 %v1568, %v1779
      %v1816 = vmul.f32 %v1570, %v1779
      %v1817 = vmul.f32 %v1572, %v1780
      %v1818 = vmul.f32 %v1574, %v1780
      %v1819 = vmul.f32 %v1576, %v1781
      %v1820 = vmul.f32 %v1578, %v1781
      %v1821 = vmul.f32 %v1580, %v1782
      %v1822 = vmul.f32 %v1582, %v1782
      %v1823 = vmul.f32 %v1584, %v1783
      %v1824 = vmul.f32 %v1586, %v1783
      %v1825 = vmul.f32 %v1588, %v1784
      %v1826 = vmul.f32 %v1590, %v1784
      %v1827 = vmul.f32 %v1592, %v1785
      %v1828 = vmul.f32 %v1594, %v1785
      %v1829 = vmul.f32 %v1596, %v1786
      %v1830 = vmul.f32 %v1598, %v1786
      %v1831 = vmul.f32 %v1600, %v1787
      %v1832 = vmul.f32 %v1602, %v1787
      %v1833 = vmul.f32 %v1604, %v1788
      %v1834 = vmul.f32 %v1606, %v1788
      %v1835 = vmul.f32 %v1608, %v1789
      %v1836 = vmul.f32 %v1610, %v1789
      %v1837 = vmul.f32 %v1612, %v1790
      %v1838 = vmul.f32 %v1614, %v1790
      %v1839 = vmul.f32 %v1616, %v1791
      %v1840 = vmul.f32 %v1618, %v1791
      %v1841 = vmul.f32 %v1620, %v1792
      %v1842 = vmul.f32 %v1622, %v1792
      %v1843 = vmul.f32 %v1624, %v1793
      %v1844 = vmul.f32 %v1626, %v1793
      %v1845 = vmul.f32 %v1628, %v1794
      %v1846 = vmul.f32 %v1630, %v1794
      %v1847 = vmul.f32 %v1632, %v1795
      %v1848 = vmul.f32 %v1634, %v1795
      %v1849 = vmul.f32 %v1636, %v1796
      %v1850 = vmul.f32 %v1638, %v1796
      %v1851 = vmul.f32 %v1640, %v1797
      %v1852 = vmul.f32 %v1642, %v1797
      %v1853 = vmul.f32 %v1644, %v1798
      %v1854 = vmul.f32 %v1646, %v1798
      %v1855 = vmul.f32 %v1648, %v1799
      %v1856 = vmul.f32 %v1650, %v1799
      %v1857 = vmul.f32 %v1652, %v1800
      %v1858 = vmul.f32 %v1654, %v1800
      %v1859 = vmul.f32 %v1656, %v1801
      %v1860 = vmul.f32 %v1658, %v1801
      %v1861 = vmul.f32 %v1660, %v1802
      %v1862 = vmul.f32 %v1662, %v1802
      %v1863 = vmul.f32 %v1664, %v1803
      %v1864 = vmul.f32 %v1666, %v1803
      %v1865 = vmul.f32 %v1668, %v1804
      %v1866 = vmul.f32 %v1670, %v1804
      %v1867 = vmul.f32 %v1672, %v1805
      %v1868 = vmul.f32 %v1674, %v1805
      %v1869 = vmul.f32 %v1676, %v1806
      %v1870 = vmul.f32 %v1678, %v1806
      %v1871 = vpack.c.bf16 %v1809, %v1807
      %v1872 = vpack.c.bf16 %v1810, %v1808
      %v1873 = vpack.c.bf16 %v1813, %v1811
      %v1874 = vpack.c.bf16 %v1814, %v1812
      %v1875 = vpack.c.bf16 %v1817, %v1815
      %v1876 = vpack.c.bf16 %v1818, %v1816
      %v1877 = vpack.c.bf16 %v1821, %v1819
      %v1878 = vpack.c.bf16 %v1822, %v1820
      %v1879 = vpack.c.bf16 %v1825, %v1823
      %v1880 = vpack.c.bf16 %v1826, %v1824
      %v1881 = vpack.c.bf16 %v1829, %v1827
      %v1882 = vpack.c.bf16 %v1830, %v1828
      %v1883 = vpack.c.bf16 %v1833, %v1831
      %v1884 = vpack.c.bf16 %v1834, %v1832
      %v1885 = vpack.c.bf16 %v1837, %v1835
      %v1886 = vpack.c.bf16 %v1838, %v1836
      %v1887 = vpack.c.bf16 %v1841, %v1839
      %v1888 = vpack.c.bf16 %v1842, %v1840
      %v1889 = vpack.c.bf16 %v1845, %v1843
      %v1890 = vpack.c.bf16 %v1846, %v1844
      %v1891 = vpack.c.bf16 %v1849, %v1847
      %v1892 = vpack.c.bf16 %v1850, %v1848
      %v1893 = vpack.c.bf16 %v1853, %v1851
      %v1894 = vpack.c.bf16 %v1854, %v1852
      %v1895 = vpack.c.bf16 %v1857, %v1855
      %v1896 = vpack.c.bf16 %v1858, %v1856
      %v1897 = vpack.c.bf16 %v1861, %v1859
      %v1898 = vpack.c.bf16 %v1862, %v1860
      %v1899 = vpack.c.bf16 %v1865, %v1863
      %v1900 = vpack.c.bf16 %v1866, %v1864
      %v1901 = vpack.c.bf16 %v1869, %v1867
      %v1902 = vpack.c.bf16 %v1870, %v1868
      %v1903 = vpack.c.bf16 %v946, %v943
      %v1904 = vpack.c.bf16 %v954, %v951
      %v1905 = vpack.c.bf16 %v962, %v959
      %v1906 = vpack.c.bf16 %v970, %v967
      %v1907 = vpack.c.bf16 %v978, %v975
      %v1908 = vpack.c.bf16 %v986, %v983
      %v1909 = vpack.c.bf16 %v994, %v991
      %v1910 = vpack.c.bf16 %v1002, %v999
      %v1911 = vpack.c.bf16 %v1010, %v1007
      %v1912 = vpack.c.bf16 %v1018, %v1015
      %v1913 = vpack.c.bf16 %v1026, %v1023
      %v1914 = vpack.c.bf16 %v1034, %v1031
      %v1915 = vpack.c.bf16 %v1042, %v1039
      %v1916 = vpack.c.bf16 %v1050, %v1047
      %v1917 = vpack.c.bf16 %v1058, %v1055
      %v1918 = vpack.c.bf16 %v1066, %v1063
      %1919 = vmatprep.subr.bf16.mxu0 0
      %1920 = vmatpush1.bf16.msra.mxu0 %v1910
      %1921 = vmatprep.subr.bf16.mxu0 0
      %1922 = vmatpush1.bf16.msra.mxu0 %v1909
      %1923 = vmatprep.subr.bf16.mxu0 0
      %1924 = vmatpush1.bf16.msra.mxu0 %v1908
      %1925 = vmatprep.subr.bf16.mxu0 0
      %1926 = vmatpush1.bf16.msra.mxu0 %v1907
      %1927 = vmatprep.subr.bf16.mxu0 0
      %1928 = vmatpush1.bf16.msra.mxu0 %v1906
      %1929 = vmatprep.subr.bf16.mxu0 0
      %1930 = vmatpush1.bf16.msra.mxu0 %v1905
      %1931 = vmatprep.subr.bf16.mxu0 0
      %1932 = vmatpush1.bf16.msra.mxu0 %v1904
      %1933 = vmatprep.subr.bf16.mxu0 0
      %1934 = vmatpush1.bf16.msra.mxu0 %v1903
      %1935 = vmatprep.subr.bf16.mxu0 0
      %1936 = vmatpush2.bf16.msra.mxu0 %v1918
      %1937 = vmatprep.subr.bf16.mxu0 0
      %1938 = vmatpush2.bf16.msra.mxu0 %v1917
      %1939 = vmatprep.subr.bf16.mxu0 0
      %1940 = vmatpush2.bf16.msra.mxu0 %v1916
      %1941 = vmatprep.subr.bf16.mxu0 0
      %1942 = vmatpush2.bf16.msra.mxu0 %v1915
      %1943 = vmatprep.subr.bf16.mxu0 0
      %1944 = vmatpush2.bf16.msra.mxu0 %v1914
      %1945 = vmatprep.subr.bf16.mxu0 0
      %1946 = vmatpush2.bf16.msra.mxu0 %v1913
      %1947 = vmatprep.subr.bf16.mxu0 0
      %1948 = vmatpush2.bf16.msra.mxu0 %v1912
      %1949 = vmatprep.subr.bf16.mxu0 0
      %1950 = vmatpush2.bf16.msra.mxu0 %v1911
      %1951 = vmatprep.mubr.bf16.mxu0 %v1872
      %1952 = vmatmul.mubr.bf16.gmra.mxu0 %v1871
      %v1953 = vpop.f32.mrf.mxu0
      %v1954 = vadd.f32 0.0, %v1953
      %v1955 = vpop.f32.mrf.mxu0
      %v1956 = vpop.f32.mrf.mxu0
      %v1957 = vadd.f32 0.0, %v1956
      %v1958 = vpop.f32.mrf.mxu0
      %1959 = vmatprep.mubr.bf16.mxu0 %v1874
      %1960 = vmatmul.mubr.bf16.gmra.mxu0 %v1873
      %v1961 = vpop.f32.mrf.mxu0
      %v1962 = vadd.f32 0.0, %v1961
      %v1963 = vpop.f32.mrf.mxu0
      %v1964 = vpop.f32.mrf.mxu0
      %v1965 = vadd.f32 0.0, %v1964
      %v1966 = vpop.f32.mrf.mxu0
      %1967 = vmatprep.mubr.bf16.mxu0 %v1876
      %1968 = vmatmul.mubr.bf16.gmra.mxu0 %v1875
      %v1969 = vpop.f32.mrf.mxu0
      %v1970 = vadd.f32 0.0, %v1969
      %v1971 = vpop.f32.mrf.mxu0
      %v1972 = vpop.f32.mrf.mxu0
      %v1973 = vadd.f32 0.0, %v1972
      %v1974 = vpop.f32.mrf.mxu0
      %1975 = vmatprep.mubr.bf16.mxu0 %v1878
      %1976 = vmatmul.mubr.bf16.gmra.mxu0 %v1877
      %v1977 = vpop.f32.mrf.mxu0
      %v1978 = vadd.f32 0.0, %v1977
      %v1979 = vpop.f32.mrf.mxu0
      %v1980 = vpop.f32.mrf.mxu0
      %v1981 = vadd.f32 0.0, %v1980
      %v1982 = vpop.f32.mrf.mxu0
      %1983 = vmatprep.mubr.bf16.mxu0 %v1880
      %1984 = vmatmul.mubr.bf16.gmra.mxu0 %v1879
      %v1985 = vpop.f32.mrf.mxu0
      %v1986 = vadd.f32 0.0, %v1985
      %v1987 = vpop.f32.mrf.mxu0
      %v1988 = vpop.f32.mrf.mxu0
      %v1989 = vadd.f32 0.0, %v1988
      %v1990 = vpop.f32.mrf.mxu0
      %1991 = vmatprep.mubr.bf16.mxu0 %v1882
      %1992 = vmatmul.mubr.bf16.gmra.mxu0 %v1881
      %v1993 = vpop.f32.mrf.mxu0
      %v1994 = vadd.f32 0.0, %v1993
      %v1995 = vpop.f32.mrf.mxu0
      %v1996 = vpop.f32.mrf.mxu0
      %v1997 = vadd.f32 0.0, %v1996
      %v1998 = vpop.f32.mrf.mxu0
      %1999 = vmatprep.mubr.bf16.mxu0 %v1884
      %2000 = vmatmul.mubr.bf16.gmra.mxu0 %v1883
      %v2001 = vpop.f32.mrf.mxu0
      %v2002 = vadd.f32 0.0, %v2001
      %v2003 = vpop.f32.mrf.mxu0
      %v2004 = vpop.f32.mrf.mxu0
      %v2005 = vadd.f32 0.0, %v2004
      %v2006 = vpop.f32.mrf.mxu0
      %2007 = vmatprep.mubr.bf16.mxu0 %v1886
      %2008 = vmatmul.mubr.bf16.gmra.mxu0 %v1885
      %v2009 = vpop.f32.mrf.mxu0
      %v2010 = vadd.f32 0.0, %v2009
      %v2011 = vpop.f32.mrf.mxu0
      %v2012 = vpop.f32.mrf.mxu0
      %v2013 = vadd.f32 0.0, %v2012
      %v2014 = vpop.f32.mrf.mxu0
      %2015 = vmatprep.mubr.bf16.mxu0 %v1888
      %2016 = vmatmul.mubr.bf16.gmra.mxu0 %v1887
      %v2017 = vpop.f32.mrf.mxu0
      %v2018 = vadd.f32 0.0, %v2017
      %v2019 = vpop.f32.mrf.mxu0
      %v2020 = vpop.f32.mrf.mxu0
      %v2021 = vadd.f32 0.0, %v2020
      %v2022 = vpop.f32.mrf.mxu0
      %2023 = vmatprep.mubr.bf16.mxu0 %v1890
      %2024 = vmatmul.mubr.bf16.gmra.mxu0 %v1889
      %v2025 = vpop.f32.mrf.mxu0
      %v2026 = vadd.f32 0.0, %v2025
      %v2027 = vpop.f32.mrf.mxu0
      %v2028 = vpop.f32.mrf.mxu0
      %v2029 = vadd.f32 0.0, %v2028
      %v2030 = vpop.f32.mrf.mxu0
      %2031 = vmatprep.mubr.bf16.mxu0 %v1892
      %2032 = vmatmul.mubr.bf16.gmra.mxu0 %v1891
      %v2033 = vpop.f32.mrf.mxu0
      %v2034 = vadd.f32 0.0, %v2033
      %v2035 = vpop.f32.mrf.mxu0
      %v2036 = vpop.f32.mrf.mxu0
      %v2037 = vadd.f32 0.0, %v2036
      %v2038 = vpop.f32.mrf.mxu0
      %2039 = vmatprep.mubr.bf16.mxu0 %v1894
      %2040 = vmatmul.mubr.bf16.gmra.mxu0 %v1893
      %v2041 = vpop.f32.mrf.mxu0
      %v2042 = vadd.f32 0.0, %v2041
      %v2043 = vpop.f32.mrf.mxu0
      %v2044 = vpop.f32.mrf.mxu0
      %v2045 = vadd.f32 0.0, %v2044
      %v2046 = vpop.f32.mrf.mxu0
      %2047 = vmatprep.mubr.bf16.mxu0 %v1896
      %2048 = vmatmul.mubr.bf16.gmra.mxu0 %v1895
      %v2049 = vpop.f32.mrf.mxu0
      %v2050 = vadd.f32 0.0, %v2049
      %v2051 = vpop.f32.mrf.mxu0
      %v2052 = vpop.f32.mrf.mxu0
      %v2053 = vadd.f32 0.0, %v2052
      %v2054 = vpop.f32.mrf.mxu0
      %2055 = vmatprep.mubr.bf16.mxu0 %v1898
      %2056 = vmatmul.mubr.bf16.gmra.mxu0 %v1897
      %v2057 = vpop.f32.mrf.mxu0
      %v2058 = vadd.f32 0.0, %v2057
      %v2059 = vpop.f32.mrf.mxu0
      %v2060 = vpop.f32.mrf.mxu0
      %v2061 = vadd.f32 0.0, %v2060
      %v2062 = vpop.f32.mrf.mxu0
      %2063 = vmatprep.mubr.bf16.mxu0 %v1900
      %2064 = vmatmul.mubr.bf16.gmra.mxu0 %v1899
      %v2065 = vpop.f32.mrf.mxu0
      %v2066 = vadd.f32 0.0, %v2065
      %v2067 = vpop.f32.mrf.mxu0
      %v2068 = vpop.f32.mrf.mxu0
      %v2069 = vadd.f32 0.0, %v2068
      %v2070 = vpop.f32.mrf.mxu0
      %2071 = vmatprep.mubr.bf16.mxu0 %v1902
      %2072 = vmatmul.mubr.bf16.gmra.mxu0 %v1901
      %v2073 = vpop.f32.mrf.mxu0
      %v2074 = vadd.f32 0.0, %v2073
      %v2075 = vpop.f32.mrf.mxu0
      %v2076 = vpop.f32.mrf.mxu0
      %v2077 = vadd.f32 0.0, %v2076
      %v2078 = vpop.f32.mrf.mxu0
      %2079 = vdwg.mxu0
      %v2080 = vpack.c.bf16 %v1957, %v1954
      %v2081 = vpack.c.bf16 %v1965, %v1962
      %v2082 = vpack.c.bf16 %v1973, %v1970
      %v2083 = vpack.c.bf16 %v1981, %v1978
      %v2084 = vpack.c.bf16 %v1989, %v1986
      %v2085 = vpack.c.bf16 %v1997, %v1994
      %v2086 = vpack.c.bf16 %v2005, %v2002
      %v2087 = vpack.c.bf16 %v2013, %v2010
      %v2088 = vpack.c.bf16 %v2021, %v2018
      %v2089 = vpack.c.bf16 %v2029, %v2026
      %v2090 = vpack.c.bf16 %v2037, %v2034
      %v2091 = vpack.c.bf16 %v2045, %v2042
      %v2092 = vpack.c.bf16 %v2053, %v2050
      %v2093 = vpack.c.bf16 %v2061, %v2058
      %v2094 = vpack.c.bf16 %v2069, %v2066
      %v2095 = vpack.c.bf16 %v2077, %v2074
      %v2096 = vld [vmem:[%s7] sm:$0xf]
      %s2097 = scalar_lea.vmem %s1, 20
      %v2098 = vld [vmem:[%s2097] sm:$0xf]
      %v2099 = vld [vmem:[%s2097 + $0x4] sm:$0xf]
      %v2100 = vld [vmem:[%s2097 + $0x8] sm:$0xf]
      %v2101 = vld [vmem:[%s2097 + $0xc] sm:$0xf]
      %v2102 = vld [vmem:[%s2097 + $0x10] sm:$0x3]
      %s2103 = scalar_lea.vmem %s4, 1
      %v2104 = vld [vmem:[%s2103] sm:$0x1]
      %v2106 = vlaneseq
      %v2107 = vshrl.u32 %v2106, 7
      %v2108 = vsub.s32 0, %v2107
      %v2109 = vrot.slane %v2104, %v2108
      %v2116 = vunpack.c.l.b16 %v2098
      %v2117 = vunpack.c.l.b16 %v2099
      %v2118 = vunpack.c.l.b16 %v2100
      %v2119 = vunpack.c.l.b16 %v2101
      %v2120 = vunpack.c.l.b16 %v2102
      %v2121 = vpack.c.b16 %v2117, %v2116
      %v2122 = vpack.c.b16 %v2119, %v2118
      %v2123 = vpack.c.b16 %v2120, %v2120
      %v2127 = vsel %vm522, %v2123, 0
      %2129 = vmatprep.subr.bf16.mxu0 0
      %2130 = vmatpush1.bf16.msra.mxu0 0
      %2131 = vmatprep.subr.bf16.mxu0 0
      %2132 = vmatpush1.bf16.msra.mxu0 0
      %2133 = vmatprep.subr.bf16.mxu0 0
      %2134 = vmatpush1.bf16.msra.mxu0 0
      %2135 = vmatprep.subr.bf16.mxu0 0
      %2136 = vmatpush1.bf16.msra.mxu0 0
      %2137 = vmatprep.subr.bf16.mxu0 0
      %2138 = vmatpush1.bf16.msra.mxu0 0
      %2139 = vmatprep.subr.bf16.mxu0 0
      %2140 = vmatpush1.bf16.msra.mxu0 %v2127
      %2141 = vmatprep.subr.bf16.mxu0 0
      %2142 = vmatpush1.bf16.msra.mxu0 %v2122
      %2143 = vmatprep.subr.bf16.mxu0 0
      %2144 = vmatpush1.bf16.msra.mxu0 %v2121
      %2145 = vmatprep.subr.bf16.mxu0 0
      %2146 = vmatpush2.bf16.msra.mxu0 0
      %2147 = vmatprep.subr.bf16.mxu0 0
      %2148 = vmatpush2.bf16.msra.mxu0 0
      %2149 = vmatprep.subr.bf16.mxu0 0
      %2150 = vmatpush2.bf16.msra.mxu0 0
      %2151 = vmatprep.subr.bf16.mxu0 0
      %2152 = vmatpush2.bf16.msra.mxu0 0
      %2153 = vmatprep.subr.bf16.mxu0 0
      %2154 = vmatpush2.bf16.msra.mxu0 0
      %2155 = vmatprep.subr.bf16.mxu0 0
      %2156 = vmatpush2.bf16.msra.mxu0 0
      %2157 = vmatprep.subr.bf16.mxu0 0
      %2158 = vmatpush2.bf16.msra.mxu0 0
      %2159 = vmatprep.subr.bf16.mxu0 0
      %2160 = vmatpush2.bf16.msra.mxu0 0
      %2161 = vmatprep.mubr.bf16.mxu0 0
      %2162 = vmatmul.mubr.bf16.gmra.mxu0 %v475
      %v2163 = vpop.f32.mrf.mxu0
      %v2164 = vadd.f32 %v2109, %v2163
      %v2165 = vpop.f32.mrf.mxu0
      %v2166 = vpop.f32.mrf.mxu0
      %v2167 = vadd.f32 %v2109, %v2166
      %v2168 = vpop.f32.mrf.mxu0
      %2169 = vmatprep.mubr.bf16.mxu0 0
      %2170 = vmatmul.mubr.bf16.gmra.mxu0 %v478
      %v2171 = vpop.f32.mrf.mxu0
      %v2172 = vadd.f32 %v2109, %v2171
      %v2173 = vpop.f32.mrf.mxu0
      %v2174 = vpop.f32.mrf.mxu0
      %v2175 = vadd.f32 %v2109, %v2174
      %v2176 = vpop.f32.mrf.mxu0
      %2177 = vmatprep.mubr.bf16.mxu0 0
      %2178 = vmatmul.mubr.bf16.gmra.mxu0 %v481
      %v2179 = vpop.f32.mrf.mxu0
      %v2180 = vadd.f32 %v2109, %v2179
      %v2181 = vpop.f32.mrf.mxu0
      %v2182 = vpop.f32.mrf.mxu0
      %v2183 = vadd.f32 %v2109, %v2182
      %v2184 = vpop.f32.mrf.mxu0
      %2185 = vmatprep.mubr.bf16.mxu0 0
      %2186 = vmatmul.mubr.bf16.gmra.mxu0 %v484
      %v2187 = vpop.f32.mrf.mxu0
      %v2188 = vadd.f32 %v2109, %v2187
      %v2189 = vpop.f32.mrf.mxu0
      %v2190 = vpop.f32.mrf.mxu0
      %v2191 = vadd.f32 %v2109, %v2190
      %v2192 = vpop.f32.mrf.mxu0
      %2193 = vmatprep.mubr.bf16.mxu0 0
      %2194 = vmatmul.mubr.bf16.gmra.mxu0 %v487
      %v2195 = vpop.f32.mrf.mxu0
      %v2196 = vadd.f32 %v2109, %v2195
      %v2197 = vpop.f32.mrf.mxu0
      %v2198 = vpop.f32.mrf.mxu0
      %v2199 = vadd.f32 %v2109, %v2198
      %v2200 = vpop.f32.mrf.mxu0
      %2201 = vmatprep.mubr.bf16.mxu0 0
      %2202 = vmatmul.mubr.bf16.gmra.mxu0 %v490
      %v2203 = vpop.f32.mrf.mxu0
      %v2204 = vadd.f32 %v2109, %v2203
      %v2205 = vpop.f32.mrf.mxu0
      %v2206 = vpop.f32.mrf.mxu0
      %v2207 = vadd.f32 %v2109, %v2206
      %v2208 = vpop.f32.mrf.mxu0
      %2209 = vmatprep.mubr.bf16.mxu0 0
      %2210 = vmatmul.mubr.bf16.gmra.mxu0 %v493
      %v2211 = vpop.f32.mrf.mxu0
      %v2212 = vadd.f32 %v2109, %v2211
      %v2213 = vpop.f32.mrf.mxu0
      %v2214 = vpop.f32.mrf.mxu0
      %v2215 = vadd.f32 %v2109, %v2214
      %v2216 = vpop.f32.mrf.mxu0
      %2217 = vmatprep.mubr.bf16.mxu0 0
      %2218 = vmatmul.mubr.bf16.gmra.mxu0 %v496
      %v2219 = vpop.f32.mrf.mxu0
      %v2220 = vadd.f32 %v2109, %v2219
      %v2221 = vpop.f32.mrf.mxu0
      %v2222 = vpop.f32.mrf.mxu0
      %v2223 = vadd.f32 %v2109, %v2222
      %v2224 = vpop.f32.mrf.mxu0
      %2225 = vmatprep.mubr.bf16.mxu0 0
      %2226 = vmatmul.mubr.bf16.gmra.mxu0 %v499
      %v2227 = vpop.f32.mrf.mxu0
      %v2228 = vadd.f32 %v2109, %v2227
      %v2229 = vpop.f32.mrf.mxu0
      %v2230 = vpop.f32.mrf.mxu0
      %v2231 = vadd.f32 %v2109, %v2230
      %v2232 = vpop.f32.mrf.mxu0
      %2233 = vmatprep.mubr.bf16.mxu0 0
      %2234 = vmatmul.mubr.bf16.gmra.mxu0 %v502
      %v2235 = vpop.f32.mrf.mxu0
      %v2236 = vadd.f32 %v2109, %v2235
      %v2237 = vpop.f32.mrf.mxu0
      %v2238 = vpop.f32.mrf.mxu0
      %v2239 = vadd.f32 %v2109, %v2238
      %v2240 = vpop.f32.mrf.mxu0
      %2241 = vmatprep.mubr.bf16.mxu0 0
      %2242 = vmatmul.mubr.bf16.gmra.mxu0 %v505
      %v2243 = vpop.f32.mrf.mxu0
      %v2244 = vadd.f32 %v2109, %v2243
      %v2245 = vpop.f32.mrf.mxu0
      %v2246 = vpop.f32.mrf.mxu0
      %v2247 = vadd.f32 %v2109, %v2246
      %v2248 = vpop.f32.mrf.mxu0
      %2249 = vmatprep.mubr.bf16.mxu0 0
      %2250 = vmatmul.mubr.bf16.gmra.mxu0 %v508
      %v2251 = vpop.f32.mrf.mxu0
      %v2252 = vadd.f32 %v2109, %v2251
      %v2253 = vpop.f32.mrf.mxu0
      %v2254 = vpop.f32.mrf.mxu0
      %v2255 = vadd.f32 %v2109, %v2254
      %v2256 = vpop.f32.mrf.mxu0
      %2257 = vmatprep.mubr.bf16.mxu0 0
      %2258 = vmatmul.mubr.bf16.gmra.mxu0 %v511
      %v2259 = vpop.f32.mrf.mxu0
      %v2260 = vadd.f32 %v2109, %v2259
      %v2261 = vpop.f32.mrf.mxu0
      %v2262 = vpop.f32.mrf.mxu0
      %v2263 = vadd.f32 %v2109, %v2262
      %v2264 = vpop.f32.mrf.mxu0
      %2265 = vmatprep.mubr.bf16.mxu0 0
      %2266 = vmatmul.mubr.bf16.gmra.mxu0 %v514
      %v2267 = vpop.f32.mrf.mxu0
      %v2268 = vadd.f32 %v2109, %v2267
      %v2269 = vpop.f32.mrf.mxu0
      %v2270 = vpop.f32.mrf.mxu0
      %v2271 = vadd.f32 %v2109, %v2270
      %v2272 = vpop.f32.mrf.mxu0
      %2273 = vmatprep.mubr.bf16.mxu0 0
      %2274 = vmatmul.mubr.bf16.gmra.mxu0 %v517
      %v2275 = vpop.f32.mrf.mxu0
      %v2276 = vadd.f32 %v2109, %v2275
      %v2277 = vpop.f32.mrf.mxu0
      %v2278 = vpop.f32.mrf.mxu0
      %v2279 = vadd.f32 %v2109, %v2278
      %v2280 = vpop.f32.mrf.mxu0
      %2281 = vmatprep.mubr.bf16.mxu0 0
      %2282 = vmatmul.mubr.bf16.gmra.mxu0 %v520
      %v2283 = vpop.f32.mrf.mxu0
      %v2284 = vadd.f32 %v2109, %v2283
      %v2285 = vpop.f32.mrf.mxu0
      %v2286 = vpop.f32.mrf.mxu0
      %v2287 = vadd.f32 %v2109, %v2286
      %v2288 = vpop.f32.mrf.mxu0
      %2289 = vdwg.mxu0
      %s2290 = scalar_lea.vmem %s2, 20
      %v2291 = vld [vmem:[%s2290] sm:$0xf]
      %v2292 = vld [vmem:[%s2290 + $0x4] sm:$0xf]
      %v2293 = vld [vmem:[%s2290 + $0x8] sm:$0xf]
      %v2294 = vld [vmem:[%s2290 + $0xc] sm:$0xf]
      %v2295 = vld [vmem:[%s2290 + $0x10] sm:$0x3]
      %s2296 = scalar_lea.vmem %s5, 1
      %v2297 = vld [vmem:[%s2296] sm:$0x1]
      %v2299 = vlaneseq
      %v2300 = vshrl.u32 %v2299, 7
      %v2301 = vsub.s32 0, %v2300
      %v2302 = vrot.slane %v2297, %v2301
      %v2309 = vunpack.c.l.b16 %v2291
      %v2310 = vunpack.c.l.b16 %v2292
      %v2311 = vunpack.c.l.b16 %v2293
      %v2312 = vunpack.c.l.b16 %v2294
      %v2313 = vunpack.c.l.b16 %v2295
      %v2314 = vpack.c.b16 %v2310, %v2309
      %v2315 = vpack.c.b16 %v2312, %v2311
      %v2316 = vpack.c.b16 %v2313, %v2313
      %v2320 = vsel %vm522, %v2316, 0
      %2322 = vmatprep.subr.bf16.mxu0 0
      %2323 = vmatpush1.bf16.msra.mxu0 0
      %2324 = vmatprep.subr.bf16.mxu0 0
      %2325 = vmatpush1.bf16.msra.mxu0 0
      %2326 = vmatprep.subr.bf16.mxu0 0
      %2327 = vmatpush1.bf16.msra.mxu0 0
      %2328 = vmatprep.subr.bf16.mxu0 0
      %2329 = vmatpush1.bf16.msra.mxu0 0
      %2330 = vmatprep.subr.bf16.mxu0 0
      %2331 = vmatpush1.bf16.msra.mxu0 0
      %2332 = vmatprep.subr.bf16.mxu0 0
      %2333 = vmatpush1.bf16.msra.mxu0 %v2320
      %2334 = vmatprep.subr.bf16.mxu0 0
      %2335 = vmatpush1.bf16.msra.mxu0 %v2315
      %2336 = vmatprep.subr.bf16.mxu0 0
      %2337 = vmatpush1.bf16.msra.mxu0 %v2314
      %2338 = vmatprep.subr.bf16.mxu0 0
      %2339 = vmatpush2.bf16.msra.mxu0 0
      %2340 = vmatprep.subr.bf16.mxu0 0
      %2341 = vmatpush2.bf16.msra.mxu0 0
      %2342 = vmatprep.subr.bf16.mxu0 0
      %2343 = vmatpush2.bf16.msra.mxu0 0
      %2344 = vmatprep.subr.bf16.mxu0 0
      %2345 = vmatpush2.bf16.msra.mxu0 0
      %2346 = vmatprep.subr.bf16.mxu0 0
      %2347 = vmatpush2.bf16.msra.mxu0 0
      %2348 = vmatprep.subr.bf16.mxu0 0
      %2349 = vmatpush2.bf16.msra.mxu0 0
      %2350 = vmatprep.subr.bf16.mxu0 0
      %2351 = vmatpush2.bf16.msra.mxu0 0
      %2352 = vmatprep.subr.bf16.mxu0 0
      %2353 = vmatpush2.bf16.msra.mxu0 0
      %2354 = vmatprep.mubr.bf16.mxu0 0
      %2355 = vmatmul.mubr.bf16.gmra.mxu0 %v475
      %v2356 = vpop.f32.mrf.mxu0
      %v2357 = vadd.f32 %v2302, %v2356
      %v2358 = vpop.f32.mrf.mxu0
      %v2359 = vpop.f32.mrf.mxu0
      %v2360 = vadd.f32 %v2302, %v2359
      %v2361 = vpop.f32.mrf.mxu0
      %2362 = vmatprep.mubr.bf16.mxu0 0
      %2363 = vmatmul.mubr.bf16.gmra.mxu0 %v478
      %v2364 = vpop.f32.mrf.mxu0
      %v2365 = vadd.f32 %v2302, %v2364
      %v2366 = vpop.f32.mrf.mxu0
      %v2367 = vpop.f32.mrf.mxu0
      %v2368 = vadd.f32 %v2302, %v2367
      %v2369 = vpop.f32.mrf.mxu0
      %2370 = vmatprep.mubr.bf16.mxu0 0
      %2371 = vmatmul.mubr.bf16.gmra.mxu0 %v481
      %v2372 = vpop.f32.mrf.mxu0
      %v2373 = vadd.f32 %v2302, %v2372
      %v2374 = vpop.f32.mrf.mxu0
      %v2375 = vpop.f32.mrf.mxu0
      %v2376 = vadd.f32 %v2302, %v2375
      %v2377 = vpop.f32.mrf.mxu0
      %2378 = vmatprep.mubr.bf16.mxu0 0
      %2379 = vmatmul.mubr.bf16.gmra.mxu0 %v484
      %v2380 = vpop.f32.mrf.mxu0
      %v2381 = vadd.f32 %v2302, %v2380
      %v2382 = vpop.f32.mrf.mxu0
      %v2383 = vpop.f32.mrf.mxu0
      %v2384 = vadd.f32 %v2302, %v2383
      %v2385 = vpop.f32.mrf.mxu0
      %2386 = vmatprep.mubr.bf16.mxu0 0
      %2387 = vmatmul.mubr.bf16.gmra.mxu0 %v487
      %v2388 = vpop.f32.mrf.mxu0
      %v2389 = vadd.f32 %v2302, %v2388
      %v2390 = vpop.f32.mrf.mxu0
      %v2391 = vpop.f32.mrf.mxu0
      %v2392 = vadd.f32 %v2302, %v2391
      %v2393 = vpop.f32.mrf.mxu0
      %2394 = vmatprep.mubr.bf16.mxu0 0
      %2395 = vmatmul.mubr.bf16.gmra.mxu0 %v490
      %v2396 = vpop.f32.mrf.mxu0
      %v2397 = vadd.f32 %v2302, %v2396
      %v2398 = vpop.f32.mrf.mxu0
      %v2399 = vpop.f32.mrf.mxu0
      %v2400 = vadd.f32 %v2302, %v2399
      %v2401 = vpop.f32.mrf.mxu0
      %2402 = vmatprep.mubr.bf16.mxu0 0
      %2403 = vmatmul.mubr.bf16.gmra.mxu0 %v493
      %v2404 = vpop.f32.mrf.mxu0
      %v2405 = vadd.f32 %v2302, %v2404
      %v2406 = vpop.f32.mrf.mxu0
      %v2407 = vpop.f32.mrf.mxu0
      %v2408 = vadd.f32 %v2302, %v2407
      %v2409 = vpop.f32.mrf.mxu0
      %2410 = vmatprep.mubr.bf16.mxu0 0
      %2411 = vmatmul.mubr.bf16.gmra.mxu0 %v496
      %v2412 = vpop.f32.mrf.mxu0
      %v2413 = vadd.f32 %v2302, %v2412
      %v2414 = vpop.f32.mrf.mxu0
      %v2415 = vpop.f32.mrf.mxu0
      %v2416 = vadd.f32 %v2302, %v2415
      %v2417 = vpop.f32.mrf.mxu0
      %2418 = vmatprep.mubr.bf16.mxu0 0
      %2419 = vmatmul.mubr.bf16.gmra.mxu0 %v499
      %v2420 = vpop.f32.mrf.mxu0
      %v2421 = vadd.f32 %v2302, %v2420
      %v2422 = vpop.f32.mrf.mxu0
      %v2423 = vpop.f32.mrf.mxu0
      %v2424 = vadd.f32 %v2302, %v2423
      %v2425 = vpop.f32.mrf.mxu0
      %2426 = vmatprep.mubr.bf16.mxu0 0
      %2427 = vmatmul.mubr.bf16.gmra.mxu0 %v502
      %v2428 = vpop.f32.mrf.mxu0
      %v2429 = vadd.f32 %v2302, %v2428
      %v2430 = vpop.f32.mrf.mxu0
      %v2431 = vpop.f32.mrf.mxu0
      %v2432 = vadd.f32 %v2302, %v2431
      %v2433 = vpop.f32.mrf.mxu0
      %2434 = vmatprep.mubr.bf16.mxu0 0
      %2435 = vmatmul.mubr.bf16.gmra.mxu0 %v505
      %v2436 = vpop.f32.mrf.mxu0
      %v2437 = vadd.f32 %v2302, %v2436
      %v2438 = vpop.f32.mrf.mxu0
      %v2439 = vpop.f32.mrf.mxu0
      %v2440 = vadd.f32 %v2302, %v2439
      %v2441 = vpop.f32.mrf.mxu0
      %2442 = vmatprep.mubr.bf16.mxu0 0
      %2443 = vmatmul.mubr.bf16.gmra.mxu0 %v508
      %v2444 = vpop.f32.mrf.mxu0
      %v2445 = vadd.f32 %v2302, %v2444
      %v2446 = vpop.f32.mrf.mxu0
      %v2447 = vpop.f32.mrf.mxu0
      %v2448 = vadd.f32 %v2302, %v2447
      %v2449 = vpop.f32.mrf.mxu0
      %2450 = vmatprep.mubr.bf16.mxu0 0
      %2451 = vmatmul.mubr.bf16.gmra.mxu0 %v511
      %v2452 = vpop.f32.mrf.mxu0
      %v2453 = vadd.f32 %v2302, %v2452
      %v2454 = vpop.f32.mrf.mxu0
      %v2455 = vpop.f32.mrf.mxu0
      %v2456 = vadd.f32 %v2302, %v2455
      %v2457 = vpop.f32.mrf.mxu0
      %2458 = vmatprep.mubr.bf16.mxu0 0
      %2459 = vmatmul.mubr.bf16.gmra.mxu0 %v514
      %v2460 = vpop.f32.mrf.mxu0
      %v2461 = vadd.f32 %v2302, %v2460
      %v2462 = vpop.f32.mrf.mxu0
      %v2463 = vpop.f32.mrf.mxu0
      %v2464 = vadd.f32 %v2302, %v2463
      %v2465 = vpop.f32.mrf.mxu0
      %2466 = vmatprep.mubr.bf16.mxu0 0
      %2467 = vmatmul.mubr.bf16.gmra.mxu0 %v517
      %v2468 = vpop.f32.mrf.mxu0
      %v2469 = vadd.f32 %v2302, %v2468
      %v2470 = vpop.f32.mrf.mxu0
      %v2471 = vpop.f32.mrf.mxu0
      %v2472 = vadd.f32 %v2302, %v2471
      %v2473 = vpop.f32.mrf.mxu0
      %2474 = vmatprep.mubr.bf16.mxu0 0
      %2475 = vmatmul.mubr.bf16.gmra.mxu0 %v520
      %v2476 = vpop.f32.mrf.mxu0
      %v2477 = vadd.f32 %v2302, %v2476
      %v2478 = vpop.f32.mrf.mxu0
      %v2479 = vpop.f32.mrf.mxu0
      %v2480 = vadd.f32 %v2302, %v2479
      %v2481 = vpop.f32.mrf.mxu0
      %2482 = vdwg.mxu0
      %s2483 = scalar_lea.vmem %s3, 20
      %v2484 = vld [vmem:[%s2483] sm:$0xf]
      %v2485 = vld [vmem:[%s2483 + $0x4] sm:$0xf]
      %v2486 = vld [vmem:[%s2483 + $0x8] sm:$0xf]
      %v2487 = vld [vmem:[%s2483 + $0xc] sm:$0xf]
      %v2488 = vld [vmem:[%s2483 + $0x10] sm:$0x3]
      %s2489 = scalar_lea.vmem %s6, 1
      %v2490 = vld [vmem:[%s2489] sm:$0x1]
      %v2492 = vlaneseq
      %v2493 = vshrl.u32 %v2492, 7
      %v2494 = vsub.s32 0, %v2493
      %v2495 = vrot.slane %v2490, %v2494
      %v2502 = vunpack.c.l.b16 %v2484
      %v2503 = vunpack.c.l.b16 %v2485
      %v2504 = vunpack.c.l.b16 %v2486
      %v2505 = vunpack.c.l.b16 %v2487
      %v2506 = vunpack.c.l.b16 %v2488
      %v2507 = vpack.c.b16 %v2503, %v2502
      %v2508 = vpack.c.b16 %v2505, %v2504
      %v2509 = vpack.c.b16 %v2506, %v2506
      %v2513 = vsel %vm522, %v2509, 0
      %2515 = vmatprep.subr.bf16.mxu0 0
      %2516 = vmatpush1.bf16.msra.mxu0 0
      %2517 = vmatprep.subr.bf16.mxu0 0
      %2518 = vmatpush1.bf16.msra.mxu0 0
      %2519 = vmatprep.subr.bf16.mxu0 0
      %2520 = vmatpush1.bf16.msra.mxu0 0
      %2521 = vmatprep.subr.bf16.mxu0 0
      %2522 = vmatpush1.bf16.msra.mxu0 0
      %2523 = vmatprep.subr.bf16.mxu0 0
      %2524 = vmatpush1.bf16.msra.mxu0 0
      %2525 = vmatprep.subr.bf16.mxu0 0
      %2526 = vmatpush1.bf16.msra.mxu0 %v2513
      %2527 = vmatprep.subr.bf16.mxu0 0
      %2528 = vmatpush1.bf16.msra.mxu0 %v2508
      %2529 = vmatprep.subr.bf16.mxu0 0
      %2530 = vmatpush1.bf16.msra.mxu0 %v2507
      %2531 = vmatprep.subr.bf16.mxu0 0
      %2532 = vmatpush2.bf16.msra.mxu0 0
      %2533 = vmatprep.subr.bf16.mxu0 0
      %2534 = vmatpush2.bf16.msra.mxu0 0
      %2535 = vmatprep.subr.bf16.mxu0 0
      %2536 = vmatpush2.bf16.msra.mxu0 0
      %2537 = vmatprep.subr.bf16.mxu0 0
      %2538 = vmatpush2.bf16.msra.mxu0 0
      %2539 = vmatprep.subr.bf16.mxu0 0
      %2540 = vmatpush2.bf16.msra.mxu0 0
      %2541 = vmatprep.subr.bf16.mxu0 0
      %2542 = vmatpush2.bf16.msra.mxu0 0
      %2543 = vmatprep.subr.bf16.mxu0 0
      %2544 = vmatpush2.bf16.msra.mxu0 0
      %2545 = vmatprep.subr.bf16.mxu0 0
      %2546 = vmatpush2.bf16.msra.mxu0 0
      %2547 = vmatprep.mubr.bf16.mxu0 0
      %2548 = vmatmul.mubr.bf16.gmra.mxu0 %v475
      %v2549 = vpop.f32.mrf.mxu0
      %v2550 = vadd.f32 %v2495, %v2549
      %v2551 = vpop.f32.mrf.mxu0
      %v2552 = vpop.f32.mrf.mxu0
      %v2553 = vadd.f32 %v2495, %v2552
      %v2554 = vpop.f32.mrf.mxu0
      %2555 = vmatprep.mubr.bf16.mxu0 0
      %2556 = vmatmul.mubr.bf16.gmra.mxu0 %v478
      %v2557 = vpop.f32.mrf.mxu0
      %v2558 = vadd.f32 %v2495, %v2557
      %v2559 = vpop.f32.mrf.mxu0
      %v2560 = vpop.f32.mrf.mxu0
      %v2561 = vadd.f32 %v2495, %v2560
      %v2562 = vpop.f32.mrf.mxu0
      %2563 = vmatprep.mubr.bf16.mxu0 0
      %2564 = vmatmul.mubr.bf16.gmra.mxu0 %v481
      %v2565 = vpop.f32.mrf.mxu0
      %v2566 = vadd.f32 %v2495, %v2565
      %v2567 = vpop.f32.mrf.mxu0
      %v2568 = vpop.f32.mrf.mxu0
      %v2569 = vadd.f32 %v2495, %v2568
      %v2570 = vpop.f32.mrf.mxu0
      %2571 = vmatprep.mubr.bf16.mxu0 0
      %2572 = vmatmul.mubr.bf16.gmra.mxu0 %v484
      %v2573 = vpop.f32.mrf.mxu0
      %v2574 = vadd.f32 %v2495, %v2573
      %v2575 = vpop.f32.mrf.mxu0
      %v2576 = vpop.f32.mrf.mxu0
      %v2577 = vadd.f32 %v2495, %v2576
      %v2578 = vpop.f32.mrf.mxu0
      %2579 = vmatprep.mubr.bf16.mxu0 0
      %2580 = vmatmul.mubr.bf16.gmra.mxu0 %v487
      %v2581 = vpop.f32.mrf.mxu0
      %v2582 = vadd.f32 %v2495, %v2581
      %v2583 = vpop.f32.mrf.mxu0
      %v2584 = vpop.f32.mrf.mxu0
      %v2585 = vadd.f32 %v2495, %v2584
      %v2586 = vpop.f32.mrf.mxu0
      %2587 = vmatprep.mubr.bf16.mxu0 0
      %2588 = vmatmul.mubr.bf16.gmra.mxu0 %v490
      %v2589 = vpop.f32.mrf.mxu0
      %v2590 = vadd.f32 %v2495, %v2589
      %v2591 = vpop.f32.mrf.mxu0
      %v2592 = vpop.f32.mrf.mxu0
      %v2593 = vadd.f32 %v2495, %v2592
      %v2594 = vpop.f32.mrf.mxu0
      %2595 = vmatprep.mubr.bf16.mxu0 0
      %2596 = vmatmul.mubr.bf16.gmra.mxu0 %v493
      %v2597 = vpop.f32.mrf.mxu0
      %v2598 = vadd.f32 %v2495, %v2597
      %v2599 = vpop.f32.mrf.mxu0
      %v2600 = vpop.f32.mrf.mxu0
      %v2601 = vadd.f32 %v2495, %v2600
      %v2602 = vpop.f32.mrf.mxu0
      %2603 = vmatprep.mubr.bf16.mxu0 0
      %2604 = vmatmul.mubr.bf16.gmra.mxu0 %v496
      %v2605 = vpop.f32.mrf.mxu0
      %v2606 = vadd.f32 %v2495, %v2605
      %v2607 = vpop.f32.mrf.mxu0
      %v2608 = vpop.f32.mrf.mxu0
      %v2609 = vadd.f32 %v2495, %v2608
      %v2610 = vpop.f32.mrf.mxu0
      %2611 = vmatprep.mubr.bf16.mxu0 0
      %2612 = vmatmul.mubr.bf16.gmra.mxu0 %v499
      %v2613 = vpop.f32.mrf.mxu0
      %v2614 = vadd.f32 %v2495, %v2613
      %v2615 = vpop.f32.mrf.mxu0
      %v2616 = vpop.f32.mrf.mxu0
      %v2617 = vadd.f32 %v2495, %v2616
      %v2618 = vpop.f32.mrf.mxu0
      %2619 = vmatprep.mubr.bf16.mxu0 0
      %2620 = vmatmul.mubr.bf16.gmra.mxu0 %v502
      %v2621 = vpop.f32.mrf.mxu0
      %v2622 = vadd.f32 %v2495, %v2621
      %v2623 = vpop.f32.mrf.mxu0
      %v2624 = vpop.f32.mrf.mxu0
      %v2625 = vadd.f32 %v2495, %v2624
      %v2626 = vpop.f32.mrf.mxu0
      %2627 = vmatprep.mubr.bf16.mxu0 0
      %2628 = vmatmul.mubr.bf16.gmra.mxu0 %v505
      %v2629 = vpop.f32.mrf.mxu0
      %v2630 = vadd.f32 %v2495, %v2629
      %v2631 = vpop.f32.mrf.mxu0
      %v2632 = vpop.f32.mrf.mxu0
      %v2633 = vadd.f32 %v2495, %v2632
      %v2634 = vpop.f32.mrf.mxu0
      %2635 = vmatprep.mubr.bf16.mxu0 0
      %2636 = vmatmul.mubr.bf16.gmra.mxu0 %v508
      %v2637 = vpop.f32.mrf.mxu0
      %v2638 = vadd.f32 %v2495, %v2637
      %v2639 = vpop.f32.mrf.mxu0
      %v2640 = vpop.f32.mrf.mxu0
      %v2641 = vadd.f32 %v2495, %v2640
      %v2642 = vpop.f32.mrf.mxu0
      %2643 = vmatprep.mubr.bf16.mxu0 0
      %2644 = vmatmul.mubr.bf16.gmra.mxu0 %v511
      %v2645 = vpop.f32.mrf.mxu0
      %v2646 = vadd.f32 %v2495, %v2645
      %v2647 = vpop.f32.mrf.mxu0
      %v2648 = vpop.f32.mrf.mxu0
      %v2649 = vadd.f32 %v2495, %v2648
      %v2650 = vpop.f32.mrf.mxu0
      %2651 = vmatprep.mubr.bf16.mxu0 0
      %2652 = vmatmul.mubr.bf16.gmra.mxu0 %v514
      %v2653 = vpop.f32.mrf.mxu0
      %v2654 = vadd.f32 %v2495, %v2653
      %v2655 = vpop.f32.mrf.mxu0
      %v2656 = vpop.f32.mrf.mxu0
      %v2657 = vadd.f32 %v2495, %v2656
      %v2658 = vpop.f32.mrf.mxu0
      %2659 = vmatprep.mubr.bf16.mxu0 0
      %2660 = vmatmul.mubr.bf16.gmra.mxu0 %v517
      %v2661 = vpop.f32.mrf.mxu0
      %v2662 = vadd.f32 %v2495, %v2661
      %v2663 = vpop.f32.mrf.mxu0
      %v2664 = vpop.f32.mrf.mxu0
      %v2665 = vadd.f32 %v2495, %v2664
      %v2666 = vpop.f32.mrf.mxu0
      %2667 = vmatprep.mubr.bf16.mxu0 0
      %2668 = vmatmul.mubr.bf16.gmra.mxu0 %v520
      %v2669 = vpop.f32.mrf.mxu0
      %v2670 = vadd.f32 %v2495, %v2669
      %v2671 = vpop.f32.mrf.mxu0
      %v2672 = vpop.f32.mrf.mxu0
      %v2673 = vadd.f32 %v2495, %v2672
      %v2674 = vpop.f32.mrf.mxu0
      %2675 = vdwg.mxu0
      %v2676 = vpack.c.bf16 %v2167, %v2164
      %v2677 = vpack.c.bf16 %v2175, %v2172
      %v2678 = vpack.c.bf16 %v2183, %v2180
      %v2679 = vpack.c.bf16 %v2191, %v2188
      %v2680 = vpack.c.bf16 %v2199, %v2196
      %v2681 = vpack.c.bf16 %v2207, %v2204
      %v2682 = vpack.c.bf16 %v2215, %v2212
      %v2683 = vpack.c.bf16 %v2223, %v2220
      %v2684 = vpack.c.bf16 %v2231, %v2228
      %v2685 = vpack.c.bf16 %v2239, %v2236
      %v2686 = vpack.c.bf16 %v2247, %v2244
      %v2687 = vpack.c.bf16 %v2255, %v2252
      %v2688 = vpack.c.bf16 %v2263, %v2260
      %v2689 = vpack.c.bf16 %v2271, %v2268
      %v2690 = vpack.c.bf16 %v2279, %v2276
      %v2691 = vpack.c.bf16 %v2287, %v2284
      %v2692 = vpack.c.bf16 %v2360, %v2357
      %v2693 = vpack.c.bf16 %v2368, %v2365
      %v2694 = vpack.c.bf16 %v2376, %v2373
      %v2695 = vpack.c.bf16 %v2384, %v2381
      %v2696 = vpack.c.bf16 %v2392, %v2389
      %v2697 = vpack.c.bf16 %v2400, %v2397
      %v2698 = vpack.c.bf16 %v2408, %v2405
      %v2699 = vpack.c.bf16 %v2416, %v2413
      %v2700 = vpack.c.bf16 %v2424, %v2421
      %v2701 = vpack.c.bf16 %v2432, %v2429
      %v2702 = vpack.c.bf16 %v2440, %v2437
      %v2703 = vpack.c.bf16 %v2448, %v2445
      %v2704 = vpack.c.bf16 %v2456, %v2453
      %v2705 = vpack.c.bf16 %v2464, %v2461
      %v2706 = vpack.c.bf16 %v2472, %v2469
      %v2707 = vpack.c.bf16 %v2480, %v2477
      %v2709 = vsel %vm1101, %v2676, 0
      %v2712 = vsel %vm1101, %v2677, 0
      %v2715 = vsel %vm1101, %v2678, 0
      %v2718 = vsel %vm1101, %v2679, 0
      %v2721 = vsel %vm1101, %v2680, 0
      %v2724 = vsel %vm1101, %v2681, 0
      %v2727 = vsel %vm1101, %v2682, 0
      %v2730 = vsel %vm1101, %v2683, 0
      %v2733 = vsel %vm1101, %v2684, 0
      %v2736 = vsel %vm1101, %v2685, 0
      %v2739 = vsel %vm1101, %v2686, 0
      %v2742 = vsel %vm1101, %v2687, 0
      %v2745 = vsel %vm1101, %v2688, 0
      %v2748 = vsel %vm1101, %v2689, 0
      %v2751 = vsel %vm1101, %v2690, 0
      %v2754 = vsel %vm1101, %v2691, 0
      %v2757 = vsel %vm1101, %v2692, 0
      %v2760 = vsel %vm1101, %v2693, 0
      %v2763 = vsel %vm1101, %v2694, 0
      %v2766 = vsel %vm1101, %v2695, 0
      %v2769 = vsel %vm1101, %v2696, 0
      %v2772 = vsel %vm1101, %v2697, 0
      %v2775 = vsel %vm1101, %v2698, 0
      %v2778 = vsel %vm1101, %v2699, 0
      %v2781 = vsel %vm1101, %v2700, 0
      %v2784 = vsel %vm1101, %v2701, 0
      %v2787 = vsel %vm1101, %v2702, 0
      %v2790 = vsel %vm1101, %v2703, 0
      %v2793 = vsel %vm1101, %v2704, 0
      %v2796 = vsel %vm1101, %v2705, 0
      %v2799 = vsel %vm1101, %v2706, 0
      %v2802 = vsel %vm1101, %v2707, 0
      %2804 = vmatprep.subr.bf16.mxu0 0
      %2805 = vmatpush1.bf16.xpose.msra.mxu0 %v2778
      %2806 = vmatprep.subr.bf16.mxu0 0
      %2807 = vmatpush1.bf16.xpose.msra.mxu0 %v2775
      %2808 = vmatprep.subr.bf16.mxu0 0
      %2809 = vmatpush1.bf16.xpose.msra.mxu0 %v2772
      %2810 = vmatprep.subr.bf16.mxu0 0
      %2811 = vmatpush1.bf16.xpose.msra.mxu0 %v2769
      %2812 = vmatprep.subr.bf16.mxu0 0
      %2813 = vmatpush1.bf16.xpose.msra.mxu0 %v2766
      %2814 = vmatprep.subr.bf16.mxu0 0
      %2815 = vmatpush1.bf16.xpose.msra.mxu0 %v2763
      %2816 = vmatprep.subr.bf16.mxu0 0
      %2817 = vmatpush1.bf16.xpose.msra.mxu0 %v2760
      %2818 = vmatprep.subr.bf16.mxu0 0
      %2819 = vmatpush1.bf16.xpose.msra.mxu0 %v2757
      %2820 = vmatprep.subr.bf16.mxu0 0
      %2821 = vmatpush2.bf16.xpose.msra.mxu0 %v2802
      %2822 = vmatprep.subr.bf16.mxu0 0
      %2823 = vmatpush2.bf16.xpose.msra.mxu0 %v2799
      %2824 = vmatprep.subr.bf16.mxu0 0
      %2825 = vmatpush2.bf16.xpose.msra.mxu0 %v2796
      %2826 = vmatprep.subr.bf16.mxu0 0
      %2827 = vmatpush2.bf16.xpose.msra.mxu0 %v2793
      %2828 = vmatprep.subr.bf16.mxu0 0
      %2829 = vmatpush2.bf16.xpose.msra.mxu0 %v2790
      %2830 = vmatprep.subr.bf16.mxu0 0
      %2831 = vmatpush2.bf16.xpose.msra.mxu0 %v2787
      %2832 = vmatprep.subr.bf16.mxu0 0
      %2833 = vmatpush2.bf16.xpose.msra.mxu0 %v2784
      %2834 = vmatprep.subr.bf16.mxu0 0
      %2835 = vmatpush2.bf16.xpose.msra.mxu0 %v2781
      %2836 = vmatprep.mubr.bf16.mxu0 0
      %2837 = vmatmul.mubr.bf16.gmra.mxu0 %v2709
      %v2838 = vpop.f32.mrf.mxu0
      %v2839 = vadd.f32 0.0, %v2838
      %v2840 = vpop.f32.mrf.mxu0
      %v2841 = vadd.f32 0.0, %v2840
      %v2842 = vpop.f32.mrf.mxu0
      %v2843 = vadd.f32 0.0, %v2842
      %v2844 = vpop.f32.mrf.mxu0
      %v2845 = vadd.f32 0.0, %v2844
      %2846 = vmatprep.mubr.bf16.mxu0 0
      %2847 = vmatmul.mubr.bf16.gmra.mxu0 %v2712
      %v2848 = vpop.f32.mrf.mxu0
      %v2849 = vadd.f32 0.0, %v2848
      %v2850 = vpop.f32.mrf.mxu0
      %v2851 = vadd.f32 0.0, %v2850
      %v2852 = vpop.f32.mrf.mxu0
      %v2853 = vadd.f32 0.0, %v2852
      %v2854 = vpop.f32.mrf.mxu0
      %v2855 = vadd.f32 0.0, %v2854
      %2856 = vmatprep.mubr.bf16.mxu0 0
      %2857 = vmatmul.mubr.bf16.gmra.mxu0 %v2715
      %v2858 = vpop.f32.mrf.mxu0
      %v2859 = vadd.f32 0.0, %v2858
      %v2860 = vpop.f32.mrf.mxu0
      %v2861 = vadd.f32 0.0, %v2860
      %v2862 = vpop.f32.mrf.mxu0
      %v2863 = vadd.f32 0.0, %v2862
      %v2864 = vpop.f32.mrf.mxu0
      %v2865 = vadd.f32 0.0, %v2864
      %2866 = vmatprep.mubr.bf16.mxu0 0
      %2867 = vmatmul.mubr.bf16.gmra.mxu0 %v2718
      %v2868 = vpop.f32.mrf.mxu0
      %v2869 = vadd.f32 0.0, %v2868
      %v2870 = vpop.f32.mrf.mxu0
      %v2871 = vadd.f32 0.0, %v2870
      %v2872 = vpop.f32.mrf.mxu0
      %v2873 = vadd.f32 0.0, %v2872
      %v2874 = vpop.f32.mrf.mxu0
      %v2875 = vadd.f32 0.0, %v2874
      %2876 = vmatprep.mubr.bf16.mxu0 0
      %2877 = vmatmul.mubr.bf16.gmra.mxu0 %v2721
      %v2878 = vpop.f32.mrf.mxu0
      %v2879 = vadd.f32 0.0, %v2878
      %v2880 = vpop.f32.mrf.mxu0
      %v2881 = vadd.f32 0.0, %v2880
      %v2882 = vpop.f32.mrf.mxu0
      %v2883 = vadd.f32 0.0, %v2882
      %v2884 = vpop.f32.mrf.mxu0
      %v2885 = vadd.f32 0.0, %v2884
      %2886 = vmatprep.mubr.bf16.mxu0 0
      %2887 = vmatmul.mubr.bf16.gmra.mxu0 %v2724
      %v2888 = vpop.f32.mrf.mxu0
      %v2889 = vadd.f32 0.0, %v2888
      %v2890 = vpop.f32.mrf.mxu0
      %v2891 = vadd.f32 0.0, %v2890
      %v2892 = vpop.f32.mrf.mxu0
      %v2893 = vadd.f32 0.0, %v2892
      %v2894 = vpop.f32.mrf.mxu0
      %v2895 = vadd.f32 0.0, %v2894
      %2896 = vmatprep.mubr.bf16.mxu0 0
      %2897 = vmatmul.mubr.bf16.gmra.mxu0 %v2727
      %v2898 = vpop.f32.mrf.mxu0
      %v2899 = vadd.f32 0.0, %v2898
      %v2900 = vpop.f32.mrf.mxu0
      %v2901 = vadd.f32 0.0, %v2900
      %v2902 = vpop.f32.mrf.mxu0
      %v2903 = vadd.f32 0.0, %v2902
      %v2904 = vpop.f32.mrf.mxu0
      %v2905 = vadd.f32 0.0, %v2904
      %2906 = vmatprep.mubr.bf16.mxu0 0
      %2907 = vmatmul.mubr.bf16.gmra.mxu0 %v2730
      %v2908 = vpop.f32.mrf.mxu0
      %v2909 = vadd.f32 0.0, %v2908
      %v2910 = vpop.f32.mrf.mxu0
      %v2911 = vadd.f32 0.0, %v2910
      %v2912 = vpop.f32.mrf.mxu0
      %v2913 = vadd.f32 0.0, %v2912
      %v2914 = vpop.f32.mrf.mxu0
      %v2915 = vadd.f32 0.0, %v2914
      %2916 = vmatprep.mubr.bf16.mxu0 0
      %2917 = vmatmul.mubr.bf16.gmra.mxu0 %v2733
      %v2918 = vpop.f32.mrf.mxu0
      %v2919 = vadd.f32 0.0, %v2918
      %v2920 = vpop.f32.mrf.mxu0
      %v2921 = vadd.f32 0.0, %v2920
      %v2922 = vpop.f32.mrf.mxu0
      %v2923 = vadd.f32 0.0, %v2922
      %v2924 = vpop.f32.mrf.mxu0
      %v2925 = vadd.f32 0.0, %v2924
      %2926 = vmatprep.mubr.bf16.mxu0 0
      %2927 = vmatmul.mubr.bf16.gmra.mxu0 %v2736
      %v2928 = vpop.f32.mrf.mxu0
      %v2929 = vadd.f32 0.0, %v2928
      %v2930 = vpop.f32.mrf.mxu0
      %v2931 = vadd.f32 0.0, %v2930
      %v2932 = vpop.f32.mrf.mxu0
      %v2933 = vadd.f32 0.0, %v2932
      %v2934 = vpop.f32.mrf.mxu0
      %v2935 = vadd.f32 0.0, %v2934
      %2936 = vmatprep.mubr.bf16.mxu0 0
      %2937 = vmatmul.mubr.bf16.gmra.mxu0 %v2739
      %v2938 = vpop.f32.mrf.mxu0
      %v2939 = vadd.f32 0.0, %v2938
      %v2940 = vpop.f32.mrf.mxu0
      %v2941 = vadd.f32 0.0, %v2940
      %v2942 = vpop.f32.mrf.mxu0
      %v2943 = vadd.f32 0.0, %v2942
      %v2944 = vpop.f32.mrf.mxu0
      %v2945 = vadd.f32 0.0, %v2944
      %2946 = vmatprep.mubr.bf16.mxu0 0
      %2947 = vmatmul.mubr.bf16.gmra.mxu0 %v2742
      %v2948 = vpop.f32.mrf.mxu0
      %v2949 = vadd.f32 0.0, %v2948
      %v2950 = vpop.f32.mrf.mxu0
      %v2951 = vadd.f32 0.0, %v2950
      %v2952 = vpop.f32.mrf.mxu0
      %v2953 = vadd.f32 0.0, %v2952
      %v2954 = vpop.f32.mrf.mxu0
      %v2955 = vadd.f32 0.0, %v2954
      %2956 = vmatprep.mubr.bf16.mxu0 0
      %2957 = vmatmul.mubr.bf16.gmra.mxu0 %v2745
      %v2958 = vpop.f32.mrf.mxu0
      %v2959 = vadd.f32 0.0, %v2958
      %v2960 = vpop.f32.mrf.mxu0
      %v2961 = vadd.f32 0.0, %v2960
      %v2962 = vpop.f32.mrf.mxu0
      %v2963 = vadd.f32 0.0, %v2962
      %v2964 = vpop.f32.mrf.mxu0
      %v2965 = vadd.f32 0.0, %v2964
      %2966 = vmatprep.mubr.bf16.mxu0 0
      %2967 = vmatmul.mubr.bf16.gmra.mxu0 %v2748
      %v2968 = vpop.f32.mrf.mxu0
      %v2969 = vadd.f32 0.0, %v2968
      %v2970 = vpop.f32.mrf.mxu0
      %v2971 = vadd.f32 0.0, %v2970
      %v2972 = vpop.f32.mrf.mxu0
      %v2973 = vadd.f32 0.0, %v2972
      %v2974 = vpop.f32.mrf.mxu0
      %v2975 = vadd.f32 0.0, %v2974
      %2976 = vmatprep.mubr.bf16.mxu0 0
      %2977 = vmatmul.mubr.bf16.gmra.mxu0 %v2751
      %v2978 = vpop.f32.mrf.mxu0
      %v2979 = vadd.f32 0.0, %v2978
      %v2980 = vpop.f32.mrf.mxu0
      %v2981 = vadd.f32 0.0, %v2980
      %v2982 = vpop.f32.mrf.mxu0
      %v2983 = vadd.f32 0.0, %v2982
      %v2984 = vpop.f32.mrf.mxu0
      %v2985 = vadd.f32 0.0, %v2984
      %2986 = vmatprep.mubr.bf16.mxu0 0
      %2987 = vmatmul.mubr.bf16.gmra.mxu0 %v2754
      %v2988 = vpop.f32.mrf.mxu0
      %v2989 = vadd.f32 0.0, %v2988
      %v2990 = vpop.f32.mrf.mxu0
      %v2991 = vadd.f32 0.0, %v2990
      %v2992 = vpop.f32.mrf.mxu0
      %v2993 = vadd.f32 0.0, %v2992
      %v2994 = vpop.f32.mrf.mxu0
      %v2995 = vadd.f32 0.0, %v2994
      %2996 = vdwg.mxu0
      %v2997 = vmax.f32 %v2839, %v2841
      %2998 = vmax.xlane.f32.xlu0 %v2997
      %v2999 = vpop.xlane.xlu0 %2998
      %v3000 = vmax.f32 %v2843, %v2845
      %3001 = vmax.xlane.f32.xlu0 %v3000
      %v3002 = vpop.xlane.xlu0 %3001
      %v3003 = vmax.f32 %v2849, %v2851
      %3004 = vmax.xlane.f32.xlu0 %v3003
      %v3005 = vpop.xlane.xlu0 %3004
      %v3006 = vmax.f32 %v2853, %v2855
      %3007 = vmax.xlane.f32.xlu0 %v3006
      %v3008 = vpop.xlane.xlu0 %3007
      %v3009 = vmax.f32 %v2859, %v2861
      %3010 = vmax.xlane.f32.xlu0 %v3009
      %v3011 = vpop.xlane.xlu0 %3010
      %v3012 = vmax.f32 %v2863, %v2865
      %3013 = vmax.xlane.f32.xlu0 %v3012
      %v3014 = vpop.xlane.xlu0 %3013
      %v3015 = vmax.f32 %v2869, %v2871
      %3016 = vmax.xlane.f32.xlu0 %v3015
      %v3017 = vpop.xlane.xlu0 %3016
      %v3018 = vmax.f32 %v2873, %v2875
      %3019 = vmax.xlane.f32.xlu0 %v3018
      %v3020 = vpop.xlane.xlu0 %3019
      %v3021 = vmax.f32 %v2879, %v2881
      %3022 = vmax.xlane.f32.xlu0 %v3021
      %v3023 = vpop.xlane.xlu0 %3022
      %v3024 = vmax.f32 %v2883, %v2885
      %3025 = vmax.xlane.f32.xlu0 %v3024
      %v3026 = vpop.xlane.xlu0 %3025
      %v3027 = vmax.f32 %v2889, %v2891
      %3028 = vmax.xlane.f32.xlu0 %v3027
      %v3029 = vpop.xlane.xlu0 %3028
      %v3030 = vmax.f32 %v2893, %v2895
      %3031 = vmax.xlane.f32.xlu0 %v3030
      %v3032 = vpop.xlane.xlu0 %3031
      %v3033 = vmax.f32 %v2899, %v2901
      %3034 = vmax.xlane.f32.xlu0 %v3033
      %v3035 = vpop.xlane.xlu0 %3034
      %v3036 = vmax.f32 %v2903, %v2905
      %3037 = vmax.xlane.f32.xlu0 %v3036
      %v3038 = vpop.xlane.xlu0 %3037
      %v3039 = vmax.f32 %v2909, %v2911
      %3040 = vmax.xlane.f32.xlu0 %v3039
      %v3041 = vpop.xlane.xlu0 %3040
      %v3042 = vmax.f32 %v2913, %v2915
      %3043 = vmax.xlane.f32.xlu0 %v3042
      %v3044 = vpop.xlane.xlu0 %3043
      %v3045 = vmax.f32 %v2919, %v2921
      %3046 = vmax.xlane.f32.xlu0 %v3045
      %v3047 = vpop.xlane.xlu0 %3046
      %v3048 = vmax.f32 %v2923, %v2925
      %3049 = vmax.xlane.f32.xlu0 %v3048
      %v3050 = vpop.xlane.xlu0 %3049
      %v3051 = vmax.f32 %v2929, %v2931
      %3052 = vmax.xlane.f32.xlu0 %v3051
      %v3053 = vpop.xlane.xlu0 %3052
      %v3054 = vmax.f32 %v2933, %v2935
      %3055 = vmax.xlane.f32.xlu0 %v3054
      %v3056 = vpop.xlane.xlu0 %3055
      %v3057 = vmax.f32 %v2939, %v2941
      %3058 = vmax.xlane.f32.xlu0 %v3057
      %v3059 = vpop.xlane.xlu0 %3058
      %v3060 = vmax.f32 %v2943, %v2945
      %3061 = vmax.xlane.f32.xlu0 %v3060
      %v3062 = vpop.xlane.xlu0 %3061
      %v3063 = vmax.f32 %v2949, %v2951
      %3064 = vmax.xlane.f32.xlu0 %v3063
      %v3065 = vpop.xlane.xlu0 %3064
      %v3066 = vmax.f32 %v2953, %v2955
      %3067 = vmax.xlane.f32.xlu0 %v3066
      %v3068 = vpop.xlane.xlu0 %3067
      %v3069 = vmax.f32 %v2959, %v2961
      %3070 = vmax.xlane.f32.xlu0 %v3069
      %v3071 = vpop.xlane.xlu0 %3070
      %v3072 = vmax.f32 %v2963, %v2965
      %3073 = vmax.xlane.f32.xlu0 %v3072
      %v3074 = vpop.xlane.xlu0 %3073
      %v3075 = vmax.f32 %v2969, %v2971
      %3076 = vmax.xlane.f32.xlu0 %v3075
      %v3077 = vpop.xlane.xlu0 %3076
      %v3078 = vmax.f32 %v2973, %v2975
      %3079 = vmax.xlane.f32.xlu0 %v3078
      %v3080 = vpop.xlane.xlu0 %3079
      %v3081 = vmax.f32 %v2979, %v2981
      %3082 = vmax.xlane.f32.xlu0 %v3081
      %v3083 = vpop.xlane.xlu0 %3082
      %v3084 = vmax.f32 %v2983, %v2985
      %3085 = vmax.xlane.f32.xlu0 %v3084
      %v3086 = vpop.xlane.xlu0 %3085
      %v3087 = vmax.f32 %v2989, %v2991
      %3088 = vmax.xlane.f32.xlu0 %v3087
      %v3089 = vpop.xlane.xlu0 %3088
      %v3090 = vmax.f32 %v2993, %v2995
      %3091 = vmax.xlane.f32.xlu0 %v3090
      %v3092 = vpop.xlane.xlu0 %3091
      %v3093 = vsub.f32 %v2839, %v2999
      %v3094 = vsub.f32 %v2841, %v2999
      %v3095 = vsub.f32 %v2843, %v3002
      %v3096 = vsub.f32 %v2845, %v3002
      %v3097 = vsub.f32 %v2849, %v3005
      %v3098 = vsub.f32 %v2851, %v3005
      %v3099 = vsub.f32 %v2853, %v3008
      %v3100 = vsub.f32 %v2855, %v3008
      %v3101 = vsub.f32 %v2859, %v3011
      %v3102 = vsub.f32 %v2861, %v3011
      %v3103 = vsub.f32 %v2863, %v3014
      %v3104 = vsub.f32 %v2865, %v3014
      %v3105 = vsub.f32 %v2869, %v3017
      %v3106 = vsub.f32 %v2871, %v3017
      %v3107 = vsub.f32 %v2873, %v3020
      %v3108 = vsub.f32 %v2875, %v3020
      %v3109 = vsub.f32 %v2879, %v3023
      %v3110 = vsub.f32 %v2881, %v3023
      %v3111 = vsub.f32 %v2883, %v3026
      %v3112 = vsub.f32 %v2885, %v3026
      %v3113 = vsub.f32 %v2889, %v3029
      %v3114 = vsub.f32 %v2891, %v3029
      %v3115 = vsub.f32 %v2893, %v3032
      %v3116 = vsub.f32 %v2895, %v3032
      %v3117 = vsub.f32 %v2899, %v3035
      %v3118 = vsub.f32 %v2901, %v3035
      %v3119 = vsub.f32 %v2903, %v3038
      %v3120 = vsub.f32 %v2905, %v3038
      %v3121 = vsub.f32 %v2909, %v3041
      %v3122 = vsub.f32 %v2911, %v3041
      %v3123 = vsub.f32 %v2913, %v3044
      %v3124 = vsub.f32 %v2915, %v3044
      %v3125 = vsub.f32 %v2919, %v3047
      %v3126 = vsub.f32 %v2921, %v3047
      %v3127 = vsub.f32 %v2923, %v3050
      %v3128 = vsub.f32 %v2925, %v3050
      %v3129 = vsub.f32 %v2929, %v3053
      %v3130 = vsub.f32 %v2931, %v3053
      %v3131 = vsub.f32 %v2933, %v3056
      %v3132 = vsub.f32 %v2935, %v3056
      %v3133 = vsub.f32 %v2939, %v3059
      %v3134 = vsub.f32 %v2941, %v3059
      %v3135 = vsub.f32 %v2943, %v3062
      %v3136 = vsub.f32 %v2945, %v3062
      %v3137 = vsub.f32 %v2949, %v3065
      %v3138 = vsub.f32 %v2951, %v3065
      %v3139 = vsub.f32 %v2953, %v3068
      %v3140 = vsub.f32 %v2955, %v3068
      %v3141 = vsub.f32 %v2959, %v3071
      %v3142 = vsub.f32 %v2961, %v3071
      %v3143 = vsub.f32 %v2963, %v3074
      %v3144 = vsub.f32 %v2965, %v3074
      %v3145 = vsub.f32 %v2969, %v3077
      %v3146 = vsub.f32 %v2971, %v3077
      %v3147 = vsub.f32 %v2973, %v3080
      %v3148 = vsub.f32 %v2975, %v3080
      %v3149 = vsub.f32 %v2979, %v3083
      %v3150 = vsub.f32 %v2981, %v3083
      %v3151 = vsub.f32 %v2983, %v3086
      %v3152 = vsub.f32 %v2985, %v3086
      %v3153 = vsub.f32 %v2989, %v3089
      %v3154 = vsub.f32 %v2991, %v3089
      %v3155 = vsub.f32 %v2993, %v3092
      %v3156 = vsub.f32 %v2995, %v3092
      %v3157 = vmul.f32 %v3093, 1.442695
      %v3158 = vpow.pop %v3157
      %v3159 = vmul.f32 %v3094, 1.442695
      %v3160 = vpow.pop %v3159
      %v3161 = vmul.f32 %v3095, 1.442695
      %v3162 = vpow.pop %v3161
      %v3163 = vmul.f32 %v3096, 1.442695
      %v3164 = vpow.pop %v3163
      %v3165 = vmul.f32 %v3097, 1.442695
      %v3166 = vpow.pop %v3165
      %v3167 = vmul.f32 %v3098, 1.442695
      %v3168 = vpow.pop %v3167
      %v3169 = vmul.f32 %v3099, 1.442695
      %v3170 = vpow.pop %v3169
      %v3171 = vmul.f32 %v3100, 1.442695
      %v3172 = vpow.pop %v3171
      %v3173 = vmul.f32 %v3101, 1.442695
      %v3174 = vpow.pop %v3173
      %v3175 = vmul.f32 %v3102, 1.442695
      %v3176 = vpow.pop %v3175
      %v3177 = vmul.f32 %v3103, 1.442695
      %v3178 = vpow.pop %v3177
      %v3179 = vmul.f32 %v3104, 1.442695
      %v3180 = vpow.pop %v3179
      %v3181 = vmul.f32 %v3105, 1.442695
      %v3182 = vpow.pop %v3181
      %v3183 = vmul.f32 %v3106, 1.442695
      %v3184 = vpow.pop %v3183
      %v3185 = vmul.f32 %v3107, 1.442695
      %v3186 = vpow.pop %v3185
      %v3187 = vmul.f32 %v3108, 1.442695
      %v3188 = vpow.pop %v3187
      %v3189 = vmul.f32 %v3109, 1.442695
      %v3190 = vpow.pop %v3189
      %v3191 = vmul.f32 %v3110, 1.442695
      %v3192 = vpow.pop %v3191
      %v3193 = vmul.f32 %v3111, 1.442695
      %v3194 = vpow.pop %v3193
      %v3195 = vmul.f32 %v3112, 1.442695
      %v3196 = vpow.pop %v3195
      %v3197 = vmul.f32 %v3113, 1.442695
      %v3198 = vpow.pop %v3197
      %v3199 = vmul.f32 %v3114, 1.442695
      %v3200 = vpow.pop %v3199
      %v3201 = vmul.f32 %v3115, 1.442695
      %v3202 = vpow.pop %v3201
      %v3203 = vmul.f32 %v3116, 1.442695
      %v3204 = vpow.pop %v3203
      %v3205 = vmul.f32 %v3117, 1.442695
      %v3206 = vpow.pop %v3205
      %v3207 = vmul.f32 %v3118, 1.442695
      %v3208 = vpow.pop %v3207
      %v3209 = vmul.f32 %v3119, 1.442695
      %v3210 = vpow.pop %v3209
      %v3211 = vmul.f32 %v3120, 1.442695
      %v3212 = vpow.pop %v3211
      %v3213 = vmul.f32 %v3121, 1.442695
      %v3214 = vpow.pop %v3213
      %v3215 = vmul.f32 %v3122, 1.442695
      %v3216 = vpow.pop %v3215
      %v3217 = vmul.f32 %v3123, 1.442695
      %v3218 = vpow.pop %v3217
      %v3219 = vmul.f32 %v3124, 1.442695
      %v3220 = vpow.pop %v3219
      %v3221 = vmul.f32 %v3125, 1.442695
      %v3222 = vpow.pop %v3221
      %v3223 = vmul.f32 %v3126, 1.442695
      %v3224 = vpow.pop %v3223
      %v3225 = vmul.f32 %v3127, 1.442695
      %v3226 = vpow.pop %v3225
      %v3227 = vmul.f32 %v3128, 1.442695
      %v3228 = vpow.pop %v3227
      %v3229 = vmul.f32 %v3129, 1.442695
      %v3230 = vpow.pop %v3229
      %v3231 = vmul.f32 %v3130, 1.442695
      %v3232 = vpow.pop %v3231
      %v3233 = vmul.f32 %v3131, 1.442695
      %v3234 = vpow.pop %v3233
      %v3235 = vmul.f32 %v3132, 1.442695
      %v3236 = vpow.pop %v3235
      %v3237 = vmul.f32 %v3133, 1.442695
      %v3238 = vpow.pop %v3237
      %v3239 = vmul.f32 %v3134, 1.442695
      %v3240 = vpow.pop %v3239
      %v3241 = vmul.f32 %v3135, 1.442695
      %v3242 = vpow.pop %v3241
      %v3243 = vmul.f32 %v3136, 1.442695
      %v3244 = vpow.pop %v3243
      %v3245 = vmul.f32 %v3137, 1.442695
      %v3246 = vpow.pop %v3245
      %v3247 = vmul.f32 %v3138, 1.442695
      %v3248 = vpow.pop %v3247
      %v3249 = vmul.f32 %v3139, 1.442695
      %v3250 = vpow.pop %v3249
      %v3251 = vmul.f32 %v3140, 1.442695
      %v3252 = vpow.pop %v3251
      %v3253 = vmul.f32 %v3141, 1.442695
      %v3254 = vpow.pop %v3253
      %v3255 = vmul.f32 %v3142, 1.442695
      %v3256 = vpow.pop %v3255
      %v3257 = vmul.f32 %v3143, 1.442695
      %v3258 = vpow.pop %v3257
      %v3259 = vmul.f32 %v3144, 1.442695
      %v3260 = vpow.pop %v3259
      %v3261 = vmul.f32 %v3145, 1.442695
      %v3262 = vpow.pop %v3261
      %v3263 = vmul.f32 %v3146, 1.442695
      %v3264 = vpow.pop %v3263
      %v3265 = vmul.f32 %v3147, 1.442695
      %v3266 = vpow.pop %v3265
      %v3267 = vmul.f32 %v3148, 1.442695
      %v3268 = vpow.pop %v3267
      %v3269 = vmul.f32 %v3149, 1.442695
      %v3270 = vpow.pop %v3269
      %v3271 = vmul.f32 %v3150, 1.442695
      %v3272 = vpow.pop %v3271
      %v3273 = vmul.f32 %v3151, 1.442695
      %v3274 = vpow.pop %v3273
      %v3275 = vmul.f32 %v3152, 1.442695
      %v3276 = vpow.pop %v3275
      %v3277 = vmul.f32 %v3153, 1.442695
      %v3278 = vpow.pop %v3277
      %v3279 = vmul.f32 %v3154, 1.442695
      %v3280 = vpow.pop %v3279
      %v3281 = vmul.f32 %v3155, 1.442695
      %v3282 = vpow.pop %v3281
      %v3283 = vmul.f32 %v3156, 1.442695
      %v3284 = vpow.pop %v3283
      %v3285 = vadd.f32 %v3158, %v3160
      %3286 = vadd.xlane.f32.xlu0 %v3285
      %v3287 = vpop.xlane.xlu0 %3286
      %v3288 = vadd.f32 %v3162, %v3164
      %3289 = vadd.xlane.f32.xlu0 %v3288
      %v3290 = vpop.xlane.xlu0 %3289
      %v3291 = vadd.f32 %v3166, %v3168
      %3292 = vadd.xlane.f32.xlu0 %v3291
      %v3293 = vpop.xlane.xlu0 %3292
      %v3294 = vadd.f32 %v3170, %v3172
      %3295 = vadd.xlane.f32.xlu0 %v3294
      %v3296 = vpop.xlane.xlu0 %3295
      %v3297 = vadd.f32 %v3174, %v3176
      %3298 = vadd.xlane.f32.xlu0 %v3297
      %v3299 = vpop.xlane.xlu0 %3298
      %v3300 = vadd.f32 %v3178, %v3180
      %3301 = vadd.xlane.f32.xlu0 %v3300
      %v3302 = vpop.xlane.xlu0 %3301
      %v3303 = vadd.f32 %v3182, %v3184
      %3304 = vadd.xlane.f32.xlu0 %v3303
      %v3305 = vpop.xlane.xlu0 %3304
      %v3306 = vadd.f32 %v3186, %v3188
      %3307 = vadd.xlane.f32.xlu0 %v3306
      %v3308 = vpop.xlane.xlu0 %3307
      %v3309 = vadd.f32 %v3190, %v3192
      %3310 = vadd.xlane.f32.xlu0 %v3309
      %v3311 = vpop.xlane.xlu0 %3310
      %v3312 = vadd.f32 %v3194, %v3196
      %3313 = vadd.xlane.f32.xlu0 %v3312
      %v3314 = vpop.xlane.xlu0 %3313
      %v3315 = vadd.f32 %v3198, %v3200
      %3316 = vadd.xlane.f32.xlu0 %v3315
      %v3317 = vpop.xlane.xlu0 %3316
      %v3318 = vadd.f32 %v3202, %v3204
      %3319 = vadd.xlane.f32.xlu0 %v3318
      %v3320 = vpop.xlane.xlu0 %3319
      %v3321 = vadd.f32 %v3206, %v3208
      %3322 = vadd.xlane.f32.xlu0 %v3321
      %v3323 = vpop.xlane.xlu0 %3322
      %v3324 = vadd.f32 %v3210, %v3212
      %3325 = vadd.xlane.f32.xlu0 %v3324
      %v3326 = vpop.xlane.xlu0 %3325
      %v3327 = vadd.f32 %v3214, %v3216
      %3328 = vadd.xlane.f32.xlu0 %v3327
      %v3329 = vpop.xlane.xlu0 %3328
      %v3330 = vadd.f32 %v3218, %v3220
      %3331 = vadd.xlane.f32.xlu0 %v3330
      %v3332 = vpop.xlane.xlu0 %3331
      %v3333 = vadd.f32 %v3222, %v3224
      %3334 = vadd.xlane.f32.xlu0 %v3333
      %v3335 = vpop.xlane.xlu0 %3334
      %v3336 = vadd.f32 %v3226, %v3228
      %3337 = vadd.xlane.f32.xlu0 %v3336
      %v3338 = vpop.xlane.xlu0 %3337
      %v3339 = vadd.f32 %v3230, %v3232
      %3340 = vadd.xlane.f32.xlu0 %v3339
      %v3341 = vpop.xlane.xlu0 %3340
      %v3342 = vadd.f32 %v3234, %v3236
      %3343 = vadd.xlane.f32.xlu0 %v3342
      %v3344 = vpop.xlane.xlu0 %3343
      %v3345 = vadd.f32 %v3238, %v3240
      %3346 = vadd.xlane.f32.xlu0 %v3345
      %v3347 = vpop.xlane.xlu0 %3346
      %v3348 = vadd.f32 %v3242, %v3244
      %3349 = vadd.xlane.f32.xlu0 %v3348
      %v3350 = vpop.xlane.xlu0 %3349
      %v3351 = vadd.f32 %v3246, %v3248
      %3352 = vadd.xlane.f32.xlu0 %v3351
      %v3353 = vpop.xlane.xlu0 %3352
      %v3354 = vadd.f32 %v3250, %v3252
      %3355 = vadd.xlane.f32.xlu0 %v3354
      %v3356 = vpop.xlane.xlu0 %3355
      %v3357 = vadd.f32 %v3254, %v3256
      %3358 = vadd.xlane.f32.xlu0 %v3357
      %v3359 = vpop.xlane.xlu0 %3358
      %v3360 = vadd.f32 %v3258, %v3260
      %3361 = vadd.xlane.f32.xlu0 %v3360
      %v3362 = vpop.xlane.xlu0 %3361
      %v3363 = vadd.f32 %v3262, %v3264
      %3364 = vadd.xlane.f32.xlu0 %v3363
      %v3365 = vpop.xlane.xlu0 %3364
      %v3366 = vadd.f32 %v3266, %v3268
      %3367 = vadd.xlane.f32.xlu0 %v3366
      %v3368 = vpop.xlane.xlu0 %3367
      %v3369 = vadd.f32 %v3270, %v3272
      %3370 = vadd.xlane.f32.xlu0 %v3369
      %v3371 = vpop.xlane.xlu0 %3370
      %v3372 = vadd.f32 %v3274, %v3276
      %3373 = vadd.xlane.f32.xlu0 %v3372
      %v3374 = vpop.xlane.xlu0 %3373
      %v3375 = vadd.f32 %v3278, %v3280
      %3376 = vadd.xlane.f32.xlu0 %v3375
      %v3377 = vpop.xlane.xlu0 %3376
      %v3378 = vadd.f32 %v3282, %v3284
      %3379 = vadd.xlane.f32.xlu0 %v3378
      %v3380 = vpop.xlane.xlu0 %3379
      %v3381 = vrcp.pop %v3287
      %v3382 = vrcp.pop %v3290
      %v3383 = vrcp.pop %v3293
      %v3384 = vrcp.pop %v3296
      %v3385 = vrcp.pop %v3299
      %v3386 = vrcp.pop %v3302
      %v3387 = vrcp.pop %v3305
      %v3388 = vrcp.pop %v3308
      %v3389 = vrcp.pop %v3311
      %v3390 = vrcp.pop %v3314
      %v3391 = vrcp.pop %v3317
      %v3392 = vrcp.pop %v3320
      %v3393 = vrcp.pop %v3323
      %v3394 = vrcp.pop %v3326
      %v3395 = vrcp.pop %v3329
      %v3396 = vrcp.pop %v3332
      %v3397 = vrcp.pop %v3335
      %v3398 = vrcp.pop %v3338
      %v3399 = vrcp.pop %v3341
      %v3400 = vrcp.pop %v3344
      %v3401 = vrcp.pop %v3347
      %v3402 = vrcp.pop %v3350
      %v3403 = vrcp.pop %v3353
      %v3404 = vrcp.pop %v3356
      %v3405 = vrcp.pop %v3359
      %v3406 = vrcp.pop %v3362
      %v3407 = vrcp.pop %v3365
      %v3408 = vrcp.pop %v3368
      %v3409 = vrcp.pop %v3371
      %v3410 = vrcp.pop %v3374
      %v3411 = vrcp.pop %v3377
      %v3412 = vrcp.pop %v3380
      %v3413 = vmul.f32 %v3158, %v3381
      %v3414 = vmul.f32 %v3160, %v3381
      %v3415 = vmul.f32 %v3162, %v3382
      %v3416 = vmul.f32 %v3164, %v3382
      %v3417 = vmul.f32 %v3166, %v3383
      %v3418 = vmul.f32 %v3168, %v3383
      %v3419 = vmul.f32 %v3170, %v3384
      %v3420 = vmul.f32 %v3172, %v3384
      %v3421 = vmul.f32 %v3174, %v3385
      %v3422 = vmul.f32 %v3176, %v3385
      %v3423 = vmul.f32 %v3178, %v3386
      %v3424 = vmul.f32 %v3180, %v3386
      %v3425 = vmul.f32 %v3182, %v3387
      %v3426 = vmul.f32 %v3184, %v3387
      %v3427 = vmul.f32 %v3186, %v3388
      %v3428 = vmul.f32 %v3188, %v3388
      %v3429 = vmul.f32 %v3190, %v3389
      %v3430 = vmul.f32 %v3192, %v3389
      %v3431 = vmul.f32 %v3194, %v3390
      %v3432 = vmul.f32 %v3196, %v3390
      %v3433 = vmul.f32 %v3198, %v3391
      %v3434 = vmul.f32 %v3200, %v3391
      %v3435 = vmul.f32 %v3202, %v3392
      %v3436 = vmul.f32 %v3204, %v3392
      %v3437 = vmul.f32 %v3206, %v3393
      %v3438 = vmul.f32 %v3208, %v3393
      %v3439 = vmul.f32 %v3210, %v3394
      %v3440 = vmul.f32 %v3212, %v3394
      %v3441 = vmul.f32 %v3214, %v3395
      %v3442 = vmul.f32 %v3216, %v3395
      %v3443 = vmul.f32 %v3218, %v3396
      %v3444 = vmul.f32 %v3220, %v3396
      %v3445 = vmul.f32 %v3222, %v3397
      %v3446 = vmul.f32 %v3224, %v3397
      %v3447 = vmul.f32 %v3226, %v3398
      %v3448 = vmul.f32 %v3228, %v3398
      %v3449 = vmul.f32 %v3230, %v3399
      %v3450 = vmul.f32 %v3232, %v3399
      %v3451 = vmul.f32 %v3234, %v3400
      %v3452 = vmul.f32 %v3236, %v3400
      %v3453 = vmul.f32 %v3238, %v3401
      %v3454 = vmul.f32 %v3240, %v3401
      %v3455 = vmul.f32 %v3242, %v3402
      %v3456 = vmul.f32 %v3244, %v3402
      %v3457 = vmul.f32 %v3246, %v3403
      %v3458 = vmul.f32 %v3248, %v3403
      %v3459 = vmul.f32 %v3250, %v3404
      %v3460 = vmul.f32 %v3252, %v3404
      %v3461 = vmul.f32 %v3254, %v3405
      %v3462 = vmul.f32 %v3256, %v3405
      %v3463 = vmul.f32 %v3258, %v3406
      %v3464 = vmul.f32 %v3260, %v3406
      %v3465 = vmul.f32 %v3262, %v3407
      %v3466 = vmul.f32 %v3264, %v3407
      %v3467 = vmul.f32 %v3266, %v3408
      %v3468 = vmul.f32 %v3268, %v3408
      %v3469 = vmul.f32 %v3270, %v3409
      %v3470 = vmul.f32 %v3272, %v3409
      %v3471 = vmul.f32 %v3274, %v3410
      %v3472 = vmul.f32 %v3276, %v3410
      %v3473 = vmul.f32 %v3278, %v3411
      %v3474 = vmul.f32 %v3280, %v3411
      %v3475 = vmul.f32 %v3282, %v3412
      %v3476 = vmul.f32 %v3284, %v3412
      %v3477 = vpack.c.bf16 %v3415, %v3413
      %v3478 = vpack.c.bf16 %v3416, %v3414
      %v3479 = vpack.c.bf16 %v3419, %v3417
      %v3480 = vpack.c.bf16 %v3420, %v3418
      %v3481 = vpack.c.bf16 %v3423, %v3421
      %v3482 = vpack.c.bf16 %v3424, %v3422
      %v3483 = vpack.c.bf16 %v3427, %v3425
      %v3484 = vpack.c.bf16 %v3428, %v3426
      %v3485 = vpack.c.bf16 %v3431, %v3429
      %v3486 = vpack.c.bf16 %v3432, %v3430
      %v3487 = vpack.c.bf16 %v3435, %v3433
      %v3488 = vpack.c.bf16 %v3436, %v3434
      %v3489 = vpack.c.bf16 %v3439, %v3437
      %v3490 = vpack.c.bf16 %v3440, %v3438
      %v3491 = vpack.c.bf16 %v3443, %v3441
      %v3492 = vpack.c.bf16 %v3444, %v3442
      %v3493 = vpack.c.bf16 %v3447, %v3445
      %v3494 = vpack.c.bf16 %v3448, %v3446
      %v3495 = vpack.c.bf16 %v3451, %v3449
      %v3496 = vpack.c.bf16 %v3452, %v3450
      %v3497 = vpack.c.bf16 %v3455, %v3453
      %v3498 = vpack.c.bf16 %v3456, %v3454
      %v3499 = vpack.c.bf16 %v3459, %v3457
      %v3500 = vpack.c.bf16 %v3460, %v3458
      %v3501 = vpack.c.bf16 %v3463, %v3461
      %v3502 = vpack.c.bf16 %v3464, %v3462
      %v3503 = vpack.c.bf16 %v3467, %v3465
      %v3504 = vpack.c.bf16 %v3468, %v3466
      %v3505 = vpack.c.bf16 %v3471, %v3469
      %v3506 = vpack.c.bf16 %v3472, %v3470
      %v3507 = vpack.c.bf16 %v3475, %v3473
      %v3508 = vpack.c.bf16 %v3476, %v3474
      %v3509 = vpack.c.bf16 %v2553, %v2550
      %v3510 = vpack.c.bf16 %v2561, %v2558
      %v3511 = vpack.c.bf16 %v2569, %v2566
      %v3512 = vpack.c.bf16 %v2577, %v2574
      %v3513 = vpack.c.bf16 %v2585, %v2582
      %v3514 = vpack.c.bf16 %v2593, %v2590
      %v3515 = vpack.c.bf16 %v2601, %v2598
      %v3516 = vpack.c.bf16 %v2609, %v2606
      %v3517 = vpack.c.bf16 %v2617, %v2614
      %v3518 = vpack.c.bf16 %v2625, %v2622
      %v3519 = vpack.c.bf16 %v2633, %v2630
      %v3520 = vpack.c.bf16 %v2641, %v2638
      %v3521 = vpack.c.bf16 %v2649, %v2646
      %v3522 = vpack.c.bf16 %v2657, %v2654
      %v3523 = vpack.c.bf16 %v2665, %v2662
      %v3524 = vpack.c.bf16 %v2673, %v2670
      %3525 = vmatprep.subr.bf16.mxu0 0
      %3526 = vmatpush1.bf16.msra.mxu0 %v3516
      %3527 = vmatprep.subr.bf16.mxu0 0
      %3528 = vmatpush1.bf16.msra.mxu0 %v3515
      %3529 = vmatprep.subr.bf16.mxu0 0
      %3530 = vmatpush1.bf16.msra.mxu0 %v3514
      %3531 = vmatprep.subr.bf16.mxu0 0
      %3532 = vmatpush1.bf16.msra.mxu0 %v3513
      %3533 = vmatprep.subr.bf16.mxu0 0
      %3534 = vmatpush1.bf16.msra.mxu0 %v3512
      %3535 = vmatprep.subr.bf16.mxu0 0
      %3536 = vmatpush1.bf16.msra.mxu0 %v3511
      %3537 = vmatprep.subr.bf16.mxu0 0
      %3538 = vmatpush1.bf16.msra.mxu0 %v3510
      %3539 = vmatprep.subr.bf16.mxu0 0
      %3540 = vmatpush1.bf16.msra.mxu0 %v3509
      %3541 = vmatprep.subr.bf16.mxu0 0
      %3542 = vmatpush2.bf16.msra.mxu0 %v3524
      %3543 = vmatprep.subr.bf16.mxu0 0
      %3544 = vmatpush2.bf16.msra.mxu0 %v3523
      %3545 = vmatprep.subr.bf16.mxu0 0
      %3546 = vmatpush2.bf16.msra.mxu0 %v3522
      %3547 = vmatprep.subr.bf16.mxu0 0
      %3548 = vmatpush2.bf16.msra.mxu0 %v3521
      %3549 = vmatprep.subr.bf16.mxu0 0
      %3550 = vmatpush2.bf16.msra.mxu0 %v3520
      %3551 = vmatprep.subr.bf16.mxu0 0
      %3552 = vmatpush2.bf16.msra.mxu0 %v3519
      %3553 = vmatprep.subr.bf16.mxu0 0
      %3554 = vmatpush2.bf16.msra.mxu0 %v3518
      %3555 = vmatprep.subr.bf16.mxu0 0
      %3556 = vmatpush2.bf16.msra.mxu0 %v3517
      %3557 = vmatprep.mubr.bf16.mxu0 %v3478
      %3558 = vmatmul.mubr.bf16.gmra.mxu0 %v3477
      %v3559 = vpop.f32.mrf.mxu0
      %v3560 = vadd.f32 0.0, %v3559
      %v3561 = vpop.f32.mrf.mxu0
      %v3562 = vpop.f32.mrf.mxu0
      %v3563 = vadd.f32 0.0, %v3562
      %v3564 = vpop.f32.mrf.mxu0
      %3565 = vmatprep.mubr.bf16.mxu0 %v3480
      %3566 = vmatmul.mubr.bf16.gmra.mxu0 %v3479
      %v3567 = vpop.f32.mrf.mxu0
      %v3568 = vadd.f32 0.0, %v3567
      %v3569 = vpop.f32.mrf.mxu0
      %v3570 = vpop.f32.mrf.mxu0
      %v3571 = vadd.f32 0.0, %v3570
      %v3572 = vpop.f32.mrf.mxu0
      %3573 = vmatprep.mubr.bf16.mxu0 %v3482
      %3574 = vmatmul.mubr.bf16.gmra.mxu0 %v3481
      %v3575 = vpop.f32.mrf.mxu0
      %v3576 = vadd.f32 0.0, %v3575
      %v3577 = vpop.f32.mrf.mxu0
      %v3578 = vpop.f32.mrf.mxu0
      %v3579 = vadd.f32 0.0, %v3578
      %v3580 = vpop.f32.mrf.mxu0
      %3581 = vmatprep.mubr.bf16.mxu0 %v3484
      %3582 = vmatmul.mubr.bf16.gmra.mxu0 %v3483
      %v3583 = vpop.f32.mrf.mxu0
      %v3584 = vadd.f32 0.0, %v3583
      %v3585 = vpop.f32.mrf.mxu0
      %v3586 = vpop.f32.mrf.mxu0
      %v3587 = vadd.f32 0.0, %v3586
      %v3588 = vpop.f32.mrf.mxu0
      %3589 = vmatprep.mubr.bf16.mxu0 %v3486
      %3590 = vmatmul.mubr.bf16.gmra.mxu0 %v3485
      %v3591 = vpop.f32.mrf.mxu0
      %v3592 = vadd.f32 0.0, %v3591
      %v3593 = vpop.f32.mrf.mxu0
      %v3594 = vpop.f32.mrf.mxu0
      %v3595 = vadd.f32 0.0, %v3594
      %v3596 = vpop.f32.mrf.mxu0
      %3597 = vmatprep.mubr.bf16.mxu0 %v3488
      %3598 = vmatmul.mubr.bf16.gmra.mxu0 %v3487
      %v3599 = vpop.f32.mrf.mxu0
      %v3600 = vadd.f32 0.0, %v3599
      %v3601 = vpop.f32.mrf.mxu0
      %v3602 = vpop.f32.mrf.mxu0
      %v3603 = vadd.f32 0.0, %v3602
      %v3604 = vpop.f32.mrf.mxu0
      %3605 = vmatprep.mubr.bf16.mxu0 %v3490
      %3606 = vmatmul.mubr.bf16.gmra.mxu0 %v3489
      %v3607 = vpop.f32.mrf.mxu0
      %v3608 = vadd.f32 0.0, %v3607
      %v3609 = vpop.f32.mrf.mxu0
      %v3610 = vpop.f32.mrf.mxu0
      %v3611 = vadd.f32 0.0, %v3610
      %v3612 = vpop.f32.mrf.mxu0
      %3613 = vmatprep.mubr.bf16.mxu0 %v3492
      %3614 = vmatmul.mubr.bf16.gmra.mxu0 %v3491
      %v3615 = vpop.f32.mrf.mxu0
      %v3616 = vadd.f32 0.0, %v3615
      %v3617 = vpop.f32.mrf.mxu0
      %v3618 = vpop.f32.mrf.mxu0
      %v3619 = vadd.f32 0.0, %v3618
      %v3620 = vpop.f32.mrf.mxu0
      %3621 = vmatprep.mubr.bf16.mxu0 %v3494
      %3622 = vmatmul.mubr.bf16.gmra.mxu0 %v3493
      %v3623 = vpop.f32.mrf.mxu0
      %v3624 = vadd.f32 0.0, %v3623
      %v3625 = vpop.f32.mrf.mxu0
      %v3626 = vpop.f32.mrf.mxu0
      %v3627 = vadd.f32 0.0, %v3626
      %v3628 = vpop.f32.mrf.mxu0
      %3629 = vmatprep.mubr.bf16.mxu0 %v3496
      %3630 = vmatmul.mubr.bf16.gmra.mxu0 %v3495
      %v3631 = vpop.f32.mrf.mxu0
      %v3632 = vadd.f32 0.0, %v3631
      %v3633 = vpop.f32.mrf.mxu0
      %v3634 = vpop.f32.mrf.mxu0
      %v3635 = vadd.f32 0.0, %v3634
      %v3636 = vpop.f32.mrf.mxu0
      %3637 = vmatprep.mubr.bf16.mxu0 %v3498
      %3638 = vmatmul.mubr.bf16.gmra.mxu0 %v3497
      %v3639 = vpop.f32.mrf.mxu0
      %v3640 = vadd.f32 0.0, %v3639
      %v3641 = vpop.f32.mrf.mxu0
      %v3642 = vpop.f32.mrf.mxu0
      %v3643 = vadd.f32 0.0, %v3642
      %v3644 = vpop.f32.mrf.mxu0
      %3645 = vmatprep.mubr.bf16.mxu0 %v3500
      %3646 = vmatmul.mubr.bf16.gmra.mxu0 %v3499
      %v3647 = vpop.f32.mrf.mxu0
      %v3648 = vadd.f32 0.0, %v3647
      %v3649 = vpop.f32.mrf.mxu0
      %v3650 = vpop.f32.mrf.mxu0
      %v3651 = vadd.f32 0.0, %v3650
      %v3652 = vpop.f32.mrf.mxu0
      %3653 = vmatprep.mubr.bf16.mxu0 %v3502
      %3654 = vmatmul.mubr.bf16.gmra.mxu0 %v3501
      %v3655 = vpop.f32.mrf.mxu0
      %v3656 = vadd.f32 0.0, %v3655
      %v3657 = vpop.f32.mrf.mxu0
      %v3658 = vpop.f32.mrf.mxu0
      %v3659 = vadd.f32 0.0, %v3658
      %v3660 = vpop.f32.mrf.mxu0
      %3661 = vmatprep.mubr.bf16.mxu0 %v3504
      %3662 = vmatmul.mubr.bf16.gmra.mxu0 %v3503
      %v3663 = vpop.f32.mrf.mxu0
      %v3664 = vadd.f32 0.0, %v3663
      %v3665 = vpop.f32.mrf.mxu0
      %v3666 = vpop.f32.mrf.mxu0
      %v3667 = vadd.f32 0.0, %v3666
      %v3668 = vpop.f32.mrf.mxu0
      %3669 = vmatprep.mubr.bf16.mxu0 %v3506
      %3670 = vmatmul.mubr.bf16.gmra.mxu0 %v3505
      %v3671 = vpop.f32.mrf.mxu0
      %v3672 = vadd.f32 0.0, %v3671
      %v3673 = vpop.f32.mrf.mxu0
      %v3674 = vpop.f32.mrf.mxu0
      %v3675 = vadd.f32 0.0, %v3674
      %v3676 = vpop.f32.mrf.mxu0
      %3677 = vmatprep.mubr.bf16.mxu0 %v3508
      %3678 = vmatmul.mubr.bf16.gmra.mxu0 %v3507
      %v3679 = vpop.f32.mrf.mxu0
      %v3680 = vadd.f32 0.0, %v3679
      %v3681 = vpop.f32.mrf.mxu0
      %v3682 = vpop.f32.mrf.mxu0
      %v3683 = vadd.f32 0.0, %v3682
      %v3684 = vpop.f32.mrf.mxu0
      %3685 = vdwg.mxu0
      %v3686 = vpack.c.bf16 %v3563, %v3560
      %v3687 = vpack.c.bf16 %v3571, %v3568
      %v3688 = vpack.c.bf16 %v3579, %v3576
      %v3689 = vpack.c.bf16 %v3587, %v3584
      %v3690 = vpack.c.bf16 %v3595, %v3592
      %v3691 = vpack.c.bf16 %v3603, %v3600
      %v3692 = vpack.c.bf16 %v3611, %v3608
      %v3693 = vpack.c.bf16 %v3619, %v3616
      %v3694 = vpack.c.bf16 %v3627, %v3624
      %v3695 = vpack.c.bf16 %v3635, %v3632
      %v3696 = vpack.c.bf16 %v3643, %v3640
      %v3697 = vpack.c.bf16 %v3651, %v3648
      %v3698 = vpack.c.bf16 %v3659, %v3656
      %v3699 = vpack.c.bf16 %v3667, %v3664
      %v3700 = vpack.c.bf16 %v3675, %v3672
      %v3701 = vpack.c.bf16 %v3683, %v3680
      %s3702 = scalar_lea.vmem %s7, 4
      %v3703 = vld [vmem:[%s3702] sm:$0xf]
      %v3705 = vsel %vm1101, %v3686, 0
      %v3708 = vsel %vm1101, %v3687, 0
      %v3711 = vsel %vm1101, %v3688, 0
      %v3714 = vsel %vm1101, %v3689, 0
      %v3717 = vsel %vm1101, %v3690, 0
      %v3720 = vsel %vm1101, %v3691, 0
      %v3723 = vsel %vm1101, %v3692, 0
      %v3726 = vsel %vm1101, %v3693, 0
      %v3729 = vsel %vm1101, %v3694, 0
      %v3732 = vsel %vm1101, %v3695, 0
      %v3735 = vsel %vm1101, %v3696, 0
      %v3738 = vsel %vm1101, %v3697, 0
      %v3741 = vsel %vm1101, %v3698, 0
      %v3744 = vsel %vm1101, %v3699, 0
      %v3747 = vsel %vm1101, %v3700, 0
      %v3750 = vsel %vm1101, %v3701, 0
      %vm3752 = vcmask 1043456
      %v3754 = vsel %vm3752, %v3703, 0
      %3756 = vmatprep.subr.bf16.mxu0 0
      %3757 = vmatpush1.bf16.msra.mxu0 0
      %3758 = vmatprep.subr.bf16.mxu0 0
      %3759 = vmatpush1.bf16.msra.mxu0 0
      %3760 = vmatprep.subr.bf16.mxu0 0
      %3761 = vmatpush1.bf16.msra.mxu0 0
      %3762 = vmatprep.subr.bf16.mxu0 0
      %3763 = vmatpush1.bf16.msra.mxu0 0
      %3764 = vmatprep.subr.bf16.mxu0 0
      %3765 = vmatpush1.bf16.msra.mxu0 0
      %3766 = vmatprep.subr.bf16.mxu0 0
      %3767 = vmatpush1.bf16.msra.mxu0 0
      %3768 = vmatprep.subr.bf16.mxu0 0
      %3769 = vmatpush1.bf16.msra.mxu0 0
      %3770 = vmatprep.subr.bf16.mxu0 0
      %3771 = vmatpush1.bf16.msra.mxu0 %v3754
      %3772 = vmatprep.subr.bf16.mxu0 0
      %3773 = vmatpush2.bf16.msra.mxu0 0
      %3774 = vmatprep.subr.bf16.mxu0 0
      %3775 = vmatpush2.bf16.msra.mxu0 0
      %3776 = vmatprep.subr.bf16.mxu0 0
      %3777 = vmatpush2.bf16.msra.mxu0 0
      %3778 = vmatprep.subr.bf16.mxu0 0
      %3779 = vmatpush2.bf16.msra.mxu0 0
      %3780 = vmatprep.subr.bf16.mxu0 0
      %3781 = vmatpush2.bf16.msra.mxu0 0
      %3782 = vmatprep.subr.bf16.mxu0 0
      %3783 = vmatpush2.bf16.msra.mxu0 0
      %3784 = vmatprep.subr.bf16.mxu0 0
      %3785 = vmatpush2.bf16.msra.mxu0 0
      %3786 = vmatprep.subr.bf16.mxu0 0
      %3787 = vmatpush2.bf16.msra.mxu0 0
      %3788 = vmatprep.mubr.bf16.mxu0 0
      %3789 = vmatmul.mubr.bf16.gmra.mxu0 %v3705
      %v3790 = vpop.f32.mrf.mxu0
      %v3791 = vadd.f32 0.0, %v3790
      %v3792 = vpop.f32.mrf.mxu0
      %v3793 = vpop.f32.mrf.mxu0
      %v3794 = vadd.f32 0.0, %v3793
      %v3795 = vpop.f32.mrf.mxu0
      %3796 = vmatprep.mubr.bf16.mxu0 0
      %3797 = vmatmul.mubr.bf16.gmra.mxu0 %v3708
      %v3798 = vpop.f32.mrf.mxu0
      %v3799 = vadd.f32 0.0, %v3798
      %v3800 = vpop.f32.mrf.mxu0
      %v3801 = vpop.f32.mrf.mxu0
      %v3802 = vadd.f32 0.0, %v3801
      %v3803 = vpop.f32.mrf.mxu0
      %3804 = vmatprep.mubr.bf16.mxu0 0
      %3805 = vmatmul.mubr.bf16.gmra.mxu0 %v3711
      %v3806 = vpop.f32.mrf.mxu0
      %v3807 = vadd.f32 0.0, %v3806
      %v3808 = vpop.f32.mrf.mxu0
      %v3809 = vpop.f32.mrf.mxu0
      %v3810 = vadd.f32 0.0, %v3809
      %v3811 = vpop.f32.mrf.mxu0
      %3812 = vmatprep.mubr.bf16.mxu0 0
      %3813 = vmatmul.mubr.bf16.gmra.mxu0 %v3714
      %v3814 = vpop.f32.mrf.mxu0
      %v3815 = vadd.f32 0.0, %v3814
      %v3816 = vpop.f32.mrf.mxu0
      %v3817 = vpop.f32.mrf.mxu0
      %v3818 = vadd.f32 0.0, %v3817
      %v3819 = vpop.f32.mrf.mxu0
      %3820 = vmatprep.mubr.bf16.mxu0 0
      %3821 = vmatmul.mubr.bf16.gmra.mxu0 %v3717
      %v3822 = vpop.f32.mrf.mxu0
      %v3823 = vadd.f32 0.0, %v3822
      %v3824 = vpop.f32.mrf.mxu0
      %v3825 = vpop.f32.mrf.mxu0
      %v3826 = vadd.f32 0.0, %v3825
      %v3827 = vpop.f32.mrf.mxu0
      %3828 = vmatprep.mubr.bf16.mxu0 0
      %3829 = vmatmul.mubr.bf16.gmra.mxu0 %v3720
      %v3830 = vpop.f32.mrf.mxu0
      %v3831 = vadd.f32 0.0, %v3830
      %v3832 = vpop.f32.mrf.mxu0
      %v3833 = vpop.f32.mrf.mxu0
      %v3834 = vadd.f32 0.0, %v3833
      %v3835 = vpop.f32.mrf.mxu0
      %3836 = vmatprep.mubr.bf16.mxu0 0
      %3837 = vmatmul.mubr.bf16.gmra.mxu0 %v3723
      %v3838 = vpop.f32.mrf.mxu0
      %v3839 = vadd.f32 0.0, %v3838
      %v3840 = vpop.f32.mrf.mxu0
      %v3841 = vpop.f32.mrf.mxu0
      %v3842 = vadd.f32 0.0, %v3841
      %v3843 = vpop.f32.mrf.mxu0
      %3844 = vmatprep.mubr.bf16.mxu0 0
      %3845 = vmatmul.mubr.bf16.gmra.mxu0 %v3726
      %v3846 = vpop.f32.mrf.mxu0
      %v3847 = vadd.f32 0.0, %v3846
      %v3848 = vpop.f32.mrf.mxu0
      %v3849 = vpop.f32.mrf.mxu0
      %v3850 = vadd.f32 0.0, %v3849
      %v3851 = vpop.f32.mrf.mxu0
      %3852 = vmatprep.mubr.bf16.mxu0 0
      %3853 = vmatmul.mubr.bf16.gmra.mxu0 %v3729
      %v3854 = vpop.f32.mrf.mxu0
      %v3855 = vadd.f32 0.0, %v3854
      %v3856 = vpop.f32.mrf.mxu0
      %v3857 = vpop.f32.mrf.mxu0
      %v3858 = vadd.f32 0.0, %v3857
      %v3859 = vpop.f32.mrf.mxu0
      %3860 = vmatprep.mubr.bf16.mxu0 0
      %3861 = vmatmul.mubr.bf16.gmra.mxu0 %v3732
      %v3862 = vpop.f32.mrf.mxu0
      %v3863 = vadd.f32 0.0, %v3862
      %v3864 = vpop.f32.mrf.mxu0
      %v3865 = vpop.f32.mrf.mxu0
      %v3866 = vadd.f32 0.0, %v3865
      %v3867 = vpop.f32.mrf.mxu0
      %3868 = vmatprep.mubr.bf16.mxu0 0
      %3869 = vmatmul.mubr.bf16.gmra.mxu0 %v3735
      %v3870 = vpop.f32.mrf.mxu0
      %v3871 = vadd.f32 0.0, %v3870
      %v3872 = vpop.f32.mrf.mxu0
      %v3873 = vpop.f32.mrf.mxu0
      %v3874 = vadd.f32 0.0, %v3873
      %v3875 = vpop.f32.mrf.mxu0
      %3876 = vmatprep.mubr.bf16.mxu0 0
      %3877 = vmatmul.mubr.bf16.gmra.mxu0 %v3738
      %v3878 = vpop.f32.mrf.mxu0
      %v3879 = vadd.f32 0.0, %v3878
      %v3880 = vpop.f32.mrf.mxu0
      %v3881 = vpop.f32.mrf.mxu0
      %v3882 = vadd.f32 0.0, %v3881
      %v3883 = vpop.f32.mrf.mxu0
      %3884 = vmatprep.mubr.bf16.mxu0 0
      %3885 = vmatmul.mubr.bf16.gmra.mxu0 %v3741
      %v3886 = vpop.f32.mrf.mxu0
      %v3887 = vadd.f32 0.0, %v3886
      %v3888 = vpop.f32.mrf.mxu0
      %v3889 = vpop.f32.mrf.mxu0
      %v3890 = vadd.f32 0.0, %v3889
      %v3891 = vpop.f32.mrf.mxu0
      %3892 = vmatprep.mubr.bf16.mxu0 0
      %3893 = vmatmul.mubr.bf16.gmra.mxu0 %v3744
      %v3894 = vpop.f32.mrf.mxu0
      %v3895 = vadd.f32 0.0, %v3894
      %v3896 = vpop.f32.mrf.mxu0
      %v3897 = vpop.f32.mrf.mxu0
      %v3898 = vadd.f32 0.0, %v3897
      %v3899 = vpop.f32.mrf.mxu0
      %3900 = vmatprep.mubr.bf16.mxu0 0
      %3901 = vmatmul.mubr.bf16.gmra.mxu0 %v3747
      %v3902 = vpop.f32.mrf.mxu0
      %v3903 = vadd.f32 0.0, %v3902
      %v3904 = vpop.f32.mrf.mxu0
      %v3905 = vpop.f32.mrf.mxu0
      %v3906 = vadd.f32 0.0, %v3905
      %v3907 = vpop.f32.mrf.mxu0
      %3908 = vmatprep.mubr.bf16.mxu0 0
      %3909 = vmatmul.mubr.bf16.gmra.mxu0 %v3750
      %v3910 = vpop.f32.mrf.mxu0
      %v3911 = vadd.f32 0.0, %v3910
      %v3912 = vpop.f32.mrf.mxu0
      %v3913 = vpop.f32.mrf.mxu0
      %v3914 = vadd.f32 0.0, %v3913
      %v3915 = vpop.f32.mrf.mxu0
      %3916 = vdwg.mxu0
      %v3918 = vsel %vm1101, %v2080, 0
      %v3921 = vsel %vm1101, %v2081, 0
      %v3924 = vsel %vm1101, %v2082, 0
      %v3927 = vsel %vm1101, %v2083, 0
      %v3930 = vsel %vm1101, %v2084, 0
      %v3933 = vsel %vm1101, %v2085, 0
      %v3936 = vsel %vm1101, %v2086, 0
      %v3939 = vsel %vm1101, %v2087, 0
      %v3942 = vsel %vm1101, %v2088, 0
      %v3945 = vsel %vm1101, %v2089, 0
      %v3948 = vsel %vm1101, %v2090, 0
      %v3951 = vsel %vm1101, %v2091, 0
      %v3954 = vsel %vm1101, %v2092, 0
      %v3957 = vsel %vm1101, %v2093, 0
      %v3960 = vsel %vm1101, %v2094, 0
      %v3963 = vsel %vm1101, %v2095, 0
      %v3966 = vsel %vm3752, %v2096, 0
      %3968 = vmatprep.subr.bf16.mxu0 0
      %3969 = vmatpush1.bf16.msra.mxu0 0
      %3970 = vmatprep.subr.bf16.mxu0 0
      %3971 = vmatpush1.bf16.msra.mxu0 0
      %3972 = vmatprep.subr.bf16.mxu0 0
      %3973 = vmatpush1.bf16.msra.mxu0 0
      %3974 = vmatprep.subr.bf16.mxu0 0
      %3975 = vmatpush1.bf16.msra.mxu0 0
      %3976 = vmatprep.subr.bf16.mxu0 0
      %3977 = vmatpush1.bf16.msra.mxu0 0
      %3978 = vmatprep.subr.bf16.mxu0 0
      %3979 = vmatpush1.bf16.msra.mxu0 0
      %3980 = vmatprep.subr.bf16.mxu0 0
      %3981 = vmatpush1.bf16.msra.mxu0 0
      %3982 = vmatprep.subr.bf16.mxu0 0
      %3983 = vmatpush1.bf16.msra.mxu0 %v3966
      %3984 = vmatprep.subr.bf16.mxu0 0
      %3985 = vmatpush2.bf16.msra.mxu0 0
      %3986 = vmatprep.subr.bf16.mxu0 0
      %3987 = vmatpush2.bf16.msra.mxu0 0
      %3988 = vmatprep.subr.bf16.mxu0 0
      %3989 = vmatpush2.bf16.msra.mxu0 0
      %3990 = vmatprep.subr.bf16.mxu0 0
      %3991 = vmatpush2.bf16.msra.mxu0 0
      %3992 = vmatprep.subr.bf16.mxu0 0
      %3993 = vmatpush2.bf16.msra.mxu0 0
      %3994 = vmatprep.subr.bf16.mxu0 0
      %3995 = vmatpush2.bf16.msra.mxu0 0
      %3996 = vmatprep.subr.bf16.mxu0 0
      %3997 = vmatpush2.bf16.msra.mxu0 0
      %3998 = vmatprep.subr.bf16.mxu0 0
      %3999 = vmatpush2.bf16.msra.mxu0 0
      %4000 = vmatprep.mubr.bf16.mxu0 0
      %4001 = vmatmul.mubr.bf16.gmra.mxu0 %v3918
      %v4002 = vpop.f32.mrf.mxu0
      %v4003 = vadd.f32 %v3791, %v4002
      %v4004 = vpop.f32.mrf.mxu0
      %v4005 = vpop.f32.mrf.mxu0
      %v4006 = vadd.f32 %v3794, %v4005
      %v4007 = vpop.f32.mrf.mxu0
      %4008 = vmatprep.mubr.bf16.mxu0 0
      %4009 = vmatmul.mubr.bf16.gmra.mxu0 %v3921
      %v4010 = vpop.f32.mrf.mxu0
      %v4011 = vadd.f32 %v3799, %v4010
      %v4012 = vpop.f32.mrf.mxu0
      %v4013 = vpop.f32.mrf.mxu0
      %v4014 = vadd.f32 %v3802, %v4013
      %v4015 = vpop.f32.mrf.mxu0
      %4016 = vmatprep.mubr.bf16.mxu0 0
      %4017 = vmatmul.mubr.bf16.gmra.mxu0 %v3924
      %v4018 = vpop.f32.mrf.mxu0
      %v4019 = vadd.f32 %v3807, %v4018
      %v4020 = vpop.f32.mrf.mxu0
      %v4021 = vpop.f32.mrf.mxu0
      %v4022 = vadd.f32 %v3810, %v4021
      %v4023 = vpop.f32.mrf.mxu0
      %4024 = vmatprep.mubr.bf16.mxu0 0
      %4025 = vmatmul.mubr.bf16.gmra.mxu0 %v3927
      %v4026 = vpop.f32.mrf.mxu0
      %v4027 = vadd.f32 %v3815, %v4026
      %v4028 = vpop.f32.mrf.mxu0
      %v4029 = vpop.f32.mrf.mxu0
      %v4030 = vadd.f32 %v3818, %v4029
      %v4031 = vpop.f32.mrf.mxu0
      %4032 = vmatprep.mubr.bf16.mxu0 0
      %4033 = vmatmul.mubr.bf16.gmra.mxu0 %v3930
      %v4034 = vpop.f32.mrf.mxu0
      %v4035 = vadd.f32 %v3823, %v4034
      %v4036 = vpop.f32.mrf.mxu0
      %v4037 = vpop.f32.mrf.mxu0
      %v4038 = vadd.f32 %v3826, %v4037
      %v4039 = vpop.f32.mrf.mxu0
      %4040 = vmatprep.mubr.bf16.mxu0 0
      %4041 = vmatmul.mubr.bf16.gmra.mxu0 %v3933
      %v4042 = vpop.f32.mrf.mxu0
      %v4043 = vadd.f32 %v3831, %v4042
      %v4044 = vpop.f32.mrf.mxu0
      %v4045 = vpop.f32.mrf.mxu0
      %v4046 = vadd.f32 %v3834, %v4045
      %v4047 = vpop.f32.mrf.mxu0
      %4048 = vmatprep.mubr.bf16.mxu0 0
      %4049 = vmatmul.mubr.bf16.gmra.mxu0 %v3936
      %v4050 = vpop.f32.mrf.mxu0
      %v4051 = vadd.f32 %v3839, %v4050
      %v4052 = vpop.f32.mrf.mxu0
      %v4053 = vpop.f32.mrf.mxu0
      %v4054 = vadd.f32 %v3842, %v4053
      %v4055 = vpop.f32.mrf.mxu0
      %4056 = vmatprep.mubr.bf16.mxu0 0
      %4057 = vmatmul.mubr.bf16.gmra.mxu0 %v3939
      %v4058 = vpop.f32.mrf.mxu0
      %v4059 = vadd.f32 %v3847, %v4058
      %v4060 = vpop.f32.mrf.mxu0
      %v4061 = vpop.f32.mrf.mxu0
      %v4062 = vadd.f32 %v3850, %v4061
      %v4063 = vpop.f32.mrf.mxu0
      %4064 = vmatprep.mubr.bf16.mxu0 0
      %4065 = vmatmul.mubr.bf16.gmra.mxu0 %v3942
      %v4066 = vpop.f32.mrf.mxu0
      %v4067 = vadd.f32 %v3855, %v4066
      %v4068 = vpop.f32.mrf.mxu0
      %v4069 = vpop.f32.mrf.mxu0
      %v4070 = vadd.f32 %v3858, %v4069
      %v4071 = vpop.f32.mrf.mxu0
      %4072 = vmatprep.mubr.bf16.mxu0 0
      %4073 = vmatmul.mubr.bf16.gmra.mxu0 %v3945
      %v4074 = vpop.f32.mrf.mxu0
      %v4075 = vadd.f32 %v3863, %v4074
      %v4076 = vpop.f32.mrf.mxu0
      %v4077 = vpop.f32.mrf.mxu0
      %v4078 = vadd.f32 %v3866, %v4077
      %v4079 = vpop.f32.mrf.mxu0
      %4080 = vmatprep.mubr.bf16.mxu0 0
      %4081 = vmatmul.mubr.bf16.gmra.mxu0 %v3948
      %v4082 = vpop.f32.mrf.mxu0
      %v4083 = vadd.f32 %v3871, %v4082
      %v4084 = vpop.f32.mrf.mxu0
      %v4085 = vpop.f32.mrf.mxu0
      %v4086 = vadd.f32 %v3874, %v4085
      %v4087 = vpop.f32.mrf.mxu0
      %4088 = vmatprep.mubr.bf16.mxu0 0
      %4089 = vmatmul.mubr.bf16.gmra.mxu0 %v3951
      %v4090 = vpop.f32.mrf.mxu0
      %v4091 = vadd.f32 %v3879, %v4090
      %v4092 = vpop.f32.mrf.mxu0
      %v4093 = vpop.f32.mrf.mxu0
      %v4094 = vadd.f32 %v3882, %v4093
      %v4095 = vpop.f32.mrf.mxu0
      %4096 = vmatprep.mubr.bf16.mxu0 0
      %4097 = vmatmul.mubr.bf16.gmra.mxu0 %v3954
      %v4098 = vpop.f32.mrf.mxu0
      %v4099 = vadd.f32 %v3887, %v4098
      %v4100 = vpop.f32.mrf.mxu0
      %v4101 = vpop.f32.mrf.mxu0
      %v4102 = vadd.f32 %v3890, %v4101
      %v4103 = vpop.f32.mrf.mxu0
      %4104 = vmatprep.mubr.bf16.mxu0 0
      %4105 = vmatmul.mubr.bf16.gmra.mxu0 %v3957
      %v4106 = vpop.f32.mrf.mxu0
      %v4107 = vadd.f32 %v3895, %v4106
      %v4108 = vpop.f32.mrf.mxu0
      %v4109 = vpop.f32.mrf.mxu0
      %v4110 = vadd.f32 %v3898, %v4109
      %v4111 = vpop.f32.mrf.mxu0
      %4112 = vmatprep.mubr.bf16.mxu0 0
      %4113 = vmatmul.mubr.bf16.gmra.mxu0 %v3960
      %v4114 = vpop.f32.mrf.mxu0
      %v4115 = vadd.f32 %v3903, %v4114
      %v4116 = vpop.f32.mrf.mxu0
      %v4117 = vpop.f32.mrf.mxu0
      %v4118 = vadd.f32 %v3906, %v4117
      %v4119 = vpop.f32.mrf.mxu0
      %4120 = vmatprep.mubr.bf16.mxu0 0
      %4121 = vmatmul.mubr.bf16.gmra.mxu0 %v3963
      %v4122 = vpop.f32.mrf.mxu0
      %v4123 = vadd.f32 %v3911, %v4122
      %v4124 = vpop.f32.mrf.mxu0
      %v4125 = vpop.f32.mrf.mxu0
      %v4126 = vadd.f32 %v3914, %v4125
      %v4127 = vpop.f32.mrf.mxu0
      %4128 = vdwg.mxu0
      %s4129 = scalar_lea.vmem %s1, 40
      %v4130 = vld [vmem:[%s4129] sm:$0xf]
      %v4131 = vld [vmem:[%s4129 + $0x4] sm:$0xf]
      %v4132 = vld [vmem:[%s4129 + $0x8] sm:$0xf]
      %v4133 = vld [vmem:[%s4129 + $0xc] sm:$0xf]
      %v4134 = vld [vmem:[%s4129 + $0x10] sm:$0x3]
      %s4135 = scalar_lea.vmem %s4, 2
      %v4136 = vld [vmem:[%s4135] sm:$0x1]
      %v4138 = vlaneseq
      %v4139 = vshrl.u32 %v4138, 7
      %v4140 = vsub.s32 0, %v4139
      %v4141 = vrot.slane %v4136, %v4140
      %v4148 = vunpack.c.l.b16 %v4130
      %v4149 = vunpack.c.l.b16 %v4131
      %v4150 = vunpack.c.l.b16 %v4132
      %v4151 = vunpack.c.l.b16 %v4133
      %v4152 = vunpack.c.l.b16 %v4134
      %v4153 = vpack.c.b16 %v4149, %v4148
      %v4154 = vpack.c.b16 %v4151, %v4150
      %v4155 = vpack.c.b16 %v4152, %v4152
      %v4159 = vsel %vm522, %v4155, 0
      %4161 = vmatprep.subr.bf16.mxu0 0
      %4162 = vmatpush1.bf16.msra.mxu0 0
      %4163 = vmatprep.subr.bf16.mxu0 0
      %4164 = vmatpush1.bf16.msra.mxu0 0
      %4165 = vmatprep.subr.bf16.mxu0 0
      %4166 = vmatpush1.bf16.msra.mxu0 0
      %4167 = vmatprep.subr.bf16.mxu0 0
      %4168 = vmatpush1.bf16.msra.mxu0 0
      %4169 = vmatprep.subr.bf16.mxu0 0
      %4170 = vmatpush1.bf16.msra.mxu0 0
      %4171 = vmatprep.subr.bf16.mxu0 0
      %4172 = vmatpush1.bf16.msra.mxu0 %v4159
      %4173 = vmatprep.subr.bf16.mxu0 0
      %4174 = vmatpush1.bf16.msra.mxu0 %v4154
      %4175 = vmatprep.subr.bf16.mxu0 0
      %4176 = vmatpush1.bf16.msra.mxu0 %v4153
      %4177 = vmatprep.subr.bf16.mxu0 0
      %4178 = vmatpush2.bf16.msra.mxu0 0
      %4179 = vmatprep.subr.bf16.mxu0 0
      %4180 = vmatpush2.bf16.msra.mxu0 0
      %4181 = vmatprep.subr.bf16.mxu0 0
      %4182 = vmatpush2.bf16.msra.mxu0 0
      %4183 = vmatprep.subr.bf16.mxu0 0
      %4184 = vmatpush2.bf16.msra.mxu0 0
      %4185 = vmatprep.subr.bf16.mxu0 0
      %4186 = vmatpush2.bf16.msra.mxu0 0
      %4187 = vmatprep.subr.bf16.mxu0 0
      %4188 = vmatpush2.bf16.msra.mxu0 0
      %4189 = vmatprep.subr.bf16.mxu0 0
      %4190 = vmatpush2.bf16.msra.mxu0 0
      %4191 = vmatprep.subr.bf16.mxu0 0
      %4192 = vmatpush2.bf16.msra.mxu0 0
      %4193 = vmatprep.mubr.bf16.mxu0 0
      %4194 = vmatmul.mubr.bf16.gmra.mxu0 %v475
      %v4195 = vpop.f32.mrf.mxu0
      %v4196 = vadd.f32 %v4141, %v4195
      %v4197 = vpop.f32.mrf.mxu0
      %v4198 = vpop.f32.mrf.mxu0
      %v4199 = vadd.f32 %v4141, %v4198
      %v4200 = vpop.f32.mrf.mxu0
      %4201 = vmatprep.mubr.bf16.mxu0 0
      %4202 = vmatmul.mubr.bf16.gmra.mxu0 %v478
      %v4203 = vpop.f32.mrf.mxu0
      %v4204 = vadd.f32 %v4141, %v4203
      %v4205 = vpop.f32.mrf.mxu0
      %v4206 = vpop.f32.mrf.mxu0
      %v4207 = vadd.f32 %v4141, %v4206
      %v4208 = vpop.f32.mrf.mxu0
      %4209 = vmatprep.mubr.bf16.mxu0 0
      %4210 = vmatmul.mubr.bf16.gmra.mxu0 %v481
      %v4211 = vpop.f32.mrf.mxu0
      %v4212 = vadd.f32 %v4141, %v4211
      %v4213 = vpop.f32.mrf.mxu0
      %v4214 = vpop.f32.mrf.mxu0
      %v4215 = vadd.f32 %v4141, %v4214
      %v4216 = vpop.f32.mrf.mxu0
      %4217 = vmatprep.mubr.bf16.mxu0 0
      %4218 = vmatmul.mubr.bf16.gmra.mxu0 %v484
      %v4219 = vpop.f32.mrf.mxu0
      %v4220 = vadd.f32 %v4141, %v4219
      %v4221 = vpop.f32.mrf.mxu0
      %v4222 = vpop.f32.mrf.mxu0
      %v4223 = vadd.f32 %v4141, %v4222
      %v4224 = vpop.f32.mrf.mxu0
      %4225 = vmatprep.mubr.bf16.mxu0 0
      %4226 = vmatmul.mubr.bf16.gmra.mxu0 %v487
      %v4227 = vpop.f32.mrf.mxu0
      %v4228 = vadd.f32 %v4141, %v4227
      %v4229 = vpop.f32.mrf.mxu0
      %v4230 = vpop.f32.mrf.mxu0
      %v4231 = vadd.f32 %v4141, %v4230
      %v4232 = vpop.f32.mrf.mxu0
      %4233 = vmatprep.mubr.bf16.mxu0 0
      %4234 = vmatmul.mubr.bf16.gmra.mxu0 %v490
      %v4235 = vpop.f32.mrf.mxu0
      %v4236 = vadd.f32 %v4141, %v4235
      %v4237 = vpop.f32.mrf.mxu0
      %v4238 = vpop.f32.mrf.mxu0
      %v4239 = vadd.f32 %v4141, %v4238
      %v4240 = vpop.f32.mrf.mxu0
      %4241 = vmatprep.mubr.bf16.mxu0 0
      %4242 = vmatmul.mubr.bf16.gmra.mxu0 %v493
      %v4243 = vpop.f32.mrf.mxu0
      %v4244 = vadd.f32 %v4141, %v4243
      %v4245 = vpop.f32.mrf.mxu0
      %v4246 = vpop.f32.mrf.mxu0
      %v4247 = vadd.f32 %v4141, %v4246
      %v4248 = vpop.f32.mrf.mxu0
      %4249 = vmatprep.mubr.bf16.mxu0 0
      %4250 = vmatmul.mubr.bf16.gmra.mxu0 %v496
      %v4251 = vpop.f32.mrf.mxu0
      %v4252 = vadd.f32 %v4141, %v4251
      %v4253 = vpop.f32.mrf.mxu0
      %v4254 = vpop.f32.mrf.mxu0
      %v4255 = vadd.f32 %v4141, %v4254
      %v4256 = vpop.f32.mrf.mxu0
      %4257 = vmatprep.mubr.bf16.mxu0 0
      %4258 = vmatmul.mubr.bf16.gmra.mxu0 %v499
      %v4259 = vpop.f32.mrf.mxu0
      %v4260 = vadd.f32 %v4141, %v4259
      %v4261 = vpop.f32.mrf.mxu0
      %v4262 = vpop.f32.mrf.mxu0
      %v4263 = vadd.f32 %v4141, %v4262
      %v4264 = vpop.f32.mrf.mxu0
      %4265 = vmatprep.mubr.bf16.mxu0 0
      %4266 = vmatmul.mubr.bf16.gmra.mxu0 %v502
      %v4267 = vpop.f32.mrf.mxu0
      %v4268 = vadd.f32 %v4141, %v4267
      %v4269 = vpop.f32.mrf.mxu0
      %v4270 = vpop.f32.mrf.mxu0
      %v4271 = vadd.f32 %v4141, %v4270
      %v4272 = vpop.f32.mrf.mxu0
      %4273 = vmatprep.mubr.bf16.mxu0 0
      %4274 = vmatmul.mubr.bf16.gmra.mxu0 %v505
      %v4275 = vpop.f32.mrf.mxu0
      %v4276 = vadd.f32 %v4141, %v4275
      %v4277 = vpop.f32.mrf.mxu0
      %v4278 = vpop.f32.mrf.mxu0
      %v4279 = vadd.f32 %v4141, %v4278
      %v4280 = vpop.f32.mrf.mxu0
      %4281 = vmatprep.mubr.bf16.mxu0 0
      %4282 = vmatmul.mubr.bf16.gmra.mxu0 %v508
      %v4283 = vpop.f32.mrf.mxu0
      %v4284 = vadd.f32 %v4141, %v4283
      %v4285 = vpop.f32.mrf.mxu0
      %v4286 = vpop.f32.mrf.mxu0
      %v4287 = vadd.f32 %v4141, %v4286
      %v4288 = vpop.f32.mrf.mxu0
      %4289 = vmatprep.mubr.bf16.mxu0 0
      %4290 = vmatmul.mubr.bf16.gmra.mxu0 %v511
      %v4291 = vpop.f32.mrf.mxu0
      %v4292 = vadd.f32 %v4141, %v4291
      %v4293 = vpop.f32.mrf.mxu0
      %v4294 = vpop.f32.mrf.mxu0
      %v4295 = vadd.f32 %v4141, %v4294
      %v4296 = vpop.f32.mrf.mxu0
      %4297 = vmatprep.mubr.bf16.mxu0 0
      %4298 = vmatmul.mubr.bf16.gmra.mxu0 %v514
      %v4299 = vpop.f32.mrf.mxu0
      %v4300 = vadd.f32 %v4141, %v4299
      %v4301 = vpop.f32.mrf.mxu0
      %v4302 = vpop.f32.mrf.mxu0
      %v4303 = vadd.f32 %v4141, %v4302
      %v4304 = vpop.f32.mrf.mxu0
      %4305 = vmatprep.mubr.bf16.mxu0 0
      %4306 = vmatmul.mubr.bf16.gmra.mxu0 %v517
      %v4307 = vpop.f32.mrf.mxu0
      %v4308 = vadd.f32 %v4141, %v4307
      %v4309 = vpop.f32.mrf.mxu0
      %v4310 = vpop.f32.mrf.mxu0
      %v4311 = vadd.f32 %v4141, %v4310
      %v4312 = vpop.f32.mrf.mxu0
      %4313 = vmatprep.mubr.bf16.mxu0 0
      %4314 = vmatmul.mubr.bf16.gmra.mxu0 %v520
      %v4315 = vpop.f32.mrf.mxu0
      %v4316 = vadd.f32 %v4141, %v4315
      %v4317 = vpop.f32.mrf.mxu0
      %v4318 = vpop.f32.mrf.mxu0
      %v4319 = vadd.f32 %v4141, %v4318
      %v4320 = vpop.f32.mrf.mxu0
      %4321 = vdwg.mxu0
      %s4322 = scalar_lea.vmem %s2, 40
      %v4323 = vld [vmem:[%s4322] sm:$0xf]
      %v4324 = vld [vmem:[%s4322 + $0x4] sm:$0xf]
      %v4325 = vld [vmem:[%s4322 + $0x8] sm:$0xf]
      %v4326 = vld [vmem:[%s4322 + $0xc] sm:$0xf]
      %v4327 = vld [vmem:[%s4322 + $0x10] sm:$0x3]
      %s4328 = scalar_lea.vmem %s5, 2
      %v4329 = vld [vmem:[%s4328] sm:$0x1]
      %v4331 = vlaneseq
      %v4332 = vshrl.u32 %v4331, 7
      %v4333 = vsub.s32 0, %v4332
      %v4334 = vrot.slane %v4329, %v4333
      %v4341 = vunpack.c.l.b16 %v4323
      %v4342 = vunpack.c.l.b16 %v4324
      %v4343 = vunpack.c.l.b16 %v4325
      %v4344 = vunpack.c.l.b16 %v4326
      %v4345 = vunpack.c.l.b16 %v4327
      %v4346 = vpack.c.b16 %v4342, %v4341
      %v4347 = vpack.c.b16 %v4344, %v4343
      %v4348 = vpack.c.b16 %v4345, %v4345
      %v4352 = vsel %vm522, %v4348, 0
      %4354 = vmatprep.subr.bf16.mxu0 0
      %4355 = vmatpush1.bf16.msra.mxu0 0
      %4356 = vmatprep.subr.bf16.mxu0 0
      %4357 = vmatpush1.bf16.msra.mxu0 0
      %4358 = vmatprep.subr.bf16.mxu0 0
      %4359 = vmatpush1.bf16.msra.mxu0 0
      %4360 = vmatprep.subr.bf16.mxu0 0
      %4361 = vmatpush1.bf16.msra.mxu0 0
      %4362 = vmatprep.subr.bf16.mxu0 0
      %4363 = vmatpush1.bf16.msra.mxu0 0
      %4364 = vmatprep.subr.bf16.mxu0 0
      %4365 = vmatpush1.bf16.msra.mxu0 %v4352
      %4366 = vmatprep.subr.bf16.mxu0 0
      %4367 = vmatpush1.bf16.msra.mxu0 %v4347
      %4368 = vmatprep.subr.bf16.mxu0 0
      %4369 = vmatpush1.bf16.msra.mxu0 %v4346
      %4370 = vmatprep.subr.bf16.mxu0 0
      %4371 = vmatpush2.bf16.msra.mxu0 0
      %4372 = vmatprep.subr.bf16.mxu0 0
      %4373 = vmatpush2.bf16.msra.mxu0 0
      %4374 = vmatprep.subr.bf16.mxu0 0
      %4375 = vmatpush2.bf16.msra.mxu0 0
      %4376 = vmatprep.subr.bf16.mxu0 0
      %4377 = vmatpush2.bf16.msra.mxu0 0
      %4378 = vmatprep.subr.bf16.mxu0 0
      %4379 = vmatpush2.bf16.msra.mxu0 0
      %4380 = vmatprep.subr.bf16.mxu0 0
      %4381 = vmatpush2.bf16.msra.mxu0 0
      %4382 = vmatprep.subr.bf16.mxu0 0
      %4383 = vmatpush2.bf16.msra.mxu0 0
      %4384 = vmatprep.subr.bf16.mxu0 0
      %4385 = vmatpush2.bf16.msra.mxu0 0
      %4386 = vmatprep.mubr.bf16.mxu0 0
      %4387 = vmatmul.mubr.bf16.gmra.mxu0 %v475
      %v4388 = vpop.f32.mrf.mxu0
      %v4389 = vadd.f32 %v4334, %v4388
      %v4390 = vpop.f32.mrf.mxu0
      %v4391 = vpop.f32.mrf.mxu0
      %v4392 = vadd.f32 %v4334, %v4391
      %v4393 = vpop.f32.mrf.mxu0
      %4394 = vmatprep.mubr.bf16.mxu0 0
      %4395 = vmatmul.mubr.bf16.gmra.mxu0 %v478
      %v4396 = vpop.f32.mrf.mxu0
      %v4397 = vadd.f32 %v4334, %v4396
      %v4398 = vpop.f32.mrf.mxu0
      %v4399 = vpop.f32.mrf.mxu0
      %v4400 = vadd.f32 %v4334, %v4399
      %v4401 = vpop.f32.mrf.mxu0
      %4402 = vmatprep.mubr.bf16.mxu0 0
      %4403 = vmatmul.mubr.bf16.gmra.mxu0 %v481
      %v4404 = vpop.f32.mrf.mxu0
      %v4405 = vadd.f32 %v4334, %v4404
      %v4406 = vpop.f32.mrf.mxu0
      %v4407 = vpop.f32.mrf.mxu0
      %v4408 = vadd.f32 %v4334, %v4407
      %v4409 = vpop.f32.mrf.mxu0
      %4410 = vmatprep.mubr.bf16.mxu0 0
      %4411 = vmatmul.mubr.bf16.gmra.mxu0 %v484
      %v4412 = vpop.f32.mrf.mxu0
      %v4413 = vadd.f32 %v4334, %v4412
      %v4414 = vpop.f32.mrf.mxu0
      %v4415 = vpop.f32.mrf.mxu0
      %v4416 = vadd.f32 %v4334, %v4415
      %v4417 = vpop.f32.mrf.mxu0
      %4418 = vmatprep.mubr.bf16.mxu0 0
      %4419 = vmatmul.mubr.bf16.gmra.mxu0 %v487
      %v4420 = vpop.f32.mrf.mxu0
      %v4421 = vadd.f32 %v4334, %v4420
      %v4422 = vpop.f32.mrf.mxu0
      %v4423 = vpop.f32.mrf.mxu0
      %v4424 = vadd.f32 %v4334, %v4423
      %v4425 = vpop.f32.mrf.mxu0
      %4426 = vmatprep.mubr.bf16.mxu0 0
      %4427 = vmatmul.mubr.bf16.gmra.mxu0 %v490
      %v4428 = vpop.f32.mrf.mxu0
      %v4429 = vadd.f32 %v4334, %v4428
      %v4430 = vpop.f32.mrf.mxu0
      %v4431 = vpop.f32.mrf.mxu0
      %v4432 = vadd.f32 %v4334, %v4431
      %v4433 = vpop.f32.mrf.mxu0
      %4434 = vmatprep.mubr.bf16.mxu0 0
      %4435 = vmatmul.mubr.bf16.gmra.mxu0 %v493
      %v4436 = vpop.f32.mrf.mxu0
      %v4437 = vadd.f32 %v4334, %v4436
      %v4438 = vpop.f32.mrf.mxu0
      %v4439 = vpop.f32.mrf.mxu0
      %v4440 = vadd.f32 %v4334, %v4439
      %v4441 = vpop.f32.mrf.mxu0
      %4442 = vmatprep.mubr.bf16.mxu0 0
      %4443 = vmatmul.mubr.bf16.gmra.mxu0 %v496
      %v4444 = vpop.f32.mrf.mxu0
      %v4445 = vadd.f32 %v4334, %v4444
      %v4446 = vpop.f32.mrf.mxu0
      %v4447 = vpop.f32.mrf.mxu0
      %v4448 = vadd.f32 %v4334, %v4447
      %v4449 = vpop.f32.mrf.mxu0
      %4450 = vmatprep.mubr.bf16.mxu0 0
      %4451 = vmatmul.mubr.bf16.gmra.mxu0 %v499
      %v4452 = vpop.f32.mrf.mxu0
      %v4453 = vadd.f32 %v4334, %v4452
      %v4454 = vpop.f32.mrf.mxu0
      %v4455 = vpop.f32.mrf.mxu0
      %v4456 = vadd.f32 %v4334, %v4455
      %v4457 = vpop.f32.mrf.mxu0
      %4458 = vmatprep.mubr.bf16.mxu0 0
      %4459 = vmatmul.mubr.bf16.gmra.mxu0 %v502
      %v4460 = vpop.f32.mrf.mxu0
      %v4461 = vadd.f32 %v4334, %v4460
      %v4462 = vpop.f32.mrf.mxu0
      %v4463 = vpop.f32.mrf.mxu0
      %v4464 = vadd.f32 %v4334, %v4463
      %v4465 = vpop.f32.mrf.mxu0
      %4466 = vmatprep.mubr.bf16.mxu0 0
      %4467 = vmatmul.mubr.bf16.gmra.mxu0 %v505
      %v4468 = vpop.f32.mrf.mxu0
      %v4469 = vadd.f32 %v4334, %v4468
      %v4470 = vpop.f32.mrf.mxu0
      %v4471 = vpop.f32.mrf.mxu0
      %v4472 = vadd.f32 %v4334, %v4471
      %v4473 = vpop.f32.mrf.mxu0
      %4474 = vmatprep.mubr.bf16.mxu0 0
      %4475 = vmatmul.mubr.bf16.gmra.mxu0 %v508
      %v4476 = vpop.f32.mrf.mxu0
      %v4477 = vadd.f32 %v4334, %v4476
      %v4478 = vpop.f32.mrf.mxu0
      %v4479 = vpop.f32.mrf.mxu0
      %v4480 = vadd.f32 %v4334, %v4479
      %v4481 = vpop.f32.mrf.mxu0
      %4482 = vmatprep.mubr.bf16.mxu0 0
      %4483 = vmatmul.mubr.bf16.gmra.mxu0 %v511
      %v4484 = vpop.f32.mrf.mxu0
      %v4485 = vadd.f32 %v4334, %v4484
      %v4486 = vpop.f32.mrf.mxu0
      %v4487 = vpop.f32.mrf.mxu0
      %v4488 = vadd.f32 %v4334, %v4487
      %v4489 = vpop.f32.mrf.mxu0
      %4490 = vmatprep.mubr.bf16.mxu0 0
      %4491 = vmatmul.mubr.bf16.gmra.mxu0 %v514
      %v4492 = vpop.f32.mrf.mxu0
      %v4493 = vadd.f32 %v4334, %v4492
      %v4494 = vpop.f32.mrf.mxu0
      %v4495 = vpop.f32.mrf.mxu0
      %v4496 = vadd.f32 %v4334, %v4495
      %v4497 = vpop.f32.mrf.mxu0
      %4498 = vmatprep.mubr.bf16.mxu0 0
      %4499 = vmatmul.mubr.bf16.gmra.mxu0 %v517
      %v4500 = vpop.f32.mrf.mxu0
      %v4501 = vadd.f32 %v4334, %v4500
      %v4502 = vpop.f32.mrf.mxu0
      %v4503 = vpop.f32.mrf.mxu0
      %v4504 = vadd.f32 %v4334, %v4503
      %v4505 = vpop.f32.mrf.mxu0
      %4506 = vmatprep.mubr.bf16.mxu0 0
      %4507 = vmatmul.mubr.bf16.gmra.mxu0 %v520
      %v4508 = vpop.f32.mrf.mxu0
      %v4509 = vadd.f32 %v4334, %v4508
      %v4510 = vpop.f32.mrf.mxu0
      %v4511 = vpop.f32.mrf.mxu0
      %v4512 = vadd.f32 %v4334, %v4511
      %v4513 = vpop.f32.mrf.mxu0
      %4514 = vdwg.mxu0
      %s4515 = scalar_lea.vmem %s3, 40
      %v4516 = vld [vmem:[%s4515] sm:$0xf]
      %v4517 = vld [vmem:[%s4515 + $0x4] sm:$0xf]
      %v4518 = vld [vmem:[%s4515 + $0x8] sm:$0xf]
      %v4519 = vld [vmem:[%s4515 + $0xc] sm:$0xf]
      %v4520 = vld [vmem:[%s4515 + $0x10] sm:$0x3]
      %s4521 = scalar_lea.vmem %s6, 2
      %v4522 = vld [vmem:[%s4521] sm:$0x1]
      %v4524 = vlaneseq
      %v4525 = vshrl.u32 %v4524, 7
      %v4526 = vsub.s32 0, %v4525
      %v4527 = vrot.slane %v4522, %v4526
      %v4534 = vunpack.c.l.b16 %v4516
      %v4535 = vunpack.c.l.b16 %v4517
      %v4536 = vunpack.c.l.b16 %v4518
      %v4537 = vunpack.c.l.b16 %v4519
      %v4538 = vunpack.c.l.b16 %v4520
      %v4539 = vpack.c.b16 %v4535, %v4534
      %v4540 = vpack.c.b16 %v4537, %v4536
      %v4541 = vpack.c.b16 %v4538, %v4538
      %v4545 = vsel %vm522, %v4541, 0
      %4547 = vmatprep.subr.bf16.mxu0 0
      %4548 = vmatpush1.bf16.msra.mxu0 0
      %4549 = vmatprep.subr.bf16.mxu0 0
      %4550 = vmatpush1.bf16.msra.mxu0 0
      %4551 = vmatprep.subr.bf16.mxu0 0
      %4552 = vmatpush1.bf16.msra.mxu0 0
      %4553 = vmatprep.subr.bf16.mxu0 0
      %4554 = vmatpush1.bf16.msra.mxu0 0
      %4555 = vmatprep.subr.bf16.mxu0 0
      %4556 = vmatpush1.bf16.msra.mxu0 0
      %4557 = vmatprep.subr.bf16.mxu0 0
      %4558 = vmatpush1.bf16.msra.mxu0 %v4545
      %4559 = vmatprep.subr.bf16.mxu0 0
      %4560 = vmatpush1.bf16.msra.mxu0 %v4540
      %4561 = vmatprep.subr.bf16.mxu0 0
      %4562 = vmatpush1.bf16.msra.mxu0 %v4539
      %4563 = vmatprep.subr.bf16.mxu0 0
      %4564 = vmatpush2.bf16.msra.mxu0 0
      %4565 = vmatprep.subr.bf16.mxu0 0
      %4566 = vmatpush2.bf16.msra.mxu0 0
      %4567 = vmatprep.subr.bf16.mxu0 0
      %4568 = vmatpush2.bf16.msra.mxu0 0
      %4569 = vmatprep.subr.bf16.mxu0 0
      %4570 = vmatpush2.bf16.msra.mxu0 0
      %4571 = vmatprep.subr.bf16.mxu0 0
      %4572 = vmatpush2.bf16.msra.mxu0 0
      %4573 = vmatprep.subr.bf16.mxu0 0
      %4574 = vmatpush2.bf16.msra.mxu0 0
      %4575 = vmatprep.subr.bf16.mxu0 0
      %4576 = vmatpush2.bf16.msra.mxu0 0
      %4577 = vmatprep.subr.bf16.mxu0 0
      %4578 = vmatpush2.bf16.msra.mxu0 0
      %4579 = vmatprep.mubr.bf16.mxu0 0
      %4580 = vmatmul.mubr.bf16.gmra.mxu0 %v475
      %v4581 = vpop.f32.mrf.mxu0
      %v4582 = vadd.f32 %v4527, %v4581
      %v4583 = vpop.f32.mrf.mxu0
      %v4584 = vpop.f32.mrf.mxu0
      %v4585 = vadd.f32 %v4527, %v4584
      %v4586 = vpop.f32.mrf.mxu0
      %4587 = vmatprep.mubr.bf16.mxu0 0
      %4588 = vmatmul.mubr.bf16.gmra.mxu0 %v478
      %v4589 = vpop.f32.mrf.mxu0
      %v4590 = vadd.f32 %v4527, %v4589
      %v4591 = vpop.f32.mrf.mxu0
      %v4592 = vpop.f32.mrf.mxu0
      %v4593 = vadd.f32 %v4527, %v4592
      %v4594 = vpop.f32.mrf.mxu0
      %4595 = vmatprep.mubr.bf16.mxu0 0
      %4596 = vmatmul.mubr.bf16.gmra.mxu0 %v481
      %v4597 = vpop.f32.mrf.mxu0
      %v4598 = vadd.f32 %v4527, %v4597
      %v4599 = vpop.f32.mrf.mxu0
      %v4600 = vpop.f32.mrf.mxu0
      %v4601 = vadd.f32 %v4527, %v4600
      %v4602 = vpop.f32.mrf.mxu0
      %4603 = vmatprep.mubr.bf16.mxu0 0
      %4604 = vmatmul.mubr.bf16.gmra.mxu0 %v484
      %v4605 = vpop.f32.mrf.mxu0
      %v4606 = vadd.f32 %v4527, %v4605
      %v4607 = vpop.f32.mrf.mxu0
      %v4608 = vpop.f32.mrf.mxu0
      %v4609 = vadd.f32 %v4527, %v4608
      %v4610 = vpop.f32.mrf.mxu0
      %4611 = vmatprep.mubr.bf16.mxu0 0
      %4612 = vmatmul.mubr.bf16.gmra.mxu0 %v487
      %v4613 = vpop.f32.mrf.mxu0
      %v4614 = vadd.f32 %v4527, %v4613
      %v4615 = vpop.f32.mrf.mxu0
      %v4616 = vpop.f32.mrf.mxu0
      %v4617 = vadd.f32 %v4527, %v4616
      %v4618 = vpop.f32.mrf.mxu0
      %4619 = vmatprep.mubr.bf16.mxu0 0
      %4620 = vmatmul.mubr.bf16.gmra.mxu0 %v490
      %v4621 = vpop.f32.mrf.mxu0
      %v4622 = vadd.f32 %v4527, %v4621
      %v4623 = vpop.f32.mrf.mxu0
      %v4624 = vpop.f32.mrf.mxu0
      %v4625 = vadd.f32 %v4527, %v4624
      %v4626 = vpop.f32.mrf.mxu0
      %4627 = vmatprep.mubr.bf16.mxu0 0
      %4628 = vmatmul.mubr.bf16.gmra.mxu0 %v493
      %v4629 = vpop.f32.mrf.mxu0
      %v4630 = vadd.f32 %v4527, %v4629
      %v4631 = vpop.f32.mrf.mxu0
      %v4632 = vpop.f32.mrf.mxu0
      %v4633 = vadd.f32 %v4527, %v4632
      %v4634 = vpop.f32.mrf.mxu0
      %4635 = vmatprep.mubr.bf16.mxu0 0
      %4636 = vmatmul.mubr.bf16.gmra.mxu0 %v496
      %v4637 = vpop.f32.mrf.mxu0
      %v4638 = vadd.f32 %v4527, %v4637
      %v4639 = vpop.f32.mrf.mxu0
      %v4640 = vpop.f32.mrf.mxu0
      %v4641 = vadd.f32 %v4527, %v4640
      %v4642 = vpop.f32.mrf.mxu0
      %4643 = vmatprep.mubr.bf16.mxu0 0
      %4644 = vmatmul.mubr.bf16.gmra.mxu0 %v499
      %v4645 = vpop.f32.mrf.mxu0
      %v4646 = vadd.f32 %v4527, %v4645
      %v4647 = vpop.f32.mrf.mxu0
      %v4648 = vpop.f32.mrf.mxu0
      %v4649 = vadd.f32 %v4527, %v4648
      %v4650 = vpop.f32.mrf.mxu0
      %4651 = vmatprep.mubr.bf16.mxu0 0
      %4652 = vmatmul.mubr.bf16.gmra.mxu0 %v502
      %v4653 = vpop.f32.mrf.mxu0
      %v4654 = vadd.f32 %v4527, %v4653
      %v4655 = vpop.f32.mrf.mxu0
      %v4656 = vpop.f32.mrf.mxu0
      %v4657 = vadd.f32 %v4527, %v4656
      %v4658 = vpop.f32.mrf.mxu0
      %4659 = vmatprep.mubr.bf16.mxu0 0
      %4660 = vmatmul.mubr.bf16.gmra.mxu0 %v505
      %v4661 = vpop.f32.mrf.mxu0
      %v4662 = vadd.f32 %v4527, %v4661
      %v4663 = vpop.f32.mrf.mxu0
      %v4664 = vpop.f32.mrf.mxu0
      %v4665 = vadd.f32 %v4527, %v4664
      %v4666 = vpop.f32.mrf.mxu0
      %4667 = vmatprep.mubr.bf16.mxu0 0
      %4668 = vmatmul.mubr.bf16.gmra.mxu0 %v508
      %v4669 = vpop.f32.mrf.mxu0
      %v4670 = vadd.f32 %v4527, %v4669
      %v4671 = vpop.f32.mrf.mxu0
      %v4672 = vpop.f32.mrf.mxu0
      %v4673 = vadd.f32 %v4527, %v4672
      %v4674 = vpop.f32.mrf.mxu0
      %4675 = vmatprep.mubr.bf16.mxu0 0
      %4676 = vmatmul.mubr.bf16.gmra.mxu0 %v511
      %v4677 = vpop.f32.mrf.mxu0
      %v4678 = vadd.f32 %v4527, %v4677
      %v4679 = vpop.f32.mrf.mxu0
      %v4680 = vpop.f32.mrf.mxu0
      %v4681 = vadd.f32 %v4527, %v4680
      %v4682 = vpop.f32.mrf.mxu0
      %4683 = vmatprep.mubr.bf16.mxu0 0
      %4684 = vmatmul.mubr.bf16.gmra.mxu0 %v514
      %v4685 = vpop.f32.mrf.mxu0
      %v4686 = vadd.f32 %v4527, %v4685
      %v4687 = vpop.f32.mrf.mxu0
      %v4688 = vpop.f32.mrf.mxu0
      %v4689 = vadd.f32 %v4527, %v4688
      %v4690 = vpop.f32.mrf.mxu0
      %4691 = vmatprep.mubr.bf16.mxu0 0
      %4692 = vmatmul.mubr.bf16.gmra.mxu0 %v517
      %v4693 = vpop.f32.mrf.mxu0
      %v4694 = vadd.f32 %v4527, %v4693
      %v4695 = vpop.f32.mrf.mxu0
      %v4696 = vpop.f32.mrf.mxu0
      %v4697 = vadd.f32 %v4527, %v4696
      %v4698 = vpop.f32.mrf.mxu0
      %4699 = vmatprep.mubr.bf16.mxu0 0
      %4700 = vmatmul.mubr.bf16.gmra.mxu0 %v520
      %v4701 = vpop.f32.mrf.mxu0
      %v4702 = vadd.f32 %v4527, %v4701
      %v4703 = vpop.f32.mrf.mxu0
      %v4704 = vpop.f32.mrf.mxu0
      %v4705 = vadd.f32 %v4527, %v4704
      %v4706 = vpop.f32.mrf.mxu0
      %4707 = vdwg.mxu0
      %v4708 = vpack.c.bf16 %v4199, %v4196
      %v4709 = vpack.c.bf16 %v4207, %v4204
      %v4710 = vpack.c.bf16 %v4215, %v4212
      %v4711 = vpack.c.bf16 %v4223, %v4220
      %v4712 = vpack.c.bf16 %v4231, %v4228
      %v4713 = vpack.c.bf16 %v4239, %v4236
      %v4714 = vpack.c.bf16 %v4247, %v4244
      %v4715 = vpack.c.bf16 %v4255, %v4252
      %v4716 = vpack.c.bf16 %v4263, %v4260
      %v4717 = vpack.c.bf16 %v4271, %v4268
      %v4718 = vpack.c.bf16 %v4279, %v4276
      %v4719 = vpack.c.bf16 %v4287, %v4284
      %v4720 = vpack.c.bf16 %v4295, %v4292
      %v4721 = vpack.c.bf16 %v4303, %v4300
      %v4722 = vpack.c.bf16 %v4311, %v4308
      %v4723 = vpack.c.bf16 %v4319, %v4316
      %v4724 = vpack.c.bf16 %v4392, %v4389
      %v4725 = vpack.c.bf16 %v4400, %v4397
      %v4726 = vpack.c.bf16 %v4408, %v4405
      %v4727 = vpack.c.bf16 %v4416, %v4413
      %v4728 = vpack.c.bf16 %v4424, %v4421
      %v4729 = vpack.c.bf16 %v4432, %v4429
      %v4730 = vpack.c.bf16 %v4440, %v4437
      %v4731 = vpack.c.bf16 %v4448, %v4445
      %v4732 = vpack.c.bf16 %v4456, %v4453
      %v4733 = vpack.c.bf16 %v4464, %v4461
      %v4734 = vpack.c.bf16 %v4472, %v4469
      %v4735 = vpack.c.bf16 %v4480, %v4477
      %v4736 = vpack.c.bf16 %v4488, %v4485
      %v4737 = vpack.c.bf16 %v4496, %v4493
      %v4738 = vpack.c.bf16 %v4504, %v4501
      %v4739 = vpack.c.bf16 %v4512, %v4509
      %v4741 = vsel %vm1101, %v4708, 0
      %v4744 = vsel %vm1101, %v4709, 0
      %v4747 = vsel %vm1101, %v4710, 0
      %v4750 = vsel %vm1101, %v4711, 0
      %v4753 = vsel %vm1101, %v4712, 0
      %v4756 = vsel %vm1101, %v4713, 0
      %v4759 = vsel %vm1101, %v4714, 0
      %v4762 = vsel %vm1101, %v4715, 0
      %v4765 = vsel %vm1101, %v4716, 0
      %v4768 = vsel %vm1101, %v4717, 0
      %v4771 = vsel %vm1101, %v4718, 0
      %v4774 = vsel %vm1101, %v4719, 0
      %v4777 = vsel %vm1101, %v4720, 0
      %v4780 = vsel %vm1101, %v4721, 0
      %v4783 = vsel %vm1101, %v4722, 0
      %v4786 = vsel %vm1101, %v4723, 0
      %v4789 = vsel %vm1101, %v4724, 0
      %v4792 = vsel %vm1101, %v4725, 0
      %v4795 = vsel %vm1101, %v4726, 0
      %v4798 = vsel %vm1101, %v4727, 0
      %v4801 = vsel %vm1101, %v4728, 0
      %v4804 = vsel %vm1101, %v4729, 0
      %v4807 = vsel %vm1101, %v4730, 0
      %v4810 = vsel %vm1101, %v4731, 0
      %v4813 = vsel %vm1101, %v4732, 0
      %v4816 = vsel %vm1101, %v4733, 0
      %v4819 = vsel %vm1101, %v4734, 0
      %v4822 = vsel %vm1101, %v4735, 0
      %v4825 = vsel %vm1101, %v4736, 0
      %v4828 = vsel %vm1101, %v4737, 0
      %v4831 = vsel %vm1101, %v4738, 0
      %v4834 = vsel %vm1101, %v4739, 0
      %4836 = vmatprep.subr.bf16.mxu0 0
      %4837 = vmatpush1.bf16.xpose.msra.mxu0 %v4810
      %4838 = vmatprep.subr.bf16.mxu0 0
      %4839 = vmatpush1.bf16.xpose.msra.mxu0 %v4807
      %4840 = vmatprep.subr.bf16.mxu0 0
      %4841 = vmatpush1.bf16.xpose.msra.mxu0 %v4804
      %4842 = vmatprep.subr.bf16.mxu0 0
      %4843 = vmatpush1.bf16.xpose.msra.mxu0 %v4801
      %4844 = vmatprep.subr.bf16.mxu0 0
      %4845 = vmatpush1.bf16.xpose.msra.mxu0 %v4798
      %4846 = vmatprep.subr.bf16.mxu0 0
      %4847 = vmatpush1.bf16.xpose.msra.mxu0 %v4795
      %4848 = vmatprep.subr.bf16.mxu0 0
      %4849 = vmatpush1.bf16.xpose.msra.mxu0 %v4792
      %4850 = vmatprep.subr.bf16.mxu0 0
      %4851 = vmatpush1.bf16.xpose.msra.mxu0 %v4789
      %4852 = vmatprep.subr.bf16.mxu0 0
      %4853 = vmatpush2.bf16.xpose.msra.mxu0 %v4834
      %4854 = vmatprep.subr.bf16.mxu0 0
      %4855 = vmatpush2.bf16.xpose.msra.mxu0 %v4831
      %4856 = vmatprep.subr.bf16.mxu0 0
      %4857 = vmatpush2.bf16.xpose.msra.mxu0 %v4828
      %4858 = vmatprep.subr.bf16.mxu0 0
      %4859 = vmatpush2.bf16.xpose.msra.mxu0 %v4825
      %4860 = vmatprep.subr.bf16.mxu0 0
      %4861 = vmatpush2.bf16.xpose.msra.mxu0 %v4822
      %4862 = vmatprep.subr.bf16.mxu0 0
      %4863 = vmatpush2.bf16.xpose.msra.mxu0 %v4819
      %4864 = vmatprep.subr.bf16.mxu0 0
      %4865 = vmatpush2.bf16.xpose.msra.mxu0 %v4816
      %4866 = vmatprep.subr.bf16.mxu0 0
      %4867 = vmatpush2.bf16.xpose.msra.mxu0 %v4813
      %4868 = vmatprep.mubr.bf16.mxu0 0
      %4869 = vmatmul.mubr.bf16.gmra.mxu0 %v4741
      %v4870 = vpop.f32.mrf.mxu0
      %v4871 = vadd.f32 0.0, %v4870
      %v4872 = vpop.f32.mrf.mxu0
      %v4873 = vadd.f32 0.0, %v4872
      %v4874 = vpop.f32.mrf.mxu0
      %v4875 = vadd.f32 0.0, %v4874
      %v4876 = vpop.f32.mrf.mxu0
      %v4877 = vadd.f32 0.0, %v4876
      %4878 = vmatprep.mubr.bf16.mxu0 0
      %4879 = vmatmul.mubr.bf16.gmra.mxu0 %v4744
      %v4880 = vpop.f32.mrf.mxu0
      %v4881 = vadd.f32 0.0, %v4880
      %v4882 = vpop.f32.mrf.mxu0
      %v4883 = vadd.f32 0.0, %v4882
      %v4884 = vpop.f32.mrf.mxu0
      %v4885 = vadd.f32 0.0, %v4884
      %v4886 = vpop.f32.mrf.mxu0
      %v4887 = vadd.f32 0.0, %v4886
      %4888 = vmatprep.mubr.bf16.mxu0 0
      %4889 = vmatmul.mubr.bf16.gmra.mxu0 %v4747
      %v4890 = vpop.f32.mrf.mxu0
      %v4891 = vadd.f32 0.0, %v4890
      %v4892 = vpop.f32.mrf.mxu0
      %v4893 = vadd.f32 0.0, %v4892
      %v4894 = vpop.f32.mrf.mxu0
      %v4895 = vadd.f32 0.0, %v4894
      %v4896 = vpop.f32.mrf.mxu0
      %v4897 = vadd.f32 0.0, %v4896
      %4898 = vmatprep.mubr.bf16.mxu0 0
      %4899 = vmatmul.mubr.bf16.gmra.mxu0 %v4750
      %v4900 = vpop.f32.mrf.mxu0
      %v4901 = vadd.f32 0.0, %v4900
      %v4902 = vpop.f32.mrf.mxu0
      %v4903 = vadd.f32 0.0, %v4902
      %v4904 = vpop.f32.mrf.mxu0
      %v4905 = vadd.f32 0.0, %v4904
      %v4906 = vpop.f32.mrf.mxu0
      %v4907 = vadd.f32 0.0, %v4906
      %4908 = vmatprep.mubr.bf16.mxu0 0
      %4909 = vmatmul.mubr.bf16.gmra.mxu0 %v4753
      %v4910 = vpop.f32.mrf.mxu0
      %v4911 = vadd.f32 0.0, %v4910
      %v4912 = vpop.f32.mrf.mxu0
      %v4913 = vadd.f32 0.0, %v4912
      %v4914 = vpop.f32.mrf.mxu0
      %v4915 = vadd.f32 0.0, %v4914
      %v4916 = vpop.f32.mrf.mxu0
      %v4917 = vadd.f32 0.0, %v4916
      %4918 = vmatprep.mubr.bf16.mxu0 0
      %4919 = vmatmul.mubr.bf16.gmra.mxu0 %v4756
      %v4920 = vpop.f32.mrf.mxu0
      %v4921 = vadd.f32 0.0, %v4920
      %v4922 = vpop.f32.mrf.mxu0
      %v4923 = vadd.f32 0.0, %v4922
      %v4924 = vpop.f32.mrf.mxu0
      %v4925 = vadd.f32 0.0, %v4924
      %v4926 = vpop.f32.mrf.mxu0
      %v4927 = vadd.f32 0.0, %v4926
      %4928 = vmatprep.mubr.bf16.mxu0 0
      %4929 = vmatmul.mubr.bf16.gmra.mxu0 %v4759
      %v4930 = vpop.f32.mrf.mxu0
      %v4931 = vadd.f32 0.0, %v4930
      %v4932 = vpop.f32.mrf.mxu0
      %v4933 = vadd.f32 0.0, %v4932
      %v4934 = vpop.f32.mrf.mxu0
      %v4935 = vadd.f32 0.0, %v4934
      %v4936 = vpop.f32.mrf.mxu0
      %v4937 = vadd.f32 0.0, %v4936
      %4938 = vmatprep.mubr.bf16.mxu0 0
      %4939 = vmatmul.mubr.bf16.gmra.mxu0 %v4762
      %v4940 = vpop.f32.mrf.mxu0
      %v4941 = vadd.f32 0.0, %v4940
      %v4942 = vpop.f32.mrf.mxu0
      %v4943 = vadd.f32 0.0, %v4942
      %v4944 = vpop.f32.mrf.mxu0
      %v4945 = vadd.f32 0.0, %v4944
      %v4946 = vpop.f32.mrf.mxu0
      %v4947 = vadd.f32 0.0, %v4946
      %4948 = vmatprep.mubr.bf16.mxu0 0
      %4949 = vmatmul.mubr.bf16.gmra.mxu0 %v4765
      %v4950 = vpop.f32.mrf.mxu0
      %v4951 = vadd.f32 0.0, %v4950
      %v4952 = vpop.f32.mrf.mxu0
      %v4953 = vadd.f32 0.0, %v4952
      %v4954 = vpop.f32.mrf.mxu0
      %v4955 = vadd.f32 0.0, %v4954
      %v4956 = vpop.f32.mrf.mxu0
      %v4957 = vadd.f32 0.0, %v4956
      %4958 = vmatprep.mubr.bf16.mxu0 0
      %4959 = vmatmul.mubr.bf16.gmra.mxu0 %v4768
      %v4960 = vpop.f32.mrf.mxu0
      %v4961 = vadd.f32 0.0, %v4960
      %v4962 = vpop.f32.mrf.mxu0
      %v4963 = vadd.f32 0.0, %v4962
      %v4964 = vpop.f32.mrf.mxu0
      %v4965 = vadd.f32 0.0, %v4964
      %v4966 = vpop.f32.mrf.mxu0
      %v4967 = vadd.f32 0.0, %v4966
      %4968 = vmatprep.mubr.bf16.mxu0 0
      %4969 = vmatmul.mubr.bf16.gmra.mxu0 %v4771
      %v4970 = vpop.f32.mrf.mxu0
      %v4971 = vadd.f32 0.0, %v4970
      %v4972 = vpop.f32.mrf.mxu0
      %v4973 = vadd.f32 0.0, %v4972
      %v4974 = vpop.f32.mrf.mxu0
      %v4975 = vadd.f32 0.0, %v4974
      %v4976 = vpop.f32.mrf.mxu0
      %v4977 = vadd.f32 0.0, %v4976
      %4978 = vmatprep.mubr.bf16.mxu0 0
      %4979 = vmatmul.mubr.bf16.gmra.mxu0 %v4774
      %v4980 = vpop.f32.mrf.mxu0
      %v4981 = vadd.f32 0.0, %v4980
      %v4982 = vpop.f32.mrf.mxu0
      %v4983 = vadd.f32 0.0, %v4982
      %v4984 = vpop.f32.mrf.mxu0
      %v4985 = vadd.f32 0.0, %v4984
      %v4986 = vpop.f32.mrf.mxu0
      %v4987 = vadd.f32 0.0, %v4986
      %4988 = vmatprep.mubr.bf16.mxu0 0
      %4989 = vmatmul.mubr.bf16.gmra.mxu0 %v4777
      %v4990 = vpop.f32.mrf.mxu0
      %v4991 = vadd.f32 0.0, %v4990
      %v4992 = vpop.f32.mrf.mxu0
      %v4993 = vadd.f32 0.0, %v4992
      %v4994 = vpop.f32.mrf.mxu0
      %v4995 = vadd.f32 0.0, %v4994
      %v4996 = vpop.f32.mrf.mxu0
      %v4997 = vadd.f32 0.0, %v4996
      %4998 = vmatprep.mubr.bf16.mxu0 0
      %4999 = vmatmul.mubr.bf16.gmra.mxu0 %v4780
      %v5000 = vpop.f32.mrf.mxu0
      %v5001 = vadd.f32 0.0, %v5000
      %v5002 = vpop.f32.mrf.mxu0
      %v5003 = vadd.f32 0.0, %v5002
      %v5004 = vpop.f32.mrf.mxu0
      %v5005 = vadd.f32 0.0, %v5004
      %v5006 = vpop.f32.mrf.mxu0
      %v5007 = vadd.f32 0.0, %v5006
      %5008 = vmatprep.mubr.bf16.mxu0 0
      %5009 = vmatmul.mubr.bf16.gmra.mxu0 %v4783
      %v5010 = vpop.f32.mrf.mxu0
      %v5011 = vadd.f32 0.0, %v5010
      %v5012 = vpop.f32.mrf.mxu0
      %v5013 = vadd.f32 0.0, %v5012
      %v5014 = vpop.f32.mrf.mxu0
      %v5015 = vadd.f32 0.0, %v5014
      %v5016 = vpop.f32.mrf.mxu0
      %v5017 = vadd.f32 0.0, %v5016
      %5018 = vmatprep.mubr.bf16.mxu0 0
      %5019 = vmatmul.mubr.bf16.gmra.mxu0 %v4786
      %v5020 = vpop.f32.mrf.mxu0
      %v5021 = vadd.f32 0.0, %v5020
      %v5022 = vpop.f32.mrf.mxu0
      %v5023 = vadd.f32 0.0, %v5022
      %v5024 = vpop.f32.mrf.mxu0
      %v5025 = vadd.f32 0.0, %v5024
      %v5026 = vpop.f32.mrf.mxu0
      %v5027 = vadd.f32 0.0, %v5026
      %5028 = vdwg.mxu0
      %v5029 = vmax.f32 %v4871, %v4873
      %5030 = vmax.xlane.f32.xlu0 %v5029
      %v5031 = vpop.xlane.xlu0 %5030
      %v5032 = vmax.f32 %v4875, %v4877
      %5033 = vmax.xlane.f32.xlu0 %v5032
      %v5034 = vpop.xlane.xlu0 %5033
      %v5035 = vmax.f32 %v4881, %v4883
      %5036 = vmax.xlane.f32.xlu0 %v5035
      %v5037 = vpop.xlane.xlu0 %5036
      %v5038 = vmax.f32 %v4885, %v4887
      %5039 = vmax.xlane.f32.xlu0 %v5038
      %v5040 = vpop.xlane.xlu0 %5039
      %v5041 = vmax.f32 %v4891, %v4893
      %5042 = vmax.xlane.f32.xlu0 %v5041
      %v5043 = vpop.xlane.xlu0 %5042
      %v5044 = vmax.f32 %v4895, %v4897
      %5045 = vmax.xlane.f32.xlu0 %v5044
      %v5046 = vpop.xlane.xlu0 %5045
      %v5047 = vmax.f32 %v4901, %v4903
      %5048 = vmax.xlane.f32.xlu0 %v5047
      %v5049 = vpop.xlane.xlu0 %5048
      %v5050 = vmax.f32 %v4905, %v4907
      %5051 = vmax.xlane.f32.xlu0 %v5050
      %v5052 = vpop.xlane.xlu0 %5051
      %v5053 = vmax.f32 %v4911, %v4913
      %5054 = vmax.xlane.f32.xlu0 %v5053
      %v5055 = vpop.xlane.xlu0 %5054
      %v5056 = vmax.f32 %v4915, %v4917
      %5057 = vmax.xlane.f32.xlu0 %v5056
      %v5058 = vpop.xlane.xlu0 %5057
      %v5059 = vmax.f32 %v4921, %v4923
      %5060 = vmax.xlane.f32.xlu0 %v5059
      %v5061 = vpop.xlane.xlu0 %5060
      %v5062 = vmax.f32 %v4925, %v4927
      %5063 = vmax.xlane.f32.xlu0 %v5062
      %v5064 = vpop.xlane.xlu0 %5063
      %v5065 = vmax.f32 %v4931, %v4933
      %5066 = vmax.xlane.f32.xlu0 %v5065
      %v5067 = vpop.xlane.xlu0 %5066
      %v5068 = vmax.f32 %v4935, %v4937
      %5069 = vmax.xlane.f32.xlu0 %v5068
      %v5070 = vpop.xlane.xlu0 %5069
      %v5071 = vmax.f32 %v4941, %v4943
      %5072 = vmax.xlane.f32.xlu0 %v5071
      %v5073 = vpop.xlane.xlu0 %5072
      %v5074 = vmax.f32 %v4945, %v4947
      %5075 = vmax.xlane.f32.xlu0 %v5074
      %v5076 = vpop.xlane.xlu0 %5075
      %v5077 = vmax.f32 %v4951, %v4953
      %5078 = vmax.xlane.f32.xlu0 %v5077
      %v5079 = vpop.xlane.xlu0 %5078
      %v5080 = vmax.f32 %v4955, %v4957
      %5081 = vmax.xlane.f32.xlu0 %v5080
      %v5082 = vpop.xlane.xlu0 %5081
      %v5083 = vmax.f32 %v4961, %v4963
      %5084 = vmax.xlane.f32.xlu0 %v5083
      %v5085 = vpop.xlane.xlu0 %5084
      %v5086 = vmax.f32 %v4965, %v4967
      %5087 = vmax.xlane.f32.xlu0 %v5086
      %v5088 = vpop.xlane.xlu0 %5087
      %v5089 = vmax.f32 %v4971, %v4973
      %5090 = vmax.xlane.f32.xlu0 %v5089
      %v5091 = vpop.xlane.xlu0 %5090
      %v5092 = vmax.f32 %v4975, %v4977
      %5093 = vmax.xlane.f32.xlu0 %v5092
      %v5094 = vpop.xlane.xlu0 %5093
      %v5095 = vmax.f32 %v4981, %v4983
      %5096 = vmax.xlane.f32.xlu0 %v5095
      %v5097 = vpop.xlane.xlu0 %5096
      %v5098 = vmax.f32 %v4985, %v4987
      %5099 = vmax.xlane.f32.xlu0 %v5098
      %v5100 = vpop.xlane.xlu0 %5099
      %v5101 = vmax.f32 %v4991, %v4993
      %5102 = vmax.xlane.f32.xlu0 %v5101
      %v5103 = vpop.xlane.xlu0 %5102
      %v5104 = vmax.f32 %v4995, %v4997
      %5105 = vmax.xlane.f32.xlu0 %v5104
      %v5106 = vpop.xlane.xlu0 %5105
      %v5107 = vmax.f32 %v5001, %v5003
      %5108 = vmax.xlane.f32.xlu0 %v5107
      %v5109 = vpop.xlane.xlu0 %5108
      %v5110 = vmax.f32 %v5005, %v5007
      %5111 = vmax.xlane.f32.xlu0 %v5110
      %v5112 = vpop.xlane.xlu0 %5111
      %v5113 = vmax.f32 %v5011, %v5013
      %5114 = vmax.xlane.f32.xlu0 %v5113
      %v5115 = vpop.xlane.xlu0 %5114
      %v5116 = vmax.f32 %v5015, %v5017
      %5117 = vmax.xlane.f32.xlu0 %v5116
      %v5118 = vpop.xlane.xlu0 %5117
      %v5119 = vmax.f32 %v5021, %v5023
      %5120 = vmax.xlane.f32.xlu0 %v5119
      %v5121 = vpop.xlane.xlu0 %5120
      %v5122 = vmax.f32 %v5025, %v5027
      %5123 = vmax.xlane.f32.xlu0 %v5122
      %v5124 = vpop.xlane.xlu0 %5123
      %v5125 = vsub.f32 %v4871, %v5031
      %v5126 = vsub.f32 %v4873, %v5031
      %v5127 = vsub.f32 %v4875, %v5034
      %v5128 = vsub.f32 %v4877, %v5034
      %v5129 = vsub.f32 %v4881, %v5037
      %v5130 = vsub.f32 %v4883, %v5037
      %v5131 = vsub.f32 %v4885, %v5040
      %v5132 = vsub.f32 %v4887, %v5040
      %v5133 = vsub.f32 %v4891, %v5043
      %v5134 = vsub.f32 %v4893, %v5043
      %v5135 = vsub.f32 %v4895, %v5046
      %v5136 = vsub.f32 %v4897, %v5046
      %v5137 = vsub.f32 %v4901, %v5049
      %v5138 = vsub.f32 %v4903, %v5049
      %v5139 = vsub.f32 %v4905, %v5052
      %v5140 = vsub.f32 %v4907, %v5052
      %v5141 = vsub.f32 %v4911, %v5055
      %v5142 = vsub.f32 %v4913, %v5055
      %v5143 = vsub.f32 %v4915, %v5058
      %v5144 = vsub.f32 %v4917, %v5058
      %v5145 = vsub.f32 %v4921, %v5061
      %v5146 = vsub.f32 %v4923, %v5061
      %v5147 = vsub.f32 %v4925, %v5064
      %v5148 = vsub.f32 %v4927, %v5064
      %v5149 = vsub.f32 %v4931, %v5067
      %v5150 = vsub.f32 %v4933, %v5067
      %v5151 = vsub.f32 %v4935, %v5070
      %v5152 = vsub.f32 %v4937, %v5070
      %v5153 = vsub.f32 %v4941, %v5073
      %v5154 = vsub.f32 %v4943, %v5073
      %v5155 = vsub.f32 %v4945, %v5076
      %v5156 = vsub.f32 %v4947, %v5076
      %v5157 = vsub.f32 %v4951, %v5079
      %v5158 = vsub.f32 %v4953, %v5079
      %v5159 = vsub.f32 %v4955, %v5082
      %v5160 = vsub.f32 %v4957, %v5082
      %v5161 = vsub.f32 %v4961, %v5085
      %v5162 = vsub.f32 %v4963, %v5085
      %v5163 = vsub.f32 %v4965, %v5088
      %v5164 = vsub.f32 %v4967, %v5088
      %v5165 = vsub.f32 %v4971, %v5091
      %v5166 = vsub.f32 %v4973, %v5091
      %v5167 = vsub.f32 %v4975, %v5094
      %v5168 = vsub.f32 %v4977, %v5094
      %v5169 = vsub.f32 %v4981, %v5097
      %v5170 = vsub.f32 %v4983, %v5097
      %v5171 = vsub.f32 %v4985, %v5100
      %v5172 = vsub.f32 %v4987, %v5100
      %v5173 = vsub.f32 %v4991, %v5103
      %v5174 = vsub.f32 %v4993, %v5103
      %v5175 = vsub.f32 %v4995, %v5106
      %v5176 = vsub.f32 %v4997, %v5106
      %v5177 = vsub.f32 %v5001, %v5109
      %v5178 = vsub.f32 %v5003, %v5109
      %v5179 = vsub.f32 %v5005, %v5112
      %v5180 = vsub.f32 %v5007, %v5112
      %v5181 = vsub.f32 %v5011, %v5115
      %v5182 = vsub.f32 %v5013, %v5115
      %v5183 = vsub.f32 %v5015, %v5118
      %v5184 = vsub.f32 %v5017, %v5118
      %v5185 = vsub.f32 %v5021, %v5121
      %v5186 = vsub.f32 %v5023, %v5121
      %v5187 = vsub.f32 %v5025, %v5124
      %v5188 = vsub.f32 %v5027, %v5124
      %v5189 = vmul.f32 %v5125, 1.442695
      %v5190 = vpow.pop %v5189
      %v5191 = vmul.f32 %v5126, 1.442695
      %v5192 = vpow.pop %v5191
      %v5193 = vmul.f32 %v5127, 1.442695
      %v5194 = vpow.pop %v5193
      %v5195 = vmul.f32 %v5128, 1.442695
      %v5196 = vpow.pop %v5195
      %v5197 = vmul.f32 %v5129, 1.442695
      %v5198 = vpow.pop %v5197
      %v5199 = vmul.f32 %v5130, 1.442695
      %v5200 = vpow.pop %v5199
      %v5201 = vmul.f32 %v5131, 1.442695
      %v5202 = vpow.pop %v5201
      %v5203 = vmul.f32 %v5132, 1.442695
      %v5204 = vpow.pop %v5203
      %v5205 = vmul.f32 %v5133, 1.442695
      %v5206 = vpow.pop %v5205
      %v5207 = vmul.f32 %v5134, 1.442695
      %v5208 = vpow.pop %v5207
      %v5209 = vmul.f32 %v5135, 1.442695
      %v5210 = vpow.pop %v5209
      %v5211 = vmul.f32 %v5136, 1.442695
      %v5212 = vpow.pop %v5211
      %v5213 = vmul.f32 %v5137, 1.442695
      %v5214 = vpow.pop %v5213
      %v5215 = vmul.f32 %v5138, 1.442695
      %v5216 = vpow.pop %v5215
      %v5217 = vmul.f32 %v5139, 1.442695
      %v5218 = vpow.pop %v5217
      %v5219 = vmul.f32 %v5140, 1.442695
      %v5220 = vpow.pop %v5219
      %v5221 = vmul.f32 %v5141, 1.442695
      %v5222 = vpow.pop %v5221
      %v5223 = vmul.f32 %v5142, 1.442695
      %v5224 = vpow.pop %v5223
      %v5225 = vmul.f32 %v5143, 1.442695
      %v5226 = vpow.pop %v5225
      %v5227 = vmul.f32 %v5144, 1.442695
      %v5228 = vpow.pop %v5227
      %v5229 = vmul.f32 %v5145, 1.442695
      %v5230 = vpow.pop %v5229
      %v5231 = vmul.f32 %v5146, 1.442695
      %v5232 = vpow.pop %v5231
      %v5233 = vmul.f32 %v5147, 1.442695
      %v5234 = vpow.pop %v5233
      %v5235 = vmul.f32 %v5148, 1.442695
      %v5236 = vpow.pop %v5235
      %v5237 = vmul.f32 %v5149, 1.442695
      %v5238 = vpow.pop %v5237
      %v5239 = vmul.f32 %v5150, 1.442695
      %v5240 = vpow.pop %v5239
      %v5241 = vmul.f32 %v5151, 1.442695
      %v5242 = vpow.pop %v5241
      %v5243 = vmul.f32 %v5152, 1.442695
      %v5244 = vpow.pop %v5243
      %v5245 = vmul.f32 %v5153, 1.442695
      %v5246 = vpow.pop %v5245
      %v5247 = vmul.f32 %v5154, 1.442695
      %v5248 = vpow.pop %v5247
      %v5249 = vmul.f32 %v5155, 1.442695
      %v5250 = vpow.pop %v5249
      %v5251 = vmul.f32 %v5156, 1.442695
      %v5252 = vpow.pop %v5251
      %v5253 = vmul.f32 %v5157, 1.442695
      %v5254 = vpow.pop %v5253
      %v5255 = vmul.f32 %v5158, 1.442695
      %v5256 = vpow.pop %v5255
      %v5257 = vmul.f32 %v5159, 1.442695
      %v5258 = vpow.pop %v5257
      %v5259 = vmul.f32 %v5160, 1.442695
      %v5260 = vpow.pop %v5259
      %v5261 = vmul.f32 %v5161, 1.442695
      %v5262 = vpow.pop %v5261
      %v5263 = vmul.f32 %v5162, 1.442695
      %v5264 = vpow.pop %v5263
      %v5265 = vmul.f32 %v5163, 1.442695
      %v5266 = vpow.pop %v5265
      %v5267 = vmul.f32 %v5164, 1.442695
      %v5268 = vpow.pop %v5267
      %v5269 = vmul.f32 %v5165, 1.442695
      %v5270 = vpow.pop %v5269
      %v5271 = vmul.f32 %v5166, 1.442695
      %v5272 = vpow.pop %v5271
      %v5273 = vmul.f32 %v5167, 1.442695
      %v5274 = vpow.pop %v5273
      %v5275 = vmul.f32 %v5168, 1.442695
      %v5276 = vpow.pop %v5275
      %v5277 = vmul.f32 %v5169, 1.442695
      %v5278 = vpow.pop %v5277
      %v5279 = vmul.f32 %v5170, 1.442695
      %v5280 = vpow.pop %v5279
      %v5281 = vmul.f32 %v5171, 1.442695
      %v5282 = vpow.pop %v5281
      %v5283 = vmul.f32 %v5172, 1.442695
      %v5284 = vpow.pop %v5283
      %v5285 = vmul.f32 %v5173, 1.442695
      %v5286 = vpow.pop %v5285
      %v5287 = vmul.f32 %v5174, 1.442695
      %v5288 = vpow.pop %v5287
      %v5289 = vmul.f32 %v5175, 1.442695
      %v5290 = vpow.pop %v5289
      %v5291 = vmul.f32 %v5176, 1.442695
      %v5292 = vpow.pop %v5291
      %v5293 = vmul.f32 %v5177, 1.442695
      %v5294 = vpow.pop %v5293
      %v5295 = vmul.f32 %v5178, 1.442695
      %v5296 = vpow.pop %v5295
      %v5297 = vmul.f32 %v5179, 1.442695
      %v5298 = vpow.pop %v5297
      %v5299 = vmul.f32 %v5180, 1.442695
      %v5300 = vpow.pop %v5299
      %v5301 = vmul.f32 %v5181, 1.442695
      %v5302 = vpow.pop %v5301
      %v5303 = vmul.f32 %v5182, 1.442695
      %v5304 = vpow.pop %v5303
      %v5305 = vmul.f32 %v5183, 1.442695
      %v5306 = vpow.pop %v5305
      %v5307 = vmul.f32 %v5184, 1.442695
      %v5308 = vpow.pop %v5307
      %v5309 = vmul.f32 %v5185, 1.442695
      %v5310 = vpow.pop %v5309
      %v5311 = vmul.f32 %v5186, 1.442695
      %v5312 = vpow.pop %v5311
      %v5313 = vmul.f32 %v5187, 1.442695
      %v5314 = vpow.pop %v5313
      %v5315 = vmul.f32 %v5188, 1.442695
      %v5316 = vpow.pop %v5315
      %v5317 = vadd.f32 %v5190, %v5192
      %5318 = vadd.xlane.f32.xlu0 %v5317
      %v5319 = vpop.xlane.xlu0 %5318
      %v5320 = vadd.f32 %v5194, %v5196
      %5321 = vadd.xlane.f32.xlu0 %v5320
      %v5322 = vpop.xlane.xlu0 %5321
      %v5323 = vadd.f32 %v5198, %v5200
      %5324 = vadd.xlane.f32.xlu0 %v5323
      %v5325 = vpop.xlane.xlu0 %5324
      %v5326 = vadd.f32 %v5202, %v5204
      %5327 = vadd.xlane.f32.xlu0 %v5326
      %v5328 = vpop.xlane.xlu0 %5327
      %v5329 = vadd.f32 %v5206, %v5208
      %5330 = vadd.xlane.f32.xlu0 %v5329
      %v5331 = vpop.xlane.xlu0 %5330
      %v5332 = vadd.f32 %v5210, %v5212
      %5333 = vadd.xlane.f32.xlu0 %v5332
      %v5334 = vpop.xlane.xlu0 %5333
      %v5335 = vadd.f32 %v5214, %v5216
      %5336 = vadd.xlane.f32.xlu0 %v5335
      %v5337 = vpop.xlane.xlu0 %5336
      %v5338 = vadd.f32 %v5218, %v5220
      %5339 = vadd.xlane.f32.xlu0 %v5338
      %v5340 = vpop.xlane.xlu0 %5339
      %v5341 = vadd.f32 %v5222, %v5224
      %5342 = vadd.xlane.f32.xlu0 %v5341
      %v5343 = vpop.xlane.xlu0 %5342
      %v5344 = vadd.f32 %v5226, %v5228
      %5345 = vadd.xlane.f32.xlu0 %v5344
      %v5346 = vpop.xlane.xlu0 %5345
      %v5347 = vadd.f32 %v5230, %v5232
      %5348 = vadd.xlane.f32.xlu0 %v5347
      %v5349 = vpop.xlane.xlu0 %5348
      %v5350 = vadd.f32 %v5234, %v5236
      %5351 = vadd.xlane.f32.xlu0 %v5350
      %v5352 = vpop.xlane.xlu0 %5351
      %v5353 = vadd.f32 %v5238, %v5240
      %5354 = vadd.xlane.f32.xlu0 %v5353
      %v5355 = vpop.xlane.xlu0 %5354
      %v5356 = vadd.f32 %v5242, %v5244
      %5357 = vadd.xlane.f32.xlu0 %v5356
      %v5358 = vpop.xlane.xlu0 %5357
      %v5359 = vadd.f32 %v5246, %v5248
      %5360 = vadd.xlane.f32.xlu0 %v5359
      %v5361 = vpop.xlane.xlu0 %5360
      %v5362 = vadd.f32 %v5250, %v5252
      %5363 = vadd.xlane.f32.xlu0 %v5362
      %v5364 = vpop.xlane.xlu0 %5363
      %v5365 = vadd.f32 %v5254, %v5256
      %5366 = vadd.xlane.f32.xlu0 %v5365
      %v5367 = vpop.xlane.xlu0 %5366
      %v5368 = vadd.f32 %v5258, %v5260
      %5369 = vadd.xlane.f32.xlu0 %v5368
      %v5370 = vpop.xlane.xlu0 %5369
      %v5371 = vadd.f32 %v5262, %v5264
      %5372 = vadd.xlane.f32.xlu0 %v5371
      %v5373 = vpop.xlane.xlu0 %5372
      %v5374 = vadd.f32 %v5266, %v5268
      %5375 = vadd.xlane.f32.xlu0 %v5374
      %v5376 = vpop.xlane.xlu0 %5375
      %v5377 = vadd.f32 %v5270, %v5272
      %5378 = vadd.xlane.f32.xlu0 %v5377
      %v5379 = vpop.xlane.xlu0 %5378
      %v5380 = vadd.f32 %v5274, %v5276
      %5381 = vadd.xlane.f32.xlu0 %v5380
      %v5382 = vpop.xlane.xlu0 %5381
      %v5383 = vadd.f32 %v5278, %v5280
      %5384 = vadd.xlane.f32.xlu0 %v5383
      %v5385 = vpop.xlane.xlu0 %5384
      %v5386 = vadd.f32 %v5282, %v5284
      %5387 = vadd.xlane.f32.xlu0 %v5386
      %v5388 = vpop.xlane.xlu0 %5387
      %v5389 = vadd.f32 %v5286, %v5288
      %5390 = vadd.xlane.f32.xlu0 %v5389
      %v5391 = vpop.xlane.xlu0 %5390
      %v5392 = vadd.f32 %v5290, %v5292
      %5393 = vadd.xlane.f32.xlu0 %v5392
      %v5394 = vpop.xlane.xlu0 %5393
      %v5395 = vadd.f32 %v5294, %v5296
      %5396 = vadd.xlane.f32.xlu0 %v5395
      %v5397 = vpop.xlane.xlu0 %5396
      %v5398 = vadd.f32 %v5298, %v5300
      %5399 = vadd.xlane.f32.xlu0 %v5398
      %v5400 = vpop.xlane.xlu0 %5399
      %v5401 = vadd.f32 %v5302, %v5304
      %5402 = vadd.xlane.f32.xlu0 %v5401
      %v5403 = vpop.xlane.xlu0 %5402
      %v5404 = vadd.f32 %v5306, %v5308
      %5405 = vadd.xlane.f32.xlu0 %v5404
      %v5406 = vpop.xlane.xlu0 %5405
      %v5407 = vadd.f32 %v5310, %v5312
      %5408 = vadd.xlane.f32.xlu0 %v5407
      %v5409 = vpop.xlane.xlu0 %5408
      %v5410 = vadd.f32 %v5314, %v5316
      %5411 = vadd.xlane.f32.xlu0 %v5410
      %v5412 = vpop.xlane.xlu0 %5411
      %v5413 = vrcp.pop %v5319
      %v5414 = vrcp.pop %v5322
      %v5415 = vrcp.pop %v5325
      %v5416 = vrcp.pop %v5328
      %v5417 = vrcp.pop %v5331
      %v5418 = vrcp.pop %v5334
      %v5419 = vrcp.pop %v5337
      %v5420 = vrcp.pop %v5340
      %v5421 = vrcp.pop %v5343
      %v5422 = vrcp.pop %v5346
      %v5423 = vrcp.pop %v5349
      %v5424 = vrcp.pop %v5352
      %v5425 = vrcp.pop %v5355
      %v5426 = vrcp.pop %v5358
      %v5427 = vrcp.pop %v5361
      %v5428 = vrcp.pop %v5364
      %v5429 = vrcp.pop %v5367
      %v5430 = vrcp.pop %v5370
      %v5431 = vrcp.pop %v5373
      %v5432 = vrcp.pop %v5376
      %v5433 = vrcp.pop %v5379
      %v5434 = vrcp.pop %v5382
      %v5435 = vrcp.pop %v5385
      %v5436 = vrcp.pop %v5388
      %v5437 = vrcp.pop %v5391
      %v5438 = vrcp.pop %v5394
      %v5439 = vrcp.pop %v5397
      %v5440 = vrcp.pop %v5400
      %v5441 = vrcp.pop %v5403
      %v5442 = vrcp.pop %v5406
      %v5443 = vrcp.pop %v5409
      %v5444 = vrcp.pop %v5412
      %v5445 = vmul.f32 %v5190, %v5413
      %v5446 = vmul.f32 %v5192, %v5413
      %v5447 = vmul.f32 %v5194, %v5414
      %v5448 = vmul.f32 %v5196, %v5414
      %v5449 = vmul.f32 %v5198, %v5415
      %v5450 = vmul.f32 %v5200, %v5415
      %v5451 = vmul.f32 %v5202, %v5416
      %v5452 = vmul.f32 %v5204, %v5416
      %v5453 = vmul.f32 %v5206, %v5417
      %v5454 = vmul.f32 %v5208, %v5417
      %v5455 = vmul.f32 %v5210, %v5418
      %v5456 = vmul.f32 %v5212, %v5418
      %v5457 = vmul.f32 %v5214, %v5419
      %v5458 = vmul.f32 %v5216, %v5419
      %v5459 = vmul.f32 %v5218, %v5420
      %v5460 = vmul.f32 %v5220, %v5420
      %v5461 = vmul.f32 %v5222, %v5421
      %v5462 = vmul.f32 %v5224, %v5421
      %v5463 = vmul.f32 %v5226, %v5422
      %v5464 = vmul.f32 %v5228, %v5422
      %v5465 = vmul.f32 %v5230, %v5423
      %v5466 = vmul.f32 %v5232, %v5423
      %v5467 = vmul.f32 %v5234, %v5424
      %v5468 = vmul.f32 %v5236, %v5424
      %v5469 = vmul.f32 %v5238, %v5425
      %v5470 = vmul.f32 %v5240, %v5425
      %v5471 = vmul.f32 %v5242, %v5426
      %v5472 = vmul.f32 %v5244, %v5426
      %v5473 = vmul.f32 %v5246, %v5427
      %v5474 = vmul.f32 %v5248, %v5427
      %v5475 = vmul.f32 %v5250, %v5428
      %v5476 = vmul.f32 %v5252, %v5428
      %v5477 = vmul.f32 %v5254, %v5429
      %v5478 = vmul.f32 %v5256, %v5429
      %v5479 = vmul.f32 %v5258, %v5430
      %v5480 = vmul.f32 %v5260, %v5430
      %v5481 = vmul.f32 %v5262, %v5431
      %v5482 = vmul.f32 %v5264, %v5431
      %v5483 = vmul.f32 %v5266, %v5432
      %v5484 = vmul.f32 %v5268, %v5432
      %v5485 = vmul.f32 %v5270, %v5433
      %v5486 = vmul.f32 %v5272, %v5433
      %v5487 = vmul.f32 %v5274, %v5434
      %v5488 = vmul.f32 %v5276, %v5434
      %v5489 = vmul.f32 %v5278, %v5435
      %v5490 = vmul.f32 %v5280, %v5435
      %v5491 = vmul.f32 %v5282, %v5436
      %v5492 = vmul.f32 %v5284, %v5436
      %v5493 = vmul.f32 %v5286, %v5437
      %v5494 = vmul.f32 %v5288, %v5437
      %v5495 = vmul.f32 %v5290, %v5438
      %v5496 = vmul.f32 %v5292, %v5438
      %v5497 = vmul.f32 %v5294, %v5439
      %v5498 = vmul.f32 %v5296, %v5439
      %v5499 = vmul.f32 %v5298, %v5440
      %v5500 = vmul.f32 %v5300, %v5440
      %v5501 = vmul.f32 %v5302, %v5441
      %v5502 = vmul.f32 %v5304, %v5441
      %v5503 = vmul.f32 %v5306, %v5442
      %v5504 = vmul.f32 %v5308, %v5442
      %v5505 = vmul.f32 %v5310, %v5443
      %v5506 = vmul.f32 %v5312, %v5443
      %v5507 = vmul.f32 %v5314, %v5444
      %v5508 = vmul.f32 %v5316, %v5444
      %v5509 = vpack.c.bf16 %v5447, %v5445
      %v5510 = vpack.c.bf16 %v5448, %v5446
      %v5511 = vpack.c.bf16 %v5451, %v5449
      %v5512 = vpack.c.bf16 %v5452, %v5450
      %v5513 = vpack.c.bf16 %v5455, %v5453
      %v5514 = vpack.c.bf16 %v5456, %v5454
      %v5515 = vpack.c.bf16 %v5459, %v5457
      %v5516 = vpack.c.bf16 %v5460, %v5458
      %v5517 = vpack.c.bf16 %v5463, %v5461
      %v5518 = vpack.c.bf16 %v5464, %v5462
      %v5519 = vpack.c.bf16 %v5467, %v5465
      %v5520 = vpack.c.bf16 %v5468, %v5466
      %v5521 = vpack.c.bf16 %v5471, %v5469
      %v5522 = vpack.c.bf16 %v5472, %v5470
      %v5523 = vpack.c.bf16 %v5475, %v5473
      %v5524 = vpack.c.bf16 %v5476, %v5474
      %v5525 = vpack.c.bf16 %v5479, %v5477
      %v5526 = vpack.c.bf16 %v5480, %v5478
      %v5527 = vpack.c.bf16 %v5483, %v5481
      %v5528 = vpack.c.bf16 %v5484, %v5482
      %v5529 = vpack.c.bf16 %v5487, %v5485
      %v5530 = vpack.c.bf16 %v5488, %v5486
      %v5531 = vpack.c.bf16 %v5491, %v5489
      %v5532 = vpack.c.bf16 %v5492, %v5490
      %v5533 = vpack.c.bf16 %v5495, %v5493
      %v5534 = vpack.c.bf16 %v5496, %v5494
      %v5535 = vpack.c.bf16 %v5499, %v5497
      %v5536 = vpack.c.bf16 %v5500, %v5498
      %v5537 = vpack.c.bf16 %v5503, %v5501
      %v5538 = vpack.c.bf16 %v5504, %v5502
      %v5539 = vpack.c.bf16 %v5507, %v5505
      %v5540 = vpack.c.bf16 %v5508, %v5506
      %v5541 = vpack.c.bf16 %v4585, %v4582
      %v5542 = vpack.c.bf16 %v4593, %v4590
      %v5543 = vpack.c.bf16 %v4601, %v4598
      %v5544 = vpack.c.bf16 %v4609, %v4606
      %v5545 = vpack.c.bf16 %v4617, %v4614
      %v5546 = vpack.c.bf16 %v4625, %v4622
      %v5547 = vpack.c.bf16 %v4633, %v4630
      %v5548 = vpack.c.bf16 %v4641, %v4638
      %v5549 = vpack.c.bf16 %v4649, %v4646
      %v5550 = vpack.c.bf16 %v4657, %v4654
      %v5551 = vpack.c.bf16 %v4665, %v4662
      %v5552 = vpack.c.bf16 %v4673, %v4670
      %v5553 = vpack.c.bf16 %v4681, %v4678
      %v5554 = vpack.c.bf16 %v4689, %v4686
      %v5555 = vpack.c.bf16 %v4697, %v4694
      %v5556 = vpack.c.bf16 %v4705, %v4702
      %5557 = vmatprep.subr.bf16.mxu0 0
      %5558 = vmatpush1.bf16.msra.mxu0 %v5548
      %5559 = vmatprep.subr.bf16.mxu0 0
      %5560 = vmatpush1.bf16.msra.mxu0 %v5547
      %5561 = vmatprep.subr.bf16.mxu0 0
      %5562 = vmatpush1.bf16.msra.mxu0 %v5546
      %5563 = vmatprep.subr.bf16.mxu0 0
      %5564 = vmatpush1.bf16.msra.mxu0 %v5545
      %5565 = vmatprep.subr.bf16.mxu0 0
      %5566 = vmatpush1.bf16.msra.mxu0 %v5544
      %5567 = vmatprep.subr.bf16.mxu0 0
      %5568 = vmatpush1.bf16.msra.mxu0 %v5543
      %5569 = vmatprep.subr.bf16.mxu0 0
      %5570 = vmatpush1.bf16.msra.mxu0 %v5542
      %5571 = vmatprep.subr.bf16.mxu0 0
      %5572 = vmatpush1.bf16.msra.mxu0 %v5541
      %5573 = vmatprep.subr.bf16.mxu0 0
      %5574 = vmatpush2.bf16.msra.mxu0 %v5556
      %5575 = vmatprep.subr.bf16.mxu0 0
      %5576 = vmatpush2.bf16.msra.mxu0 %v5555
      %5577 = vmatprep.subr.bf16.mxu0 0
      %5578 = vmatpush2.bf16.msra.mxu0 %v5554
      %5579 = vmatprep.subr.bf16.mxu0 0
      %5580 = vmatpush2.bf16.msra.mxu0 %v5553
      %5581 = vmatprep.subr.bf16.mxu0 0
      %5582 = vmatpush2.bf16.msra.mxu0 %v5552
      %5583 = vmatprep.subr.bf16.mxu0 0
      %5584 = vmatpush2.bf16.msra.mxu0 %v5551
      %5585 = vmatprep.subr.bf16.mxu0 0
      %5586 = vmatpush2.bf16.msra.mxu0 %v5550
      %5587 = vmatprep.subr.bf16.mxu0 0
      %5588 = vmatpush2.bf16.msra.mxu0 %v5549
      %5589 = vmatprep.mubr.bf16.mxu0 %v5510
      %5590 = vmatmul.mubr.bf16.gmra.mxu0 %v5509
      %v5591 = vpop.f32.mrf.mxu0
      %v5592 = vadd.f32 0.0, %v5591
      %v5593 = vpop.f32.mrf.mxu0
      %v5594 = vpop.f32.mrf.mxu0
      %v5595 = vadd.f32 0.0, %v5594
      %v5596 = vpop.f32.mrf.mxu0
      %5597 = vmatprep.mubr.bf16.mxu0 %v5512
      %5598 = vmatmul.mubr.bf16.gmra.mxu0 %v5511
      %v5599 = vpop.f32.mrf.mxu0
      %v5600 = vadd.f32 0.0, %v5599
      %v5601 = vpop.f32.mrf.mxu0
      %v5602 = vpop.f32.mrf.mxu0
      %v5603 = vadd.f32 0.0, %v5602
      %v5604 = vpop.f32.mrf.mxu0
      %5605 = vmatprep.mubr.bf16.mxu0 %v5514
      %5606 = vmatmul.mubr.bf16.gmra.mxu0 %v5513
      %v5607 = vpop.f32.mrf.mxu0
      %v5608 = vadd.f32 0.0, %v5607
      %v5609 = vpop.f32.mrf.mxu0
      %v5610 = vpop.f32.mrf.mxu0
      %v5611 = vadd.f32 0.0, %v5610
      %v5612 = vpop.f32.mrf.mxu0
      %5613 = vmatprep.mubr.bf16.mxu0 %v5516
      %5614 = vmatmul.mubr.bf16.gmra.mxu0 %v5515
      %v5615 = vpop.f32.mrf.mxu0
      %v5616 = vadd.f32 0.0, %v5615
      %v5617 = vpop.f32.mrf.mxu0
      %v5618 = vpop.f32.mrf.mxu0
      %v5619 = vadd.f32 0.0, %v5618
      %v5620 = vpop.f32.mrf.mxu0
      %5621 = vmatprep.mubr.bf16.mxu0 %v5518
      %5622 = vmatmul.mubr.bf16.gmra.mxu0 %v5517
      %v5623 = vpop.f32.mrf.mxu0
      %v5624 = vadd.f32 0.0, %v5623
      %v5625 = vpop.f32.mrf.mxu0
      %v5626 = vpop.f32.mrf.mxu0
      %v5627 = vadd.f32 0.0, %v5626
      %v5628 = vpop.f32.mrf.mxu0
      %5629 = vmatprep.mubr.bf16.mxu0 %v5520
      %5630 = vmatmul.mubr.bf16.gmra.mxu0 %v5519
      %v5631 = vpop.f32.mrf.mxu0
      %v5632 = vadd.f32 0.0, %v5631
      %v5633 = vpop.f32.mrf.mxu0
      %v5634 = vpop.f32.mrf.mxu0
      %v5635 = vadd.f32 0.0, %v5634
      %v5636 = vpop.f32.mrf.mxu0
      %5637 = vmatprep.mubr.bf16.mxu0 %v5522
      %5638 = vmatmul.mubr.bf16.gmra.mxu0 %v5521
      %v5639 = vpop.f32.mrf.mxu0
      %v5640 = vadd.f32 0.0, %v5639
      %v5641 = vpop.f32.mrf.mxu0
      %v5642 = vpop.f32.mrf.mxu0
      %v5643 = vadd.f32 0.0, %v5642
      %v5644 = vpop.f32.mrf.mxu0
      %5645 = vmatprep.mubr.bf16.mxu0 %v5524
      %5646 = vmatmul.mubr.bf16.gmra.mxu0 %v5523
      %v5647 = vpop.f32.mrf.mxu0
      %v5648 = vadd.f32 0.0, %v5647
      %v5649 = vpop.f32.mrf.mxu0
      %v5650 = vpop.f32.mrf.mxu0
      %v5651 = vadd.f32 0.0, %v5650
      %v5652 = vpop.f32.mrf.mxu0
      %5653 = vmatprep.mubr.bf16.mxu0 %v5526
      %5654 = vmatmul.mubr.bf16.gmra.mxu0 %v5525
      %v5655 = vpop.f32.mrf.mxu0
      %v5656 = vadd.f32 0.0, %v5655
      %v5657 = vpop.f32.mrf.mxu0
      %v5658 = vpop.f32.mrf.mxu0
      %v5659 = vadd.f32 0.0, %v5658
      %v5660 = vpop.f32.mrf.mxu0
      %5661 = vmatprep.mubr.bf16.mxu0 %v5528
      %5662 = vmatmul.mubr.bf16.gmra.mxu0 %v5527
      %v5663 = vpop.f32.mrf.mxu0
      %v5664 = vadd.f32 0.0, %v5663
      %v5665 = vpop.f32.mrf.mxu0
      %v5666 = vpop.f32.mrf.mxu0
      %v5667 = vadd.f32 0.0, %v5666
      %v5668 = vpop.f32.mrf.mxu0
      %5669 = vmatprep.mubr.bf16.mxu0 %v5530
      %5670 = vmatmul.mubr.bf16.gmra.mxu0 %v5529
      %v5671 = vpop.f32.mrf.mxu0
      %v5672 = vadd.f32 0.0, %v5671
      %v5673 = vpop.f32.mrf.mxu0
      %v5674 = vpop.f32.mrf.mxu0
      %v5675 = vadd.f32 0.0, %v5674
      %v5676 = vpop.f32.mrf.mxu0
      %5677 = vmatprep.mubr.bf16.mxu0 %v5532
      %5678 = vmatmul.mubr.bf16.gmra.mxu0 %v5531
      %v5679 = vpop.f32.mrf.mxu0
      %v5680 = vadd.f32 0.0, %v5679
      %v5681 = vpop.f32.mrf.mxu0
      %v5682 = vpop.f32.mrf.mxu0
      %v5683 = vadd.f32 0.0, %v5682
      %v5684 = vpop.f32.mrf.mxu0
      %5685 = vmatprep.mubr.bf16.mxu0 %v5534
      %5686 = vmatmul.mubr.bf16.gmra.mxu0 %v5533
      %v5687 = vpop.f32.mrf.mxu0
      %v5688 = vadd.f32 0.0, %v5687
      %v5689 = vpop.f32.mrf.mxu0
      %v5690 = vpop.f32.mrf.mxu0
      %v5691 = vadd.f32 0.0, %v5690
      %v5692 = vpop.f32.mrf.mxu0
      %5693 = vmatprep.mubr.bf16.mxu0 %v5536
      %5694 = vmatmul.mubr.bf16.gmra.mxu0 %v5535
      %v5695 = vpop.f32.mrf.mxu0
      %v5696 = vadd.f32 0.0, %v5695
      %v5697 = vpop.f32.mrf.mxu0
      %v5698 = vpop.f32.mrf.mxu0
      %v5699 = vadd.f32 0.0, %v5698
      %v5700 = vpop.f32.mrf.mxu0
      %5701 = vmatprep.mubr.bf16.mxu0 %v5538
      %5702 = vmatmul.mubr.bf16.gmra.mxu0 %v5537
      %v5703 = vpop.f32.mrf.mxu0
      %v5704 = vadd.f32 0.0, %v5703
      %v5705 = vpop.f32.mrf.mxu0
      %v5706 = vpop.f32.mrf.mxu0
      %v5707 = vadd.f32 0.0, %v5706
      %v5708 = vpop.f32.mrf.mxu0
      %5709 = vmatprep.mubr.bf16.mxu0 %v5540
      %5710 = vmatmul.mubr.bf16.gmra.mxu0 %v5539
      %v5711 = vpop.f32.mrf.mxu0
      %v5712 = vadd.f32 0.0, %v5711
      %v5713 = vpop.f32.mrf.mxu0
      %v5714 = vpop.f32.mrf.mxu0
      %v5715 = vadd.f32 0.0, %v5714
      %v5716 = vpop.f32.mrf.mxu0
      %5717 = vdwg.mxu0
      %v5718 = vpack.c.bf16 %v5595, %v5592
      %v5719 = vpack.c.bf16 %v5603, %v5600
      %v5720 = vpack.c.bf16 %v5611, %v5608
      %v5721 = vpack.c.bf16 %v5619, %v5616
      %v5722 = vpack.c.bf16 %v5627, %v5624
      %v5723 = vpack.c.bf16 %v5635, %v5632
      %v5724 = vpack.c.bf16 %v5643, %v5640
      %v5725 = vpack.c.bf16 %v5651, %v5648
      %v5726 = vpack.c.bf16 %v5659, %v5656
      %v5727 = vpack.c.bf16 %v5667, %v5664
      %v5728 = vpack.c.bf16 %v5675, %v5672
      %v5729 = vpack.c.bf16 %v5683, %v5680
      %v5730 = vpack.c.bf16 %v5691, %v5688
      %v5731 = vpack.c.bf16 %v5699, %v5696
      %v5732 = vpack.c.bf16 %v5707, %v5704
      %v5733 = vpack.c.bf16 %v5715, %v5712
      %s5734 = scalar_lea.vmem %s7, 8
      %v5735 = vld [vmem:[%s5734] sm:$0xf]
      %v5737 = vsel %vm1101, %v5718, 0
      %v5740 = vsel %vm1101, %v5719, 0
      %v5743 = vsel %vm1101, %v5720, 0
      %v5746 = vsel %vm1101, %v5721, 0
      %v5749 = vsel %vm1101, %v5722, 0
      %v5752 = vsel %vm1101, %v5723, 0
      %v5755 = vsel %vm1101, %v5724, 0
      %v5758 = vsel %vm1101, %v5725, 0
      %v5761 = vsel %vm1101, %v5726, 0
      %v5764 = vsel %vm1101, %v5727, 0
      %v5767 = vsel %vm1101, %v5728, 0
      %v5770 = vsel %vm1101, %v5729, 0
      %v5773 = vsel %vm1101, %v5730, 0
      %v5776 = vsel %vm1101, %v5731, 0
      %v5779 = vsel %vm1101, %v5732, 0
      %v5782 = vsel %vm1101, %v5733, 0
      %v5785 = vsel %vm3752, %v5735, 0
      %5787 = vmatprep.subr.bf16.mxu0 0
      %5788 = vmatpush1.bf16.msra.mxu0 0
      %5789 = vmatprep.subr.bf16.mxu0 0
      %5790 = vmatpush1.bf16.msra.mxu0 0
      %5791 = vmatprep.subr.bf16.mxu0 0
      %5792 = vmatpush1.bf16.msra.mxu0 0
      %5793 = vmatprep.subr.bf16.mxu0 0
      %5794 = vmatpush1.bf16.msra.mxu0 0
      %5795 = vmatprep.subr.bf16.mxu0 0
      %5796 = vmatpush1.bf16.msra.mxu0 0
      %5797 = vmatprep.subr.bf16.mxu0 0
      %5798 = vmatpush1.bf16.msra.mxu0 0
      %5799 = vmatprep.subr.bf16.mxu0 0
      %5800 = vmatpush1.bf16.msra.mxu0 0
      %5801 = vmatprep.subr.bf16.mxu0 0
      %5802 = vmatpush1.bf16.msra.mxu0 %v5785
      %5803 = vmatprep.subr.bf16.mxu0 0
      %5804 = vmatpush2.bf16.msra.mxu0 0
      %5805 = vmatprep.subr.bf16.mxu0 0
      %5806 = vmatpush2.bf16.msra.mxu0 0
      %5807 = vmatprep.subr.bf16.mxu0 0
      %5808 = vmatpush2.bf16.msra.mxu0 0
      %5809 = vmatprep.subr.bf16.mxu0 0
      %5810 = vmatpush2.bf16.msra.mxu0 0
      %5811 = vmatprep.subr.bf16.mxu0 0
      %5812 = vmatpush2.bf16.msra.mxu0 0
      %5813 = vmatprep.subr.bf16.mxu0 0
      %5814 = vmatpush2.bf16.msra.mxu0 0
      %5815 = vmatprep.subr.bf16.mxu0 0
      %5816 = vmatpush2.bf16.msra.mxu0 0
      %5817 = vmatprep.subr.bf16.mxu0 0
      %5818 = vmatpush2.bf16.msra.mxu0 0
      %5819 = vmatprep.mubr.bf16.mxu0 0
      %5820 = vmatmul.mubr.bf16.gmra.mxu0 %v5737
      %v5821 = vpop.f32.mrf.mxu0
      %v5822 = vadd.f32 0.0, %v5821
      %v5823 = vpop.f32.mrf.mxu0
      %v5824 = vpop.f32.mrf.mxu0
      %v5825 = vadd.f32 0.0, %v5824
      %v5826 = vpop.f32.mrf.mxu0
      %5827 = vmatprep.mubr.bf16.mxu0 0
      %5828 = vmatmul.mubr.bf16.gmra.mxu0 %v5740
      %v5829 = vpop.f32.mrf.mxu0
      %v5830 = vadd.f32 0.0, %v5829
      %v5831 = vpop.f32.mrf.mxu0
      %v5832 = vpop.f32.mrf.mxu0
      %v5833 = vadd.f32 0.0, %v5832
      %v5834 = vpop.f32.mrf.mxu0
      %5835 = vmatprep.mubr.bf16.mxu0 0
      %5836 = vmatmul.mubr.bf16.gmra.mxu0 %v5743
      %v5837 = vpop.f32.mrf.mxu0
      %v5838 = vadd.f32 0.0, %v5837
      %v5839 = vpop.f32.mrf.mxu0
      %v5840 = vpop.f32.mrf.mxu0
      %v5841 = vadd.f32 0.0, %v5840
      %v5842 = vpop.f32.mrf.mxu0
      %5843 = vmatprep.mubr.bf16.mxu0 0
      %5844 = vmatmul.mubr.bf16.gmra.mxu0 %v5746
      %v5845 = vpop.f32.mrf.mxu0
      %v5846 = vadd.f32 0.0, %v5845
      %v5847 = vpop.f32.mrf.mxu0
      %v5848 = vpop.f32.mrf.mxu0
      %v5849 = vadd.f32 0.0, %v5848
      %v5850 = vpop.f32.mrf.mxu0
      %5851 = vmatprep.mubr.bf16.mxu0 0
      %5852 = vmatmul.mubr.bf16.gmra.mxu0 %v5749
      %v5853 = vpop.f32.mrf.mxu0
      %v5854 = vadd.f32 0.0, %v5853
      %v5855 = vpop.f32.mrf.mxu0
      %v5856 = vpop.f32.mrf.mxu0
      %v5857 = vadd.f32 0.0, %v5856
      %v5858 = vpop.f32.mrf.mxu0
      %5859 = vmatprep.mubr.bf16.mxu0 0
      %5860 = vmatmul.mubr.bf16.gmra.mxu0 %v5752
      %v5861 = vpop.f32.mrf.mxu0
      %v5862 = vadd.f32 0.0, %v5861
      %v5863 = vpop.f32.mrf.mxu0
      %v5864 = vpop.f32.mrf.mxu0
      %v5865 = vadd.f32 0.0, %v5864
      %v5866 = vpop.f32.mrf.mxu0
      %5867 = vmatprep.mubr.bf16.mxu0 0
      %5868 = vmatmul.mubr.bf16.gmra.mxu0 %v5755
      %v5869 = vpop.f32.mrf.mxu0
      %v5870 = vadd.f32 0.0, %v5869
      %v5871 = vpop.f32.mrf.mxu0
      %v5872 = vpop.f32.mrf.mxu0
      %v5873 = vadd.f32 0.0, %v5872
      %v5874 = vpop.f32.mrf.mxu0
      %5875 = vmatprep.mubr.bf16.mxu0 0
      %5876 = vmatmul.mubr.bf16.gmra.mxu0 %v5758
      %v5877 = vpop.f32.mrf.mxu0
      %v5878 = vadd.f32 0.0, %v5877
      %v5879 = vpop.f32.mrf.mxu0
      %v5880 = vpop.f32.mrf.mxu0
      %v5881 = vadd.f32 0.0, %v5880
      %v5882 = vpop.f32.mrf.mxu0
      %5883 = vmatprep.mubr.bf16.mxu0 0
      %5884 = vmatmul.mubr.bf16.gmra.mxu0 %v5761
      %v5885 = vpop.f32.mrf.mxu0
      %v5886 = vadd.f32 0.0, %v5885
      %v5887 = vpop.f32.mrf.mxu0
      %v5888 = vpop.f32.mrf.mxu0
      %v5889 = vadd.f32 0.0, %v5888
      %v5890 = vpop.f32.mrf.mxu0
      %5891 = vmatprep.mubr.bf16.mxu0 0
      %5892 = vmatmul.mubr.bf16.gmra.mxu0 %v5764
      %v5893 = vpop.f32.mrf.mxu0
      %v5894 = vadd.f32 0.0, %v5893
      %v5895 = vpop.f32.mrf.mxu0
      %v5896 = vpop.f32.mrf.mxu0
      %v5897 = vadd.f32 0.0, %v5896
      %v5898 = vpop.f32.mrf.mxu0
      %5899 = vmatprep.mubr.bf16.mxu0 0
      %5900 = vmatmul.mubr.bf16.gmra.mxu0 %v5767
      %v5901 = vpop.f32.mrf.mxu0
      %v5902 = vadd.f32 0.0, %v5901
      %v5903 = vpop.f32.mrf.mxu0
      %v5904 = vpop.f32.mrf.mxu0
      %v5905 = vadd.f32 0.0, %v5904
      %v5906 = vpop.f32.mrf.mxu0
      %5907 = vmatprep.mubr.bf16.mxu0 0
      %5908 = vmatmul.mubr.bf16.gmra.mxu0 %v5770
      %v5909 = vpop.f32.mrf.mxu0
      %v5910 = vadd.f32 0.0, %v5909
      %v5911 = vpop.f32.mrf.mxu0
      %v5912 = vpop.f32.mrf.mxu0
      %v5913 = vadd.f32 0.0, %v5912
      %v5914 = vpop.f32.mrf.mxu0
      %5915 = vmatprep.mubr.bf16.mxu0 0
      %5916 = vmatmul.mubr.bf16.gmra.mxu0 %v5773
      %v5917 = vpop.f32.mrf.mxu0
      %v5918 = vadd.f32 0.0, %v5917
      %v5919 = vpop.f32.mrf.mxu0
      %v5920 = vpop.f32.mrf.mxu0
      %v5921 = vadd.f32 0.0, %v5920
      %v5922 = vpop.f32.mrf.mxu0
      %5923 = vmatprep.mubr.bf16.mxu0 0
      %5924 = vmatmul.mubr.bf16.gmra.mxu0 %v5776
      %v5925 = vpop.f32.mrf.mxu0
      %v5926 = vadd.f32 0.0, %v5925
      %v5927 = vpop.f32.mrf.mxu0
      %v5928 = vpop.f32.mrf.mxu0
      %v5929 = vadd.f32 0.0, %v5928
      %v5930 = vpop.f32.mrf.mxu0
      %5931 = vmatprep.mubr.bf16.mxu0 0
      %5932 = vmatmul.mubr.bf16.gmra.mxu0 %v5779
      %v5933 = vpop.f32.mrf.mxu0
      %v5934 = vadd.f32 0.0, %v5933
      %v5935 = vpop.f32.mrf.mxu0
      %v5936 = vpop.f32.mrf.mxu0
      %v5937 = vadd.f32 0.0, %v5936
      %v5938 = vpop.f32.mrf.mxu0
      %5939 = vmatprep.mubr.bf16.mxu0 0
      %5940 = vmatmul.mubr.bf16.gmra.mxu0 %v5782
      %v5941 = vpop.f32.mrf.mxu0
      %v5942 = vadd.f32 0.0, %v5941
      %v5943 = vpop.f32.mrf.mxu0
      %v5944 = vpop.f32.mrf.mxu0
      %v5945 = vadd.f32 0.0, %v5944
      %v5946 = vpop.f32.mrf.mxu0
      %5947 = vdwg.mxu0
      %v5948 = vadd.f32 %v4003, %v5822
      %v5949 = vadd.f32 %v4006, %v5825
      %v5950 = vadd.f32 %v4011, %v5830
      %v5951 = vadd.f32 %v4014, %v5833
      %v5952 = vadd.f32 %v4019, %v5838
      %v5953 = vadd.f32 %v4022, %v5841
      %v5954 = vadd.f32 %v4027, %v5846
      %v5955 = vadd.f32 %v4030, %v5849
      %v5956 = vadd.f32 %v4035, %v5854
      %v5957 = vadd.f32 %v4038, %v5857
      %v5958 = vadd.f32 %v4043, %v5862
      %v5959 = vadd.f32 %v4046, %v5865
      %v5960 = vadd.f32 %v4051, %v5870
      %v5961 = vadd.f32 %v4054, %v5873
      %v5962 = vadd.f32 %v4059, %v5878
      %v5963 = vadd.f32 %v4062, %v5881
      %v5964 = vadd.f32 %v4067, %v5886
      %v5965 = vadd.f32 %v4070, %v5889
      %v5966 = vadd.f32 %v4075, %v5894
      %v5967 = vadd.f32 %v4078, %v5897
      %v5968 = vadd.f32 %v4083, %v5902
      %v5969 = vadd.f32 %v4086, %v5905
      %v5970 = vadd.f32 %v4091, %v5910
      %v5971 = vadd.f32 %v4094, %v5913
      %v5972 = vadd.f32 %v4099, %v5918
      %v5973 = vadd.f32 %v4102, %v5921
      %v5974 = vadd.f32 %v4107, %v5926
      %v5975 = vadd.f32 %v4110, %v5929
      %v5976 = vadd.f32 %v4115, %v5934
      %v5977 = vadd.f32 %v4118, %v5937
      %v5978 = vadd.f32 %v4123, %v5942
      %v5979 = vadd.f32 %v4126, %v5945
      %s5980 = scalar_lea.vmem %s1, 60
      %v5981 = vld [vmem:[%s5980] sm:$0xf]
      %v5982 = vld [vmem:[%s5980 + $0x4] sm:$0xf]
      %v5983 = vld [vmem:[%s5980 + $0x8] sm:$0xf]
      %v5984 = vld [vmem:[%s5980 + $0xc] sm:$0xf]
      %v5985 = vld [vmem:[%s5980 + $0x10] sm:$0x3]
      %s5986 = scalar_lea.vmem %s4, 3
      %v5987 = vld [vmem:[%s5986] sm:$0x1]
      %v5989 = vlaneseq
      %v5990 = vshrl.u32 %v5989, 7
      %v5991 = vsub.s32 0, %v5990
      %v5992 = vrot.slane %v5987, %v5991
      %v5999 = vunpack.c.l.b16 %v5981
      %v6000 = vunpack.c.l.b16 %v5982
      %v6001 = vunpack.c.l.b16 %v5983
      %v6002 = vunpack.c.l.b16 %v5984
      %v6003 = vunpack.c.l.b16 %v5985
      %v6004 = vpack.c.b16 %v6000, %v5999
      %v6005 = vpack.c.b16 %v6002, %v6001
      %v6006 = vpack.c.b16 %v6003, %v6003
      %v6010 = vsel %vm522, %v6006, 0
      %6012 = vmatprep.subr.bf16.mxu0 0
      %6013 = vmatpush1.bf16.msra.mxu0 0
      %6014 = vmatprep.subr.bf16.mxu0 0
      %6015 = vmatpush1.bf16.msra.mxu0 0
      %6016 = vmatprep.subr.bf16.mxu0 0
      %6017 = vmatpush1.bf16.msra.mxu0 0
      %6018 = vmatprep.subr.bf16.mxu0 0
      %6019 = vmatpush1.bf16.msra.mxu0 0
      %6020 = vmatprep.subr.bf16.mxu0 0
      %6021 = vmatpush1.bf16.msra.mxu0 0
      %6022 = vmatprep.subr.bf16.mxu0 0
      %6023 = vmatpush1.bf16.msra.mxu0 %v6010
      %6024 = vmatprep.subr.bf16.mxu0 0
      %6025 = vmatpush1.bf16.msra.mxu0 %v6005
      %6026 = vmatprep.subr.bf16.mxu0 0
      %6027 = vmatpush1.bf16.msra.mxu0 %v6004
      %6028 = vmatprep.subr.bf16.mxu0 0
      %6029 = vmatpush2.bf16.msra.mxu0 0
      %6030 = vmatprep.subr.bf16.mxu0 0
      %6031 = vmatpush2.bf16.msra.mxu0 0
      %6032 = vmatprep.subr.bf16.mxu0 0
      %6033 = vmatpush2.bf16.msra.mxu0 0
      %6034 = vmatprep.subr.bf16.mxu0 0
      %6035 = vmatpush2.bf16.msra.mxu0 0
      %6036 = vmatprep.subr.bf16.mxu0 0
      %6037 = vmatpush2.bf16.msra.mxu0 0
      %6038 = vmatprep.subr.bf16.mxu0 0
      %6039 = vmatpush2.bf16.msra.mxu0 0
      %6040 = vmatprep.subr.bf16.mxu0 0
      %6041 = vmatpush2.bf16.msra.mxu0 0
      %6042 = vmatprep.subr.bf16.mxu0 0
      %6043 = vmatpush2.bf16.msra.mxu0 0
      %6044 = vmatprep.mubr.bf16.mxu0 0
      %6045 = vmatmul.mubr.bf16.gmra.mxu0 %v475
      %v6046 = vpop.f32.mrf.mxu0
      %v6047 = vadd.f32 %v5992, %v6046
      %v6048 = vpop.f32.mrf.mxu0
      %v6049 = vpop.f32.mrf.mxu0
      %v6050 = vadd.f32 %v5992, %v6049
      %v6051 = vpop.f32.mrf.mxu0
      %6052 = vmatprep.mubr.bf16.mxu0 0
      %6053 = vmatmul.mubr.bf16.gmra.mxu0 %v478
      %v6054 = vpop.f32.mrf.mxu0
      %v6055 = vadd.f32 %v5992, %v6054
      %v6056 = vpop.f32.mrf.mxu0
      %v6057 = vpop.f32.mrf.mxu0
      %v6058 = vadd.f32 %v5992, %v6057
      %v6059 = vpop.f32.mrf.mxu0
      %6060 = vmatprep.mubr.bf16.mxu0 0
      %6061 = vmatmul.mubr.bf16.gmra.mxu0 %v481
      %v6062 = vpop.f32.mrf.mxu0
      %v6063 = vadd.f32 %v5992, %v6062
      %v6064 = vpop.f32.mrf.mxu0
      %v6065 = vpop.f32.mrf.mxu0
      %v6066 = vadd.f32 %v5992, %v6065
      %v6067 = vpop.f32.mrf.mxu0
      %6068 = vmatprep.mubr.bf16.mxu0 0
      %6069 = vmatmul.mubr.bf16.gmra.mxu0 %v484
      %v6070 = vpop.f32.mrf.mxu0
      %v6071 = vadd.f32 %v5992, %v6070
      %v6072 = vpop.f32.mrf.mxu0
      %v6073 = vpop.f32.mrf.mxu0
      %v6074 = vadd.f32 %v5992, %v6073
      %v6075 = vpop.f32.mrf.mxu0
      %6076 = vmatprep.mubr.bf16.mxu0 0
      %6077 = vmatmul.mubr.bf16.gmra.mxu0 %v487
      %v6078 = vpop.f32.mrf.mxu0
      %v6079 = vadd.f32 %v5992, %v6078
      %v6080 = vpop.f32.mrf.mxu0
      %v6081 = vpop.f32.mrf.mxu0
      %v6082 = vadd.f32 %v5992, %v6081
      %v6083 = vpop.f32.mrf.mxu0
      %6084 = vmatprep.mubr.bf16.mxu0 0
      %6085 = vmatmul.mubr.bf16.gmra.mxu0 %v490
      %v6086 = vpop.f32.mrf.mxu0
      %v6087 = vadd.f32 %v5992, %v6086
      %v6088 = vpop.f32.mrf.mxu0
      %v6089 = vpop.f32.mrf.mxu0
      %v6090 = vadd.f32 %v5992, %v6089
      %v6091 = vpop.f32.mrf.mxu0
      %6092 = vmatprep.mubr.bf16.mxu0 0
      %6093 = vmatmul.mubr.bf16.gmra.mxu0 %v493
      %v6094 = vpop.f32.mrf.mxu0
      %v6095 = vadd.f32 %v5992, %v6094
      %v6096 = vpop.f32.mrf.mxu0
      %v6097 = vpop.f32.mrf.mxu0
      %v6098 = vadd.f32 %v5992, %v6097
      %v6099 = vpop.f32.mrf.mxu0
      %6100 = vmatprep.mubr.bf16.mxu0 0
      %6101 = vmatmul.mubr.bf16.gmra.mxu0 %v496
      %v6102 = vpop.f32.mrf.mxu0
      %v6103 = vadd.f32 %v5992, %v6102
      %v6104 = vpop.f32.mrf.mxu0
      %v6105 = vpop.f32.mrf.mxu0
      %v6106 = vadd.f32 %v5992, %v6105
      %v6107 = vpop.f32.mrf.mxu0
      %6108 = vmatprep.mubr.bf16.mxu0 0
      %6109 = vmatmul.mubr.bf16.gmra.mxu0 %v499
      %v6110 = vpop.f32.mrf.mxu0
      %v6111 = vadd.f32 %v5992, %v6110
      %v6112 = vpop.f32.mrf.mxu0
      %v6113 = vpop.f32.mrf.mxu0
      %v6114 = vadd.f32 %v5992, %v6113
      %v6115 = vpop.f32.mrf.mxu0
      %6116 = vmatprep.mubr.bf16.mxu0 0
      %6117 = vmatmul.mubr.bf16.gmra.mxu0 %v502
      %v6118 = vpop.f32.mrf.mxu0
      %v6119 = vadd.f32 %v5992, %v6118
      %v6120 = vpop.f32.mrf.mxu0
      %v6121 = vpop.f32.mrf.mxu0
      %v6122 = vadd.f32 %v5992, %v6121
      %v6123 = vpop.f32.mrf.mxu0
      %6124 = vmatprep.mubr.bf16.mxu0 0
      %6125 = vmatmul.mubr.bf16.gmra.mxu0 %v505
      %v6126 = vpop.f32.mrf.mxu0
      %v6127 = vadd.f32 %v5992, %v6126
      %v6128 = vpop.f32.mrf.mxu0
      %v6129 = vpop.f32.mrf.mxu0
      %v6130 = vadd.f32 %v5992, %v6129
      %v6131 = vpop.f32.mrf.mxu0
      %6132 = vmatprep.mubr.bf16.mxu0 0
      %6133 = vmatmul.mubr.bf16.gmra.mxu0 %v508
      %v6134 = vpop.f32.mrf.mxu0
      %v6135 = vadd.f32 %v5992, %v6134
      %v6136 = vpop.f32.mrf.mxu0
      %v6137 = vpop.f32.mrf.mxu0
      %v6138 = vadd.f32 %v5992, %v6137
      %v6139 = vpop.f32.mrf.mxu0
      %6140 = vmatprep.mubr.bf16.mxu0 0
      %6141 = vmatmul.mubr.bf16.gmra.mxu0 %v511
      %v6142 = vpop.f32.mrf.mxu0
      %v6143 = vadd.f32 %v5992, %v6142
      %v6144 = vpop.f32.mrf.mxu0
      %v6145 = vpop.f32.mrf.mxu0
      %v6146 = vadd.f32 %v5992, %v6145
      %v6147 = vpop.f32.mrf.mxu0
      %6148 = vmatprep.mubr.bf16.mxu0 0
      %6149 = vmatmul.mubr.bf16.gmra.mxu0 %v514
      %v6150 = vpop.f32.mrf.mxu0
      %v6151 = vadd.f32 %v5992, %v6150
      %v6152 = vpop.f32.mrf.mxu0
      %v6153 = vpop.f32.mrf.mxu0
      %v6154 = vadd.f32 %v5992, %v6153
      %v6155 = vpop.f32.mrf.mxu0
      %6156 = vmatprep.mubr.bf16.mxu0 0
      %6157 = vmatmul.mubr.bf16.gmra.mxu0 %v517
      %v6158 = vpop.f32.mrf.mxu0
      %v6159 = vadd.f32 %v5992, %v6158
      %v6160 = vpop.f32.mrf.mxu0
      %v6161 = vpop.f32.mrf.mxu0
      %v6162 = vadd.f32 %v5992, %v6161
      %v6163 = vpop.f32.mrf.mxu0
      %6164 = vmatprep.mubr.bf16.mxu0 0
      %6165 = vmatmul.mubr.bf16.gmra.mxu0 %v520
      %v6166 = vpop.f32.mrf.mxu0
      %v6167 = vadd.f32 %v5992, %v6166
      %v6168 = vpop.f32.mrf.mxu0
      %v6169 = vpop.f32.mrf.mxu0
      %v6170 = vadd.f32 %v5992, %v6169
      %v6171 = vpop.f32.mrf.mxu0
      %6172 = vdwg.mxu0
      %s6173 = scalar_lea.vmem %s2, 60
      %v6174 = vld [vmem:[%s6173] sm:$0xf]
      %v6175 = vld [vmem:[%s6173 + $0x4] sm:$0xf]
      %v6176 = vld [vmem:[%s6173 + $0x8] sm:$0xf]
      %v6177 = vld [vmem:[%s6173 + $0xc] sm:$0xf]
      %v6178 = vld [vmem:[%s6173 + $0x10] sm:$0x3]
      %s6179 = scalar_lea.vmem %s5, 3
      %v6180 = vld [vmem:[%s6179] sm:$0x1]
      %v6182 = vlaneseq
      %v6183 = vshrl.u32 %v6182, 7
      %v6184 = vsub.s32 0, %v6183
      %v6185 = vrot.slane %v6180, %v6184
      %v6192 = vunpack.c.l.b16 %v6174
      %v6193 = vunpack.c.l.b16 %v6175
      %v6194 = vunpack.c.l.b16 %v6176
      %v6195 = vunpack.c.l.b16 %v6177
      %v6196 = vunpack.c.l.b16 %v6178
      %v6197 = vpack.c.b16 %v6193, %v6192
      %v6198 = vpack.c.b16 %v6195, %v6194
      %v6199 = vpack.c.b16 %v6196, %v6196
      %v6203 = vsel %vm522, %v6199, 0
      %6205 = vmatprep.subr.bf16.mxu0 0
      %6206 = vmatpush1.bf16.msra.mxu0 0
      %6207 = vmatprep.subr.bf16.mxu0 0
      %6208 = vmatpush1.bf16.msra.mxu0 0
      %6209 = vmatprep.subr.bf16.mxu0 0
      %6210 = vmatpush1.bf16.msra.mxu0 0
      %6211 = vmatprep.subr.bf16.mxu0 0
      %6212 = vmatpush1.bf16.msra.mxu0 0
      %6213 = vmatprep.subr.bf16.mxu0 0
      %6214 = vmatpush1.bf16.msra.mxu0 0
      %6215 = vmatprep.subr.bf16.mxu0 0
      %6216 = vmatpush1.bf16.msra.mxu0 %v6203
      %6217 = vmatprep.subr.bf16.mxu0 0
      %6218 = vmatpush1.bf16.msra.mxu0 %v6198
      %6219 = vmatprep.subr.bf16.mxu0 0
      %6220 = vmatpush1.bf16.msra.mxu0 %v6197
      %6221 = vmatprep.subr.bf16.mxu0 0
      %6222 = vmatpush2.bf16.msra.mxu0 0
      %6223 = vmatprep.subr.bf16.mxu0 0
      %6224 = vmatpush2.bf16.msra.mxu0 0
      %6225 = vmatprep.subr.bf16.mxu0 0
      %6226 = vmatpush2.bf16.msra.mxu0 0
      %6227 = vmatprep.subr.bf16.mxu0 0
      %6228 = vmatpush2.bf16.msra.mxu0 0
      %6229 = vmatprep.subr.bf16.mxu0 0
      %6230 = vmatpush2.bf16.msra.mxu0 0
      %6231 = vmatprep.subr.bf16.mxu0 0
      %6232 = vmatpush2.bf16.msra.mxu0 0
      %6233 = vmatprep.subr.bf16.mxu0 0
      %6234 = vmatpush2.bf16.msra.mxu0 0
      %6235 = vmatprep.subr.bf16.mxu0 0
      %6236 = vmatpush2.bf16.msra.mxu0 0
      %6237 = vmatprep.mubr.bf16.mxu0 0
      %6238 = vmatmul.mubr.bf16.gmra.mxu0 %v475
      %v6239 = vpop.f32.mrf.mxu0
      %v6240 = vadd.f32 %v6185, %v6239
      %v6241 = vpop.f32.mrf.mxu0
      %v6242 = vpop.f32.mrf.mxu0
      %v6243 = vadd.f32 %v6185, %v6242
      %v6244 = vpop.f32.mrf.mxu0
      %6245 = vmatprep.mubr.bf16.mxu0 0
      %6246 = vmatmul.mubr.bf16.gmra.mxu0 %v478
      %v6247 = vpop.f32.mrf.mxu0
      %v6248 = vadd.f32 %v6185, %v6247
      %v6249 = vpop.f32.mrf.mxu0
      %v6250 = vpop.f32.mrf.mxu0
      %v6251 = vadd.f32 %v6185, %v6250
      %v6252 = vpop.f32.mrf.mxu0
      %6253 = vmatprep.mubr.bf16.mxu0 0
      %6254 = vmatmul.mubr.bf16.gmra.mxu0 %v481
      %v6255 = vpop.f32.mrf.mxu0
      %v6256 = vadd.f32 %v6185, %v6255
      %v6257 = vpop.f32.mrf.mxu0
      %v6258 = vpop.f32.mrf.mxu0
      %v6259 = vadd.f32 %v6185, %v6258
      %v6260 = vpop.f32.mrf.mxu0
      %6261 = vmatprep.mubr.bf16.mxu0 0
      %6262 = vmatmul.mubr.bf16.gmra.mxu0 %v484
      %v6263 = vpop.f32.mrf.mxu0
      %v6264 = vadd.f32 %v6185, %v6263
      %v6265 = vpop.f32.mrf.mxu0
      %v6266 = vpop.f32.mrf.mxu0
      %v6267 = vadd.f32 %v6185, %v6266
      %v6268 = vpop.f32.mrf.mxu0
      %6269 = vmatprep.mubr.bf16.mxu0 0
      %6270 = vmatmul.mubr.bf16.gmra.mxu0 %v487
      %v6271 = vpop.f32.mrf.mxu0
      %v6272 = vadd.f32 %v6185, %v6271
      %v6273 = vpop.f32.mrf.mxu0
      %v6274 = vpop.f32.mrf.mxu0
      %v6275 = vadd.f32 %v6185, %v6274
      %v6276 = vpop.f32.mrf.mxu0
      %6277 = vmatprep.mubr.bf16.mxu0 0
      %6278 = vmatmul.mubr.bf16.gmra.mxu0 %v490
      %v6279 = vpop.f32.mrf.mxu0
      %v6280 = vadd.f32 %v6185, %v6279
      %v6281 = vpop.f32.mrf.mxu0
      %v6282 = vpop.f32.mrf.mxu0
      %v6283 = vadd.f32 %v6185, %v6282
      %v6284 = vpop.f32.mrf.mxu0
      %6285 = vmatprep.mubr.bf16.mxu0 0
      %6286 = vmatmul.mubr.bf16.gmra.mxu0 %v493
      %v6287 = vpop.f32.mrf.mxu0
      %v6288 = vadd.f32 %v6185, %v6287
      %v6289 = vpop.f32.mrf.mxu0
      %v6290 = vpop.f32.mrf.mxu0
      %v6291 = vadd.f32 %v6185, %v6290
      %v6292 = vpop.f32.mrf.mxu0
      %6293 = vmatprep.mubr.bf16.mxu0 0
      %6294 = vmatmul.mubr.bf16.gmra.mxu0 %v496
      %v6295 = vpop.f32.mrf.mxu0
      %v6296 = vadd.f32 %v6185, %v6295
      %v6297 = vpop.f32.mrf.mxu0
      %v6298 = vpop.f32.mrf.mxu0
      %v6299 = vadd.f32 %v6185, %v6298
      %v6300 = vpop.f32.mrf.mxu0
      %6301 = vmatprep.mubr.bf16.mxu0 0
      %6302 = vmatmul.mubr.bf16.gmra.mxu0 %v499
      %v6303 = vpop.f32.mrf.mxu0
      %v6304 = vadd.f32 %v6185, %v6303
      %v6305 = vpop.f32.mrf.mxu0
      %v6306 = vpop.f32.mrf.mxu0
      %v6307 = vadd.f32 %v6185, %v6306
      %v6308 = vpop.f32.mrf.mxu0
      %6309 = vmatprep.mubr.bf16.mxu0 0
      %6310 = vmatmul.mubr.bf16.gmra.mxu0 %v502
      %v6311 = vpop.f32.mrf.mxu0
      %v6312 = vadd.f32 %v6185, %v6311
      %v6313 = vpop.f32.mrf.mxu0
      %v6314 = vpop.f32.mrf.mxu0
      %v6315 = vadd.f32 %v6185, %v6314
      %v6316 = vpop.f32.mrf.mxu0
      %6317 = vmatprep.mubr.bf16.mxu0 0
      %6318 = vmatmul.mubr.bf16.gmra.mxu0 %v505
      %v6319 = vpop.f32.mrf.mxu0
      %v6320 = vadd.f32 %v6185, %v6319
      %v6321 = vpop.f32.mrf.mxu0
      %v6322 = vpop.f32.mrf.mxu0
      %v6323 = vadd.f32 %v6185, %v6322
      %v6324 = vpop.f32.mrf.mxu0
      %6325 = vmatprep.mubr.bf16.mxu0 0
      %6326 = vmatmul.mubr.bf16.gmra.mxu0 %v508
      %v6327 = vpop.f32.mrf.mxu0
      %v6328 = vadd.f32 %v6185, %v6327
      %v6329 = vpop.f32.mrf.mxu0
      %v6330 = vpop.f32.mrf.mxu0
      %v6331 = vadd.f32 %v6185, %v6330
      %v6332 = vpop.f32.mrf.mxu0
      %6333 = vmatprep.mubr.bf16.mxu0 0
      %6334 = vmatmul.mubr.bf16.gmra.mxu0 %v511
      %v6335 = vpop.f32.mrf.mxu0
      %v6336 = vadd.f32 %v6185, %v6335
      %v6337 = vpop.f32.mrf.mxu0
      %v6338 = vpop.f32.mrf.mxu0
      %v6339 = vadd.f32 %v6185, %v6338
      %v6340 = vpop.f32.mrf.mxu0
      %6341 = vmatprep.mubr.bf16.mxu0 0
      %6342 = vmatmul.mubr.bf16.gmra.mxu0 %v514
      %v6343 = vpop.f32.mrf.mxu0
      %v6344 = vadd.f32 %v6185, %v6343
      %v6345 = vpop.f32.mrf.mxu0
      %v6346 = vpop.f32.mrf.mxu0
      %v6347 = vadd.f32 %v6185, %v6346
      %v6348 = vpop.f32.mrf.mxu0
      %6349 = vmatprep.mubr.bf16.mxu0 0
      %6350 = vmatmul.mubr.bf16.gmra.mxu0 %v517
      %v6351 = vpop.f32.mrf.mxu0
      %v6352 = vadd.f32 %v6185, %v6351
      %v6353 = vpop.f32.mrf.mxu0
      %v6354 = vpop.f32.mrf.mxu0
      %v6355 = vadd.f32 %v6185, %v6354
      %v6356 = vpop.f32.mrf.mxu0
      %6357 = vmatprep.mubr.bf16.mxu0 0
      %6358 = vmatmul.mubr.bf16.gmra.mxu0 %v520
      %v6359 = vpop.f32.mrf.mxu0
      %v6360 = vadd.f32 %v6185, %v6359
      %v6361 = vpop.f32.mrf.mxu0
      %v6362 = vpop.f32.mrf.mxu0
      %v6363 = vadd.f32 %v6185, %v6362
      %v6364 = vpop.f32.mrf.mxu0
      %6365 = vdwg.mxu0
      %s6366 = scalar_lea.vmem %s3, 60
      %v6367 = vld [vmem:[%s6366] sm:$0xf]
      %v6368 = vld [vmem:[%s6366 + $0x4] sm:$0xf]
      %v6369 = vld [vmem:[%s6366 + $0x8] sm:$0xf]
      %v6370 = vld [vmem:[%s6366 + $0xc] sm:$0xf]
      %v6371 = vld [vmem:[%s6366 + $0x10] sm:$0x3]
      %s6372 = scalar_lea.vmem %s6, 3
      %v6373 = vld [vmem:[%s6372] sm:$0x1]
      %v6375 = vlaneseq
      %v6376 = vshrl.u32 %v6375, 7
      %v6377 = vsub.s32 0, %v6376
      %v6378 = vrot.slane %v6373, %v6377
      %v6385 = vunpack.c.l.b16 %v6367
      %v6386 = vunpack.c.l.b16 %v6368
      %v6387 = vunpack.c.l.b16 %v6369
      %v6388 = vunpack.c.l.b16 %v6370
      %v6389 = vunpack.c.l.b16 %v6371
      %v6390 = vpack.c.b16 %v6386, %v6385
      %v6391 = vpack.c.b16 %v6388, %v6387
      %v6392 = vpack.c.b16 %v6389, %v6389
      %v6396 = vsel %vm522, %v6392, 0
      %6398 = vmatprep.subr.bf16.mxu0 0
      %6399 = vmatpush1.bf16.msra.mxu0 0
      %6400 = vmatprep.subr.bf16.mxu0 0
      %6401 = vmatpush1.bf16.msra.mxu0 0
      %6402 = vmatprep.subr.bf16.mxu0 0
      %6403 = vmatpush1.bf16.msra.mxu0 0
      %6404 = vmatprep.subr.bf16.mxu0 0
      %6405 = vmatpush1.bf16.msra.mxu0 0
      %6406 = vmatprep.subr.bf16.mxu0 0
      %6407 = vmatpush1.bf16.msra.mxu0 0
      %6408 = vmatprep.subr.bf16.mxu0 0
      %6409 = vmatpush1.bf16.msra.mxu0 %v6396
      %6410 = vmatprep.subr.bf16.mxu0 0
      %6411 = vmatpush1.bf16.msra.mxu0 %v6391
      %6412 = vmatprep.subr.bf16.mxu0 0
      %6413 = vmatpush1.bf16.msra.mxu0 %v6390
      %6414 = vmatprep.subr.bf16.mxu0 0
      %6415 = vmatpush2.bf16.msra.mxu0 0
      %6416 = vmatprep.subr.bf16.mxu0 0
      %6417 = vmatpush2.bf16.msra.mxu0 0
      %6418 = vmatprep.subr.bf16.mxu0 0
      %6419 = vmatpush2.bf16.msra.mxu0 0
      %6420 = vmatprep.subr.bf16.mxu0 0
      %6421 = vmatpush2.bf16.msra.mxu0 0
      %6422 = vmatprep.subr.bf16.mxu0 0
      %6423 = vmatpush2.bf16.msra.mxu0 0
      %6424 = vmatprep.subr.bf16.mxu0 0
      %6425 = vmatpush2.bf16.msra.mxu0 0
      %6426 = vmatprep.subr.bf16.mxu0 0
      %6427 = vmatpush2.bf16.msra.mxu0 0
      %6428 = vmatprep.subr.bf16.mxu0 0
      %6429 = vmatpush2.bf16.msra.mxu0 0
      %6430 = vmatprep.mubr.bf16.mxu0 0
      %6431 = vmatmul.mubr.bf16.gmra.mxu0 %v475
      %v6432 = vpop.f32.mrf.mxu0
      %v6433 = vadd.f32 %v6378, %v6432
      %v6434 = vpop.f32.mrf.mxu0
      %v6435 = vpop.f32.mrf.mxu0
      %v6436 = vadd.f32 %v6378, %v6435
      %v6437 = vpop.f32.mrf.mxu0
      %6438 = vmatprep.mubr.bf16.mxu0 0
      %6439 = vmatmul.mubr.bf16.gmra.mxu0 %v478
      %v6440 = vpop.f32.mrf.mxu0
      %v6441 = vadd.f32 %v6378, %v6440
      %v6442 = vpop.f32.mrf.mxu0
      %v6443 = vpop.f32.mrf.mxu0
      %v6444 = vadd.f32 %v6378, %v6443
      %v6445 = vpop.f32.mrf.mxu0
      %6446 = vmatprep.mubr.bf16.mxu0 0
      %6447 = vmatmul.mubr.bf16.gmra.mxu0 %v481
      %v6448 = vpop.f32.mrf.mxu0
      %v6449 = vadd.f32 %v6378, %v6448
      %v6450 = vpop.f32.mrf.mxu0
      %v6451 = vpop.f32.mrf.mxu0
      %v6452 = vadd.f32 %v6378, %v6451
      %v6453 = vpop.f32.mrf.mxu0
      %6454 = vmatprep.mubr.bf16.mxu0 0
      %6455 = vmatmul.mubr.bf16.gmra.mxu0 %v484
      %v6456 = vpop.f32.mrf.mxu0
      %v6457 = vadd.f32 %v6378, %v6456
      %v6458 = vpop.f32.mrf.mxu0
      %v6459 = vpop.f32.mrf.mxu0
      %v6460 = vadd.f32 %v6378, %v6459
      %v6461 = vpop.f32.mrf.mxu0
      %6462 = vmatprep.mubr.bf16.mxu0 0
      %6463 = vmatmul.mubr.bf16.gmra.mxu0 %v487
      %v6464 = vpop.f32.mrf.mxu0
      %v6465 = vadd.f32 %v6378, %v6464
      %v6466 = vpop.f32.mrf.mxu0
      %v6467 = vpop.f32.mrf.mxu0
      %v6468 = vadd.f32 %v6378, %v6467
      %v6469 = vpop.f32.mrf.mxu0
      %6470 = vmatprep.mubr.bf16.mxu0 0
      %6471 = vmatmul.mubr.bf16.gmra.mxu0 %v490
      %v6472 = vpop.f32.mrf.mxu0
      %v6473 = vadd.f32 %v6378, %v6472
      %v6474 = vpop.f32.mrf.mxu0
      %v6475 = vpop.f32.mrf.mxu0
      %v6476 = vadd.f32 %v6378, %v6475
      %v6477 = vpop.f32.mrf.mxu0
      %6478 = vmatprep.mubr.bf16.mxu0 0
      %6479 = vmatmul.mubr.bf16.gmra.mxu0 %v493
      %v6480 = vpop.f32.mrf.mxu0
      %v6481 = vadd.f32 %v6378, %v6480
      %v6482 = vpop.f32.mrf.mxu0
      %v6483 = vpop.f32.mrf.mxu0
      %v6484 = vadd.f32 %v6378, %v6483
      %v6485 = vpop.f32.mrf.mxu0
      %6486 = vmatprep.mubr.bf16.mxu0 0
      %6487 = vmatmul.mubr.bf16.gmra.mxu0 %v496
      %v6488 = vpop.f32.mrf.mxu0
      %v6489 = vadd.f32 %v6378, %v6488
      %v6490 = vpop.f32.mrf.mxu0
      %v6491 = vpop.f32.mrf.mxu0
      %v6492 = vadd.f32 %v6378, %v6491
      %v6493 = vpop.f32.mrf.mxu0
      %6494 = vmatprep.mubr.bf16.mxu0 0
      %6495 = vmatmul.mubr.bf16.gmra.mxu0 %v499
      %v6496 = vpop.f32.mrf.mxu0
      %v6497 = vadd.f32 %v6378, %v6496
      %v6498 = vpop.f32.mrf.mxu0
      %v6499 = vpop.f32.mrf.mxu0
      %v6500 = vadd.f32 %v6378, %v6499
      %v6501 = vpop.f32.mrf.mxu0
      %6502 = vmatprep.mubr.bf16.mxu0 0
      %6503 = vmatmul.mubr.bf16.gmra.mxu0 %v502
      %v6504 = vpop.f32.mrf.mxu0
      %v6505 = vadd.f32 %v6378, %v6504
      %v6506 = vpop.f32.mrf.mxu0
      %v6507 = vpop.f32.mrf.mxu0
      %v6508 = vadd.f32 %v6378, %v6507
      %v6509 = vpop.f32.mrf.mxu0
      %6510 = vmatprep.mubr.bf16.mxu0 0
      %6511 = vmatmul.mubr.bf16.gmra.mxu0 %v505
      %v6512 = vpop.f32.mrf.mxu0
      %v6513 = vadd.f32 %v6378, %v6512
      %v6514 = vpop.f32.mrf.mxu0
      %v6515 = vpop.f32.mrf.mxu0
      %v6516 = vadd.f32 %v6378, %v6515
      %v6517 = vpop.f32.mrf.mxu0
      %6518 = vmatprep.mubr.bf16.mxu0 0
      %6519 = vmatmul.mubr.bf16.gmra.mxu0 %v508
      %v6520 = vpop.f32.mrf.mxu0
      %v6521 = vadd.f32 %v6378, %v6520
      %v6522 = vpop.f32.mrf.mxu0
      %v6523 = vpop.f32.mrf.mxu0
      %v6524 = vadd.f32 %v6378, %v6523
      %v6525 = vpop.f32.mrf.mxu0
      %6526 = vmatprep.mubr.bf16.mxu0 0
      %6527 = vmatmul.mubr.bf16.gmra.mxu0 %v511
      %v6528 = vpop.f32.mrf.mxu0
      %v6529 = vadd.f32 %v6378, %v6528
      %v6530 = vpop.f32.mrf.mxu0
      %v6531 = vpop.f32.mrf.mxu0
      %v6532 = vadd.f32 %v6378, %v6531
      %v6533 = vpop.f32.mrf.mxu0
      %6534 = vmatprep.mubr.bf16.mxu0 0
      %6535 = vmatmul.mubr.bf16.gmra.mxu0 %v514
      %v6536 = vpop.f32.mrf.mxu0
      %v6537 = vadd.f32 %v6378, %v6536
      %v6538 = vpop.f32.mrf.mxu0
      %v6539 = vpop.f32.mrf.mxu0
      %v6540 = vadd.f32 %v6378, %v6539
      %v6541 = vpop.f32.mrf.mxu0
      %6542 = vmatprep.mubr.bf16.mxu0 0
      %6543 = vmatmul.mubr.bf16.gmra.mxu0 %v517
      %v6544 = vpop.f32.mrf.mxu0
      %v6545 = vadd.f32 %v6378, %v6544
      %v6546 = vpop.f32.mrf.mxu0
      %v6547 = vpop.f32.mrf.mxu0
      %v6548 = vadd.f32 %v6378, %v6547
      %v6549 = vpop.f32.mrf.mxu0
      %6550 = vmatprep.mubr.bf16.mxu0 0
      %6551 = vmatmul.mubr.bf16.gmra.mxu0 %v520
      %v6552 = vpop.f32.mrf.mxu0
      %v6553 = vadd.f32 %v6378, %v6552
      %v6554 = vpop.f32.mrf.mxu0
      %v6555 = vpop.f32.mrf.mxu0
      %v6556 = vadd.f32 %v6378, %v6555
      %v6557 = vpop.f32.mrf.mxu0
      %6558 = vdwg.mxu0
      %v6559 = vpack.c.bf16 %v6050, %v6047
      %v6560 = vpack.c.bf16 %v6058, %v6055
      %v6561 = vpack.c.bf16 %v6066, %v6063
      %v6562 = vpack.c.bf16 %v6074, %v6071
      %v6563 = vpack.c.bf16 %v6082, %v6079
      %v6564 = vpack.c.bf16 %v6090, %v6087
      %v6565 = vpack.c.bf16 %v6098, %v6095
      %v6566 = vpack.c.bf16 %v6106, %v6103
      %v6567 = vpack.c.bf16 %v6114, %v6111
      %v6568 = vpack.c.bf16 %v6122, %v6119
      %v6569 = vpack.c.bf16 %v6130, %v6127
      %v6570 = vpack.c.bf16 %v6138, %v6135
      %v6571 = vpack.c.bf16 %v6146, %v6143
      %v6572 = vpack.c.bf16 %v6154, %v6151
      %v6573 = vpack.c.bf16 %v6162, %v6159
      %v6574 = vpack.c.bf16 %v6170, %v6167
      %v6575 = vpack.c.bf16 %v6243, %v6240
      %v6576 = vpack.c.bf16 %v6251, %v6248
      %v6577 = vpack.c.bf16 %v6259, %v6256
      %v6578 = vpack.c.bf16 %v6267, %v6264
      %v6579 = vpack.c.bf16 %v6275, %v6272
      %v6580 = vpack.c.bf16 %v6283, %v6280
      %v6581 = vpack.c.bf16 %v6291, %v6288
      %v6582 = vpack.c.bf16 %v6299, %v6296
      %v6583 = vpack.c.bf16 %v6307, %v6304
      %v6584 = vpack.c.bf16 %v6315, %v6312
      %v6585 = vpack.c.bf16 %v6323, %v6320
      %v6586 = vpack.c.bf16 %v6331, %v6328
      %v6587 = vpack.c.bf16 %v6339, %v6336
      %v6588 = vpack.c.bf16 %v6347, %v6344
      %v6589 = vpack.c.bf16 %v6355, %v6352
      %v6590 = vpack.c.bf16 %v6363, %v6360
      %v6592 = vsel %vm1101, %v6559, 0
      %v6595 = vsel %vm1101, %v6560, 0
      %v6598 = vsel %vm1101, %v6561, 0
      %v6601 = vsel %vm1101, %v6562, 0
      %v6604 = vsel %vm1101, %v6563, 0
      %v6607 = vsel %vm1101, %v6564, 0
      %v6610 = vsel %vm1101, %v6565, 0
      %v6613 = vsel %vm1101, %v6566, 0
      %v6616 = vsel %vm1101, %v6567, 0
      %v6619 = vsel %vm1101, %v6568, 0
      %v6622 = vsel %vm1101, %v6569, 0
      %v6625 = vsel %vm1101, %v6570, 0
      %v6628 = vsel %vm1101, %v6571, 0
      %v6631 = vsel %vm1101, %v6572, 0
      %v6634 = vsel %vm1101, %v6573, 0
      %v6637 = vsel %vm1101, %v6574, 0
      %v6640 = vsel %vm1101, %v6575, 0
      %v6643 = vsel %vm1101, %v6576, 0
      %v6646 = vsel %vm1101, %v6577, 0
      %v6649 = vsel %vm1101, %v6578, 0
      %v6652 = vsel %vm1101, %v6579, 0
      %v6655 = vsel %vm1101, %v6580, 0
      %v6658 = vsel %vm1101, %v6581, 0
      %v6661 = vsel %vm1101, %v6582, 0
      %v6664 = vsel %vm1101, %v6583, 0
      %v6667 = vsel %vm1101, %v6584, 0
      %v6670 = vsel %vm1101, %v6585, 0
      %v6673 = vsel %vm1101, %v6586, 0
      %v6676 = vsel %vm1101, %v6587, 0
      %v6679 = vsel %vm1101, %v6588, 0
      %v6682 = vsel %vm1101, %v6589, 0
      %v6685 = vsel %vm1101, %v6590, 0
      %6687 = vmatprep.subr.bf16.mxu0 0
      %6688 = vmatpush1.bf16.xpose.msra.mxu0 %v6661
      %6689 = vmatprep.subr.bf16.mxu0 0
      %6690 = vmatpush1.bf16.xpose.msra.mxu0 %v6658
      %6691 = vmatprep.subr.bf16.mxu0 0
      %6692 = vmatpush1.bf16.xpose.msra.mxu0 %v6655
      %6693 = vmatprep.subr.bf16.mxu0 0
      %6694 = vmatpush1.bf16.xpose.msra.mxu0 %v6652
      %6695 = vmatprep.subr.bf16.mxu0 0
      %6696 = vmatpush1.bf16.xpose.msra.mxu0 %v6649
      %6697 = vmatprep.subr.bf16.mxu0 0
      %6698 = vmatpush1.bf16.xpose.msra.mxu0 %v6646
      %6699 = vmatprep.subr.bf16.mxu0 0
      %6700 = vmatpush1.bf16.xpose.msra.mxu0 %v6643
      %6701 = vmatprep.subr.bf16.mxu0 0
      %6702 = vmatpush1.bf16.xpose.msra.mxu0 %v6640
      %6703 = vmatprep.subr.bf16.mxu0 0
      %6704 = vmatpush2.bf16.xpose.msra.mxu0 %v6685
      %6705 = vmatprep.subr.bf16.mxu0 0
      %6706 = vmatpush2.bf16.xpose.msra.mxu0 %v6682
      %6707 = vmatprep.subr.bf16.mxu0 0
      %6708 = vmatpush2.bf16.xpose.msra.mxu0 %v6679
      %6709 = vmatprep.subr.bf16.mxu0 0
      %6710 = vmatpush2.bf16.xpose.msra.mxu0 %v6676
      %6711 = vmatprep.subr.bf16.mxu0 0
      %6712 = vmatpush2.bf16.xpose.msra.mxu0 %v6673
      %6713 = vmatprep.subr.bf16.mxu0 0
      %6714 = vmatpush2.bf16.xpose.msra.mxu0 %v6670
      %6715 = vmatprep.subr.bf16.mxu0 0
      %6716 = vmatpush2.bf16.xpose.msra.mxu0 %v6667
      %6717 = vmatprep.subr.bf16.mxu0 0
      %6718 = vmatpush2.bf16.xpose.msra.mxu0 %v6664
      %6719 = vmatprep.mubr.bf16.mxu0 0
      %6720 = vmatmul.mubr.bf16.gmra.mxu0 %v6592
      %v6721 = vpop.f32.mrf.mxu0
      %v6722 = vadd.f32 0.0, %v6721
      %v6723 = vpop.f32.mrf.mxu0
      %v6724 = vadd.f32 0.0, %v6723
      %v6725 = vpop.f32.mrf.mxu0
      %v6726 = vadd.f32 0.0, %v6725
      %v6727 = vpop.f32.mrf.mxu0
      %v6728 = vadd.f32 0.0, %v6727
      %6729 = vmatprep.mubr.bf16.mxu0 0
      %6730 = vmatmul.mubr.bf16.gmra.mxu0 %v6595
      %v6731 = vpop.f32.mrf.mxu0
      %v6732 = vadd.f32 0.0, %v6731
      %v6733 = vpop.f32.mrf.mxu0
      %v6734 = vadd.f32 0.0, %v6733
      %v6735 = vpop.f32.mrf.mxu0
      %v6736 = vadd.f32 0.0, %v6735
      %v6737 = vpop.f32.mrf.mxu0
      %v6738 = vadd.f32 0.0, %v6737
      %6739 = vmatprep.mubr.bf16.mxu0 0
      %6740 = vmatmul.mubr.bf16.gmra.mxu0 %v6598
      %v6741 = vpop.f32.mrf.mxu0
      %v6742 = vadd.f32 0.0, %v6741
      %v6743 = vpop.f32.mrf.mxu0
      %v6744 = vadd.f32 0.0, %v6743
      %v6745 = vpop.f32.mrf.mxu0
      %v6746 = vadd.f32 0.0, %v6745
      %v6747 = vpop.f32.mrf.mxu0
      %v6748 = vadd.f32 0.0, %v6747
      %6749 = vmatprep.mubr.bf16.mxu0 0
      %6750 = vmatmul.mubr.bf16.gmra.mxu0 %v6601
      %v6751 = vpop.f32.mrf.mxu0
      %v6752 = vadd.f32 0.0, %v6751
      %v6753 = vpop.f32.mrf.mxu0
      %v6754 = vadd.f32 0.0, %v6753
      %v6755 = vpop.f32.mrf.mxu0
      %v6756 = vadd.f32 0.0, %v6755
      %v6757 = vpop.f32.mrf.mxu0
      %v6758 = vadd.f32 0.0, %v6757
      %6759 = vmatprep.mubr.bf16.mxu0 0
      %6760 = vmatmul.mubr.bf16.gmra.mxu0 %v6604
      %v6761 = vpop.f32.mrf.mxu0
      %v6762 = vadd.f32 0.0, %v6761
      %v6763 = vpop.f32.mrf.mxu0
      %v6764 = vadd.f32 0.0, %v6763
      %v6765 = vpop.f32.mrf.mxu0
      %v6766 = vadd.f32 0.0, %v6765
      %v6767 = vpop.f32.mrf.mxu0
      %v6768 = vadd.f32 0.0, %v6767
      %6769 = vmatprep.mubr.bf16.mxu0 0
      %6770 = vmatmul.mubr.bf16.gmra.mxu0 %v6607
      %v6771 = vpop.f32.mrf.mxu0
      %v6772 = vadd.f32 0.0, %v6771
      %v6773 = vpop.f32.mrf.mxu0
      %v6774 = vadd.f32 0.0, %v6773
      %v6775 = vpop.f32.mrf.mxu0
      %v6776 = vadd.f32 0.0, %v6775
      %v6777 = vpop.f32.mrf.mxu0
      %v6778 = vadd.f32 0.0, %v6777
      %6779 = vmatprep.mubr.bf16.mxu0 0
      %6780 = vmatmul.mubr.bf16.gmra.mxu0 %v6610
      %v6781 = vpop.f32.mrf.mxu0
      %v6782 = vadd.f32 0.0, %v6781
      %v6783 = vpop.f32.mrf.mxu0
      %v6784 = vadd.f32 0.0, %v6783
      %v6785 = vpop.f32.mrf.mxu0
      %v6786 = vadd.f32 0.0, %v6785
      %v6787 = vpop.f32.mrf.mxu0
      %v6788 = vadd.f32 0.0, %v6787
      %6789 = vmatprep.mubr.bf16.mxu0 0
      %6790 = vmatmul.mubr.bf16.gmra.mxu0 %v6613
      %v6791 = vpop.f32.mrf.mxu0
      %v6792 = vadd.f32 0.0, %v6791
      %v6793 = vpop.f32.mrf.mxu0
      %v6794 = vadd.f32 0.0, %v6793
      %v6795 = vpop.f32.mrf.mxu0
      %v6796 = vadd.f32 0.0, %v6795
      %v6797 = vpop.f32.mrf.mxu0
      %v6798 = vadd.f32 0.0, %v6797
      %6799 = vmatprep.mubr.bf16.mxu0 0
      %6800 = vmatmul.mubr.bf16.gmra.mxu0 %v6616
      %v6801 = vpop.f32.mrf.mxu0
      %v6802 = vadd.f32 0.0, %v6801
      %v6803 = vpop.f32.mrf.mxu0
      %v6804 = vadd.f32 0.0, %v6803
      %v6805 = vpop.f32.mrf.mxu0
      %v6806 = vadd.f32 0.0, %v6805
      %v6807 = vpop.f32.mrf.mxu0
      %v6808 = vadd.f32 0.0, %v6807
      %6809 = vmatprep.mubr.bf16.mxu0 0
      %6810 = vmatmul.mubr.bf16.gmra.mxu0 %v6619
      %v6811 = vpop.f32.mrf.mxu0
      %v6812 = vadd.f32 0.0, %v6811
      %v6813 = vpop.f32.mrf.mxu0
      %v6814 = vadd.f32 0.0, %v6813
      %v6815 = vpop.f32.mrf.mxu0
      %v6816 = vadd.f32 0.0, %v6815
      %v6817 = vpop.f32.mrf.mxu0
      %v6818 = vadd.f32 0.0, %v6817
      %6819 = vmatprep.mubr.bf16.mxu0 0
      %6820 = vmatmul.mubr.bf16.gmra.mxu0 %v6622
      %v6821 = vpop.f32.mrf.mxu0
      %v6822 = vadd.f32 0.0, %v6821
      %v6823 = vpop.f32.mrf.mxu0
      %v6824 = vadd.f32 0.0, %v6823
      %v6825 = vpop.f32.mrf.mxu0
      %v6826 = vadd.f32 0.0, %v6825
      %v6827 = vpop.f32.mrf.mxu0
      %v6828 = vadd.f32 0.0, %v6827
      %6829 = vmatprep.mubr.bf16.mxu0 0
      %6830 = vmatmul.mubr.bf16.gmra.mxu0 %v6625
      %v6831 = vpop.f32.mrf.mxu0
      %v6832 = vadd.f32 0.0, %v6831
      %v6833 = vpop.f32.mrf.mxu0
      %v6834 = vadd.f32 0.0, %v6833
      %v6835 = vpop.f32.mrf.mxu0
      %v6836 = vadd.f32 0.0, %v6835
      %v6837 = vpop.f32.mrf.mxu0
      %v6838 = vadd.f32 0.0, %v6837
      %6839 = vmatprep.mubr.bf16.mxu0 0
      %6840 = vmatmul.mubr.bf16.gmra.mxu0 %v6628
      %v6841 = vpop.f32.mrf.mxu0
      %v6842 = vadd.f32 0.0, %v6841
      %v6843 = vpop.f32.mrf.mxu0
      %v6844 = vadd.f32 0.0, %v6843
      %v6845 = vpop.f32.mrf.mxu0
      %v6846 = vadd.f32 0.0, %v6845
      %v6847 = vpop.f32.mrf.mxu0
      %v6848 = vadd.f32 0.0, %v6847
      %6849 = vmatprep.mubr.bf16.mxu0 0
      %6850 = vmatmul.mubr.bf16.gmra.mxu0 %v6631
      %v6851 = vpop.f32.mrf.mxu0
      %v6852 = vadd.f32 0.0, %v6851
      %v6853 = vpop.f32.mrf.mxu0
      %v6854 = vadd.f32 0.0, %v6853
      %v6855 = vpop.f32.mrf.mxu0
      %v6856 = vadd.f32 0.0, %v6855
      %v6857 = vpop.f32.mrf.mxu0
      %v6858 = vadd.f32 0.0, %v6857
      %6859 = vmatprep.mubr.bf16.mxu0 0
      %6860 = vmatmul.mubr.bf16.gmra.mxu0 %v6634
      %v6861 = vpop.f32.mrf.mxu0
      %v6862 = vadd.f32 0.0, %v6861
      %v6863 = vpop.f32.mrf.mxu0
      %v6864 = vadd.f32 0.0, %v6863
      %v6865 = vpop.f32.mrf.mxu0
      %v6866 = vadd.f32 0.0, %v6865
      %v6867 = vpop.f32.mrf.mxu0
      %v6868 = vadd.f32 0.0, %v6867
      %6869 = vmatprep.mubr.bf16.mxu0 0
      %6870 = vmatmul.mubr.bf16.gmra.mxu0 %v6637
      %v6871 = vpop.f32.mrf.mxu0
      %v6872 = vadd.f32 0.0, %v6871
      %v6873 = vpop.f32.mrf.mxu0
      %v6874 = vadd.f32 0.0, %v6873
      %v6875 = vpop.f32.mrf.mxu0
      %v6876 = vadd.f32 0.0, %v6875
      %v6877 = vpop.f32.mrf.mxu0
      %v6878 = vadd.f32 0.0, %v6877
      %6879 = vdwg.mxu0
      %v6880 = vmax.f32 %v6722, %v6724
      %6881 = vmax.xlane.f32.xlu0 %v6880
      %v6882 = vpop.xlane.xlu0 %6881
      %v6883 = vmax.f32 %v6726, %v6728
      %6884 = vmax.xlane.f32.xlu0 %v6883
      %v6885 = vpop.xlane.xlu0 %6884
      %v6886 = vmax.f32 %v6732, %v6734
      %6887 = vmax.xlane.f32.xlu0 %v6886
      %v6888 = vpop.xlane.xlu0 %6887
      %v6889 = vmax.f32 %v6736, %v6738
      %6890 = vmax.xlane.f32.xlu0 %v6889
      %v6891 = vpop.xlane.xlu0 %6890
      %v6892 = vmax.f32 %v6742, %v6744
      %6893 = vmax.xlane.f32.xlu0 %v6892
      %v6894 = vpop.xlane.xlu0 %6893
      %v6895 = vmax.f32 %v6746, %v6748
      %6896 = vmax.xlane.f32.xlu0 %v6895
      %v6897 = vpop.xlane.xlu0 %6896
      %v6898 = vmax.f32 %v6752, %v6754
      %6899 = vmax.xlane.f32.xlu0 %v6898
      %v6900 = vpop.xlane.xlu0 %6899
      %v6901 = vmax.f32 %v6756, %v6758
      %6902 = vmax.xlane.f32.xlu0 %v6901
      %v6903 = vpop.xlane.xlu0 %6902
      %v6904 = vmax.f32 %v6762, %v6764
      %6905 = vmax.xlane.f32.xlu0 %v6904
      %v6906 = vpop.xlane.xlu0 %6905
      %v6907 = vmax.f32 %v6766, %v6768
      %6908 = vmax.xlane.f32.xlu0 %v6907
      %v6909 = vpop.xlane.xlu0 %6908
      %v6910 = vmax.f32 %v6772, %v6774
      %6911 = vmax.xlane.f32.xlu0 %v6910
      %v6912 = vpop.xlane.xlu0 %6911
      %v6913 = vmax.f32 %v6776, %v6778
      %6914 = vmax.xlane.f32.xlu0 %v6913
      %v6915 = vpop.xlane.xlu0 %6914
      %v6916 = vmax.f32 %v6782, %v6784
      %6917 = vmax.xlane.f32.xlu0 %v6916
      %v6918 = vpop.xlane.xlu0 %6917
      %v6919 = vmax.f32 %v6786, %v6788
      %6920 = vmax.xlane.f32.xlu0 %v6919
      %v6921 = vpop.xlane.xlu0 %6920
      %v6922 = vmax.f32 %v6792, %v6794
      %6923 = vmax.xlane.f32.xlu0 %v6922
      %v6924 = vpop.xlane.xlu0 %6923
      %v6925 = vmax.f32 %v6796, %v6798
      %6926 = vmax.xlane.f32.xlu0 %v6925
      %v6927 = vpop.xlane.xlu0 %6926
      %v6928 = vmax.f32 %v6802, %v6804
      %6929 = vmax.xlane.f32.xlu0 %v6928
      %v6930 = vpop.xlane.xlu0 %6929
      %v6931 = vmax.f32 %v6806, %v6808
      %6932 = vmax.xlane.f32.xlu0 %v6931
      %v6933 = vpop.xlane.xlu0 %6932
      %v6934 = vmax.f32 %v6812, %v6814
      %6935 = vmax.xlane.f32.xlu0 %v6934
      %v6936 = vpop.xlane.xlu0 %6935
      %v6937 = vmax.f32 %v6816, %v6818
      %6938 = vmax.xlane.f32.xlu0 %v6937
      %v6939 = vpop.xlane.xlu0 %6938
      %v6940 = vmax.f32 %v6822, %v6824
      %6941 = vmax.xlane.f32.xlu0 %v6940
      %v6942 = vpop.xlane.xlu0 %6941
      %v6943 = vmax.f32 %v6826, %v6828
      %6944 = vmax.xlane.f32.xlu0 %v6943
      %v6945 = vpop.xlane.xlu0 %6944
      %v6946 = vmax.f32 %v6832, %v6834
      %6947 = vmax.xlane.f32.xlu0 %v6946
      %v6948 = vpop.xlane.xlu0 %6947
      %v6949 = vmax.f32 %v6836, %v6838
      %6950 = vmax.xlane.f32.xlu0 %v6949
      %v6951 = vpop.xlane.xlu0 %6950
      %v6952 = vmax.f32 %v6842, %v6844
      %6953 = vmax.xlane.f32.xlu0 %v6952
      %v6954 = vpop.xlane.xlu0 %6953
      %v6955 = vmax.f32 %v6846, %v6848
      %6956 = vmax.xlane.f32.xlu0 %v6955
      %v6957 = vpop.xlane.xlu0 %6956
      %v6958 = vmax.f32 %v6852, %v6854
      %6959 = vmax.xlane.f32.xlu0 %v6958
      %v6960 = vpop.xlane.xlu0 %6959
      %v6961 = vmax.f32 %v6856, %v6858
      %6962 = vmax.xlane.f32.xlu0 %v6961
      %v6963 = vpop.xlane.xlu0 %6962
      %v6964 = vmax.f32 %v6862, %v6864
      %6965 = vmax.xlane.f32.xlu0 %v6964
      %v6966 = vpop.xlane.xlu0 %6965
      %v6967 = vmax.f32 %v6866, %v6868
      %6968 = vmax.xlane.f32.xlu0 %v6967
      %v6969 = vpop.xlane.xlu0 %6968
      %v6970 = vmax.f32 %v6872, %v6874
      %6971 = vmax.xlane.f32.xlu0 %v6970
      %v6972 = vpop.xlane.xlu0 %6971
      %v6973 = vmax.f32 %v6876, %v6878
      %6974 = vmax.xlane.f32.xlu0 %v6973
      %v6975 = vpop.xlane.xlu0 %6974
      %v6976 = vsub.f32 %v6722, %v6882
      %v6977 = vsub.f32 %v6724, %v6882
      %v6978 = vsub.f32 %v6726, %v6885
      %v6979 = vsub.f32 %v6728, %v6885
      %v6980 = vsub.f32 %v6732, %v6888
      %v6981 = vsub.f32 %v6734, %v6888
      %v6982 = vsub.f32 %v6736, %v6891
      %v6983 = vsub.f32 %v6738, %v6891
      %v6984 = vsub.f32 %v6742, %v6894
      %v6985 = vsub.f32 %v6744, %v6894
      %v6986 = vsub.f32 %v6746, %v6897
      %v6987 = vsub.f32 %v6748, %v6897
      %v6988 = vsub.f32 %v6752, %v6900
      %v6989 = vsub.f32 %v6754, %v6900
      %v6990 = vsub.f32 %v6756, %v6903
      %v6991 = vsub.f32 %v6758, %v6903
      %v6992 = vsub.f32 %v6762, %v6906
      %v6993 = vsub.f32 %v6764, %v6906
      %v6994 = vsub.f32 %v6766, %v6909
      %v6995 = vsub.f32 %v6768, %v6909
      %v6996 = vsub.f32 %v6772, %v6912
      %v6997 = vsub.f32 %v6774, %v6912
      %v6998 = vsub.f32 %v6776, %v6915
      %v6999 = vsub.f32 %v6778, %v6915
      %v7000 = vsub.f32 %v6782, %v6918
      %v7001 = vsub.f32 %v6784, %v6918
      %v7002 = vsub.f32 %v6786, %v6921
      %v7003 = vsub.f32 %v6788, %v6921
      %v7004 = vsub.f32 %v6792, %v6924
      %v7005 = vsub.f32 %v6794, %v6924
      %v7006 = vsub.f32 %v6796, %v6927
      %v7007 = vsub.f32 %v6798, %v6927
      %v7008 = vsub.f32 %v6802, %v6930
      %v7009 = vsub.f32 %v6804, %v6930
      %v7010 = vsub.f32 %v6806, %v6933
      %v7011 = vsub.f32 %v6808, %v6933
      %v7012 = vsub.f32 %v6812, %v6936
      %v7013 = vsub.f32 %v6814, %v6936
      %v7014 = vsub.f32 %v6816, %v6939
      %v7015 = vsub.f32 %v6818, %v6939
      %v7016 = vsub.f32 %v6822, %v6942
      %v7017 = vsub.f32 %v6824, %v6942
      %v7018 = vsub.f32 %v6826, %v6945
      %v7019 = vsub.f32 %v6828, %v6945
      %v7020 = vsub.f32 %v6832, %v6948
      %v7021 = vsub.f32 %v6834, %v6948
      %v7022 = vsub.f32 %v6836, %v6951
      %v7023 = vsub.f32 %v6838, %v6951
      %v7024 = vsub.f32 %v6842, %v6954
      %v7025 = vsub.f32 %v6844, %v6954
      %v7026 = vsub.f32 %v6846, %v6957
      %v7027 = vsub.f32 %v6848, %v6957
      %v7028 = vsub.f32 %v6852, %v6960
      %v7029 = vsub.f32 %v6854, %v6960
      %v7030 = vsub.f32 %v6856, %v6963
      %v7031 = vsub.f32 %v6858, %v6963
      %v7032 = vsub.f32 %v6862, %v6966
      %v7033 = vsub.f32 %v6864, %v6966
      %v7034 = vsub.f32 %v6866, %v6969
      %v7035 = vsub.f32 %v6868, %v6969
      %v7036 = vsub.f32 %v6872, %v6972
      %v7037 = vsub.f32 %v6874, %v6972
      %v7038 = vsub.f32 %v6876, %v6975
      %v7039 = vsub.f32 %v6878, %v6975
      %v7040 = vmul.f32 %v6976, 1.442695
      %v7041 = vpow.pop %v7040
      %v7042 = vmul.f32 %v6977, 1.442695
      %v7043 = vpow.pop %v7042
      %v7044 = vmul.f32 %v6978, 1.442695
      %v7045 = vpow.pop %v7044
      %v7046 = vmul.f32 %v6979, 1.442695
      %v7047 = vpow.pop %v7046
      %v7048 = vmul.f32 %v6980, 1.442695
      %v7049 = vpow.pop %v7048
      %v7050 = vmul.f32 %v6981, 1.442695
      %v7051 = vpow.pop %v7050
      %v7052 = vmul.f32 %v6982, 1.442695
      %v7053 = vpow.pop %v7052
      %v7054 = vmul.f32 %v6983, 1.442695
      %v7055 = vpow.pop %v7054
      %v7056 = vmul.f32 %v6984, 1.442695
      %v7057 = vpow.pop %v7056
      %v7058 = vmul.f32 %v6985, 1.442695
      %v7059 = vpow.pop %v7058
      %v7060 = vmul.f32 %v6986, 1.442695
      %v7061 = vpow.pop %v7060
      %v7062 = vmul.f32 %v6987, 1.442695
      %v7063 = vpow.pop %v7062
      %v7064 = vmul.f32 %v6988, 1.442695
      %v7065 = vpow.pop %v7064
      %v7066 = vmul.f32 %v6989, 1.442695
      %v7067 = vpow.pop %v7066
      %v7068 = vmul.f32 %v6990, 1.442695
      %v7069 = vpow.pop %v7068
      %v7070 = vmul.f32 %v6991, 1.442695
      %v7071 = vpow.pop %v7070
      %v7072 = vmul.f32 %v6992, 1.442695
      %v7073 = vpow.pop %v7072
      %v7074 = vmul.f32 %v6993, 1.442695
      %v7075 = vpow.pop %v7074
      %v7076 = vmul.f32 %v6994, 1.442695
      %v7077 = vpow.pop %v7076
      %v7078 = vmul.f32 %v6995, 1.442695
      %v7079 = vpow.pop %v7078
      %v7080 = vmul.f32 %v6996, 1.442695
      %v7081 = vpow.pop %v7080
      %v7082 = vmul.f32 %v6997, 1.442695
      %v7083 = vpow.pop %v7082
      %v7084 = vmul.f32 %v6998, 1.442695
      %v7085 = vpow.pop %v7084
      %v7086 = vmul.f32 %v6999, 1.442695
      %v7087 = vpow.pop %v7086
      %v7088 = vmul.f32 %v7000, 1.442695
      %v7089 = vpow.pop %v7088
      %v7090 = vmul.f32 %v7001, 1.442695
      %v7091 = vpow.pop %v7090
      %v7092 = vmul.f32 %v7002, 1.442695
      %v7093 = vpow.pop %v7092
      %v7094 = vmul.f32 %v7003, 1.442695
      %v7095 = vpow.pop %v7094
      %v7096 = vmul.f32 %v7004, 1.442695
      %v7097 = vpow.pop %v7096
      %v7098 = vmul.f32 %v7005, 1.442695
      %v7099 = vpow.pop %v7098
      %v7100 = vmul.f32 %v7006, 1.442695
      %v7101 = vpow.pop %v7100
      %v7102 = vmul.f32 %v7007, 1.442695
      %v7103 = vpow.pop %v7102
      %v7104 = vmul.f32 %v7008, 1.442695
      %v7105 = vpow.pop %v7104
      %v7106 = vmul.f32 %v7009, 1.442695
      %v7107 = vpow.pop %v7106
      %v7108 = vmul.f32 %v7010, 1.442695
      %v7109 = vpow.pop %v7108
      %v7110 = vmul.f32 %v7011, 1.442695
      %v7111 = vpow.pop %v7110
      %v7112 = vmul.f32 %v7012, 1.442695
      %v7113 = vpow.pop %v7112
      %v7114 = vmul.f32 %v7013, 1.442695
      %v7115 = vpow.pop %v7114
      %v7116 = vmul.f32 %v7014, 1.442695
      %v7117 = vpow.pop %v7116
      %v7118 = vmul.f32 %v7015, 1.442695
      %v7119 = vpow.pop %v7118
      %v7120 = vmul.f32 %v7016, 1.442695
      %v7121 = vpow.pop %v7120
      %v7122 = vmul.f32 %v7017, 1.442695
      %v7123 = vpow.pop %v7122
      %v7124 = vmul.f32 %v7018, 1.442695
      %v7125 = vpow.pop %v7124
      %v7126 = vmul.f32 %v7019, 1.442695
      %v7127 = vpow.pop %v7126
      %v7128 = vmul.f32 %v7020, 1.442695
      %v7129 = vpow.pop %v7128
      %v7130 = vmul.f32 %v7021, 1.442695
      %v7131 = vpow.pop %v7130
      %v7132 = vmul.f32 %v7022, 1.442695
      %v7133 = vpow.pop %v7132
      %v7134 = vmul.f32 %v7023, 1.442695
      %v7135 = vpow.pop %v7134
      %v7136 = vmul.f32 %v7024, 1.442695
      %v7137 = vpow.pop %v7136
      %v7138 = vmul.f32 %v7025, 1.442695
      %v7139 = vpow.pop %v7138
      %v7140 = vmul.f32 %v7026, 1.442695
      %v7141 = vpow.pop %v7140
      %v7142 = vmul.f32 %v7027, 1.442695
      %v7143 = vpow.pop %v7142
      %v7144 = vmul.f32 %v7028, 1.442695
      %v7145 = vpow.pop %v7144
      %v7146 = vmul.f32 %v7029, 1.442695
      %v7147 = vpow.pop %v7146
      %v7148 = vmul.f32 %v7030, 1.442695
      %v7149 = vpow.pop %v7148
      %v7150 = vmul.f32 %v7031, 1.442695
      %v7151 = vpow.pop %v7150
      %v7152 = vmul.f32 %v7032, 1.442695
      %v7153 = vpow.pop %v7152
      %v7154 = vmul.f32 %v7033, 1.442695
      %v7155 = vpow.pop %v7154
      %v7156 = vmul.f32 %v7034, 1.442695
      %v7157 = vpow.pop %v7156
      %v7158 = vmul.f32 %v7035, 1.442695
      %v7159 = vpow.pop %v7158
      %v7160 = vmul.f32 %v7036, 1.442695
      %v7161 = vpow.pop %v7160
      %v7162 = vmul.f32 %v7037, 1.442695
      %v7163 = vpow.pop %v7162
      %v7164 = vmul.f32 %v7038, 1.442695
      %v7165 = vpow.pop %v7164
      %v7166 = vmul.f32 %v7039, 1.442695
      %v7167 = vpow.pop %v7166
      %v7168 = vadd.f32 %v7041, %v7043
      %7169 = vadd.xlane.f32.xlu0 %v7168
      %v7170 = vpop.xlane.xlu0 %7169
      %v7171 = vadd.f32 %v7045, %v7047
      %7172 = vadd.xlane.f32.xlu0 %v7171
      %v7173 = vpop.xlane.xlu0 %7172
      %v7174 = vadd.f32 %v7049, %v7051
      %7175 = vadd.xlane.f32.xlu0 %v7174
      %v7176 = vpop.xlane.xlu0 %7175
      %v7177 = vadd.f32 %v7053, %v7055
      %7178 = vadd.xlane.f32.xlu0 %v7177
      %v7179 = vpop.xlane.xlu0 %7178
      %v7180 = vadd.f32 %v7057, %v7059
      %7181 = vadd.xlane.f32.xlu0 %v7180
      %v7182 = vpop.xlane.xlu0 %7181
      %v7183 = vadd.f32 %v7061, %v7063
      %7184 = vadd.xlane.f32.xlu0 %v7183
      %v7185 = vpop.xlane.xlu0 %7184
      %v7186 = vadd.f32 %v7065, %v7067
      %7187 = vadd.xlane.f32.xlu0 %v7186
      %v7188 = vpop.xlane.xlu0 %7187
      %v7189 = vadd.f32 %v7069, %v7071
      %7190 = vadd.xlane.f32.xlu0 %v7189
      %v7191 = vpop.xlane.xlu0 %7190
      %v7192 = vadd.f32 %v7073, %v7075
      %7193 = vadd.xlane.f32.xlu0 %v7192
      %v7194 = vpop.xlane.xlu0 %7193
      %v7195 = vadd.f32 %v7077, %v7079
      %7196 = vadd.xlane.f32.xlu0 %v7195
      %v7197 = vpop.xlane.xlu0 %7196
      %v7198 = vadd.f32 %v7081, %v7083
      %7199 = vadd.xlane.f32.xlu0 %v7198
      %v7200 = vpop.xlane.xlu0 %7199
      %v7201 = vadd.f32 %v7085, %v7087
      %7202 = vadd.xlane.f32.xlu0 %v7201
      %v7203 = vpop.xlane.xlu0 %7202
      %v7204 = vadd.f32 %v7089, %v7091
      %7205 = vadd.xlane.f32.xlu0 %v7204
      %v7206 = vpop.xlane.xlu0 %7205
      %v7207 = vadd.f32 %v7093, %v7095
      %7208 = vadd.xlane.f32.xlu0 %v7207
      %v7209 = vpop.xlane.xlu0 %7208
      %v7210 = vadd.f32 %v7097, %v7099
      %7211 = vadd.xlane.f32.xlu0 %v7210
      %v7212 = vpop.xlane.xlu0 %7211
      %v7213 = vadd.f32 %v7101, %v7103
      %7214 = vadd.xlane.f32.xlu0 %v7213
      %v7215 = vpop.xlane.xlu0 %7214
      %v7216 = vadd.f32 %v7105, %v7107
      %7217 = vadd.xlane.f32.xlu0 %v7216
      %v7218 = vpop.xlane.xlu0 %7217
      %v7219 = vadd.f32 %v7109, %v7111
      %7220 = vadd.xlane.f32.xlu0 %v7219
      %v7221 = vpop.xlane.xlu0 %7220
      %v7222 = vadd.f32 %v7113, %v7115
      %7223 = vadd.xlane.f32.xlu0 %v7222
      %v7224 = vpop.xlane.xlu0 %7223
      %v7225 = vadd.f32 %v7117, %v7119
      %7226 = vadd.xlane.f32.xlu0 %v7225
      %v7227 = vpop.xlane.xlu0 %7226
      %v7228 = vadd.f32 %v7121, %v7123
      %7229 = vadd.xlane.f32.xlu0 %v7228
      %v7230 = vpop.xlane.xlu0 %7229
      %v7231 = vadd.f32 %v7125, %v7127
      %7232 = vadd.xlane.f32.xlu0 %v7231
      %v7233 = vpop.xlane.xlu0 %7232
      %v7234 = vadd.f32 %v7129, %v7131
      %7235 = vadd.xlane.f32.xlu0 %v7234
      %v7236 = vpop.xlane.xlu0 %7235
      %v7237 = vadd.f32 %v7133, %v7135
      %7238 = vadd.xlane.f32.xlu0 %v7237
      %v7239 = vpop.xlane.xlu0 %7238
      %v7240 = vadd.f32 %v7137, %v7139
      %7241 = vadd.xlane.f32.xlu0 %v7240
      %v7242 = vpop.xlane.xlu0 %7241
      %v7243 = vadd.f32 %v7141, %v7143
      %7244 = vadd.xlane.f32.xlu0 %v7243
      %v7245 = vpop.xlane.xlu0 %7244
      %v7246 = vadd.f32 %v7145, %v7147
      %7247 = vadd.xlane.f32.xlu0 %v7246
      %v7248 = vpop.xlane.xlu0 %7247
      %v7249 = vadd.f32 %v7149, %v7151
      %7250 = vadd.xlane.f32.xlu0 %v7249
      %v7251 = vpop.xlane.xlu0 %7250
      %v7252 = vadd.f32 %v7153, %v7155
      %7253 = vadd.xlane.f32.xlu0 %v7252
      %v7254 = vpop.xlane.xlu0 %7253
      %v7255 = vadd.f32 %v7157, %v7159
      %7256 = vadd.xlane.f32.xlu0 %v7255
      %v7257 = vpop.xlane.xlu0 %7256
      %v7258 = vadd.f32 %v7161, %v7163
      %7259 = vadd.xlane.f32.xlu0 %v7258
      %v7260 = vpop.xlane.xlu0 %7259
      %v7261 = vadd.f32 %v7165, %v7167
      %7262 = vadd.xlane.f32.xlu0 %v7261
      %v7263 = vpop.xlane.xlu0 %7262
      %v7264 = vrcp.pop %v7170
      %v7265 = vrcp.pop %v7173
      %v7266 = vrcp.pop %v7176
      %v7267 = vrcp.pop %v7179
      %v7268 = vrcp.pop %v7182
      %v7269 = vrcp.pop %v7185
      %v7270 = vrcp.pop %v7188
      %v7271 = vrcp.pop %v7191
      %v7272 = vrcp.pop %v7194
      %v7273 = vrcp.pop %v7197
      %v7274 = vrcp.pop %v7200
      %v7275 = vrcp.pop %v7203
      %v7276 = vrcp.pop %v7206
      %v7277 = vrcp.pop %v7209
      %v7278 = vrcp.pop %v7212
      %v7279 = vrcp.pop %v7215
      %v7280 = vrcp.pop %v7218
      %v7281 = vrcp.pop %v7221
      %v7282 = vrcp.pop %v7224
      %v7283 = vrcp.pop %v7227
      %v7284 = vrcp.pop %v7230
      %v7285 = vrcp.pop %v7233
      %v7286 = vrcp.pop %v7236
      %v7287 = vrcp.pop %v7239
      %v7288 = vrcp.pop %v7242
      %v7289 = vrcp.pop %v7245
      %v7290 = vrcp.pop %v7248
      %v7291 = vrcp.pop %v7251
      %v7292 = vrcp.pop %v7254
      %v7293 = vrcp.pop %v7257
      %v7294 = vrcp.pop %v7260
      %v7295 = vrcp.pop %v7263
      %v7296 = vmul.f32 %v7041, %v7264
      %v7297 = vmul.f32 %v7043, %v7264
      %v7298 = vmul.f32 %v7045, %v7265
      %v7299 = vmul.f32 %v7047, %v7265
      %v7300 = vmul.f32 %v7049, %v7266
      %v7301 = vmul.f32 %v7051, %v7266
      %v7302 = vmul.f32 %v7053, %v7267
      %v7303 = vmul.f32 %v7055, %v7267
      %v7304 = vmul.f32 %v7057, %v7268
      %v7305 = vmul.f32 %v7059, %v7268
      %v7306 = vmul.f32 %v7061, %v7269
      %v7307 = vmul.f32 %v7063, %v7269
      %v7308 = vmul.f32 %v7065, %v7270
      %v7309 = vmul.f32 %v7067, %v7270
      %v7310 = vmul.f32 %v7069, %v7271
      %v7311 = vmul.f32 %v7071, %v7271
      %v7312 = vmul.f32 %v7073, %v7272
      %v7313 = vmul.f32 %v7075, %v7272
      %v7314 = vmul.f32 %v7077, %v7273
      %v7315 = vmul.f32 %v7079, %v7273
      %v7316 = vmul.f32 %v7081, %v7274
      %v7317 = vmul.f32 %v7083, %v7274
      %v7318 = vmul.f32 %v7085, %v7275
      %v7319 = vmul.f32 %v7087, %v7275
      %v7320 = vmul.f32 %v7089, %v7276
      %v7321 = vmul.f32 %v7091, %v7276
      %v7322 = vmul.f32 %v7093, %v7277
      %v7323 = vmul.f32 %v7095, %v7277
      %v7324 = vmul.f32 %v7097, %v7278
      %v7325 = vmul.f32 %v7099, %v7278
      %v7326 = vmul.f32 %v7101, %v7279
      %v7327 = vmul.f32 %v7103, %v7279
      %v7328 = vmul.f32 %v7105, %v7280
      %v7329 = vmul.f32 %v7107, %v7280
      %v7330 = vmul.f32 %v7109, %v7281
      %v7331 = vmul.f32 %v7111, %v7281
      %v7332 = vmul.f32 %v7113, %v7282
      %v7333 = vmul.f32 %v7115, %v7282
      %v7334 = vmul.f32 %v7117, %v7283
      %v7335 = vmul.f32 %v7119, %v7283
      %v7336 = vmul.f32 %v7121, %v7284
      %v7337 = vmul.f32 %v7123, %v7284
      %v7338 = vmul.f32 %v7125, %v7285
      %v7339 = vmul.f32 %v7127, %v7285
      %v7340 = vmul.f32 %v7129, %v7286
      %v7341 = vmul.f32 %v7131, %v7286
      %v7342 = vmul.f32 %v7133, %v7287
      %v7343 = vmul.f32 %v7135, %v7287
      %v7344 = vmul.f32 %v7137, %v7288
      %v7345 = vmul.f32 %v7139, %v7288
      %v7346 = vmul.f32 %v7141, %v7289
      %v7347 = vmul.f32 %v7143, %v7289
      %v7348 = vmul.f32 %v7145, %v7290
      %v7349 = vmul.f32 %v7147, %v7290
      %v7350 = vmul.f32 %v7149, %v7291
      %v7351 = vmul.f32 %v7151, %v7291
      %v7352 = vmul.f32 %v7153, %v7292
      %v7353 = vmul.f32 %v7155, %v7292
      %v7354 = vmul.f32 %v7157, %v7293
      %v7355 = vmul.f32 %v7159, %v7293
      %v7356 = vmul.f32 %v7161, %v7294
      %v7357 = vmul.f32 %v7163, %v7294
      %v7358 = vmul.f32 %v7165, %v7295
      %v7359 = vmul.f32 %v7167, %v7295
      %v7360 = vpack.c.bf16 %v7298, %v7296
      %v7361 = vpack.c.bf16 %v7299, %v7297
      %v7362 = vpack.c.bf16 %v7302, %v7300
      %v7363 = vpack.c.bf16 %v7303, %v7301
      %v7364 = vpack.c.bf16 %v7306, %v7304
      %v7365 = vpack.c.bf16 %v7307, %v7305
      %v7366 = vpack.c.bf16 %v7310, %v7308
      %v7367 = vpack.c.bf16 %v7311, %v7309
      %v7368 = vpack.c.bf16 %v7314, %v7312
      %v7369 = vpack.c.bf16 %v7315, %v7313
      %v7370 = vpack.c.bf16 %v7318, %v7316
      %v7371 = vpack.c.bf16 %v7319, %v7317
      %v7372 = vpack.c.bf16 %v7322, %v7320
      %v7373 = vpack.c.bf16 %v7323, %v7321
      %v7374 = vpack.c.bf16 %v7326, %v7324
      %v7375 = vpack.c.bf16 %v7327, %v7325
      %v7376 = vpack.c.bf16 %v7330, %v7328
      %v7377 = vpack.c.bf16 %v7331, %v7329
      %v7378 = vpack.c.bf16 %v7334, %v7332
      %v7379 = vpack.c.bf16 %v7335, %v7333
      %v7380 = vpack.c.bf16 %v7338, %v7336
      %v7381 = vpack.c.bf16 %v7339, %v7337
      %v7382 = vpack.c.bf16 %v7342, %v7340
      %v7383 = vpack.c.bf16 %v7343, %v7341
      %v7384 = vpack.c.bf16 %v7346, %v7344
      %v7385 = vpack.c.bf16 %v7347, %v7345
      %v7386 = vpack.c.bf16 %v7350, %v7348
      %v7387 = vpack.c.bf16 %v7351, %v7349
      %v7388 = vpack.c.bf16 %v7354, %v7352
      %v7389 = vpack.c.bf16 %v7355, %v7353
      %v7390 = vpack.c.bf16 %v7358, %v7356
      %v7391 = vpack.c.bf16 %v7359, %v7357
      %v7392 = vpack.c.bf16 %v6436, %v6433
      %v7393 = vpack.c.bf16 %v6444, %v6441
      %v7394 = vpack.c.bf16 %v6452, %v6449
      %v7395 = vpack.c.bf16 %v6460, %v6457
      %v7396 = vpack.c.bf16 %v6468, %v6465
      %v7397 = vpack.c.bf16 %v6476, %v6473
      %v7398 = vpack.c.bf16 %v6484, %v6481
      %v7399 = vpack.c.bf16 %v6492, %v6489
      %v7400 = vpack.c.bf16 %v6500, %v6497
      %v7401 = vpack.c.bf16 %v6508, %v6505
      %v7402 = vpack.c.bf16 %v6516, %v6513
      %v7403 = vpack.c.bf16 %v6524, %v6521
      %v7404 = vpack.c.bf16 %v6532, %v6529
      %v7405 = vpack.c.bf16 %v6540, %v6537
      %v7406 = vpack.c.bf16 %v6548, %v6545
      %v7407 = vpack.c.bf16 %v6556, %v6553
      %7408 = vmatprep.subr.bf16.mxu0 0
      %7409 = vmatpush1.bf16.msra.mxu0 %v7399
      %7410 = vmatprep.subr.bf16.mxu0 0
      %7411 = vmatpush1.bf16.msra.mxu0 %v7398
      %7412 = vmatprep.subr.bf16.mxu0 0
      %7413 = vmatpush1.bf16.msra.mxu0 %v7397
      %7414 = vmatprep.subr.bf16.mxu0 0
      %7415 = vmatpush1.bf16.msra.mxu0 %v7396
      %7416 = vmatprep.subr.bf16.mxu0 0
      %7417 = vmatpush1.bf16.msra.mxu0 %v7395
      %7418 = vmatprep.subr.bf16.mxu0 0
      %7419 = vmatpush1.bf16.msra.mxu0 %v7394
      %7420 = vmatprep.subr.bf16.mxu0 0
      %7421 = vmatpush1.bf16.msra.mxu0 %v7393
      %7422 = vmatprep.subr.bf16.mxu0 0
      %7423 = vmatpush1.bf16.msra.mxu0 %v7392
      %7424 = vmatprep.subr.bf16.mxu0 0
      %7425 = vmatpush2.bf16.msra.mxu0 %v7407
      %7426 = vmatprep.subr.bf16.mxu0 0
      %7427 = vmatpush2.bf16.msra.mxu0 %v7406
      %7428 = vmatprep.subr.bf16.mxu0 0
      %7429 = vmatpush2.bf16.msra.mxu0 %v7405
      %7430 = vmatprep.subr.bf16.mxu0 0
      %7431 = vmatpush2.bf16.msra.mxu0 %v7404
      %7432 = vmatprep.subr.bf16.mxu0 0
      %7433 = vmatpush2.bf16.msra.mxu0 %v7403
      %7434 = vmatprep.subr.bf16.mxu0 0
      %7435 = vmatpush2.bf16.msra.mxu0 %v7402
      %7436 = vmatprep.subr.bf16.mxu0 0
      %7437 = vmatpush2.bf16.msra.mxu0 %v7401
      %7438 = vmatprep.subr.bf16.mxu0 0
      %7439 = vmatpush2.bf16.msra.mxu0 %v7400
      %7440 = vmatprep.mubr.bf16.mxu0 %v7361
      %7441 = vmatmul.mubr.bf16.gmra.mxu0 %v7360
      %v7442 = vpop.f32.mrf.mxu0
      %v7443 = vadd.f32 0.0, %v7442
      %v7444 = vpop.f32.mrf.mxu0
      %v7445 = vpop.f32.mrf.mxu0
      %v7446 = vadd.f32 0.0, %v7445
      %v7447 = vpop.f32.mrf.mxu0
      %7448 = vmatprep.mubr.bf16.mxu0 %v7363
      %7449 = vmatmul.mubr.bf16.gmra.mxu0 %v7362
      %v7450 = vpop.f32.mrf.mxu0
      %v7451 = vadd.f32 0.0, %v7450
      %v7452 = vpop.f32.mrf.mxu0
      %v7453 = vpop.f32.mrf.mxu0
      %v7454 = vadd.f32 0.0, %v7453
      %v7455 = vpop.f32.mrf.mxu0
      %7456 = vmatprep.mubr.bf16.mxu0 %v7365
      %7457 = vmatmul.mubr.bf16.gmra.mxu0 %v7364
      %v7458 = vpop.f32.mrf.mxu0
      %v7459 = vadd.f32 0.0, %v7458
      %v7460 = vpop.f32.mrf.mxu0
      %v7461 = vpop.f32.mrf.mxu0
      %v7462 = vadd.f32 0.0, %v7461
      %v7463 = vpop.f32.mrf.mxu0
      %7464 = vmatprep.mubr.bf16.mxu0 %v7367
      %7465 = vmatmul.mubr.bf16.gmra.mxu0 %v7366
      %v7466 = vpop.f32.mrf.mxu0
      %v7467 = vadd.f32 0.0, %v7466
      %v7468 = vpop.f32.mrf.mxu0
      %v7469 = vpop.f32.mrf.mxu0
      %v7470 = vadd.f32 0.0, %v7469
      %v7471 = vpop.f32.mrf.mxu0
      %7472 = vmatprep.mubr.bf16.mxu0 %v7369
      %7473 = vmatmul.mubr.bf16.gmra.mxu0 %v7368
      %v7474 = vpop.f32.mrf.mxu0
      %v7475 = vadd.f32 0.0, %v7474
      %v7476 = vpop.f32.mrf.mxu0
      %v7477 = vpop.f32.mrf.mxu0
      %v7478 = vadd.f32 0.0, %v7477
      %v7479 = vpop.f32.mrf.mxu0
      %7480 = vmatprep.mubr.bf16.mxu0 %v7371
      %7481 = vmatmul.mubr.bf16.gmra.mxu0 %v7370
      %v7482 = vpop.f32.mrf.mxu0
      %v7483 = vadd.f32 0.0, %v7482
      %v7484 = vpop.f32.mrf.mxu0
      %v7485 = vpop.f32.mrf.mxu0
      %v7486 = vadd.f32 0.0, %v7485
      %v7487 = vpop.f32.mrf.mxu0
      %7488 = vmatprep.mubr.bf16.mxu0 %v7373
      %7489 = vmatmul.mubr.bf16.gmra.mxu0 %v7372
      %v7490 = vpop.f32.mrf.mxu0
      %v7491 = vadd.f32 0.0, %v7490
      %v7492 = vpop.f32.mrf.mxu0
      %v7493 = vpop.f32.mrf.mxu0
      %v7494 = vadd.f32 0.0, %v7493
      %v7495 = vpop.f32.mrf.mxu0
      %7496 = vmatprep.mubr.bf16.mxu0 %v7375
      %7497 = vmatmul.mubr.bf16.gmra.mxu0 %v7374
      %v7498 = vpop.f32.mrf.mxu0
      %v7499 = vadd.f32 0.0, %v7498
      %v7500 = vpop.f32.mrf.mxu0
      %v7501 = vpop.f32.mrf.mxu0
      %v7502 = vadd.f32 0.0, %v7501
      %v7503 = vpop.f32.mrf.mxu0
      %7504 = vmatprep.mubr.bf16.mxu0 %v7377
      %7505 = vmatmul.mubr.bf16.gmra.mxu0 %v7376
      %v7506 = vpop.f32.mrf.mxu0
      %v7507 = vadd.f32 0.0, %v7506
      %v7508 = vpop.f32.mrf.mxu0
      %v7509 = vpop.f32.mrf.mxu0
      %v7510 = vadd.f32 0.0, %v7509
      %v7511 = vpop.f32.mrf.mxu0
      %7512 = vmatprep.mubr.bf16.mxu0 %v7379
      %7513 = vmatmul.mubr.bf16.gmra.mxu0 %v7378
      %v7514 = vpop.f32.mrf.mxu0
      %v7515 = vadd.f32 0.0, %v7514
      %v7516 = vpop.f32.mrf.mxu0
      %v7517 = vpop.f32.mrf.mxu0
      %v7518 = vadd.f32 0.0, %v7517
      %v7519 = vpop.f32.mrf.mxu0
      %7520 = vmatprep.mubr.bf16.mxu0 %v7381
      %7521 = vmatmul.mubr.bf16.gmra.mxu0 %v7380
      %v7522 = vpop.f32.mrf.mxu0
      %v7523 = vadd.f32 0.0, %v7522
      %v7524 = vpop.f32.mrf.mxu0
      %v7525 = vpop.f32.mrf.mxu0
      %v7526 = vadd.f32 0.0, %v7525
      %v7527 = vpop.f32.mrf.mxu0
      %7528 = vmatprep.mubr.bf16.mxu0 %v7383
      %7529 = vmatmul.mubr.bf16.gmra.mxu0 %v7382
      %v7530 = vpop.f32.mrf.mxu0
      %v7531 = vadd.f32 0.0, %v7530
      %v7532 = vpop.f32.mrf.mxu0
      %v7533 = vpop.f32.mrf.mxu0
      %v7534 = vadd.f32 0.0, %v7533
      %v7535 = vpop.f32.mrf.mxu0
      %7536 = vmatprep.mubr.bf16.mxu0 %v7385
      %7537 = vmatmul.mubr.bf16.gmra.mxu0 %v7384
      %v7538 = vpop.f32.mrf.mxu0
      %v7539 = vadd.f32 0.0, %v7538
      %v7540 = vpop.f32.mrf.mxu0
      %v7541 = vpop.f32.mrf.mxu0
      %v7542 = vadd.f32 0.0, %v7541
      %v7543 = vpop.f32.mrf.mxu0
      %7544 = vmatprep.mubr.bf16.mxu0 %v7387
      %7545 = vmatmul.mubr.bf16.gmra.mxu0 %v7386
      %v7546 = vpop.f32.mrf.mxu0
      %v7547 = vadd.f32 0.0, %v7546
      %v7548 = vpop.f32.mrf.mxu0
      %v7549 = vpop.f32.mrf.mxu0
      %v7550 = vadd.f32 0.0, %v7549
      %v7551 = vpop.f32.mrf.mxu0
      %7552 = vmatprep.mubr.bf16.mxu0 %v7389
      %7553 = vmatmul.mubr.bf16.gmra.mxu0 %v7388
      %v7554 = vpop.f32.mrf.mxu0
      %v7555 = vadd.f32 0.0, %v7554
      %v7556 = vpop.f32.mrf.mxu0
      %v7557 = vpop.f32.mrf.mxu0
      %v7558 = vadd.f32 0.0, %v7557
      %v7559 = vpop.f32.mrf.mxu0
      %7560 = vmatprep.mubr.bf16.mxu0 %v7391
      %7561 = vmatmul.mubr.bf16.gmra.mxu0 %v7390
      %v7562 = vpop.f32.mrf.mxu0
      %v7563 = vadd.f32 0.0, %v7562
      %v7564 = vpop.f32.mrf.mxu0
      %v7565 = vpop.f32.mrf.mxu0
      %v7566 = vadd.f32 0.0, %v7565
      %v7567 = vpop.f32.mrf.mxu0
      %7568 = vdwg.mxu0
      %v7569 = vpack.c.bf16 %v7446, %v7443
      %v7570 = vpack.c.bf16 %v7454, %v7451
      %v7571 = vpack.c.bf16 %v7462, %v7459
      %v7572 = vpack.c.bf16 %v7470, %v7467
      %v7573 = vpack.c.bf16 %v7478, %v7475
      %v7574 = vpack.c.bf16 %v7486, %v7483
      %v7575 = vpack.c.bf16 %v7494, %v7491
      %v7576 = vpack.c.bf16 %v7502, %v7499
      %v7577 = vpack.c.bf16 %v7510, %v7507
      %v7578 = vpack.c.bf16 %v7518, %v7515
      %v7579 = vpack.c.bf16 %v7526, %v7523
      %v7580 = vpack.c.bf16 %v7534, %v7531
      %v7581 = vpack.c.bf16 %v7542, %v7539
      %v7582 = vpack.c.bf16 %v7550, %v7547
      %v7583 = vpack.c.bf16 %v7558, %v7555
      %v7584 = vpack.c.bf16 %v7566, %v7563
      %s7585 = scalar_lea.vmem %s7, 12
      %v7586 = vld [vmem:[%s7585] sm:$0xf]
      %v7588 = vsel %vm1101, %v7569, 0
      %v7591 = vsel %vm1101, %v7570, 0
      %v7594 = vsel %vm1101, %v7571, 0
      %v7597 = vsel %vm1101, %v7572, 0
      %v7600 = vsel %vm1101, %v7573, 0
      %v7603 = vsel %vm1101, %v7574, 0
      %v7606 = vsel %vm1101, %v7575, 0
      %v7609 = vsel %vm1101, %v7576, 0
      %v7612 = vsel %vm1101, %v7577, 0
      %v7615 = vsel %vm1101, %v7578, 0
      %v7618 = vsel %vm1101, %v7579, 0
      %v7621 = vsel %vm1101, %v7580, 0
      %v7624 = vsel %vm1101, %v7581, 0
      %v7627 = vsel %vm1101, %v7582, 0
      %v7630 = vsel %vm1101, %v7583, 0
      %v7633 = vsel %vm1101, %v7584, 0
      %v7636 = vsel %vm3752, %v7586, 0
      %7638 = vmatprep.subr.bf16.mxu0 0
      %7639 = vmatpush1.bf16.msra.mxu0 0
      %7640 = vmatprep.subr.bf16.mxu0 0
      %7641 = vmatpush1.bf16.msra.mxu0 0
      %7642 = vmatprep.subr.bf16.mxu0 0
      %7643 = vmatpush1.bf16.msra.mxu0 0
      %7644 = vmatprep.subr.bf16.mxu0 0
      %7645 = vmatpush1.bf16.msra.mxu0 0
      %7646 = vmatprep.subr.bf16.mxu0 0
      %7647 = vmatpush1.bf16.msra.mxu0 0
      %7648 = vmatprep.subr.bf16.mxu0 0
      %7649 = vmatpush1.bf16.msra.mxu0 0
      %7650 = vmatprep.subr.bf16.mxu0 0
      %7651 = vmatpush1.bf16.msra.mxu0 0
      %7652 = vmatprep.subr.bf16.mxu0 0
      %7653 = vmatpush1.bf16.msra.mxu0 %v7636
      %7654 = vmatprep.subr.bf16.mxu0 0
      %7655 = vmatpush2.bf16.msra.mxu0 0
      %7656 = vmatprep.subr.bf16.mxu0 0
      %7657 = vmatpush2.bf16.msra.mxu0 0
      %7658 = vmatprep.subr.bf16.mxu0 0
      %7659 = vmatpush2.bf16.msra.mxu0 0
      %7660 = vmatprep.subr.bf16.mxu0 0
      %7661 = vmatpush2.bf16.msra.mxu0 0
      %7662 = vmatprep.subr.bf16.mxu0 0
      %7663 = vmatpush2.bf16.msra.mxu0 0
      %7664 = vmatprep.subr.bf16.mxu0 0
      %7665 = vmatpush2.bf16.msra.mxu0 0
      %7666 = vmatprep.subr.bf16.mxu0 0
      %7667 = vmatpush2.bf16.msra.mxu0 0
      %7668 = vmatprep.subr.bf16.mxu0 0
      %7669 = vmatpush2.bf16.msra.mxu0 0
      %7670 = vmatprep.mubr.bf16.mxu0 0
      %7671 = vmatmul.mubr.bf16.gmra.mxu0 %v7588
      %v7672 = vpop.f32.mrf.mxu0
      %v7673 = vadd.f32 0.0, %v7672
      %v7674 = vpop.f32.mrf.mxu0
      %v7675 = vpop.f32.mrf.mxu0
      %v7676 = vadd.f32 0.0, %v7675
      %v7677 = vpop.f32.mrf.mxu0
      %7678 = vmatprep.mubr.bf16.mxu0 0
      %7679 = vmatmul.mubr.bf16.gmra.mxu0 %v7591
      %v7680 = vpop.f32.mrf.mxu0
      %v7681 = vadd.f32 0.0, %v7680
      %v7682 = vpop.f32.mrf.mxu0
      %v7683 = vpop.f32.mrf.mxu0
      %v7684 = vadd.f32 0.0, %v7683
      %v7685 = vpop.f32.mrf.mxu0
      %7686 = vmatprep.mubr.bf16.mxu0 0
      %7687 = vmatmul.mubr.bf16.gmra.mxu0 %v7594
      %v7688 = vpop.f32.mrf.mxu0
      %v7689 = vadd.f32 0.0, %v7688
      %v7690 = vpop.f32.mrf.mxu0
      %v7691 = vpop.f32.mrf.mxu0
      %v7692 = vadd.f32 0.0, %v7691
      %v7693 = vpop.f32.mrf.mxu0
      %7694 = vmatprep.mubr.bf16.mxu0 0
      %7695 = vmatmul.mubr.bf16.gmra.mxu0 %v7597
      %v7696 = vpop.f32.mrf.mxu0
      %v7697 = vadd.f32 0.0, %v7696
      %v7698 = vpop.f32.mrf.mxu0
      %v7699 = vpop.f32.mrf.mxu0
      %v7700 = vadd.f32 0.0, %v7699
      %v7701 = vpop.f32.mrf.mxu0
      %7702 = vmatprep.mubr.bf16.mxu0 0
      %7703 = vmatmul.mubr.bf16.gmra.mxu0 %v7600
      %v7704 = vpop.f32.mrf.mxu0
      %v7705 = vadd.f32 0.0, %v7704
      %v7706 = vpop.f32.mrf.mxu0
      %v7707 = vpop.f32.mrf.mxu0
      %v7708 = vadd.f32 0.0, %v7707
      %v7709 = vpop.f32.mrf.mxu0
      %7710 = vmatprep.mubr.bf16.mxu0 0
      %7711 = vmatmul.mubr.bf16.gmra.mxu0 %v7603
      %v7712 = vpop.f32.mrf.mxu0
      %v7713 = vadd.f32 0.0, %v7712
      %v7714 = vpop.f32.mrf.mxu0
      %v7715 = vpop.f32.mrf.mxu0
      %v7716 = vadd.f32 0.0, %v7715
      %v7717 = vpop.f32.mrf.mxu0
      %7718 = vmatprep.mubr.bf16.mxu0 0
      %7719 = vmatmul.mubr.bf16.gmra.mxu0 %v7606
      %v7720 = vpop.f32.mrf.mxu0
      %v7721 = vadd.f32 0.0, %v7720
      %v7722 = vpop.f32.mrf.mxu0
      %v7723 = vpop.f32.mrf.mxu0
      %v7724 = vadd.f32 0.0, %v7723
      %v7725 = vpop.f32.mrf.mxu0
      %7726 = vmatprep.mubr.bf16.mxu0 0
      %7727 = vmatmul.mubr.bf16.gmra.mxu0 %v7609
      %v7728 = vpop.f32.mrf.mxu0
      %v7729 = vadd.f32 0.0, %v7728
      %v7730 = vpop.f32.mrf.mxu0
      %v7731 = vpop.f32.mrf.mxu0
      %v7732 = vadd.f32 0.0, %v7731
      %v7733 = vpop.f32.mrf.mxu0
      %7734 = vmatprep.mubr.bf16.mxu0 0
      %7735 = vmatmul.mubr.bf16.gmra.mxu0 %v7612
      %v7736 = vpop.f32.mrf.mxu0
      %v7737 = vadd.f32 0.0, %v7736
      %v7738 = vpop.f32.mrf.mxu0
      %v7739 = vpop.f32.mrf.mxu0
      %v7740 = vadd.f32 0.0, %v7739
      %v7741 = vpop.f32.mrf.mxu0
      %7742 = vmatprep.mubr.bf16.mxu0 0
      %7743 = vmatmul.mubr.bf16.gmra.mxu0 %v7615
      %v7744 = vpop.f32.mrf.mxu0
      %v7745 = vadd.f32 0.0, %v7744
      %v7746 = vpop.f32.mrf.mxu0
      %v7747 = vpop.f32.mrf.mxu0
      %v7748 = vadd.f32 0.0, %v7747
      %v7749 = vpop.f32.mrf.mxu0
      %7750 = vmatprep.mubr.bf16.mxu0 0
      %7751 = vmatmul.mubr.bf16.gmra.mxu0 %v7618
      %v7752 = vpop.f32.mrf.mxu0
      %v7753 = vadd.f32 0.0, %v7752
      %v7754 = vpop.f32.mrf.mxu0
      %v7755 = vpop.f32.mrf.mxu0
      %v7756 = vadd.f32 0.0, %v7755
      %v7757 = vpop.f32.mrf.mxu0
      %7758 = vmatprep.mubr.bf16.mxu0 0
      %7759 = vmatmul.mubr.bf16.gmra.mxu0 %v7621
      %v7760 = vpop.f32.mrf.mxu0
      %v7761 = vadd.f32 0.0, %v7760
      %v7762 = vpop.f32.mrf.mxu0
      %v7763 = vpop.f32.mrf.mxu0
      %v7764 = vadd.f32 0.0, %v7763
      %v7765 = vpop.f32.mrf.mxu0
      %7766 = vmatprep.mubr.bf16.mxu0 0
      %7767 = vmatmul.mubr.bf16.gmra.mxu0 %v7624
      %v7768 = vpop.f32.mrf.mxu0
      %v7769 = vadd.f32 0.0, %v7768
      %v7770 = vpop.f32.mrf.mxu0
      %v7771 = vpop.f32.mrf.mxu0
      %v7772 = vadd.f32 0.0, %v7771
      %v7773 = vpop.f32.mrf.mxu0
      %7774 = vmatprep.mubr.bf16.mxu0 0
      %7775 = vmatmul.mubr.bf16.gmra.mxu0 %v7627
      %v7776 = vpop.f32.mrf.mxu0
      %v7777 = vadd.f32 0.0, %v7776
      %v7778 = vpop.f32.mrf.mxu0
      %v7779 = vpop.f32.mrf.mxu0
      %v7780 = vadd.f32 0.0, %v7779
      %v7781 = vpop.f32.mrf.mxu0
      %7782 = vmatprep.mubr.bf16.mxu0 0
      %7783 = vmatmul.mubr.bf16.gmra.mxu0 %v7630
      %v7784 = vpop.f32.mrf.mxu0
      %v7785 = vadd.f32 0.0, %v7784
      %v7786 = vpop.f32.mrf.mxu0
      %v7787 = vpop.f32.mrf.mxu0
      %v7788 = vadd.f32 0.0, %v7787
      %v7789 = vpop.f32.mrf.mxu0
      %7790 = vmatprep.mubr.bf16.mxu0 0
      %7791 = vmatmul.mubr.bf16.gmra.mxu0 %v7633
      %v7792 = vpop.f32.mrf.mxu0
      %v7793 = vadd.f32 0.0, %v7792
      %v7794 = vpop.f32.mrf.mxu0
      %v7795 = vpop.f32.mrf.mxu0
      %v7796 = vadd.f32 0.0, %v7795
      %v7797 = vpop.f32.mrf.mxu0
      %7798 = vdwg.mxu0
      %v7799 = vadd.f32 %v5948, %v7673
      %v7800 = vadd.f32 %v5949, %v7676
      %v7801 = vadd.f32 %v5950, %v7681
      %v7802 = vadd.f32 %v5951, %v7684
      %v7803 = vadd.f32 %v5952, %v7689
      %v7804 = vadd.f32 %v5953, %v7692
      %v7805 = vadd.f32 %v5954, %v7697
      %v7806 = vadd.f32 %v5955, %v7700
      %v7807 = vadd.f32 %v5956, %v7705
      %v7808 = vadd.f32 %v5957, %v7708
      %v7809 = vadd.f32 %v5958, %v7713
      %v7810 = vadd.f32 %v5959, %v7716
      %v7811 = vadd.f32 %v5960, %v7721
      %v7812 = vadd.f32 %v5961, %v7724
      %v7813 = vadd.f32 %v5962, %v7729
      %v7814 = vadd.f32 %v5963, %v7732
      %v7815 = vadd.f32 %v5964, %v7737
      %v7816 = vadd.f32 %v5965, %v7740
      %v7817 = vadd.f32 %v5966, %v7745
      %v7818 = vadd.f32 %v5967, %v7748
      %v7819 = vadd.f32 %v5968, %v7753
      %v7820 = vadd.f32 %v5969, %v7756
      %v7821 = vadd.f32 %v5970, %v7761
      %v7822 = vadd.f32 %v5971, %v7764
      %v7823 = vadd.f32 %v5972, %v7769
      %v7824 = vadd.f32 %v5973, %v7772
      %v7825 = vadd.f32 %v5974, %v7777
      %v7826 = vadd.f32 %v5975, %v7780
      %v7827 = vadd.f32 %v5976, %v7785
      %v7828 = vadd.f32 %v5977, %v7788
      %v7829 = vadd.f32 %v5978, %v7793
      %v7830 = vadd.f32 %v5979, %v7796
      %v7831 = vld [vmem:[%s8] sm:$0x1]
      %v7833 = vlaneseq
      %v7834 = vshrl.u32 %v7833, 7
      %v7835 = vsub.s32 0, %v7834
      %v7836 = vrot.slane %v7831, %v7835
      %v7838 = vadd.f32 %v7799, %v7836
      %v7839 = vadd.f32 %v7800, %v7836
      %v7840 = vadd.f32 %v7801, %v7836
      %v7841 = vadd.f32 %v7802, %v7836
      %v7842 = vadd.f32 %v7803, %v7836
      %v7843 = vadd.f32 %v7804, %v7836
      %v7844 = vadd.f32 %v7805, %v7836
      %v7845 = vadd.f32 %v7806, %v7836
      %v7846 = vadd.f32 %v7807, %v7836
      %v7847 = vadd.f32 %v7808, %v7836
      %v7848 = vadd.f32 %v7809, %v7836
      %v7849 = vadd.f32 %v7810, %v7836
      %v7850 = vadd.f32 %v7811, %v7836
      %v7851 = vadd.f32 %v7812, %v7836
      %v7852 = vadd.f32 %v7813, %v7836
      %v7853 = vadd.f32 %v7814, %v7836
      %v7854 = vadd.f32 %v7815, %v7836
      %v7855 = vadd.f32 %v7816, %v7836
      %v7856 = vadd.f32 %v7817, %v7836
      %v7857 = vadd.f32 %v7818, %v7836
      %v7858 = vadd.f32 %v7819, %v7836
      %v7859 = vadd.f32 %v7820, %v7836
      %v7860 = vadd.f32 %v7821, %v7836
      %v7861 = vadd.f32 %v7822, %v7836
      %v7862 = vadd.f32 %v7823, %v7836
      %v7863 = vadd.f32 %v7824, %v7836
      %v7864 = vadd.f32 %v7825, %v7836
      %v7865 = vadd.f32 %v7826, %v7836
      %v7866 = vadd.f32 %v7827, %v7836
      %v7867 = vadd.f32 %v7828, %v7836
      %v7868 = vadd.f32 %v7829, %v7836
      %v7869 = vadd.f32 %v7830, %v7836
      %vm7870 = vcmask 261120
      %7871 = vst.msk [vmem:[%s332] sm:$0xff] %vm7870, %v7838
      %7872 = vst.msk [vmem:[%s332 + $0x8] sm:$0xff] %vm7870, %v7839
      %7873 = vst.msk [vmem:[%s332 + $0x10] sm:$0xff] %vm7870, %v7840
      %7874 = vst.msk [vmem:[%s332 + $0x18] sm:$0xff] %vm7870, %v7841
      %7875 = vst.msk [vmem:[%s332 + $0x20] sm:$0xff] %vm7870, %v7842
      %7876 = vst.msk [vmem:[%s332 + $0x28] sm:$0xff] %vm7870, %v7843
      %7877 = vst.msk [vmem:[%s332 + $0x30] sm:$0xff] %vm7870, %v7844
      %7878 = vst.msk [vmem:[%s332 + $0x38] sm:$0xff] %vm7870, %v7845
      %7879 = vst.msk [vmem:[%s332 + $0x40] sm:$0xff] %vm7870, %v7846
      %7880 = vst.msk [vmem:[%s332 + $0x48] sm:$0xff] %vm7870, %v7847
      %7881 = vst.msk [vmem:[%s332 + $0x50] sm:$0xff] %vm7870, %v7848
      %7882 = vst.msk [vmem:[%s332 + $0x58] sm:$0xff] %vm7870, %v7849
      %7883 = vst.msk [vmem:[%s332 + $0x60] sm:$0xff] %vm7870, %v7850
      %7884 = vst.msk [vmem:[%s332 + $0x68] sm:$0xff] %vm7870, %v7851
      %7885 = vst.msk [vmem:[%s332 + $0x70] sm:$0xff] %vm7870, %v7852
      %7886 = vst.msk [vmem:[%s332 + $0x78] sm:$0xff] %vm7870, %v7853
      %7887 = vst.msk [vmem:[%s332 + $0x80] sm:$0xff] %vm7870, %v7854
      %7888 = vst.msk [vmem:[%s332 + $0x88] sm:$0xff] %vm7870, %v7855
      %7889 = vst.msk [vmem:[%s332 + $0x90] sm:$0xff] %vm7870, %v7856
      %7890 = vst.msk [vmem:[%s332 + $0x98] sm:$0xff] %vm7870, %v7857
      %7891 = vst.msk [vmem:[%s332 + $0xa0] sm:$0xff] %vm7870, %v7858
      %7892 = vst.msk [vmem:[%s332 + $0xa8] sm:$0xff] %vm7870, %v7859
      %7893 = vst.msk [vmem:[%s332 + $0xb0] sm:$0xff] %vm7870, %v7860
      %7894 = vst.msk [vmem:[%s332 + $0xb8] sm:$0xff] %vm7870, %v7861
      %7895 = vst.msk [vmem:[%s332 + $0xc0] sm:$0xff] %vm7870, %v7862
      %7896 = vst.msk [vmem:[%s332 + $0xc8] sm:$0xff] %vm7870, %v7863
      %7897 = vst.msk [vmem:[%s332 + $0xd0] sm:$0xff] %vm7870, %v7864
      %7898 = vst.msk [vmem:[%s332 + $0xd8] sm:$0xff] %vm7870, %v7865
      %7899 = vst.msk [vmem:[%s332 + $0xe0] sm:$0xff] %vm7870, %v7866
      %7900 = vst.msk [vmem:[%s332 + $0xe8] sm:$0xff] %vm7870, %v7867
      %7901 = vst.msk [vmem:[%s332 + $0xf0] sm:$0xff] %vm7870, %v7868
      %7902 = vst.msk [vmem:[%s332 + $0xf8] sm:$0xff] %vm7870, %v7869
      %p7903 = scmp.lt.s32.totalorder %s20, 1
      %s7904 = scalar_select %p7903, %s20, 1
      %s7905 = smul.addr %s7904, 32
      %s7906 = smul.addr %s7905, 8
      %s7907 = scalar_lea.vmem %s9, %s7906
      // Predicated region
      $region57: #{tpu_custom_call.1} parent=55 // pred_check
        %p7908 = pneg %p232
      $region58: #{tpu_custom_call.1} parent=55 // pred_check_branch
        %7910 = sbr.rel (%p7908) target = $region60
      $region59: #{tpu_custom_call.1} parent=55 // pred_region
        _
      $region60: #{tpu_custom_call.1} parent=55 // pred_fallthru
        _
    $region56: #{tpu_custom_call.1} parent=5 // pred_fallthru
      _
    %p7911 = scmp.le.s32.totalorder 2, %s15
    // Predicated region
    $region61: #{tpu_custom_call.1} parent=5 // pred_check
      %p7912 = pneg %p7911
    $region62: #{tpu_custom_call.1} parent=5 // pred_check_branch
      %7914 = sbr.rel (%p7912) target = $region64
    $region63: #{tpu_custom_call.1} parent=5 // pred_region
      %s7915 = ssub.s32 %s15, 2
      // Predicated region
      $region65: #{tpu_custom_call.1} parent=63 // pred_check
        %p7916 = pneg %p238
      $region66: #{tpu_custom_call.1} parent=63 // pred_check_branch
        %7918 = sbr.rel (%p7916) target = $region68
      $region67: #{tpu_custom_call.1} parent=63 // pred_region
        %p7919 = scmp.lt.s32.totalorder %s21, 1
        %s7920 = scalar_select %p7919, %s21, 1
        %s7921 = smul.addr %s7920, 32
        %s7922 = smul.addr %s7921, 8
        %s7923 = scalar_lea.vmem %s9, %s7922
      $region68: #{tpu_custom_call.1} parent=63 // pred_fallthru
        _
    $region64: #{tpu_custom_call.1} parent=5 // pred_fallthru
      _
  $region6: #{tpu_custom_call.1} parent=0 // loop_footer
    %s19 = sadd.s32 1, %s15
  $region7: #{tpu_custom_call.1} parent=0 // loop_footer_branch
    %14 = sbr.rel target = $region3
  $region8: #{tpu_custom_call.1} parent=0 // loop_exit
    _

</llo_original>
